<compile_context>
chip_gen: v7x
topology: tpu7x:2x2x1
jax: 0.10.0
libtpu: 0.0.40
codegen_flags: <defaults>
</compile_context>

<pallas_src>
import functools

import jax
import jax.numpy as jnp
from jax import lax
from jax.experimental import pallas as pl
from jax.experimental.pallas import tpu as pltpu


def _round_up(a, b):
    return (a + b - 1) // b * b


def _basic_block_kernel(x_ref, w1_ref, w2_ref, sb_ref, o_ref, mid_ref,
                        *, H, W, Wpad, Cp):
    """One grid step = one image.

    x_ref  : (1, (H+4)*Wpad, Cp) bf16  zero-padded NHWC image, flattened with
             row stride Wpad and TWO halo rows top/bottom (so every shifted
             tap slice below is statically in bounds).
    w?_ref : (9, Cp, Cp) bf16          3x3 taps, each (Cin, Cout), zero-padded.
    sb_ref : (8, Cp) f32               rows 0..3 = s1, b1, s2, b2 (folded BN).
    o_ref  : (1, H*Wpad, Cp) f32       lane-dense flat output slab.
    mid_ref: ((H+4)*Wpad, Cp) bf16     conv1->bn1->relu activation, same flat
                                       layout as the input.
    """
    M = H * Wpad            # rows of one flat output slab
    q0 = 2 * Wpad           # flat row index of image pixel row 0 (at col -1)

    sb = sb_ref[...]                           # one aligned (8,128) tile load
    s1, b1 = sb[0:1], sb[1:2]
    s2, b2 = sb[2:3], sb[3:4]

    def conv3x3(load_rows, w_ref):
        # 9 shifted (M, Cp) @ (Cp, Cp) matmuls accumulated in f32 on the MXU.
        # All slice starts are static Python ints.
        acc = jnp.zeros((M, Cp), jnp.float32)
        for t in range(9):
            dh, dw = divmod(t, 3)
            off = (dh - 1) * Wpad + (dw - 1)
            acc = acc + jnp.dot(load_rows(q0 + off), w_ref[t],
                                preferred_element_type=jnp.float32)
        return acc

    # ---- conv1 -> bn1 -> relu ----------------------------------------------
    acc1 = conv3x3(lambda r: x_ref[0, pl.ds(r, M), :], w1_ref)
    y1 = jnp.maximum(acc1 * s1 + b1, 0.0)

    # Zero the left/right padding columns so conv2 sees proper SAME padding.
    col = lax.broadcasted_iota(jnp.int32, (H, Wpad, Cp), 1).reshape(M, Cp)
    interior = jnp.logical_and(col >= 1, col <= W)
    mid = jnp.where(interior, y1, 0.0).astype(mid_ref.dtype)

    # Zero only the top/bottom halo rows (not the whole scratch), then store
    # the interior as a single aligned, lane-dense slab.
    halo_zeros = jnp.zeros((q0, Cp), mid_ref.dtype)
    mid_ref[pl.ds(0, q0), :] = halo_zeros
    mid_ref[pl.ds(q0 + M, q0), :] = halo_zeros
    mid_ref[pl.ds(q0, M), :] = mid

    # ---- conv2 -> bn2 -> (+identity) -> relu --------------------------------
    acc2 = conv3x3(lambda r: mid_ref[pl.ds(r, M), :], w2_ref)
    identity = x_ref[0, pl.ds(q0, M), :].astype(jnp.float32)   # aligned read
    out = jnp.maximum(acc2 * s2 + b2 + identity, 0.0)
    o_ref[0] = out.astype(o_ref.dtype)


def _fold_bn(gamma, beta, mean, var, eps=1e-5):
    scale = gamma / jnp.sqrt(var + eps)
    bias = beta - mean * scale
    return (scale.reshape(1, -1).astype(jnp.float32),
            bias.reshape(1, -1).astype(jnp.float32))


def basic_block_forward(x_nchw, params):
    """Pallas implementation of BasicBlock.forward. Input/output are NCHW."""
    N, C, H, W = x_nchw.shape
    # TODO(synk): stride>1 / downsample / Cin != Cout not supported.
    assert params["conv1_w"].shape == (C, C, 3, 3), "only square stride-1 blocks"
    assert params["conv2_w"].shape == (C, C, 3, 3), "only square stride-1 blocks"

    Cp = _round_up(C, 128)          # lane-dense channel count
    Wpad = _round_up(W + 2, 8)      # sublane-aligned padded row length
    M = H * Wpad                    # flat rows per output slab
    R = (H + 4) * Wpad              # flat rows per padded input slab

    # Layout prep (fused XLA pass): NCHW -> NHWC, bf16, pad channels to Cp,
    # pad spatially (2 halo rows, 1 + alignment halo cols), flatten rows.
    x = jnp.transpose(x_nchw, (0, 2, 3, 1)).astype(jnp.bfloat16)
    xflat = jnp.pad(
        x, ((0, 0), (2, 2), (1, Wpad - W - 1), (0, Cp - C))
    ).reshape(N, R, Cp)

    def taps(w_oihw):   # OIHW -> (tap, Cin, Cout), zero-padded to Cp, bf16
        w = jnp.transpose(w_oihw, (2, 3, 1, 0)).reshape(9, C, C)
        return jnp.pad(w, ((0, 0), (0, Cp - C), (0, Cp - C))).astype(jnp.bfloat16)

    def bn(prefix):
        return _fold_bn(params[f"{prefix}_gamma"], params[f"{prefix}_beta"],
                        params[f"{prefix}_mean"], params[f"{prefix}_var"])

    w1, w2 = taps(params["conv1_w"]), taps(params["conv2_w"])
    s1, b1 = bn("bn1")
    s2, b2 = bn("bn2")
    # Pack the 4 per-channel BN vectors into one aligned (8, Cp) tile.
    sb = jnp.pad(jnp.concatenate([s1, b1, s2, b2], axis=0),
                 ((0, 4), (0, Cp - C))).astype(jnp.float32)

    kernel = functools.partial(_basic_block_kernel, H=H, W=W, Wpad=Wpad, Cp=Cp)

    flops = N * 2 * 9 * 2 * M * Cp * Cp           # 2 convs x 9 taps, MACs*2
    bytes_accessed = (xflat.size * 2 + w1.size * 2 + w2.size * 2
                      + sb.size * 4 + N * M * Cp * 4)

    out_flat = pl.pallas_call(
        kernel,
        out_shape=jax.ShapeDtypeStruct((N, M, Cp), jnp.float32),
        grid_spec=pltpu.PrefetchScalarGridSpec(
            num_scalar_prefetch=0,
            grid=(N,),
            in_specs=[
                pl.BlockSpec((1, R, Cp), lambda n: (n, 0, 0)),
                pl.BlockSpec((9, Cp, Cp), lambda n: (0, 0, 0)),
                pl.BlockSpec((9, Cp, Cp), lambda n: (0, 0, 0)),
                pl.BlockSpec((8, Cp), lambda n: (0, 0)),
            ],
            out_specs=pl.BlockSpec((1, M, Cp), lambda n: (n, 0, 0)),
            scratch_shapes=[pltpu.VMEM((R, Cp), jnp.bfloat16)],
        ),
        compiler_params=pltpu.CompilerParams(
            dimension_semantics=("parallel",)),
        cost_estimate=pl.CostEstimate(flops=flops, transcendentals=0,
                                      bytes_accessed=bytes_accessed),
    )(xflat, w1, w2, sb)

    # Interior extraction + back to NCHW (cheap XLA slice / transpose).
    out = out_flat.reshape(N, H, Wpad, Cp)[:, :, 1:W + 1, :C]
    return jnp.transpose(out, (0, 3, 1, 2)).astype(x_nchw.dtype)


def basic_block_reference(x_nchw, params):
    """Pure-JAX reference with matching bf16-input / f32-accumulate numerics."""
    def q(a):   # quantize to bf16, compute in f32
        return a.astype(jnp.bfloat16).astype(jnp.float32)

    x = q(jnp.transpose(x_nchw, (0, 2, 3, 1)))
    w1 = q(jnp.transpose(params["conv1_w"], (2, 3, 1, 0)))
    w2 = q(jnp.transpose(params["conv2_w"], (2, 3, 1, 0)))
    s1, b1 = _fold_bn(params["bn1_gamma"], params["bn1_beta"],
                      params["bn1_mean"], params["bn1_var"])
    s2, b2 = _fold_bn(params["bn2_gamma"], params["bn2_beta"],
                      params["bn2_mean"], params["bn2_var"])
    dn = ("NHWC", "HWIO", "NHWC")
    y = lax.conv_general_dilated(x, w1, (1, 1), "SAME", dimension_numbers=dn,
                                 precision=lax.Precision.HIGHEST)
    y = q(jnp.maximum(y * s1 + b1, 0.0))
    y = lax.conv_general_dilated(y, w2, (1, 1), "SAME", dimension_numbers=dn,
                                 precision=lax.Precision.HIGHEST)
    y = jnp.maximum(y * s2 + b2 + x, 0.0)
    return jnp.transpose(y, (0, 3, 1, 2)).astype(x_nchw.dtype)


if __name__ == "__main__":
    N, C, H, W = 2, 4, 16, 16
    ks = jax.random.split(jax.random.PRNGKey(0), 11)

    params = {
        "conv1_w":   0.1 * jax.random.normal(ks[0], (C, C, 3, 3), jnp.float32),  # OIHW
        "conv2_w":   0.1 * jax.random.normal(ks[1], (C, C, 3, 3), jnp.float32),
        "bn1_gamma": 1.0 + 0.1 * jax.random.normal(ks[2], (C,), jnp.float32),
        "bn1_beta":  0.1 * jax.random.normal(ks[3], (C,), jnp.float32),
        "bn1_mean":  0.1 * jax.random.normal(ks[4], (C,), jnp.float32),
        "bn1_var":   0.5 + jax.random.uniform(ks[5], (C,), jnp.float32),
        "bn2_gamma": 1.0 + 0.1 * jax.random.normal(ks[6], (C,), jnp.float32),
        "bn2_beta":  0.1 * jax.random.normal(ks[7], (C,), jnp.float32),
        "bn2_mean":  0.1 * jax.random.normal(ks[8], (C,), jnp.float32),
        "bn2_var":   0.5 + jax.random.uniform(ks[9], (C,), jnp.float32),
    }
    x = jax.random.normal(ks[10], (N, C, H, W), jnp.float32)

    out = jax.block_until_ready(basic_block_forward(x, params))
    ref = jax.block_until_ready(basic_block_reference(x, params))

    assert out.shape == (N, C, H, W)
    assert jnp.allclose(out, ref, atol=2e-3, rtol=2e-3), "mismatch vs JAX reference"
    print("KERNEL_OK")
</pallas_src>

<mosaic_0001>
module attributes {stable_mosaic.version = 11 : i64} {
  func.func @_basic_block_kernel(%arg0: i32, %arg1: memref<1x480x128xbf16, #tpu.memory_space<vmem>>, %arg2: memref<9x128x128xbf16, #tpu.memory_space<vmem>>, %arg3: memref<9x128x128xbf16, #tpu.memory_space<vmem>>, %arg4: memref<8x128xf32, #tpu.memory_space<vmem>>, %arg5: memref<1x384x128xf32, #tpu.memory_space<vmem>>, %arg6: memref<480x128xbf16, #tpu.memory_space<vmem>>) attributes {dimension_semantics = [#tpu.dimension_semantics<parallel>], iteration_bounds = array<i64: 2>, scalar_prefetch = 0 : i64, scratch_operands = 1 : i64, tpu.core_type = #tpu.core_type<tc>, window_params = [{transform_indices = @transform_0, window_bounds = array<i64: 1, 480, 128>}, {pipeline_mode = #tpu.pipeline_mode<synchronous>, transform_indices = @transform_1, window_bounds = array<i64: 9, 128, 128>}, {pipeline_mode = #tpu.pipeline_mode<synchronous>, transform_indices = @transform_2, window_bounds = array<i64: 9, 128, 128>}, {pipeline_mode = #tpu.pipeline_mode<synchronous>, transform_indices = @transform_3, window_bounds = array<i64: 8, 128>}, {transform_indices = @transform_4, window_bounds = array<i64: 1, 384, 128>}]} {
    %c0 = arith.constant 0 : index
    %c0_0 = arith.constant 0 : index
    %0 = vector.load %arg4[%c0, %c0_0] : memref<8x128xf32, #tpu.memory_space<vmem>>, vector<8x128xf32>
    %1 = vector.extract_strided_slice %0 {offsets = [0, 0], sizes = [1, 128], strides = [1, 1]} : vector<8x128xf32> to vector<1x128xf32>
    %2 = vector.extract_strided_slice %0 {offsets = [1, 0], sizes = [1, 128], strides = [1, 1]} : vector<8x128xf32> to vector<1x128xf32>
    %3 = vector.extract_strided_slice %0 {offsets = [2, 0], sizes = [1, 128], strides = [1, 1]} : vector<8x128xf32> to vector<1x128xf32>
    %4 = vector.extract_strided_slice %0 {offsets = [3, 0], sizes = [1, 128], strides = [1, 1]} : vector<8x128xf32> to vector<1x128xf32>
    %cst = arith.constant 0.000000e+00 : f32
    %5 = vector.broadcast %cst : f32 to vector<384x128xf32>
    %c0_1 = arith.constant 0 : index
    %c23 = arith.constant 23 : index
    %c0_2 = arith.constant 0 : index
    %6 = vector.load %arg1[%c0_1, %c23, %c0_2] : memref<1x480x128xbf16, #tpu.memory_space<vmem>>, vector<1x384x128xbf16>
    %7 = vector.shape_cast %6 : vector<1x384x128xbf16> to vector<384x128xbf16>
    %c0_3 = arith.constant 0 : index
    %c0_4 = arith.constant 0 : index
    %c0_5 = arith.constant 0 : index
    %8 = vector.load %arg2[%c0_3, %c0_4, %c0_5] : memref<9x128x128xbf16, #tpu.memory_space<vmem>>, vector<1x128x128xbf16>
    %9 = vector.shape_cast %8 : vector<1x128x128xbf16> to vector<128x128xbf16>
    %cst_6 = arith.constant dense<0.000000e+00> : vector<384x128xf32>
    %10 = tpu.matmul %7, %9, %cst_6 {dimension_numbers = #tpu.dot_dimension_numbers<[1], [0], [0], [1], [0, 0, 1, 1], [], []>} : vector<384x128xbf16>, vector<128x128xbf16>, vector<384x128xf32> -> vector<384x128xf32>
    %11 = arith.addf %5, %10 : vector<384x128xf32>
    %c0_7 = arith.constant 0 : index
    %c24 = arith.constant 24 : index
    %c0_8 = arith.constant 0 : index
    %12 = vector.load %arg1[%c0_7, %c24, %c0_8] : memref<1x480x128xbf16, #tpu.memory_space<vmem>>, vector<1x384x128xbf16>
    %13 = vector.shape_cast %12 : vector<1x384x128xbf16> to vector<384x128xbf16>
    %c1 = arith.constant 1 : index
    %c0_9 = arith.constant 0 : index
    %c0_10 = arith.constant 0 : index
    %14 = vector.load %arg2[%c1, %c0_9, %c0_10] : memref<9x128x128xbf16, #tpu.memory_space<vmem>>, vector<1x128x128xbf16>
    %15 = vector.shape_cast %14 : vector<1x128x128xbf16> to vector<128x128xbf16>
    %cst_11 = arith.constant dense<0.000000e+00> : vector<384x128xf32>
    %16 = tpu.matmul %13, %15, %cst_11 {dimension_numbers = #tpu.dot_dimension_numbers<[1], [0], [0], [1], [0, 0, 1, 1], [], []>} : vector<384x128xbf16>, vector<128x128xbf16>, vector<384x128xf32> -> vector<384x128xf32>
    %17 = arith.addf %11, %16 : vector<384x128xf32>
    %c0_12 = arith.constant 0 : index
    %c25 = arith.constant 25 : index
    %c0_13 = arith.constant 0 : index
    %18 = vector.load %arg1[%c0_12, %c25, %c0_13] : memref<1x480x128xbf16, #tpu.memory_space<vmem>>, vector<1x384x128xbf16>
    %19 = vector.shape_cast %18 : vector<1x384x128xbf16> to vector<384x128xbf16>
    %c2 = arith.constant 2 : index
    %c0_14 = arith.constant 0 : index
    %c0_15 = arith.constant 0 : index
    %20 = vector.load %arg2[%c2, %c0_14, %c0_15] : memref<9x128x128xbf16, #tpu.memory_space<vmem>>, vector<1x128x128xbf16>
    %21 = vector.shape_cast %20 : vector<1x128x128xbf16> to vector<128x128xbf16>
    %cst_16 = arith.constant dense<0.000000e+00> : vector<384x128xf32>
    %22 = tpu.matmul %19, %21, %cst_16 {dimension_numbers = #tpu.dot_dimension_numbers<[1], [0], [0], [1], [0, 0, 1, 1], [], []>} : vector<384x128xbf16>, vector<128x128xbf16>, vector<384x128xf32> -> vector<384x128xf32>
    %23 = arith.addf %17, %22 : vector<384x128xf32>
    %c0_17 = arith.constant 0 : index
    %c47 = arith.constant 47 : index
    %c0_18 = arith.constant 0 : index
    %24 = vector.load %arg1[%c0_17, %c47, %c0_18] : memref<1x480x128xbf16, #tpu.memory_space<vmem>>, vector<1x384x128xbf16>
    %25 = vector.shape_cast %24 : vector<1x384x128xbf16> to vector<384x128xbf16>
    %c3 = arith.constant 3 : index
    %c0_19 = arith.constant 0 : index
    %c0_20 = arith.constant 0 : index
    %26 = vector.load %arg2[%c3, %c0_19, %c0_20] : memref<9x128x128xbf16, #tpu.memory_space<vmem>>, vector<1x128x128xbf16>
    %27 = vector.shape_cast %26 : vector<1x128x128xbf16> to vector<128x128xbf16>
    %cst_21 = arith.constant dense<0.000000e+00> : vector<384x128xf32>
    %28 = tpu.matmul %25, %27, %cst_21 {dimension_numbers = #tpu.dot_dimension_numbers<[1], [0], [0], [1], [0, 0, 1, 1], [], []>} : vector<384x128xbf16>, vector<128x128xbf16>, vector<384x128xf32> -> vector<384x128xf32>
    %29 = arith.addf %23, %28 : vector<384x128xf32>
    %c0_22 = arith.constant 0 : index
    %c48 = arith.constant 48 : index
    %c0_23 = arith.constant 0 : index
    %30 = vector.load %arg1[%c0_22, %c48, %c0_23] : memref<1x480x128xbf16, #tpu.memory_space<vmem>>, vector<1x384x128xbf16>
    %31 = vector.shape_cast %30 : vector<1x384x128xbf16> to vector<384x128xbf16>
    %c4 = arith.constant 4 : index
    %c0_24 = arith.constant 0 : index
    %c0_25 = arith.constant 0 : index
    %32 = vector.load %arg2[%c4, %c0_24, %c0_25] : memref<9x128x128xbf16, #tpu.memory_space<vmem>>, vector<1x128x128xbf16>
    %33 = vector.shape_cast %32 : vector<1x128x128xbf16> to vector<128x128xbf16>
    %cst_26 = arith.constant dense<0.000000e+00> : vector<384x128xf32>
    %34 = tpu.matmul %31, %33, %cst_26 {dimension_numbers = #tpu.dot_dimension_numbers<[1], [0], [0], [1], [0, 0, 1, 1], [], []>} : vector<384x128xbf16>, vector<128x128xbf16>, vector<384x128xf32> -> vector<384x128xf32>
    %35 = arith.addf %29, %34 : vector<384x128xf32>
    %c0_27 = arith.constant 0 : index
    %c49 = arith.constant 49 : index
    %c0_28 = arith.constant 0 : index
    %36 = vector.load %arg1[%c0_27, %c49, %c0_28] : memref<1x480x128xbf16, #tpu.memory_space<vmem>>, vector<1x384x128xbf16>
    %37 = vector.shape_cast %36 : vector<1x384x128xbf16> to vector<384x128xbf16>
    %c5 = arith.constant 5 : index
    %c0_29 = arith.constant 0 : index
    %c0_30 = arith.constant 0 : index
    %38 = vector.load %arg2[%c5, %c0_29, %c0_30] : memref<9x128x128xbf16, #tpu.memory_space<vmem>>, vector<1x128x128xbf16>
    %39 = vector.shape_cast %38 : vector<1x128x128xbf16> to vector<128x128xbf16>
    %cst_31 = arith.constant dense<0.000000e+00> : vector<384x128xf32>
    %40 = tpu.matmul %37, %39, %cst_31 {dimension_numbers = #tpu.dot_dimension_numbers<[1], [0], [0], [1], [0, 0, 1, 1], [], []>} : vector<384x128xbf16>, vector<128x128xbf16>, vector<384x128xf32> -> vector<384x128xf32>
    %41 = arith.addf %35, %40 : vector<384x128xf32>
    %c0_32 = arith.constant 0 : index
    %c71 = arith.constant 71 : index
    %c0_33 = arith.constant 0 : index
    %42 = vector.load %arg1[%c0_32, %c71, %c0_33] : memref<1x480x128xbf16, #tpu.memory_space<vmem>>, vector<1x384x128xbf16>
    %43 = vector.shape_cast %42 : vector<1x384x128xbf16> to vector<384x128xbf16>
    %c6 = arith.constant 6 : index
    %c0_34 = arith.constant 0 : index
    %c0_35 = arith.constant 0 : index
    %44 = vector.load %arg2[%c6, %c0_34, %c0_35] : memref<9x128x128xbf16, #tpu.memory_space<vmem>>, vector<1x128x128xbf16>
    %45 = vector.shape_cast %44 : vector<1x128x128xbf16> to vector<128x128xbf16>
    %cst_36 = arith.constant dense<0.000000e+00> : vector<384x128xf32>
    %46 = tpu.matmul %43, %45, %cst_36 {dimension_numbers = #tpu.dot_dimension_numbers<[1], [0], [0], [1], [0, 0, 1, 1], [], []>} : vector<384x128xbf16>, vector<128x128xbf16>, vector<384x128xf32> -> vector<384x128xf32>
    %47 = arith.addf %41, %46 : vector<384x128xf32>
    %c0_37 = arith.constant 0 : index
    %c72 = arith.constant 72 : index
    %c0_38 = arith.constant 0 : index
    %48 = vector.load %arg1[%c0_37, %c72, %c0_38] : memref<1x480x128xbf16, #tpu.memory_space<vmem>>, vector<1x384x128xbf16>
    %49 = vector.shape_cast %48 : vector<1x384x128xbf16> to vector<384x128xbf16>
    %c7 = arith.constant 7 : index
    %c0_39 = arith.constant 0 : index
    %c0_40 = arith.constant 0 : index
    %50 = vector.load %arg2[%c7, %c0_39, %c0_40] : memref<9x128x128xbf16, #tpu.memory_space<vmem>>, vector<1x128x128xbf16>
    %51 = vector.shape_cast %50 : vector<1x128x128xbf16> to vector<128x128xbf16>
    %cst_41 = arith.constant dense<0.000000e+00> : vector<384x128xf32>
    %52 = tpu.matmul %49, %51, %cst_41 {dimension_numbers = #tpu.dot_dimension_numbers<[1], [0], [0], [1], [0, 0, 1, 1], [], []>} : vector<384x128xbf16>, vector<128x128xbf16>, vector<384x128xf32> -> vector<384x128xf32>
    %53 = arith.addf %47, %52 : vector<384x128xf32>
    %c0_42 = arith.constant 0 : index
    %c73 = arith.constant 73 : index
    %c0_43 = arith.constant 0 : index
    %54 = vector.load %arg1[%c0_42, %c73, %c0_43] : memref<1x480x128xbf16, #tpu.memory_space<vmem>>, vector<1x384x128xbf16>
    %55 = vector.shape_cast %54 : vector<1x384x128xbf16> to vector<384x128xbf16>
    %c8 = arith.constant 8 : index
    %c0_44 = arith.constant 0 : index
    %c0_45 = arith.constant 0 : index
    %56 = vector.load %arg2[%c8, %c0_44, %c0_45] : memref<9x128x128xbf16, #tpu.memory_space<vmem>>, vector<1x128x128xbf16>
    %57 = vector.shape_cast %56 : vector<1x128x128xbf16> to vector<128x128xbf16>
    %cst_46 = arith.constant dense<0.000000e+00> : vector<384x128xf32>
    %58 = tpu.matmul %55, %57, %cst_46 {dimension_numbers = #tpu.dot_dimension_numbers<[1], [0], [0], [1], [0, 0, 1, 1], [], []>} : vector<384x128xbf16>, vector<128x128xbf16>, vector<384x128xf32> -> vector<384x128xf32>
    %59 = arith.addf %53, %58 : vector<384x128xf32>
    %60 = vector.broadcast %1 : vector<1x128xf32> to vector<384x128xf32>
    %61 = arith.mulf %59, %60 : vector<384x128xf32>
    %62 = vector.broadcast %2 : vector<1x128xf32> to vector<384x128xf32>
    %63 = arith.addf %61, %62 : vector<384x128xf32>
    %cst_47 = arith.constant 0.000000e+00 : f32
    %64 = vector.broadcast %cst_47 : f32 to vector<384x128xf32>
    %65 = arith.maximumf %63, %64 : vector<384x128xf32>
    %66 = tpu.iota {dimensions = array<i32: 1>} : vector<16x24x128xi32>
    %67 = vector.shape_cast %66 : vector<16x24x128xi32> to vector<384x128xi32>
    %c1_i32 = arith.constant 1 : i32
    %68 = vector.broadcast %c1_i32 : i32 to vector<384x128xi32>
    %69 = arith.cmpi sge, %67, %68 : vector<384x128xi32>
    %c16_i32 = arith.constant 16 : i32
    %70 = vector.broadcast %c16_i32 : i32 to vector<384x128xi32>
    %71 = arith.cmpi sle, %67, %70 : vector<384x128xi32>
    %72 = arith.andi %69, %71 : vector<384x128xi1>
    %cst_48 = arith.constant 0.000000e+00 : f32
    %73 = vector.broadcast %cst_48 : f32 to vector<384x128xf32>
    %74 = arith.select %72, %65, %73 : vector<384x128xi1>, vector<384x128xf32>
    %75 = arith.truncf %74 : vector<384x128xf32> to vector<384x128xbf16>
    %cst_49 = arith.constant 0.000000e+00 : bf16
    %76 = vector.broadcast %cst_49 : bf16 to vector<48x128xbf16>
    %c0_50 = arith.constant 0 : index
    %c0_51 = arith.constant 0 : index
    %77 = vector.load %arg6[%c0_50, %c0_51] : memref<480x128xbf16, #tpu.memory_space<vmem>>, vector<48x128xbf16>
    tpu.vector_store %arg6[%c0_50, %c0_51], %76 {strides = array<i32>} : memref<480x128xbf16, #tpu.memory_space<vmem>>, vector<48x128xbf16>,
    %c432 = arith.constant 432 : index
    %c0_52 = arith.constant 0 : index
    %78 = vector.load %arg6[%c432, %c0_52] : memref<480x128xbf16, #tpu.memory_space<vmem>>, vector<48x128xbf16>
    tpu.vector_store %arg6[%c432, %c0_52], %76 {strides = array<i32>} : memref<480x128xbf16, #tpu.memory_space<vmem>>, vector<48x128xbf16>,
    %c48_53 = arith.constant 48 : index
    %c0_54 = arith.constant 0 : index
    %79 = vector.load %arg6[%c48_53, %c0_54] : memref<480x128xbf16, #tpu.memory_space<vmem>>, vector<384x128xbf16>
    tpu.vector_store %arg6[%c48_53, %c0_54], %75 {strides = array<i32>} : memref<480x128xbf16, #tpu.memory_space<vmem>>, vector<384x128xbf16>,
    %cst_55 = arith.constant 0.000000e+00 : f32
    %80 = vector.broadcast %cst_55 : f32 to vector<384x128xf32>
    %c23_56 = arith.constant 23 : index
    %c0_57 = arith.constant 0 : index
    %81 = vector.load %arg6[%c23_56, %c0_57] : memref<480x128xbf16, #tpu.memory_space<vmem>>, vector<384x128xbf16>
    %c0_58 = arith.constant 0 : index
    %c0_59 = arith.constant 0 : index
    %c0_60 = arith.constant 0 : index
    %82 = vector.load %arg3[%c0_58, %c0_59, %c0_60] : memref<9x128x128xbf16, #tpu.memory_space<vmem>>, vector<1x128x128xbf16>
    %83 = vector.shape_cast %82 : vector<1x128x128xbf16> to vector<128x128xbf16>
    %cst_61 = arith.constant dense<0.000000e+00> : vector<384x128xf32>
    %84 = tpu.matmul %81, %83, %cst_61 {dimension_numbers = #tpu.dot_dimension_numbers<[1], [0], [0], [1], [0, 0, 1, 1], [], []>} : vector<384x128xbf16>, vector<128x128xbf16>, vector<384x128xf32> -> vector<384x128xf32>
    %85 = arith.addf %80, %84 : vector<384x128xf32>
    %c24_62 = arith.constant 24 : index
    %c0_63 = arith.constant 0 : index
    %86 = vector.load %arg6[%c24_62, %c0_63] : memref<480x128xbf16, #tpu.memory_space<vmem>>, vector<384x128xbf16>
    %c1_64 = arith.constant 1 : index
    %c0_65 = arith.constant 0 : index
    %c0_66 = arith.constant 0 : index
    %87 = vector.load %arg3[%c1_64, %c0_65, %c0_66] : memref<9x128x128xbf16, #tpu.memory_space<vmem>>, vector<1x128x128xbf16>
    %88 = vector.shape_cast %87 : vector<1x128x128xbf16> to vector<128x128xbf16>
    %cst_67 = arith.constant dense<0.000000e+00> : vector<384x128xf32>
    %89 = tpu.matmul %86, %88, %cst_67 {dimension_numbers = #tpu.dot_dimension_numbers<[1], [0], [0], [1], [0, 0, 1, 1], [], []>} : vector<384x128xbf16>, vector<128x128xbf16>, vector<384x128xf32> -> vector<384x128xf32>
    %90 = arith.addf %85, %89 : vector<384x128xf32>
    %c25_68 = arith.constant 25 : index
    %c0_69 = arith.constant 0 : index
    %91 = vector.load %arg6[%c25_68, %c0_69] : memref<480x128xbf16, #tpu.memory_space<vmem>>, vector<384x128xbf16>
    %c2_70 = arith.constant 2 : index
    %c0_71 = arith.constant 0 : index
    %c0_72 = arith.constant 0 : index
    %92 = vector.load %arg3[%c2_70, %c0_71, %c0_72] : memref<9x128x128xbf16, #tpu.memory_space<vmem>>, vector<1x128x128xbf16>
    %93 = vector.shape_cast %92 : vector<1x128x128xbf16> to vector<128x128xbf16>
    %cst_73 = arith.constant dense<0.000000e+00> : vector<384x128xf32>
    %94 = tpu.matmul %91, %93, %cst_73 {dimension_numbers = #tpu.dot_dimension_numbers<[1], [0], [0], [1], [0, 0, 1, 1], [], []>} : vector<384x128xbf16>, vector<128x128xbf16>, vector<384x128xf32> -> vector<384x128xf32>
    %95 = arith.addf %90, %94 : vector<384x128xf32>
    %c47_74 = arith.constant 47 : index
    %c0_75 = arith.constant 0 : index
    %96 = vector.load %arg6[%c47_74, %c0_75] : memref<480x128xbf16, #tpu.memory_space<vmem>>, vector<384x128xbf16>
    %c3_76 = arith.constant 3 : index
    %c0_77 = arith.constant 0 : index
    %c0_78 = arith.constant 0 : index
    %97 = vector.load %arg3[%c3_76, %c0_77, %c0_78] : memref<9x128x128xbf16, #tpu.memory_space<vmem>>, vector<1x128x128xbf16>
    %98 = vector.shape_cast %97 : vector<1x128x128xbf16> to vector<128x128xbf16>
    %cst_79 = arith.constant dense<0.000000e+00> : vector<384x128xf32>
    %99 = tpu.matmul %96, %98, %cst_79 {dimension_numbers = #tpu.dot_dimension_numbers<[1], [0], [0], [1], [0, 0, 1, 1], [], []>} : vector<384x128xbf16>, vector<128x128xbf16>, vector<384x128xf32> -> vector<384x128xf32>
    %100 = arith.addf %95, %99 : vector<384x128xf32>
    %c48_80 = arith.constant 48 : index
    %c0_81 = arith.constant 0 : index
    %101 = vector.load %arg6[%c48_80, %c0_81] : memref<480x128xbf16, #tpu.memory_space<vmem>>, vector<384x128xbf16>
    %c4_82 = arith.constant 4 : index
    %c0_83 = arith.constant 0 : index
    %c0_84 = arith.constant 0 : index
    %102 = vector.load %arg3[%c4_82, %c0_83, %c0_84] : memref<9x128x128xbf16, #tpu.memory_space<vmem>>, vector<1x128x128xbf16>
    %103 = vector.shape_cast %102 : vector<1x128x128xbf16> to vector<128x128xbf16>
    %cst_85 = arith.constant dense<0.000000e+00> : vector<384x128xf32>
    %104 = tpu.matmul %101, %103, %cst_85 {dimension_numbers = #tpu.dot_dimension_numbers<[1], [0], [0], [1], [0, 0, 1, 1], [], []>} : vector<384x128xbf16>, vector<128x128xbf16>, vector<384x128xf32> -> vector<384x128xf32>
    %105 = arith.addf %100, %104 : vector<384x128xf32>
    %c49_86 = arith.constant 49 : index
    %c0_87 = arith.constant 0 : index
    %106 = vector.load %arg6[%c49_86, %c0_87] : memref<480x128xbf16, #tpu.memory_space<vmem>>, vector<384x128xbf16>
    %c5_88 = arith.constant 5 : index
    %c0_89 = arith.constant 0 : index
    %c0_90 = arith.constant 0 : index
    %107 = vector.load %arg3[%c5_88, %c0_89, %c0_90] : memref<9x128x128xbf16, #tpu.memory_space<vmem>>, vector<1x128x128xbf16>
    %108 = vector.shape_cast %107 : vector<1x128x128xbf16> to vector<128x128xbf16>
    %cst_91 = arith.constant dense<0.000000e+00> : vector<384x128xf32>
    %109 = tpu.matmul %106, %108, %cst_91 {dimension_numbers = #tpu.dot_dimension_numbers<[1], [0], [0], [1], [0, 0, 1, 1], [], []>} : vector<384x128xbf16>, vector<128x128xbf16>, vector<384x128xf32> -> vector<384x128xf32>
    %110 = arith.addf %105, %109 : vector<384x128xf32>
    %c71_92 = arith.constant 71 : index
    %c0_93 = arith.constant 0 : index
    %111 = vector.load %arg6[%c71_92, %c0_93] : memref<480x128xbf16, #tpu.memory_space<vmem>>, vector<384x128xbf16>
    %c6_94 = arith.constant 6 : index
    %c0_95 = arith.constant 0 : index
    %c0_96 = arith.constant 0 : index
    %112 = vector.load %arg3[%c6_94, %c0_95, %c0_96] : memref<9x128x128xbf16, #tpu.memory_space<vmem>>, vector<1x128x128xbf16>
    %113 = vector.shape_cast %112 : vector<1x128x128xbf16> to vector<128x128xbf16>
    %cst_97 = arith.constant dense<0.000000e+00> : vector<384x128xf32>
    %114 = tpu.matmul %111, %113, %cst_97 {dimension_numbers = #tpu.dot_dimension_numbers<[1], [0], [0], [1], [0, 0, 1, 1], [], []>} : vector<384x128xbf16>, vector<128x128xbf16>, vector<384x128xf32> -> vector<384x128xf32>
    %115 = arith.addf %110, %114 : vector<384x128xf32>
    %c72_98 = arith.constant 72 : index
    %c0_99 = arith.constant 0 : index
    %116 = vector.load %arg6[%c72_98, %c0_99] : memref<480x128xbf16, #tpu.memory_space<vmem>>, vector<384x128xbf16>
    %c7_100 = arith.constant 7 : index
    %c0_101 = arith.constant 0 : index
    %c0_102 = arith.constant 0 : index
    %117 = vector.load %arg3[%c7_100, %c0_101, %c0_102] : memref<9x128x128xbf16, #tpu.memory_space<vmem>>, vector<1x128x128xbf16>
    %118 = vector.shape_cast %117 : vector<1x128x128xbf16> to vector<128x128xbf16>
    %cst_103 = arith.constant dense<0.000000e+00> : vector<384x128xf32>
    %119 = tpu.matmul %116, %118, %cst_103 {dimension_numbers = #tpu.dot_dimension_numbers<[1], [0], [0], [1], [0, 0, 1, 1], [], []>} : vector<384x128xbf16>, vector<128x128xbf16>, vector<384x128xf32> -> vector<384x128xf32>
    %120 = arith.addf %115, %119 : vector<384x128xf32>
    %c73_104 = arith.constant 73 : index
    %c0_105 = arith.constant 0 : index
    %121 = vector.load %arg6[%c73_104, %c0_105] : memref<480x128xbf16, #tpu.memory_space<vmem>>, vector<384x128xbf16>
    %c8_106 = arith.constant 8 : index
    %c0_107 = arith.constant 0 : index
    %c0_108 = arith.constant 0 : index
    %122 = vector.load %arg3[%c8_106, %c0_107, %c0_108] : memref<9x128x128xbf16, #tpu.memory_space<vmem>>, vector<1x128x128xbf16>
    %123 = vector.shape_cast %122 : vector<1x128x128xbf16> to vector<128x128xbf16>
    %cst_109 = arith.constant dense<0.000000e+00> : vector<384x128xf32>
    %124 = tpu.matmul %121, %123, %cst_109 {dimension_numbers = #tpu.dot_dimension_numbers<[1], [0], [0], [1], [0, 0, 1, 1], [], []>} : vector<384x128xbf16>, vector<128x128xbf16>, vector<384x128xf32> -> vector<384x128xf32>
    %125 = arith.addf %120, %124 : vector<384x128xf32>
    %c0_110 = arith.constant 0 : index
    %c48_111 = arith.constant 48 : index
    %c0_112 = arith.constant 0 : index
    %126 = vector.load %arg1[%c0_110, %c48_111, %c0_112] : memref<1x480x128xbf16, #tpu.memory_space<vmem>>, vector<1x384x128xbf16>
    %127 = vector.shape_cast %126 : vector<1x384x128xbf16> to vector<384x128xbf16>
    %128 = arith.extf %127 : vector<384x128xbf16> to vector<384x128xf32>
    %129 = vector.broadcast %3 : vector<1x128xf32> to vector<384x128xf32>
    %130 = arith.mulf %125, %129 : vector<384x128xf32>
    %131 = vector.broadcast %4 : vector<1x128xf32> to vector<384x128xf32>
    %132 = arith.addf %130, %131 : vector<384x128xf32>
    %133 = arith.addf %132, %128 : vector<384x128xf32>
    %cst_113 = arith.constant 0.000000e+00 : f32
    %134 = vector.broadcast %cst_113 : f32 to vector<384x128xf32>
    %135 = arith.maximumf %133, %134 : vector<384x128xf32>
    %c0_114 = arith.constant 0 : index
    %c0_115 = arith.constant 0 : index
    %c0_116 = arith.constant 0 : index
    %136 = vector.load %arg5[%c0_114, %c0_115, %c0_116] : memref<1x384x128xf32, #tpu.memory_space<vmem>>, vector<1x384x128xf32>
    %137 = vector.shape_cast %136 : vector<1x384x128xf32> to vector<384x128xf32>
    %138 = vector.shape_cast %135 : vector<384x128xf32> to vector<1x384x128xf32>
    tpu.vector_store %arg5[%c0_114, %c0_115, %c0_116], %138 {strides = array<i32>} : memref<1x384x128xf32, #tpu.memory_space<vmem>>, vector<1x384x128xf32>,
    return
  }
  func.func @transform_0(%arg0: i32) -> (i32, i32, i32) {
    %c0_i32 = arith.constant 0 : i32
    %c0_i32_0 = arith.constant 0 : i32
    %c0_i32_1 = arith.constant 0 : i32
    return %arg0, %c0_i32, %c0_i32_0 : i32, i32, i32
  }
  func.func @transform_1(%arg0: i32) -> (i32, i32, i32) {
    %c0_i32 = arith.constant 0 : i32
    %c0_i32_0 = arith.constant 0 : i32
    %c0_i32_1 = arith.constant 0 : i32
    %c0_i32_2 = arith.constant 0 : i32
    return %c0_i32, %c0_i32_0, %c0_i32_1 : i32, i32, i32
  }
  func.func @transform_2(%arg0: i32) -> (i32, i32, i32) {
    %c0_i32 = arith.constant 0 : i32
    %c0_i32_0 = arith.constant 0 : i32
    %c0_i32_1 = arith.constant 0 : i32
    %c0_i32_2 = arith.constant 0 : i32
    return %c0_i32, %c0_i32_0, %c0_i32_1 : i32, i32, i32
  }
  func.func @transform_3(%arg0: i32) -> (i32, i32) {
    %c0_i32 = arith.constant 0 : i32
    %c0_i32_0 = arith.constant 0 : i32
    %c0_i32_1 = arith.constant 0 : i32
    return %c0_i32, %c0_i32_0 : i32, i32
  }
  func.func @transform_4(%arg0: i32) -> (i32, i32, i32) {
    %c0_i32 = arith.constant 0 : i32
    %c0_i32_0 = arith.constant 0 : i32
    %c0_i32_1 = arith.constant 0 : i32
    return %arg0, %c0_i32, %c0_i32_0 : i32, i32, i32
  }
}

</mosaic_0001>

<llo_original>
// kernel: tpu_custom_call.1
$region0: #{tpu_custom_call.1}
  #allocation0 [shape = 'u32[]', space=smem, size = 0x4, offset = 0x4, fixed_abs, tag = 'smem constant byte address 0x4 - core index']
  #allocation1 [shape = 'u32[144,128]{1,0:T(1,128)}', space=vmem, size = 0x12000, scoped, tag = 'internal scratch']
  #allocation2 [shape = 'bf16[480,128]{1,0:T(16,128)(2,1)}', space=vmem, size = 0x1e000, scoped, tag = 'scratch operand']
  %s0 = inlined_call_operand.hbm [shape: bf16[2,480,128], index: 0, kind: input, shape index: {}]
  %s1 = inlined_call_operand.hbm [shape: bf16[9,128,128], index: 1, kind: input, shape index: {}]
  %s2 = inlined_call_operand.hbm [shape: bf16[9,128,128], index: 2, kind: input, shape index: {}]
  %s3 = inlined_call_operand.vmem [shape: f32[8,128], index: 3, kind: input, shape index: {}]
  %s4 = inlined_call_operand.hbm [shape: f32[2,384,128], index: 4, kind: output, shape index: {}]
  %s5 = sld [smem:[#allocation0]]
  $region61: #{tpu_custom_call.1} parent=0
    _
  %s7 = ssub.s32 1, %s5
  %s8 = scalar_select 0, %s7, %s5
  $region1: #{tpu_custom_call.1} parent=0
    #allocation3 [shape = 'u8[245760]{0}', space=vmem, size = 0x3c000, scoped, tag = 'input window, operand 0']
    #allocation4 [shape = 's32[2]{0}', space=sflag, size = 0x8, scoped, tag = 'scoped memory for tpu_custom_call.1']
    #allocation5 [shape = 's32[2]{0}', space=sflag, size = 0x8, scoped, tag = 'scoped memory for tpu_custom_call.1']
    #allocation6 [shape = 'u8[294912]{0}', space=vmem, size = 0x48000, scoped, tag = 'input window, operand 1, single buffered']
    #allocation7 [shape = 's32[1]{0}', space=sflag, size = 0x4, scoped, tag = 'scoped memory for tpu_custom_call.1']
    #allocation8 [shape = 'u8[294912]{0}', space=vmem, size = 0x48000, scoped, tag = 'input window, operand 2, single buffered']
    #allocation9 [shape = 'u8[393216]{0}', space=vmem, size = 0x60000, scoped, tag = 'output window, operand 0']
    %9 = vsyncpa [#allocation4], 0
    %s10 = scalar_lea.sflag [#allocation4], 1
    %11 = vsyncpa %s10, 0
    %12 = vsyncpa [#allocation7], 0
    %13 = vsyncpa [#allocation5], 0
    %s14 = scalar_lea.sflag [#allocation5], 1
    %15 = vsyncpa %s14, 0
    loop: start=0, step=1, limit=4
    $region2: #{tpu_custom_call.1} parent=1 // loop_pre_header
      _
    $region3: #{tpu_custom_call.1} parent=1 // loop_header
      %s17 = sphi 0, %s21
      %p18 = scmp.ge.s32.totalorder %s17, 4
      %s27 = sphi 0, %s29
      %s30 = sphi 0, %s27
      %s31 = sphi 0, %s30
      %s47 = sphi 0, %s31
      %s51 = sphi 0, %s51
      %s53 = sphi 0, %s51
      %s54 = sphi 0, %s53
      %s68 = sphi 0, %s54
      %s72 = sphi 0, %s72
      %s74 = sphi 0, %s72
      %s75 = sphi 0, %s74
      %s89 = sphi 0, %s75
      %s93 = sphi 0, %s93
      %s95 = sphi 0, %s93
      %s96 = sphi 0, %s95
      %s110 = sphi 0, %s96
      %s116 = sphi 0, %s118
      %s119 = sphi 0, %s116
      %s120 = sphi 0, %s119
      %s136 = sphi 0, %s120
    $region4: #{tpu_custom_call.1} parent=1 // loop_header_branch
      %20 = sbr.rel (%p18) target = $region8
    $region5: #{tpu_custom_call.1} parent=1 // loop_body
      %s22 = ssub.s32 %s17, 1
      %s23 = ssub.s32 %s17, 2
      %s24 = sadd.s32 %s17, 1
      %s25 = ssub.s32 %s17, %s24
      %p26 = scmp.eq.s32.totalorder %s25, 0
      %s28 = sadd.s32 %s27, 1
      %s29 = scalar_select %p26, %s27, %s28
      %p32 = pneg %p26
      %p33 = scmp.eq.s32.totalorder %s17, 1
      %p34 = por %p32, %p33
      %p35 = scmp.ne.s32.totalorder %s27, %s30
      %p36 = scmp.eq.s32.totalorder %s17, 0
      %p37 = por %p35, %p36
      %p38 = scmp.ne.s32.totalorder %s27, %s30
      %p39 = scmp.eq.s32.totalorder %s22, 1
      %p40 = por %p38, %p39
      %p41 = scmp.ne.s32.totalorder %s30, %s31
      %p42 = scmp.eq.s32.totalorder %s22, 0
      %p43 = por %p41, %p42
      %p44 = scmp.ne.s32.totalorder %s30, %s31
      %p45 = scmp.eq.s32.totalorder %s23, 1
      %p46 = por %p44, %p45
      %p48 = scmp.ne.s32.totalorder %s31, %s47
      %p49 = scmp.eq.s32.totalorder %s23, 0
      %p50 = por %p48, %p49
      %s52 = sadd.s32 %s51, 1
      %p55 = scmp.eq.s32.totalorder %s17, 1
      %p56 = scmp.ne.s32.totalorder %s51, %s53
      %p57 = scmp.eq.s32.totalorder %s17, 0
      %p58 = por %p56, %p57
      %p59 = scmp.ne.s32.totalorder %s51, %s53
      %p60 = scmp.eq.s32.totalorder %s22, 1
      %p61 = por %p59, %p60
      %p62 = scmp.ne.s32.totalorder %s53, %s54
      %p63 = scmp.eq.s32.totalorder %s22, 0
      %p64 = por %p62, %p63
      %p65 = scmp.ne.s32.totalorder %s53, %s54
      %p66 = scmp.eq.s32.totalorder %s23, 1
      %p67 = por %p65, %p66
      %p69 = scmp.ne.s32.totalorder %s54, %s68
      %p70 = scmp.eq.s32.totalorder %s23, 0
      %p71 = por %p69, %p70
      %s73 = sadd.s32 %s72, 1
      %p76 = scmp.eq.s32.totalorder %s17, 1
      %p77 = scmp.ne.s32.totalorder %s72, %s74
      %p78 = scmp.eq.s32.totalorder %s17, 0
      %p79 = por %p77, %p78
      %p80 = scmp.ne.s32.totalorder %s72, %s74
      %p81 = scmp.eq.s32.totalorder %s22, 1
      %p82 = por %p80, %p81
      %p83 = scmp.ne.s32.totalorder %s74, %s75
      %p84 = scmp.eq.s32.totalorder %s22, 0
      %p85 = por %p83, %p84
      %p86 = scmp.ne.s32.totalorder %s74, %s75
      %p87 = scmp.eq.s32.totalorder %s23, 1
      %p88 = por %p86, %p87
      %p90 = scmp.ne.s32.totalorder %s75, %s89
      %p91 = scmp.eq.s32.totalorder %s23, 0
      %p92 = por %p90, %p91
      %s94 = sadd.s32 %s93, 1
      %p97 = scmp.eq.s32.totalorder %s17, 1
      %p98 = scmp.ne.s32.totalorder %s93, %s95
      %p99 = scmp.eq.s32.totalorder %s17, 0
      %p100 = por %p98, %p99
      %p101 = scmp.ne.s32.totalorder %s93, %s95
      %p102 = scmp.eq.s32.totalorder %s22, 1
      %p103 = por %p101, %p102
      %p104 = scmp.ne.s32.totalorder %s95, %s96
      %p105 = scmp.eq.s32.totalorder %s22, 0
      %p106 = por %p104, %p105
      %p107 = scmp.ne.s32.totalorder %s95, %s96
      %p108 = scmp.eq.s32.totalorder %s23, 1
      %p109 = por %p107, %p108
      %p111 = scmp.ne.s32.totalorder %s96, %s110
      %p112 = scmp.eq.s32.totalorder %s23, 0
      %p113 = por %p111, %p112
      %s114 = ssub.s32 %s17, %s24
      %p115 = scmp.eq.s32.totalorder %s114, 0
      %s117 = sadd.s32 %s116, 1
      %s118 = scalar_select %p115, %s116, %s117
      %p121 = pneg %p115
      %p122 = scmp.eq.s32.totalorder %s17, 1
      %p123 = por %p121, %p122
      %p124 = scmp.ne.s32.totalorder %s116, %s119
      %p125 = scmp.eq.s32.totalorder %s17, 0
      %p126 = por %p124, %p125
      %p127 = scmp.ne.s32.totalorder %s116, %s119
      %p128 = scmp.eq.s32.totalorder %s22, 1
      %p129 = por %p127, %p128
      %p130 = scmp.ne.s32.totalorder %s119, %s120
      %p131 = scmp.eq.s32.totalorder %s22, 0
      %p132 = por %p130, %p131
      %p133 = scmp.ne.s32.totalorder %s119, %s120
      %p134 = scmp.eq.s32.totalorder %s23, 1
      %p135 = por %p133, %p134
      %p137 = scmp.ne.s32.totalorder %s120, %s136
      %p138 = scmp.eq.s32.totalorder %s23, 0
      %p139 = por %p137, %p138
      %p140 = scmp.le.s32.totalorder 1, %s17
      %p141 = scmp.lt.s32.totalorder %s17, 3
      %p142 = pnand %p140, %p141
      %p143 = pneg %p142
      // Predicated region
      $region9: #{tpu_custom_call.1} parent=5 // pred_check
        _
      $region10: #{tpu_custom_call.1} parent=5 // pred_check_branch
        %145 = sbr.rel (%p142) target = $region12
      $region11: #{tpu_custom_call.1} parent=5 // pred_region
        %s146 = ssub.s32 %s17, 1
        // Predicated region
        $region13: #{tpu_custom_call.1} parent=11 // pred_check
          %p147 = pneg %p64
        $region14: #{tpu_custom_call.1} parent=11 // pred_check_branch
          %149 = sbr.rel (%p147) target = $region16
        $region15: #{tpu_custom_call.1} parent=11 // pred_region
          %s151 = ssub.s32 9216, 9216
          %152 = vsyncadd [#allocation7], %s151
          %s153 = sshll.u32 [#allocation6], 4
          %s154 = int_to_ptr.vmem [resolvable:$true] %s153
          %159 = dma.hbm_to_vmem [thread:$0]  %s1, 9216, %s154, [#allocation7], 64, 64, 4
        $region16: #{tpu_custom_call.1} parent=11 // pred_fallthru
          _
        // Predicated region
        $region17: #{tpu_custom_call.1} parent=11 // pred_check
          %p160 = pneg %p85
        $region18: #{tpu_custom_call.1} parent=11 // pred_check_branch
          %162 = sbr.rel (%p160) target = $region20
        $region19: #{tpu_custom_call.1} parent=11 // pred_region
          %s164 = ssub.s32 9216, 9216
          %165 = vsyncadd [#allocation7], %s164
          %s166 = sshll.u32 [#allocation8], 4
          %s167 = int_to_ptr.vmem [resolvable:$true] %s166
          %172 = dma.hbm_to_vmem [thread:$0]  %s2, 9216, %s167, [#allocation7], 64, 64, 4
        $region20: #{tpu_custom_call.1} parent=11 // pred_fallthru
          _
        // Predicated region
        $region21: #{tpu_custom_call.1} parent=11 // pred_check
          %p173 = pneg %p106
        $region22: #{tpu_custom_call.1} parent=11 // pred_check_branch
          %175 = sbr.rel (%p173) target = $region24
        $region23: #{tpu_custom_call.1} parent=11 // pred_region
          _
        $region24: #{tpu_custom_call.1} parent=11 // pred_fallthru
          _
      $region12: #{tpu_custom_call.1} parent=5 // pred_fallthru
        _
      %p176 = scmp.lt.s32.totalorder %s17, 2
      // Predicated region
      $region25: #{tpu_custom_call.1} parent=5 // pred_check
        %p177 = pneg %p176
      $region26: #{tpu_custom_call.1} parent=5 // pred_check_branch
        %179 = sbr.rel (%p177) target = $region28
      $region27: #{tpu_custom_call.1} parent=5 // pred_region
        // Predicated region
        $region29: #{tpu_custom_call.1} parent=27 // pred_check
          %p180 = pneg %p37
        $region30: #{tpu_custom_call.1} parent=27 // pred_check_branch
          %182 = sbr.rel (%p180) target = $region32
        $region31: #{tpu_custom_call.1} parent=27 // pred_region
          %s183 = sand.u32 %s27, 1
          %s184 = scalar_lea.sflag [#allocation4], %s183
          %s185 = sand.u32 %s27, 1
          %s186 = smul.addr %s185, 240
          %s187 = scalar_lea.vmem [#allocation3], %s186
          %s189 = ssub.s32 3840, 3840
          %190 = vsyncadd %s184, %s189
          %s191 = smul.addr %s17, 60
          %s192 = smul.addr %s191, 64
          %s193 = scalar_lea.hbm %s0, %s192
          %s194 = sshll.u32 %s187, 4
          %s195 = int_to_ptr.vmem [resolvable:$true] %s194
          %200 = dma.hbm_to_vmem [thread:$0]  %s193, 3840, %s195, %s184, 64, 64, 4
        $region32: #{tpu_custom_call.1} parent=27 // pred_fallthru
          _
      $region28: #{tpu_custom_call.1} parent=5 // pred_fallthru
        _
      %p201 = scmp.le.s32.totalorder 1, %s17
      %p202 = scmp.lt.s32.totalorder %s17, 3
      %p203 = pnand %p201, %p202
      %p204 = pneg %p203
      // Predicated region
      $region33: #{tpu_custom_call.1} parent=5 // pred_check
        _
      $region34: #{tpu_custom_call.1} parent=5 // pred_check_branch
        %206 = sbr.rel (%p203) target = $region36
      $region35: #{tpu_custom_call.1} parent=5 // pred_region
        %s207 = ssub.s32 %s17, 1
        %s208 = sand.u32 %s30, 1
        %s209 = scalar_lea.sflag [#allocation4], %s208
        %s210 = sand.u32 %s30, 1
        %s211 = smul.addr %s210, 240
        %s212 = scalar_lea.vmem [#allocation3], %s211
        // Predicated region
        $region37: #{tpu_custom_call.1} parent=35 // pred_check
          %p213 = pneg %p43
        $region38: #{tpu_custom_call.1} parent=35 // pred_check_branch
          %215 = sbr.rel (%p213) target = $region40
        $region39: #{tpu_custom_call.1} parent=35 // pred_region
          %216 = dma.done %s209, 3840
        $region40: #{tpu_custom_call.1} parent=35 // pred_fallthru
          _
        // Predicated region
        $region41: #{tpu_custom_call.1} parent=35 // pred_check
          %p217 = pneg %p64
        $region42: #{tpu_custom_call.1} parent=35 // pred_check_branch
          %219 = sbr.rel (%p217) target = $region44
        $region43: #{tpu_custom_call.1} parent=35 // pred_region
          %220 = dma.done [#allocation7], 9216
        $region44: #{tpu_custom_call.1} parent=35 // pred_fallthru
          _
        // Predicated region
        $region45: #{tpu_custom_call.1} parent=35 // pred_check
          %p221 = pneg %p85
        $region46: #{tpu_custom_call.1} parent=35 // pred_check_branch
          %223 = sbr.rel (%p221) target = $region48
        $region47: #{tpu_custom_call.1} parent=35 // pred_region
          %224 = dma.done [#allocation7], 9216
        $region48: #{tpu_custom_call.1} parent=35 // pred_fallthru
          _
        %s225 = sand.u32 %s30, 1
        %s226 = scalar_lea.sflag [#allocation4], %s225
        %s227 = sand.u32 %s30, 1
        %s228 = smul.addr %s227, 240
        %s229 = scalar_lea.vmem [#allocation3], %s228
        %p230 = pneg %p43
        %p231 = pneg %p40
        %p232 = pneg %p64
        %p233 = pneg %p61
        %p234 = pneg %p85
        %p235 = pneg %p82
        %p236 = pneg %p106
        %p237 = pneg %p103
        %p238 = pneg %p132
        %p239 = pneg %p129
        %s240 = sand.u32 %s119, 1
        %s241 = scalar_lea.sflag [#allocation5], %s240
        %s242 = sand.u32 %s119, 1
        %s243 = smul.addr %s242, 384
        %s244 = scalar_lea.vmem [#allocation9], %s243
        %v246 = vld [vmem:[%s3] sm:$0xff]
        %v247 = vld [vmem:[%s212 + $0x8] sm:$0x8]
        %v248 = vld [vmem:[%s212 + $0xc] sm:$0xf]
        %v249 = vld [vmem:[%s212 + $0x10] sm:$0xf]
        %v250 = vld [vmem:[%s212 + $0x14] sm:$0xf]
        %v251 = vld [vmem:[%s212 + $0x18] sm:$0xf]
        %v252 = vld [vmem:[%s212 + $0x1c] sm:$0xf]
        %v253 = vld [vmem:[%s212 + $0x20] sm:$0xf]
        %v254 = vld [vmem:[%s212 + $0x24] sm:$0xf]
        %v255 = vld [vmem:[%s212 + $0x28] sm:$0xf]
        %v256 = vld [vmem:[%s212 + $0x2c] sm:$0xf]
        %v257 = vld [vmem:[%s212 + $0x30] sm:$0xf]
        %v258 = vld [vmem:[%s212 + $0x34] sm:$0xf]
        %v259 = vld [vmem:[%s212 + $0x38] sm:$0xf]
        %v260 = vld [vmem:[%s212 + $0x3c] sm:$0xf]
        %v261 = vld [vmem:[%s212 + $0x40] sm:$0xf]
        %v262 = vld [vmem:[%s212 + $0x44] sm:$0xf]
        %v263 = vld [vmem:[%s212 + $0x48] sm:$0xf]
        %v264 = vld [vmem:[%s212 + $0x4c] sm:$0xf]
        %v265 = vld [vmem:[%s212 + $0x50] sm:$0xf]
        %v266 = vld [vmem:[%s212 + $0x54] sm:$0xf]
        %v267 = vld [vmem:[%s212 + $0x58] sm:$0xf]
        %v268 = vld [vmem:[%s212 + $0x5c] sm:$0xf]
        %v269 = vld [vmem:[%s212 + $0x60] sm:$0xf]
        %v270 = vld [vmem:[%s212 + $0x64] sm:$0xf]
        %v271 = vld [vmem:[%s212 + $0x68] sm:$0xf]
        %v272 = vld [vmem:[%s212 + $0x6c] sm:$0xf]
        %v273 = vld [vmem:[%s212 + $0x70] sm:$0xf]
        %v274 = vld [vmem:[%s212 + $0x74] sm:$0xf]
        %v275 = vld [vmem:[%s212 + $0x78] sm:$0xf]
        %v276 = vld [vmem:[%s212 + $0x7c] sm:$0xf]
        %v277 = vld [vmem:[%s212 + $0x80] sm:$0xf]
        %v278 = vld [vmem:[%s212 + $0x84] sm:$0xf]
        %v279 = vld [vmem:[%s212 + $0x88] sm:$0xf]
        %v280 = vld [vmem:[%s212 + $0x8c] sm:$0xf]
        %v281 = vld [vmem:[%s212 + $0x90] sm:$0xf]
        %v282 = vld [vmem:[%s212 + $0x94] sm:$0xf]
        %v283 = vld [vmem:[%s212 + $0x98] sm:$0xf]
        %v284 = vld [vmem:[%s212 + $0x9c] sm:$0xf]
        %v285 = vld [vmem:[%s212 + $0xa0] sm:$0xf]
        %v286 = vld [vmem:[%s212 + $0xa4] sm:$0xf]
        %v287 = vld [vmem:[%s212 + $0xa8] sm:$0xf]
        %v288 = vld [vmem:[%s212 + $0xac] sm:$0xf]
        %v289 = vld [vmem:[%s212 + $0xb0] sm:$0xf]
        %v290 = vld [vmem:[%s212 + $0xb4] sm:$0xf]
        %v291 = vld [vmem:[%s212 + $0xb8] sm:$0xf]
        %v292 = vld [vmem:[%s212 + $0xbc] sm:$0xf]
        %v293 = vld [vmem:[%s212 + $0xc0] sm:$0xf]
        %v294 = vld [vmem:[%s212 + $0xc4] sm:$0xf]
        %v295 = vld [vmem:[%s212 + $0xc8] sm:$0xf]
        %v296 = vld [vmem:[#allocation6] sm:$0xf]
        %v297 = vld [vmem:[#allocation6 + $0x4] sm:$0xf]
        %v298 = vld [vmem:[#allocation6 + $0x8] sm:$0xf]
        %v299 = vld [vmem:[#allocation6 + $0xc] sm:$0xf]
        %v300 = vld [vmem:[#allocation6 + $0x10] sm:$0xf]
        %v301 = vld [vmem:[#allocation6 + $0x14] sm:$0xf]
        %v302 = vld [vmem:[#allocation6 + $0x18] sm:$0xf]
        %v303 = vld [vmem:[#allocation6 + $0x1c] sm:$0xf]
        %v304 = vld [vmem:[#allocation6 + $0x20] sm:$0xf]
        %v305 = vld [vmem:[#allocation6 + $0x24] sm:$0xf]
        %v306 = vld [vmem:[#allocation6 + $0x28] sm:$0xf]
        %v307 = vld [vmem:[#allocation6 + $0x2c] sm:$0xf]
        %v308 = vld [vmem:[#allocation6 + $0x30] sm:$0xf]
        %v309 = vld [vmem:[#allocation6 + $0x34] sm:$0xf]
        %v310 = vld [vmem:[#allocation6 + $0x38] sm:$0xf]
        %v311 = vld [vmem:[#allocation6 + $0x3c] sm:$0xf]
        %s312 = scalar_lea.vmem [#allocation6], 64
        %v313 = vld [vmem:[%s312] sm:$0xf]
        %v314 = vld [vmem:[%s312 + $0x4] sm:$0xf]
        %v315 = vld [vmem:[%s312 + $0x8] sm:$0xf]
        %v316 = vld [vmem:[%s312 + $0xc] sm:$0xf]
        %v317 = vld [vmem:[%s312 + $0x10] sm:$0xf]
        %v318 = vld [vmem:[%s312 + $0x14] sm:$0xf]
        %v319 = vld [vmem:[%s312 + $0x18] sm:$0xf]
        %v320 = vld [vmem:[%s312 + $0x1c] sm:$0xf]
        %v321 = vld [vmem:[%s312 + $0x20] sm:$0xf]
        %v322 = vld [vmem:[%s312 + $0x24] sm:$0xf]
        %v323 = vld [vmem:[%s312 + $0x28] sm:$0xf]
        %v324 = vld [vmem:[%s312 + $0x2c] sm:$0xf]
        %v325 = vld [vmem:[%s312 + $0x30] sm:$0xf]
        %v326 = vld [vmem:[%s312 + $0x34] sm:$0xf]
        %v327 = vld [vmem:[%s312 + $0x38] sm:$0xf]
        %v328 = vld [vmem:[%s312 + $0x3c] sm:$0xf]
        %v377 = vunpack.c.l.b16 %v248
        %v378 = vunpack.c.l.b16 %v249
        %v379 = vunpack.c.l.b16 %v250
        %v380 = vunpack.c.l.b16 %v251
        %v381 = vunpack.c.l.b16 %v252
        %v382 = vunpack.c.l.b16 %v253
        %v383 = vunpack.c.l.b16 %v254
        %v384 = vunpack.c.l.b16 %v255
        %v385 = vunpack.c.l.b16 %v256
        %v386 = vunpack.c.l.b16 %v257
        %v387 = vunpack.c.l.b16 %v258
        %v388 = vunpack.c.l.b16 %v259
        %v389 = vunpack.c.l.b16 %v260
        %v390 = vunpack.c.l.b16 %v261
        %v391 = vunpack.c.l.b16 %v262
        %v392 = vunpack.c.l.b16 %v263
        %v393 = vunpack.c.l.b16 %v264
        %v394 = vunpack.c.l.b16 %v265
        %v395 = vunpack.c.l.b16 %v266
        %v396 = vunpack.c.l.b16 %v267
        %v397 = vunpack.c.l.b16 %v268
        %v398 = vunpack.c.l.b16 %v269
        %v399 = vunpack.c.l.b16 %v270
        %v400 = vunpack.c.l.b16 %v271
        %v401 = vunpack.c.l.b16 %v272
        %v402 = vunpack.c.l.b16 %v273
        %v403 = vunpack.c.l.b16 %v274
        %v404 = vunpack.c.l.b16 %v275
        %v405 = vunpack.c.l.b16 %v276
        %v406 = vunpack.c.l.b16 %v277
        %v407 = vunpack.c.l.b16 %v278
        %v408 = vunpack.c.l.b16 %v279
        %v409 = vunpack.c.l.b16 %v280
        %v410 = vunpack.c.l.b16 %v281
        %v411 = vunpack.c.l.b16 %v282
        %v412 = vunpack.c.l.b16 %v283
        %v413 = vunpack.c.l.b16 %v284
        %v414 = vunpack.c.l.b16 %v285
        %v415 = vunpack.c.l.b16 %v286
        %v416 = vunpack.c.l.b16 %v287
        %v417 = vunpack.c.l.b16 %v288
        %v418 = vunpack.c.l.b16 %v289
        %v419 = vunpack.c.l.b16 %v290
        %v420 = vunpack.c.l.b16 %v291
        %v421 = vunpack.c.l.b16 %v292
        %v422 = vunpack.c.l.b16 %v293
        %v423 = vunpack.c.l.b16 %v294
        %v424 = vunpack.c.l.b16 %v295
        %v425 = vpack.c.b16 %v378, %v377
        %v426 = vpack.c.b16 %v380, %v379
        %v427 = vpack.c.b16 %v382, %v381
        %v428 = vpack.c.b16 %v384, %v383
        %v429 = vpack.c.b16 %v386, %v385
        %v430 = vpack.c.b16 %v388, %v387
        %v431 = vpack.c.b16 %v390, %v389
        %v432 = vpack.c.b16 %v392, %v391
        %v433 = vpack.c.b16 %v394, %v393
        %v434 = vpack.c.b16 %v396, %v395
        %v435 = vpack.c.b16 %v398, %v397
        %v436 = vpack.c.b16 %v400, %v399
        %v437 = vpack.c.b16 %v402, %v401
        %v438 = vpack.c.b16 %v404, %v403
        %v439 = vpack.c.b16 %v406, %v405
        %v440 = vpack.c.b16 %v408, %v407
        %v441 = vpack.c.b16 %v410, %v409
        %v442 = vpack.c.b16 %v412, %v411
        %v443 = vpack.c.b16 %v414, %v413
        %v444 = vpack.c.b16 %v416, %v415
        %v445 = vpack.c.b16 %v418, %v417
        %v446 = vpack.c.b16 %v420, %v419
        %v447 = vpack.c.b16 %v422, %v421
        %v448 = vpack.c.b16 %v424, %v423
        %v489 = vunpack.c.l.b16 %v313
        %v490 = vunpack.c.l.b16 %v314
        %v491 = vunpack.c.l.b16 %v315
        %v492 = vunpack.c.l.b16 %v316
        %v493 = vunpack.c.l.b16 %v317
        %v494 = vunpack.c.l.b16 %v318
        %v495 = vunpack.c.l.b16 %v319
        %v496 = vunpack.c.l.b16 %v320
        %v497 = vunpack.c.l.b16 %v321
        %v498 = vunpack.c.l.b16 %v322
        %v499 = vunpack.c.l.b16 %v323
        %v500 = vunpack.c.l.b16 %v324
        %v501 = vunpack.c.l.b16 %v325
        %v502 = vunpack.c.l.b16 %v326
        %v503 = vunpack.c.l.b16 %v327
        %v504 = vunpack.c.l.b16 %v328
        %v505 = vpack.c.b16 %v490, %v489
        %v506 = vpack.c.b16 %v492, %v491
        %v507 = vpack.c.b16 %v494, %v493
        %v508 = vpack.c.b16 %v496, %v495
        %v509 = vpack.c.b16 %v498, %v497
        %v510 = vpack.c.b16 %v500, %v499
        %v511 = vpack.c.b16 %v502, %v501
        %v512 = vpack.c.b16 %v504, %v503
        %521 = vmatprep.subr.bf16.mxu0 0
        %522 = vmatpush1.bf16.msra.mxu0 %v505
        %523 = vmatprep.subr.bf16.mxu0 0
        %524 = vmatpush1.bf16.msra.mxu0 %v506
        %525 = vmatprep.subr.bf16.mxu0 0
        %526 = vmatpush1.bf16.msra.mxu0 %v507
        %527 = vmatprep.subr.bf16.mxu0 0
        %528 = vmatpush1.bf16.msra.mxu0 %v508
        %529 = vmatprep.subr.bf16.mxu0 0
        %530 = vmatpush1.bf16.msra.mxu0 %v509
        %531 = vmatprep.subr.bf16.mxu0 0
        %532 = vmatpush1.bf16.msra.mxu0 %v510
        %533 = vmatprep.subr.bf16.mxu0 0
        %534 = vmatpush1.bf16.msra.mxu0 %v511
        %535 = vmatprep.subr.bf16.mxu0 0
        %536 = vmatpush1.bf16.msra.mxu0 %v512
        %537 = vmatprep.subr.bf16.mxu0 0
        %538 = vmatpush1.bf16.msra.mxu0 0
        %539 = vmatprep.subr.bf16.mxu0 0
        %540 = vmatpush1.bf16.msra.mxu0 0
        %541 = vmatprep.subr.bf16.mxu0 0
        %542 = vmatpush1.bf16.msra.mxu0 0
        %543 = vmatprep.subr.bf16.mxu0 0
        %544 = vmatpush1.bf16.msra.mxu0 0
        %545 = vmatprep.subr.bf16.mxu0 0
        %546 = vmatpush1.bf16.msra.mxu0 0
        %547 = vmatprep.subr.bf16.mxu0 0
        %548 = vmatpush1.bf16.msra.mxu0 0
        %549 = vmatprep.subr.bf16.mxu0 0
        %550 = vmatpush1.bf16.msra.mxu0 0
        %551 = vmatprep.subr.bf16.mxu0 0
        %552 = vmatpush1.bf16.msra.mxu0 0
        %553 = vmatprep.mubr.bf16.mxu0 0
        %554 = vmatmul.mubr.bf16.gmra.mrb[0].mxu0 %v425
        %v555 = vpop.f32.mrb[0].mxu0
        %v556 = vadd.f32 0.0, %v555
        %v557 = vpop.f32.mrb[0].mxu0
        %v558 = vpop.f32.mrb[0].mxu0
        %v559 = vadd.f32 0.0, %v558
        %v560 = vpop.f32.mrb[0].mxu0
        %561 = vmatprep.mubr.bf16.mxu0 0
        %562 = vmatmul.mubr.bf16.gmra.mrb[0].mxu0 %v426
        %v563 = vpop.f32.mrb[0].mxu0
        %v564 = vadd.f32 0.0, %v563
        %v565 = vpop.f32.mrb[0].mxu0
        %v566 = vpop.f32.mrb[0].mxu0
        %v567 = vadd.f32 0.0, %v566
        %v568 = vpop.f32.mrb[0].mxu0
        %569 = vmatprep.mubr.bf16.mxu0 0
        %570 = vmatmul.mubr.bf16.gmra.mrb[0].mxu0 %v427
        %v571 = vpop.f32.mrb[0].mxu0
        %v572 = vadd.f32 0.0, %v571
        %v573 = vpop.f32.mrb[0].mxu0
        %v574 = vpop.f32.mrb[0].mxu0
        %v575 = vadd.f32 0.0, %v574
        %v576 = vpop.f32.mrb[0].mxu0
        %577 = vmatprep.mubr.bf16.mxu0 0
        %578 = vmatmul.mubr.bf16.gmra.mrb[0].mxu0 %v428
        %v579 = vpop.f32.mrb[0].mxu0
        %v580 = vadd.f32 0.0, %v579
        %v581 = vpop.f32.mrb[0].mxu0
        %v582 = vpop.f32.mrb[0].mxu0
        %v583 = vadd.f32 0.0, %v582
        %v584 = vpop.f32.mrb[0].mxu0
        %585 = vmatprep.mubr.bf16.mxu0 0
        %586 = vmatmul.mubr.bf16.gmra.mrb[0].mxu0 %v429
        %v587 = vpop.f32.mrb[0].mxu0
        %v588 = vadd.f32 0.0, %v587
        %v589 = vpop.f32.mrb[0].mxu0
        %v590 = vpop.f32.mrb[0].mxu0
        %v591 = vadd.f32 0.0, %v590
        %v592 = vpop.f32.mrb[0].mxu0
        %593 = vmatprep.mubr.bf16.mxu0 0
        %594 = vmatmul.mubr.bf16.gmra.mrb[0].mxu0 %v430
        %v595 = vpop.f32.mrb[0].mxu0
        %v596 = vadd.f32 0.0, %v595
        %v597 = vpop.f32.mrb[0].mxu0
        %v598 = vpop.f32.mrb[0].mxu0
        %v599 = vadd.f32 0.0, %v598
        %v600 = vpop.f32.mrb[0].mxu0
        %601 = vmatprep.mubr.bf16.mxu0 0
        %602 = vmatmul.mubr.bf16.gmra.mrb[0].mxu0 %v431
        %v603 = vpop.f32.mrb[0].mxu0
        %v604 = vadd.f32 0.0, %v603
        %v605 = vpop.f32.mrb[0].mxu0
        %v606 = vpop.f32.mrb[0].mxu0
        %v607 = vadd.f32 0.0, %v606
        %v608 = vpop.f32.mrb[0].mxu0
        %609 = vmatprep.mubr.bf16.mxu0 0
        %610 = vmatmul.mubr.bf16.gmra.mrb[0].mxu0 %v432
        %v611 = vpop.f32.mrb[0].mxu0
        %v612 = vadd.f32 0.0, %v611
        %v613 = vpop.f32.mrb[0].mxu0
        %v614 = vpop.f32.mrb[0].mxu0
        %v615 = vadd.f32 0.0, %v614
        %v616 = vpop.f32.mrb[0].mxu0
        %617 = vmatprep.mubr.bf16.mxu0 0
        %618 = vmatmul.mubr.bf16.gmra.mrb[0].mxu0 %v433
        %v619 = vpop.f32.mrb[0].mxu0
        %v620 = vadd.f32 0.0, %v619
        %v621 = vpop.f32.mrb[0].mxu0
        %v622 = vpop.f32.mrb[0].mxu0
        %v623 = vadd.f32 0.0, %v622
        %v624 = vpop.f32.mrb[0].mxu0
        %625 = vmatprep.mubr.bf16.mxu0 0
        %626 = vmatmul.mubr.bf16.gmra.mrb[0].mxu0 %v434
        %v627 = vpop.f32.mrb[0].mxu0
        %v628 = vadd.f32 0.0, %v627
        %v629 = vpop.f32.mrb[0].mxu0
        %v630 = vpop.f32.mrb[0].mxu0
        %v631 = vadd.f32 0.0, %v630
        %v632 = vpop.f32.mrb[0].mxu0
        %633 = vmatprep.mubr.bf16.mxu0 0
        %634 = vmatmul.mubr.bf16.gmra.mrb[0].mxu0 %v435
        %v635 = vpop.f32.mrb[0].mxu0
        %v636 = vadd.f32 0.0, %v635
        %v637 = vpop.f32.mrb[0].mxu0
        %v638 = vpop.f32.mrb[0].mxu0
        %v639 = vadd.f32 0.0, %v638
        %v640 = vpop.f32.mrb[0].mxu0
        %641 = vmatprep.mubr.bf16.mxu0 0
        %642 = vmatmul.mubr.bf16.gmra.mrb[0].mxu0 %v436
        %v643 = vpop.f32.mrb[0].mxu0
        %v644 = vadd.f32 0.0, %v643
        %v645 = vpop.f32.mrb[0].mxu0
        %v646 = vpop.f32.mrb[0].mxu0
        %v647 = vadd.f32 0.0, %v646
        %v648 = vpop.f32.mrb[0].mxu0
        %649 = vmatprep.mubr.bf16.mxu0 0
        %650 = vmatmul.mubr.bf16.gmra.mrb[0].mxu0 %v437
        %v651 = vpop.f32.mrb[0].mxu0
        %v652 = vadd.f32 0.0, %v651
        %v653 = vpop.f32.mrb[0].mxu0
        %v654 = vpop.f32.mrb[0].mxu0
        %v655 = vadd.f32 0.0, %v654
        %v656 = vpop.f32.mrb[0].mxu0
        %657 = vmatprep.mubr.bf16.mxu0 0
        %658 = vmatmul.mubr.bf16.gmra.mrb[0].mxu0 %v438
        %v659 = vpop.f32.mrb[0].mxu0
        %v660 = vadd.f32 0.0, %v659
        %v661 = vpop.f32.mrb[0].mxu0
        %v662 = vpop.f32.mrb[0].mxu0
        %v663 = vadd.f32 0.0, %v662
        %v664 = vpop.f32.mrb[0].mxu0
        %665 = vmatprep.mubr.bf16.mxu0 0
        %666 = vmatmul.mubr.bf16.gmra.mrb[0].mxu0 %v439
        %v667 = vpop.f32.mrb[0].mxu0
        %v668 = vadd.f32 0.0, %v667
        %v669 = vpop.f32.mrb[0].mxu0
        %v670 = vpop.f32.mrb[0].mxu0
        %v671 = vadd.f32 0.0, %v670
        %v672 = vpop.f32.mrb[0].mxu0
        %673 = vmatprep.mubr.bf16.mxu0 0
        %674 = vmatmul.mubr.bf16.gmra.mrb[0].mxu0 %v440
        %v675 = vpop.f32.mrb[0].mxu0
        %v676 = vadd.f32 0.0, %v675
        %v677 = vpop.f32.mrb[0].mxu0
        %v678 = vpop.f32.mrb[0].mxu0
        %v679 = vadd.f32 0.0, %v678
        %v680 = vpop.f32.mrb[0].mxu0
        %681 = vmatprep.mubr.bf16.mxu0 0
        %682 = vmatmul.mubr.bf16.gmra.mrb[0].mxu0 %v441
        %v683 = vpop.f32.mrb[0].mxu0
        %v684 = vadd.f32 0.0, %v683
        %v685 = vpop.f32.mrb[0].mxu0
        %v686 = vpop.f32.mrb[0].mxu0
        %v687 = vadd.f32 0.0, %v686
        %v688 = vpop.f32.mrb[0].mxu0
        %689 = vmatprep.mubr.bf16.mxu0 0
        %690 = vmatmul.mubr.bf16.gmra.mrb[0].mxu0 %v442
        %v691 = vpop.f32.mrb[0].mxu0
        %v692 = vadd.f32 0.0, %v691
        %v693 = vpop.f32.mrb[0].mxu0
        %v694 = vpop.f32.mrb[0].mxu0
        %v695 = vadd.f32 0.0, %v694
        %v696 = vpop.f32.mrb[0].mxu0
        %697 = vmatprep.mubr.bf16.mxu0 0
        %698 = vmatmul.mubr.bf16.gmra.mrb[0].mxu0 %v443
        %v699 = vpop.f32.mrb[0].mxu0
        %v700 = vadd.f32 0.0, %v699
        %v701 = vpop.f32.mrb[0].mxu0
        %v702 = vpop.f32.mrb[0].mxu0
        %v703 = vadd.f32 0.0, %v702
        %v704 = vpop.f32.mrb[0].mxu0
        %705 = vmatprep.mubr.bf16.mxu0 0
        %706 = vmatmul.mubr.bf16.gmra.mrb[0].mxu0 %v444
        %v707 = vpop.f32.mrb[0].mxu0
        %v708 = vadd.f32 0.0, %v707
        %v709 = vpop.f32.mrb[0].mxu0
        %v710 = vpop.f32.mrb[0].mxu0
        %v711 = vadd.f32 0.0, %v710
        %v712 = vpop.f32.mrb[0].mxu0
        %713 = vmatprep.mubr.bf16.mxu0 0
        %714 = vmatmul.mubr.bf16.gmra.mrb[0].mxu0 %v445
        %v715 = vpop.f32.mrb[0].mxu0
        %v716 = vadd.f32 0.0, %v715
        %v717 = vpop.f32.mrb[0].mxu0
        %v718 = vpop.f32.mrb[0].mxu0
        %v719 = vadd.f32 0.0, %v718
        %v720 = vpop.f32.mrb[0].mxu0
        %721 = vmatprep.mubr.bf16.mxu0 0
        %722 = vmatmul.mubr.bf16.gmra.mrb[0].mxu0 %v446
        %v723 = vpop.f32.mrb[0].mxu0
        %v724 = vadd.f32 0.0, %v723
        %v725 = vpop.f32.mrb[0].mxu0
        %v726 = vpop.f32.mrb[0].mxu0
        %v727 = vadd.f32 0.0, %v726
        %v728 = vpop.f32.mrb[0].mxu0
        %729 = vmatprep.mubr.bf16.mxu0 0
        %730 = vmatmul.mubr.bf16.gmra.mrb[0].mxu0 %v447
        %v731 = vpop.f32.mrb[0].mxu0
        %v732 = vadd.f32 0.0, %v731
        %v733 = vpop.f32.mrb[0].mxu0
        %v734 = vpop.f32.mrb[0].mxu0
        %v735 = vadd.f32 0.0, %v734
        %v736 = vpop.f32.mrb[0].mxu0
        %737 = vmatprep.mubr.bf16.mxu0 0
        %738 = vmatmul.mubr.bf16.gmra.mrb[0].mxu0 %v448
        %v739 = vpop.f32.mrb[0].mxu0
        %v740 = vadd.f32 0.0, %v739
        %v741 = vpop.f32.mrb[0].mxu0
        %v742 = vpop.f32.mrb[0].mxu0
        %v743 = vadd.f32 0.0, %v742
        %v744 = vpop.f32.mrb[0].mxu0
        %745 = vdwg.mxu0
        %v747 = vunpack.c.l.b16 %v247
        %v748 = vpack.c.b16 %v377, %v747
        %v749 = vpack.c.b16 %v379, %v378
        %v750 = vpack.c.b16 %v381, %v380
        %v751 = vpack.c.b16 %v383, %v382
        %v752 = vpack.c.b16 %v385, %v384
        %v753 = vpack.c.b16 %v387, %v386
        %v754 = vpack.c.b16 %v389, %v388
        %v755 = vpack.c.b16 %v391, %v390
        %v756 = vpack.c.b16 %v393, %v392
        %v757 = vpack.c.b16 %v395, %v394
        %v758 = vpack.c.b16 %v397, %v396
        %v759 = vpack.c.b16 %v399, %v398
        %v760 = vpack.c.b16 %v401, %v400
        %v761 = vpack.c.b16 %v403, %v402
        %v762 = vpack.c.b16 %v405, %v404
        %v763 = vpack.c.b16 %v407, %v406
        %v764 = vpack.c.b16 %v409, %v408
        %v765 = vpack.c.b16 %v411, %v410
        %v766 = vpack.c.b16 %v413, %v412
        %v767 = vpack.c.b16 %v415, %v414
        %v768 = vpack.c.b16 %v417, %v416
        %v769 = vpack.c.b16 %v419, %v418
        %v770 = vpack.c.b16 %v421, %v420
        %v771 = vpack.c.b16 %v423, %v422
        %v772 = vpack.c.b16 %v424, %v424
        %vm773 = vsmask.f32 4352
        %v775 = vshrl.u32 %v748, 16
        %v777 = vrot.slane %v775, 3
        %v778 = vshll.u32 %v748, 16
        %v780 = vrot.slane %v778, 4
        %v781 = vor.u32 %v777, %v780
        %v783 = vshrl.u32 %v749, 16
        %v785 = vrot.slane %v783, 3
        %v786 = vshll.u32 %v749, 16
        %v788 = vrot.slane %v786, 4
        %v789 = vor.u32 %v785, %v788
        %v790 = vsel %vm773, %v781, %v789
        %v792 = vshrl.u32 %v750, 16
        %v794 = vrot.slane %v792, 3
        %v795 = vshll.u32 %v750, 16
        %v797 = vrot.slane %v795, 4
        %v798 = vor.u32 %v794, %v797
        %v799 = vsel %vm773, %v789, %v798
        %v801 = vshrl.u32 %v751, 16
        %v803 = vrot.slane %v801, 3
        %v804 = vshll.u32 %v751, 16
        %v806 = vrot.slane %v804, 4
        %v807 = vor.u32 %v803, %v806
        %v808 = vsel %vm773, %v798, %v807
        %v810 = vshrl.u32 %v752, 16
        %v812 = vrot.slane %v810, 3
        %v813 = vshll.u32 %v752, 16
        %v815 = vrot.slane %v813, 4
        %v816 = vor.u32 %v812, %v815
        %v817 = vsel %vm773, %v807, %v816
        %v819 = vshrl.u32 %v753, 16
        %v821 = vrot.slane %v819, 3
        %v822 = vshll.u32 %v753, 16
        %v824 = vrot.slane %v822, 4
        %v825 = vor.u32 %v821, %v824
        %v826 = vsel %vm773, %v816, %v825
        %v828 = vshrl.u32 %v754, 16
        %v830 = vrot.slane %v828, 3
        %v831 = vshll.u32 %v754, 16
        %v833 = vrot.slane %v831, 4
        %v834 = vor.u32 %v830, %v833
        %v835 = vsel %vm773, %v825, %v834
        %v837 = vshrl.u32 %v755, 16
        %v839 = vrot.slane %v837, 3
        %v840 = vshll.u32 %v755, 16
        %v842 = vrot.slane %v840, 4
        %v843 = vor.u32 %v839, %v842
        %v844 = vsel %vm773, %v834, %v843
        %v846 = vshrl.u32 %v756, 16
        %v848 = vrot.slane %v846, 3
        %v849 = vshll.u32 %v756, 16
        %v851 = vrot.slane %v849, 4
        %v852 = vor.u32 %v848, %v851
        %v853 = vsel %vm773, %v843, %v852
        %v855 = vshrl.u32 %v757, 16
        %v857 = vrot.slane %v855, 3
        %v858 = vshll.u32 %v757, 16
        %v860 = vrot.slane %v858, 4
        %v861 = vor.u32 %v857, %v860
        %v862 = vsel %vm773, %v852, %v861
        %v864 = vshrl.u32 %v758, 16
        %v866 = vrot.slane %v864, 3
        %v867 = vshll.u32 %v758, 16
        %v869 = vrot.slane %v867, 4
        %v870 = vor.u32 %v866, %v869
        %v871 = vsel %vm773, %v861, %v870
        %v873 = vshrl.u32 %v759, 16
        %v875 = vrot.slane %v873, 3
        %v876 = vshll.u32 %v759, 16
        %v878 = vrot.slane %v876, 4
        %v879 = vor.u32 %v875, %v878
        %v880 = vsel %vm773, %v870, %v879
        %v882 = vshrl.u32 %v760, 16
        %v884 = vrot.slane %v882, 3
        %v885 = vshll.u32 %v760, 16
        %v887 = vrot.slane %v885, 4
        %v888 = vor.u32 %v884, %v887
        %v889 = vsel %vm773, %v879, %v888
        %v891 = vshrl.u32 %v761, 16
        %v893 = vrot.slane %v891, 3
        %v894 = vshll.u32 %v761, 16
        %v896 = vrot.slane %v894, 4
        %v897 = vor.u32 %v893, %v896
        %v898 = vsel %vm773, %v888, %v897
        %v900 = vshrl.u32 %v762, 16
        %v902 = vrot.slane %v900, 3
        %v903 = vshll.u32 %v762, 16
        %v905 = vrot.slane %v903, 4
        %v906 = vor.u32 %v902, %v905
        %v907 = vsel %vm773, %v897, %v906
        %v909 = vshrl.u32 %v763, 16
        %v911 = vrot.slane %v909, 3
        %v912 = vshll.u32 %v763, 16
        %v914 = vrot.slane %v912, 4
        %v915 = vor.u32 %v911, %v914
        %v916 = vsel %vm773, %v906, %v915
        %v918 = vshrl.u32 %v764, 16
        %v920 = vrot.slane %v918, 3
        %v921 = vshll.u32 %v764, 16
        %v923 = vrot.slane %v921, 4
        %v924 = vor.u32 %v920, %v923
        %v925 = vsel %vm773, %v915, %v924
        %v927 = vshrl.u32 %v765, 16
        %v929 = vrot.slane %v927, 3
        %v930 = vshll.u32 %v765, 16
        %v932 = vrot.slane %v930, 4
        %v933 = vor.u32 %v929, %v932
        %v934 = vsel %vm773, %v924, %v933
        %v936 = vshrl.u32 %v766, 16
        %v938 = vrot.slane %v936, 3
        %v939 = vshll.u32 %v766, 16
        %v941 = vrot.slane %v939, 4
        %v942 = vor.u32 %v938, %v941
        %v943 = vsel %vm773, %v933, %v942
        %v945 = vshrl.u32 %v767, 16
        %v947 = vrot.slane %v945, 3
        %v948 = vshll.u32 %v767, 16
        %v950 = vrot.slane %v948, 4
        %v951 = vor.u32 %v947, %v950
        %v952 = vsel %vm773, %v942, %v951
        %v954 = vshrl.u32 %v768, 16
        %v956 = vrot.slane %v954, 3
        %v957 = vshll.u32 %v768, 16
        %v959 = vrot.slane %v957, 4
        %v960 = vor.u32 %v956, %v959
        %v961 = vsel %vm773, %v951, %v960
        %v963 = vshrl.u32 %v769, 16
        %v965 = vrot.slane %v963, 3
        %v966 = vshll.u32 %v769, 16
        %v968 = vrot.slane %v966, 4
        %v969 = vor.u32 %v965, %v968
        %v970 = vsel %vm773, %v960, %v969
        %v972 = vshrl.u32 %v770, 16
        %v974 = vrot.slane %v972, 3
        %v975 = vshll.u32 %v770, 16
        %v977 = vrot.slane %v975, 4
        %v978 = vor.u32 %v974, %v977
        %v979 = vsel %vm773, %v969, %v978
        %v981 = vshrl.u32 %v771, 16
        %v983 = vrot.slane %v981, 3
        %v984 = vshll.u32 %v771, 16
        %v986 = vrot.slane %v984, 4
        %v987 = vor.u32 %v983, %v986
        %v988 = vsel %vm773, %v978, %v987
        %v990 = vshrl.u32 %v772, 16
        %v992 = vrot.slane %v990, 3
        %v993 = vshll.u32 %v772, 16
        %v995 = vrot.slane %v993, 4
        %v996 = vor.u32 %v992, %v995
        %v997 = vsel %vm773, %v987, %v996
        %v1038 = vunpack.c.l.b16 %v296
        %v1039 = vunpack.c.l.b16 %v297
        %v1040 = vunpack.c.l.b16 %v298
        %v1041 = vunpack.c.l.b16 %v299
        %v1042 = vunpack.c.l.b16 %v300
        %v1043 = vunpack.c.l.b16 %v301
        %v1044 = vunpack.c.l.b16 %v302
        %v1045 = vunpack.c.l.b16 %v303
        %v1046 = vunpack.c.l.b16 %v304
        %v1047 = vunpack.c.l.b16 %v305
        %v1048 = vunpack.c.l.b16 %v306
        %v1049 = vunpack.c.l.b16 %v307
        %v1050 = vunpack.c.l.b16 %v308
        %v1051 = vunpack.c.l.b16 %v309
        %v1052 = vunpack.c.l.b16 %v310
        %v1053 = vunpack.c.l.b16 %v311
        %v1054 = vpack.c.b16 %v1039, %v1038
        %v1055 = vpack.c.b16 %v1041, %v1040
        %v1056 = vpack.c.b16 %v1043, %v1042
        %v1057 = vpack.c.b16 %v1045, %v1044
        %v1058 = vpack.c.b16 %v1047, %v1046
        %v1059 = vpack.c.b16 %v1049, %v1048
        %v1060 = vpack.c.b16 %v1051, %v1050
        %v1061 = vpack.c.b16 %v1053, %v1052
        %1070 = vmatprep.subr.bf16.mxu0 0
        %1071 = vmatpush1.bf16.msra.mxu0 %v1054
        %1072 = vmatprep.subr.bf16.mxu0 0
        %1073 = vmatpush1.bf16.msra.mxu0 %v1055
        %1074 = vmatprep.subr.bf16.mxu0 0
        %1075 = vmatpush1.bf16.msra.mxu0 %v1056
        %1076 = vmatprep.subr.bf16.mxu0 0
        %1077 = vmatpush1.bf16.msra.mxu0 %v1057
        %1078 = vmatprep.subr.bf16.mxu0 0
        %1079 = vmatpush1.bf16.msra.mxu0 %v1058
        %1080 = vmatprep.subr.bf16.mxu0 0
        %1081 = vmatpush1.bf16.msra.mxu0 %v1059
        %1082 = vmatprep.subr.bf16.mxu0 0
        %1083 = vmatpush1.bf16.msra.mxu0 %v1060
        %1084 = vmatprep.subr.bf16.mxu0 0
        %1085 = vmatpush1.bf16.msra.mxu0 %v1061
        %1086 = vmatprep.subr.bf16.mxu0 0
        %1087 = vmatpush1.bf16.msra.mxu0 0
        %1088 = vmatprep.subr.bf16.mxu0 0
        %1089 = vmatpush1.bf16.msra.mxu0 0
        %1090 = vmatprep.subr.bf16.mxu0 0
        %1091 = vmatpush1.bf16.msra.mxu0 0
        %1092 = vmatprep.subr.bf16.mxu0 0
        %1093 = vmatpush1.bf16.msra.mxu0 0
        %1094 = vmatprep.subr.bf16.mxu0 0
        %1095 = vmatpush1.bf16.msra.mxu0 0
        %1096 = vmatprep.subr.bf16.mxu0 0
        %1097 = vmatpush1.bf16.msra.mxu0 0
        %1098 = vmatprep.subr.bf16.mxu0 0
        %1099 = vmatpush1.bf16.msra.mxu0 0
        %1100 = vmatprep.subr.bf16.mxu0 0
        %1101 = vmatpush1.bf16.msra.mxu0 0
        %1102 = vmatprep.mubr.bf16.mxu0 0
        %1103 = vmatmul.mubr.bf16.gmra.mrb[0].mxu0 %v790
        %v1104 = vpop.f32.mrb[0].mxu0
        %v1105 = vadd.f32 %v556, %v1104
        %v1106 = vpop.f32.mrb[0].mxu0
        %v1107 = vpop.f32.mrb[0].mxu0
        %v1108 = vadd.f32 %v559, %v1107
        %v1109 = vpop.f32.mrb[0].mxu0
        %1110 = vmatprep.mubr.bf16.mxu0 0
        %1111 = vmatmul.mubr.bf16.gmra.mrb[0].mxu0 %v799
        %v1112 = vpop.f32.mrb[0].mxu0
        %v1113 = vadd.f32 %v564, %v1112
        %v1114 = vpop.f32.mrb[0].mxu0
        %v1115 = vpop.f32.mrb[0].mxu0
        %v1116 = vadd.f32 %v567, %v1115
        %v1117 = vpop.f32.mrb[0].mxu0
        %1118 = vmatprep.mubr.bf16.mxu0 0
        %1119 = vmatmul.mubr.bf16.gmra.mrb[0].mxu0 %v808
        %v1120 = vpop.f32.mrb[0].mxu0
        %v1121 = vadd.f32 %v572, %v1120
        %v1122 = vpop.f32.mrb[0].mxu0
        %v1123 = vpop.f32.mrb[0].mxu0
        %v1124 = vadd.f32 %v575, %v1123
        %v1125 = vpop.f32.mrb[0].mxu0
        %1126 = vmatprep.mubr.bf16.mxu0 0
        %1127 = vmatmul.mubr.bf16.gmra.mrb[0].mxu0 %v817
        %v1128 = vpop.f32.mrb[0].mxu0
        %v1129 = vadd.f32 %v580, %v1128
        %v1130 = vpop.f32.mrb[0].mxu0
        %v1131 = vpop.f32.mrb[0].mxu0
        %v1132 = vadd.f32 %v583, %v1131
        %v1133 = vpop.f32.mrb[0].mxu0
        %1134 = vmatprep.mubr.bf16.mxu0 0
        %1135 = vmatmul.mubr.bf16.gmra.mrb[0].mxu0 %v826
        %v1136 = vpop.f32.mrb[0].mxu0
        %v1137 = vadd.f32 %v588, %v1136
        %v1138 = vpop.f32.mrb[0].mxu0
        %v1139 = vpop.f32.mrb[0].mxu0
        %v1140 = vadd.f32 %v591, %v1139
        %v1141 = vpop.f32.mrb[0].mxu0
        %1142 = vmatprep.mubr.bf16.mxu0 0
        %1143 = vmatmul.mubr.bf16.gmra.mrb[0].mxu0 %v835
        %v1144 = vpop.f32.mrb[0].mxu0
        %v1145 = vadd.f32 %v596, %v1144
        %v1146 = vpop.f32.mrb[0].mxu0
        %v1147 = vpop.f32.mrb[0].mxu0
        %v1148 = vadd.f32 %v599, %v1147
        %v1149 = vpop.f32.mrb[0].mxu0
        %1150 = vmatprep.mubr.bf16.mxu0 0
        %1151 = vmatmul.mubr.bf16.gmra.mrb[0].mxu0 %v844
        %v1152 = vpop.f32.mrb[0].mxu0
        %v1153 = vadd.f32 %v604, %v1152
        %v1154 = vpop.f32.mrb[0].mxu0
        %v1155 = vpop.f32.mrb[0].mxu0
        %v1156 = vadd.f32 %v607, %v1155
        %v1157 = vpop.f32.mrb[0].mxu0
        %1158 = vmatprep.mubr.bf16.mxu0 0
        %1159 = vmatmul.mubr.bf16.gmra.mrb[0].mxu0 %v853
        %v1160 = vpop.f32.mrb[0].mxu0
        %v1161 = vadd.f32 %v612, %v1160
        %v1162 = vpop.f32.mrb[0].mxu0
        %v1163 = vpop.f32.mrb[0].mxu0
        %v1164 = vadd.f32 %v615, %v1163
        %v1165 = vpop.f32.mrb[0].mxu0
        %1166 = vmatprep.mubr.bf16.mxu0 0
        %1167 = vmatmul.mubr.bf16.gmra.mrb[0].mxu0 %v862
        %v1168 = vpop.f32.mrb[0].mxu0
        %v1169 = vadd.f32 %v620, %v1168
        %v1170 = vpop.f32.mrb[0].mxu0
        %v1171 = vpop.f32.mrb[0].mxu0
        %v1172 = vadd.f32 %v623, %v1171
        %v1173 = vpop.f32.mrb[0].mxu0
        %1174 = vmatprep.mubr.bf16.mxu0 0
        %1175 = vmatmul.mubr.bf16.gmra.mrb[0].mxu0 %v871
        %v1176 = vpop.f32.mrb[0].mxu0
        %v1177 = vadd.f32 %v628, %v1176
        %v1178 = vpop.f32.mrb[0].mxu0
        %v1179 = vpop.f32.mrb[0].mxu0
        %v1180 = vadd.f32 %v631, %v1179
        %v1181 = vpop.f32.mrb[0].mxu0
        %1182 = vmatprep.mubr.bf16.mxu0 0
        %1183 = vmatmul.mubr.bf16.gmra.mrb[0].mxu0 %v880
        %v1184 = vpop.f32.mrb[0].mxu0
        %v1185 = vadd.f32 %v636, %v1184
        %v1186 = vpop.f32.mrb[0].mxu0
        %v1187 = vpop.f32.mrb[0].mxu0
        %v1188 = vadd.f32 %v639, %v1187
        %v1189 = vpop.f32.mrb[0].mxu0
        %1190 = vmatprep.mubr.bf16.mxu0 0
        %1191 = vmatmul.mubr.bf16.gmra.mrb[0].mxu0 %v889
        %v1192 = vpop.f32.mrb[0].mxu0
        %v1193 = vadd.f32 %v644, %v1192
        %v1194 = vpop.f32.mrb[0].mxu0
        %v1195 = vpop.f32.mrb[0].mxu0
        %v1196 = vadd.f32 %v647, %v1195
        %v1197 = vpop.f32.mrb[0].mxu0
        %1198 = vmatprep.mubr.bf16.mxu0 0
        %1199 = vmatmul.mubr.bf16.gmra.mrb[0].mxu0 %v898
        %v1200 = vpop.f32.mrb[0].mxu0
        %v1201 = vadd.f32 %v652, %v1200
        %v1202 = vpop.f32.mrb[0].mxu0
        %v1203 = vpop.f32.mrb[0].mxu0
        %v1204 = vadd.f32 %v655, %v1203
        %v1205 = vpop.f32.mrb[0].mxu0
        %1206 = vmatprep.mubr.bf16.mxu0 0
        %1207 = vmatmul.mubr.bf16.gmra.mrb[0].mxu0 %v907
        %v1208 = vpop.f32.mrb[0].mxu0
        %v1209 = vadd.f32 %v660, %v1208
        %v1210 = vpop.f32.mrb[0].mxu0
        %v1211 = vpop.f32.mrb[0].mxu0
        %v1212 = vadd.f32 %v663, %v1211
        %v1213 = vpop.f32.mrb[0].mxu0
        %1214 = vmatprep.mubr.bf16.mxu0 0
        %1215 = vmatmul.mubr.bf16.gmra.mrb[0].mxu0 %v916
        %v1216 = vpop.f32.mrb[0].mxu0
        %v1217 = vadd.f32 %v668, %v1216
        %v1218 = vpop.f32.mrb[0].mxu0
        %v1219 = vpop.f32.mrb[0].mxu0
        %v1220 = vadd.f32 %v671, %v1219
        %v1221 = vpop.f32.mrb[0].mxu0
        %1222 = vmatprep.mubr.bf16.mxu0 0
        %1223 = vmatmul.mubr.bf16.gmra.mrb[0].mxu0 %v925
        %v1224 = vpop.f32.mrb[0].mxu0
        %v1225 = vadd.f32 %v676, %v1224
        %v1226 = vpop.f32.mrb[0].mxu0
        %v1227 = vpop.f32.mrb[0].mxu0
        %v1228 = vadd.f32 %v679, %v1227
        %v1229 = vpop.f32.mrb[0].mxu0
        %1230 = vmatprep.mubr.bf16.mxu0 0
        %1231 = vmatmul.mubr.bf16.gmra.mrb[0].mxu0 %v934
        %v1232 = vpop.f32.mrb[0].mxu0
        %v1233 = vadd.f32 %v684, %v1232
        %v1234 = vpop.f32.mrb[0].mxu0
        %v1235 = vpop.f32.mrb[0].mxu0
        %v1236 = vadd.f32 %v687, %v1235
        %v1237 = vpop.f32.mrb[0].mxu0
        %1238 = vmatprep.mubr.bf16.mxu0 0
        %1239 = vmatmul.mubr.bf16.gmra.mrb[0].mxu0 %v943
        %v1240 = vpop.f32.mrb[0].mxu0
        %v1241 = vadd.f32 %v692, %v1240
        %v1242 = vpop.f32.mrb[0].mxu0
        %v1243 = vpop.f32.mrb[0].mxu0
        %v1244 = vadd.f32 %v695, %v1243
        %v1245 = vpop.f32.mrb[0].mxu0
        %1246 = vmatprep.mubr.bf16.mxu0 0
        %1247 = vmatmul.mubr.bf16.gmra.mrb[0].mxu0 %v952
        %v1248 = vpop.f32.mrb[0].mxu0
        %v1249 = vadd.f32 %v700, %v1248
        %v1250 = vpop.f32.mrb[0].mxu0
        %v1251 = vpop.f32.mrb[0].mxu0
        %v1252 = vadd.f32 %v703, %v1251
        %v1253 = vpop.f32.mrb[0].mxu0
        %1254 = vmatprep.mubr.bf16.mxu0 0
        %1255 = vmatmul.mubr.bf16.gmra.mrb[0].mxu0 %v961
        %v1256 = vpop.f32.mrb[0].mxu0
        %v1257 = vadd.f32 %v708, %v1256
        %v1258 = vpop.f32.mrb[0].mxu0
        %v1259 = vpop.f32.mrb[0].mxu0
        %v1260 = vadd.f32 %v711, %v1259
        %v1261 = vpop.f32.mrb[0].mxu0
        %1262 = vmatprep.mubr.bf16.mxu0 0
        %1263 = vmatmul.mubr.bf16.gmra.mrb[0].mxu0 %v970
        %v1264 = vpop.f32.mrb[0].mxu0
        %v1265 = vadd.f32 %v716, %v1264
        %v1266 = vpop.f32.mrb[0].mxu0
        %v1267 = vpop.f32.mrb[0].mxu0
        %v1268 = vadd.f32 %v719, %v1267
        %v1269 = vpop.f32.mrb[0].mxu0
        %1270 = vmatprep.mubr.bf16.mxu0 0
        %1271 = vmatmul.mubr.bf16.gmra.mrb[0].mxu0 %v979
        %v1272 = vpop.f32.mrb[0].mxu0
        %v1273 = vadd.f32 %v724, %v1272
        %v1274 = vpop.f32.mrb[0].mxu0
        %v1275 = vpop.f32.mrb[0].mxu0
        %v1276 = vadd.f32 %v727, %v1275
        %v1277 = vpop.f32.mrb[0].mxu0
        %1278 = vmatprep.mubr.bf16.mxu0 0
        %1279 = vmatmul.mubr.bf16.gmra.mrb[0].mxu0 %v988
        %v1280 = vpop.f32.mrb[0].mxu0
        %v1281 = vadd.f32 %v732, %v1280
        %v1282 = vpop.f32.mrb[0].mxu0
        %v1283 = vpop.f32.mrb[0].mxu0
        %v1284 = vadd.f32 %v735, %v1283
        %v1285 = vpop.f32.mrb[0].mxu0
        %1286 = vmatprep.mubr.bf16.mxu0 0
        %1287 = vmatmul.mubr.bf16.gmra.mrb[0].mxu0 %v997
        %v1288 = vpop.f32.mrb[0].mxu0
        %v1289 = vadd.f32 %v740, %v1288
        %v1290 = vpop.f32.mrb[0].mxu0
        %v1291 = vpop.f32.mrb[0].mxu0
        %v1292 = vadd.f32 %v743, %v1291
        %v1293 = vpop.f32.mrb[0].mxu0
        %1294 = vdwg.mxu0
        %v1295 = vld [vmem:[%s212 + $0xc] sm:$0xf]
        %v1296 = vld [vmem:[%s212 + $0x10] sm:$0xf]
        %v1297 = vld [vmem:[%s212 + $0x14] sm:$0xf]
        %v1298 = vld [vmem:[%s212 + $0x18] sm:$0xf]
        %v1299 = vld [vmem:[%s212 + $0x1c] sm:$0xf]
        %v1300 = vld [vmem:[%s212 + $0x20] sm:$0xf]
        %v1301 = vld [vmem:[%s212 + $0x24] sm:$0xf]
        %v1302 = vld [vmem:[%s212 + $0x28] sm:$0xf]
        %v1303 = vld [vmem:[%s212 + $0x2c] sm:$0xf]
        %v1304 = vld [vmem:[%s212 + $0x30] sm:$0xf]
        %v1305 = vld [vmem:[%s212 + $0x34] sm:$0xf]
        %v1306 = vld [vmem:[%s212 + $0x38] sm:$0xf]
        %v1307 = vld [vmem:[%s212 + $0x3c] sm:$0xf]
        %v1308 = vld [vmem:[%s212 + $0x40] sm:$0xf]
        %v1309 = vld [vmem:[%s212 + $0x44] sm:$0xf]
        %v1310 = vld [vmem:[%s212 + $0x48] sm:$0xf]
        %v1311 = vld [vmem:[%s212 + $0x4c] sm:$0xf]
        %v1312 = vld [vmem:[%s212 + $0x50] sm:$0xf]
        %v1313 = vld [vmem:[%s212 + $0x54] sm:$0xf]
        %v1314 = vld [vmem:[%s212 + $0x58] sm:$0xf]
        %v1315 = vld [vmem:[%s212 + $0x5c] sm:$0xf]
        %v1316 = vld [vmem:[%s212 + $0x60] sm:$0xf]
        %v1317 = vld [vmem:[%s212 + $0x64] sm:$0xf]
        %v1318 = vld [vmem:[%s212 + $0x68] sm:$0xf]
        %v1319 = vld [vmem:[%s212 + $0x6c] sm:$0xf]
        %v1320 = vld [vmem:[%s212 + $0x70] sm:$0xf]
        %v1321 = vld [vmem:[%s212 + $0x74] sm:$0xf]
        %v1322 = vld [vmem:[%s212 + $0x78] sm:$0xf]
        %v1323 = vld [vmem:[%s212 + $0x7c] sm:$0xf]
        %v1324 = vld [vmem:[%s212 + $0x80] sm:$0xf]
        %v1325 = vld [vmem:[%s212 + $0x84] sm:$0xf]
        %v1326 = vld [vmem:[%s212 + $0x88] sm:$0xf]
        %v1327 = vld [vmem:[%s212 + $0x8c] sm:$0xf]
        %v1328 = vld [vmem:[%s212 + $0x90] sm:$0xf]
        %v1329 = vld [vmem:[%s212 + $0x94] sm:$0xf]
        %v1330 = vld [vmem:[%s212 + $0x98] sm:$0xf]
        %v1331 = vld [vmem:[%s212 + $0x9c] sm:$0xf]
        %v1332 = vld [vmem:[%s212 + $0xa0] sm:$0xf]
        %v1333 = vld [vmem:[%s212 + $0xa4] sm:$0xf]
        %v1334 = vld [vmem:[%s212 + $0xa8] sm:$0xf]
        %v1335 = vld [vmem:[%s212 + $0xac] sm:$0xf]
        %v1336 = vld [vmem:[%s212 + $0xb0] sm:$0xf]
        %v1337 = vld [vmem:[%s212 + $0xb4] sm:$0xf]
        %v1338 = vld [vmem:[%s212 + $0xb8] sm:$0xf]
        %v1339 = vld [vmem:[%s212 + $0xbc] sm:$0xf]
        %v1340 = vld [vmem:[%s212 + $0xc0] sm:$0xf]
        %v1341 = vld [vmem:[%s212 + $0xc4] sm:$0xf]
        %v1342 = vld [vmem:[%s212 + $0xc8] sm:$0xf]
        %v1343 = vld [vmem:[%s212 + $0xcc] sm:$0x1]
        %s1344 = scalar_lea.vmem [#allocation6], 128
        %v1345 = vld [vmem:[%s1344] sm:$0xf]
        %v1346 = vld [vmem:[%s1344 + $0x4] sm:$0xf]
        %v1347 = vld [vmem:[%s1344 + $0x8] sm:$0xf]
        %v1348 = vld [vmem:[%s1344 + $0xc] sm:$0xf]
        %v1349 = vld [vmem:[%s1344 + $0x10] sm:$0xf]
        %v1350 = vld [vmem:[%s1344 + $0x14] sm:$0xf]
        %v1351 = vld [vmem:[%s1344 + $0x18] sm:$0xf]
        %v1352 = vld [vmem:[%s1344 + $0x1c] sm:$0xf]
        %v1353 = vld [vmem:[%s1344 + $0x20] sm:$0xf]
        %v1354 = vld [vmem:[%s1344 + $0x24] sm:$0xf]
        %v1355 = vld [vmem:[%s1344 + $0x28] sm:$0xf]
        %v1356 = vld [vmem:[%s1344 + $0x2c] sm:$0xf]
        %v1357 = vld [vmem:[%s1344 + $0x30] sm:$0xf]
        %v1358 = vld [vmem:[%s1344 + $0x34] sm:$0xf]
        %v1359 = vld [vmem:[%s1344 + $0x38] sm:$0xf]
        %v1360 = vld [vmem:[%s1344 + $0x3c] sm:$0xf]
        %v1410 = vunpack.c.l.b16 %v1295
        %v1411 = vunpack.c.l.b16 %v1296
        %v1412 = vunpack.c.l.b16 %v1297
        %v1413 = vunpack.c.l.b16 %v1298
        %v1414 = vunpack.c.l.b16 %v1299
        %v1415 = vunpack.c.l.b16 %v1300
        %v1416 = vunpack.c.l.b16 %v1301
        %v1417 = vunpack.c.l.b16 %v1302
        %v1418 = vunpack.c.l.b16 %v1303
        %v1419 = vunpack.c.l.b16 %v1304
        %v1420 = vunpack.c.l.b16 %v1305
        %v1421 = vunpack.c.l.b16 %v1306
        %v1422 = vunpack.c.l.b16 %v1307
        %v1423 = vunpack.c.l.b16 %v1308
        %v1424 = vunpack.c.l.b16 %v1309
        %v1425 = vunpack.c.l.b16 %v1310
        %v1426 = vunpack.c.l.b16 %v1311
        %v1427 = vunpack.c.l.b16 %v1312
        %v1428 = vunpack.c.l.b16 %v1313
        %v1429 = vunpack.c.l.b16 %v1314
        %v1430 = vunpack.c.l.b16 %v1315
        %v1431 = vunpack.c.l.b16 %v1316
        %v1432 = vunpack.c.l.b16 %v1317
        %v1433 = vunpack.c.l.b16 %v1318
        %v1434 = vunpack.c.l.b16 %v1319
        %v1435 = vunpack.c.l.b16 %v1320
        %v1436 = vunpack.c.l.b16 %v1321
        %v1437 = vunpack.c.l.b16 %v1322
        %v1438 = vunpack.c.l.b16 %v1323
        %v1439 = vunpack.c.l.b16 %v1324
        %v1440 = vunpack.c.l.b16 %v1325
        %v1441 = vunpack.c.l.b16 %v1326
        %v1442 = vunpack.c.l.b16 %v1327
        %v1443 = vunpack.c.l.b16 %v1328
        %v1444 = vunpack.c.l.b16 %v1329
        %v1445 = vunpack.c.l.b16 %v1330
        %v1446 = vunpack.c.l.b16 %v1331
        %v1447 = vunpack.c.l.b16 %v1332
        %v1448 = vunpack.c.l.b16 %v1333
        %v1449 = vunpack.c.l.b16 %v1334
        %v1450 = vunpack.c.l.b16 %v1335
        %v1451 = vunpack.c.l.b16 %v1336
        %v1452 = vunpack.c.l.b16 %v1337
        %v1453 = vunpack.c.l.b16 %v1338
        %v1454 = vunpack.c.l.b16 %v1339
        %v1455 = vunpack.c.l.b16 %v1340
        %v1456 = vunpack.c.l.b16 %v1341
        %v1457 = vunpack.c.l.b16 %v1342
        %v1458 = vunpack.c.l.b16 %v1343
        %v1459 = vpack.c.b16 %v1411, %v1410
        %v1460 = vpack.c.b16 %v1413, %v1412
        %v1461 = vpack.c.b16 %v1415, %v1414
        %v1462 = vpack.c.b16 %v1417, %v1416
        %v1463 = vpack.c.b16 %v1419, %v1418
        %v1464 = vpack.c.b16 %v1421, %v1420
        %v1465 = vpack.c.b16 %v1423, %v1422
        %v1466 = vpack.c.b16 %v1425, %v1424
        %v1467 = vpack.c.b16 %v1427, %v1426
        %v1468 = vpack.c.b16 %v1429, %v1428
        %v1469 = vpack.c.b16 %v1431, %v1430
        %v1470 = vpack.c.b16 %v1433, %v1432
        %v1471 = vpack.c.b16 %v1435, %v1434
        %v1472 = vpack.c.b16 %v1437, %v1436
        %v1473 = vpack.c.b16 %v1439, %v1438
        %v1474 = vpack.c.b16 %v1441, %v1440
        %v1475 = vpack.c.b16 %v1443, %v1442
        %v1476 = vpack.c.b16 %v1445, %v1444
        %v1477 = vpack.c.b16 %v1447, %v1446
        %v1478 = vpack.c.b16 %v1449, %v1448
        %v1479 = vpack.c.b16 %v1451, %v1450
        %v1480 = vpack.c.b16 %v1453, %v1452
        %v1481 = vpack.c.b16 %v1455, %v1454
        %v1482 = vpack.c.b16 %v1457, %v1456
        %v1483 = vpack.c.b16 %v1458, %v1458
        %vm1484 = vsmask.f32 7424
        %v1486 = vshrl.u32 %v1459, 16
        %v1488 = vshll.u32 %v1459, 16
        %v1490 = vrot.slane %v1488, 1
        %v1491 = vor.u32 %v1486, %v1490
        %v1493 = vshll.u32 %v1460, 16
        %v1495 = vrot.slane %v1493, 1
        %v1496 = vsel %vm1484, %v1491, %v1495
        %v1497 = vshrl.u32 %v1460, 16
        %v1499 = vor.u32 %v1497, %v1495
        %v1501 = vshll.u32 %v1461, 16
        %v1503 = vrot.slane %v1501, 1
        %v1504 = vsel %vm1484, %v1499, %v1503
        %v1505 = vshrl.u32 %v1461, 16
        %v1507 = vor.u32 %v1505, %v1503
        %v1509 = vshll.u32 %v1462, 16
        %v1511 = vrot.slane %v1509, 1
        %v1512 = vsel %vm1484, %v1507, %v1511
        %v1513 = vshrl.u32 %v1462, 16
        %v1515 = vor.u32 %v1513, %v1511
        %v1517 = vshll.u32 %v1463, 16
        %v1519 = vrot.slane %v1517, 1
        %v1520 = vsel %vm1484, %v1515, %v1519
        %v1521 = vshrl.u32 %v1463, 16
        %v1523 = vor.u32 %v1521, %v1519
        %v1525 = vshll.u32 %v1464, 16
        %v1527 = vrot.slane %v1525, 1
        %v1528 = vsel %vm1484, %v1523, %v1527
        %v1529 = vshrl.u32 %v1464, 16
        %v1531 = vor.u32 %v1529, %v1527
        %v1533 = vshll.u32 %v1465, 16
        %v1535 = vrot.slane %v1533, 1
        %v1536 = vsel %vm1484, %v1531, %v1535
        %v1537 = vshrl.u32 %v1465, 16
        %v1539 = vor.u32 %v1537, %v1535
        %v1541 = vshll.u32 %v1466, 16
        %v1543 = vrot.slane %v1541, 1
        %v1544 = vsel %vm1484, %v1539, %v1543
        %v1545 = vshrl.u32 %v1466, 16
        %v1547 = vor.u32 %v1545, %v1543
        %v1549 = vshll.u32 %v1467, 16
        %v1551 = vrot.slane %v1549, 1
        %v1552 = vsel %vm1484, %v1547, %v1551
        %v1553 = vshrl.u32 %v1467, 16
        %v1555 = vor.u32 %v1553, %v1551
        %v1557 = vshll.u32 %v1468, 16
        %v1559 = vrot.slane %v1557, 1
        %v1560 = vsel %vm1484, %v1555, %v1559
        %v1561 = vshrl.u32 %v1468, 16
        %v1563 = vor.u32 %v1561, %v1559
        %v1565 = vshll.u32 %v1469, 16
        %v1567 = vrot.slane %v1565, 1
        %v1568 = vsel %vm1484, %v1563, %v1567
        %v1569 = vshrl.u32 %v1469, 16
        %v1571 = vor.u32 %v1569, %v1567
        %v1573 = vshll.u32 %v1470, 16
        %v1575 = vrot.slane %v1573, 1
        %v1576 = vsel %vm1484, %v1571, %v1575
        %v1577 = vshrl.u32 %v1470, 16
        %v1579 = vor.u32 %v1577, %v1575
        %v1581 = vshll.u32 %v1471, 16
        %v1583 = vrot.slane %v1581, 1
        %v1584 = vsel %vm1484, %v1579, %v1583
        %v1585 = vshrl.u32 %v1471, 16
        %v1587 = vor.u32 %v1585, %v1583
        %v1589 = vshll.u32 %v1472, 16
        %v1591 = vrot.slane %v1589, 1
        %v1592 = vsel %vm1484, %v1587, %v1591
        %v1593 = vshrl.u32 %v1472, 16
        %v1595 = vor.u32 %v1593, %v1591
        %v1597 = vshll.u32 %v1473, 16
        %v1599 = vrot.slane %v1597, 1
        %v1600 = vsel %vm1484, %v1595, %v1599
        %v1601 = vshrl.u32 %v1473, 16
        %v1603 = vor.u32 %v1601, %v1599
        %v1605 = vshll.u32 %v1474, 16
        %v1607 = vrot.slane %v1605, 1
        %v1608 = vsel %vm1484, %v1603, %v1607
        %v1609 = vshrl.u32 %v1474, 16
        %v1611 = vor.u32 %v1609, %v1607
        %v1613 = vshll.u32 %v1475, 16
        %v1615 = vrot.slane %v1613, 1
        %v1616 = vsel %vm1484, %v1611, %v1615
        %v1617 = vshrl.u32 %v1475, 16
        %v1619 = vor.u32 %v1617, %v1615
        %v1621 = vshll.u32 %v1476, 16
        %v1623 = vrot.slane %v1621, 1
        %v1624 = vsel %vm1484, %v1619, %v1623
        %v1625 = vshrl.u32 %v1476, 16
        %v1627 = vor.u32 %v1625, %v1623
        %v1629 = vshll.u32 %v1477, 16
        %v1631 = vrot.slane %v1629, 1
        %v1632 = vsel %vm1484, %v1627, %v1631
        %v1633 = vshrl.u32 %v1477, 16
        %v1635 = vor.u32 %v1633, %v1631
        %v1637 = vshll.u32 %v1478, 16
        %v1639 = vrot.slane %v1637, 1
        %v1640 = vsel %vm1484, %v1635, %v1639
        %v1641 = vshrl.u32 %v1478, 16
        %v1643 = vor.u32 %v1641, %v1639
        %v1645 = vshll.u32 %v1479, 16
        %v1647 = vrot.slane %v1645, 1
        %v1648 = vsel %vm1484, %v1643, %v1647
        %v1649 = vshrl.u32 %v1479, 16
        %v1651 = vor.u32 %v1649, %v1647
        %v1653 = vshll.u32 %v1480, 16
        %v1655 = vrot.slane %v1653, 1
        %v1656 = vsel %vm1484, %v1651, %v1655
        %v1657 = vshrl.u32 %v1480, 16
        %v1659 = vor.u32 %v1657, %v1655
        %v1661 = vshll.u32 %v1481, 16
        %v1663 = vrot.slane %v1661, 1
        %v1664 = vsel %vm1484, %v1659, %v1663
        %v1665 = vshrl.u32 %v1481, 16
        %v1667 = vor.u32 %v1665, %v1663
        %v1669 = vshll.u32 %v1482, 16
        %v1671 = vrot.slane %v1669, 1
        %v1672 = vsel %vm1484, %v1667, %v1671
        %v1673 = vshrl.u32 %v1482, 16
        %v1675 = vor.u32 %v1673, %v1671
        %v1677 = vshll.u32 %v1483, 16
        %v1679 = vrot.slane %v1677, 1
        %v1680 = vsel %vm1484, %v1675, %v1679
        %v1721 = vunpack.c.l.b16 %v1345
        %v1722 = vunpack.c.l.b16 %v1346
        %v1723 = vunpack.c.l.b16 %v1347
        %v1724 = vunpack.c.l.b16 %v1348
        %v1725 = vunpack.c.l.b16 %v1349
        %v1726 = vunpack.c.l.b16 %v1350
        %v1727 = vunpack.c.l.b16 %v1351
        %v1728 = vunpack.c.l.b16 %v1352
        %v1729 = vunpack.c.l.b16 %v1353
        %v1730 = vunpack.c.l.b16 %v1354
        %v1731 = vunpack.c.l.b16 %v1355
        %v1732 = vunpack.c.l.b16 %v1356
        %v1733 = vunpack.c.l.b16 %v1357
        %v1734 = vunpack.c.l.b16 %v1358
        %v1735 = vunpack.c.l.b16 %v1359
        %v1736 = vunpack.c.l.b16 %v1360
        %v1737 = vpack.c.b16 %v1722, %v1721
        %v1738 = vpack.c.b16 %v1724, %v1723
        %v1739 = vpack.c.b16 %v1726, %v1725
        %v1740 = vpack.c.b16 %v1728, %v1727
        %v1741 = vpack.c.b16 %v1730, %v1729
        %v1742 = vpack.c.b16 %v1732, %v1731
        %v1743 = vpack.c.b16 %v1734, %v1733
        %v1744 = vpack.c.b16 %v1736, %v1735
        %1753 = vmatprep.subr.bf16.mxu0 0
        %1754 = vmatpush1.bf16.msra.mxu0 %v1737
        %1755 = vmatprep.subr.bf16.mxu0 0
        %1756 = vmatpush1.bf16.msra.mxu0 %v1738
        %1757 = vmatprep.subr.bf16.mxu0 0
        %1758 = vmatpush1.bf16.msra.mxu0 %v1739
        %1759 = vmatprep.subr.bf16.mxu0 0
        %1760 = vmatpush1.bf16.msra.mxu0 %v1740
        %1761 = vmatprep.subr.bf16.mxu0 0
        %1762 = vmatpush1.bf16.msra.mxu0 %v1741
        %1763 = vmatprep.subr.bf16.mxu0 0
        %1764 = vmatpush1.bf16.msra.mxu0 %v1742
        %1765 = vmatprep.subr.bf16.mxu0 0
        %1766 = vmatpush1.bf16.msra.mxu0 %v1743
        %1767 = vmatprep.subr.bf16.mxu0 0
        %1768 = vmatpush1.bf16.msra.mxu0 %v1744
        %1769 = vmatprep.subr.bf16.mxu0 0
        %1770 = vmatpush1.bf16.msra.mxu0 0
        %1771 = vmatprep.subr.bf16.mxu0 0
        %1772 = vmatpush1.bf16.msra.mxu0 0
        %1773 = vmatprep.subr.bf16.mxu0 0
        %1774 = vmatpush1.bf16.msra.mxu0 0
        %1775 = vmatprep.subr.bf16.mxu0 0
        %1776 = vmatpush1.bf16.msra.mxu0 0
        %1777 = vmatprep.subr.bf16.mxu0 0
        %1778 = vmatpush1.bf16.msra.mxu0 0
        %1779 = vmatprep.subr.bf16.mxu0 0
        %1780 = vmatpush1.bf16.msra.mxu0 0
        %1781 = vmatprep.subr.bf16.mxu0 0
        %1782 = vmatpush1.bf16.msra.mxu0 0
        %1783 = vmatprep.subr.bf16.mxu0 0
        %1784 = vmatpush1.bf16.msra.mxu0 0
        %1785 = vmatprep.mubr.bf16.mxu0 0
        %1786 = vmatmul.mubr.bf16.gmra.mrb[0].mxu0 %v1496
        %v1787 = vpop.f32.mrb[0].mxu0
        %v1788 = vadd.f32 0.0, %v1787
        %v1789 = vpop.f32.mrb[0].mxu0
        %v1790 = vpop.f32.mrb[0].mxu0
        %v1791 = vadd.f32 0.0, %v1790
        %v1792 = vpop.f32.mrb[0].mxu0
        %1793 = vmatprep.mubr.bf16.mxu0 0
        %1794 = vmatmul.mubr.bf16.gmra.mrb[0].mxu0 %v1504
        %v1795 = vpop.f32.mrb[0].mxu0
        %v1796 = vadd.f32 0.0, %v1795
        %v1797 = vpop.f32.mrb[0].mxu0
        %v1798 = vpop.f32.mrb[0].mxu0
        %v1799 = vadd.f32 0.0, %v1798
        %v1800 = vpop.f32.mrb[0].mxu0
        %1801 = vmatprep.mubr.bf16.mxu0 0
        %1802 = vmatmul.mubr.bf16.gmra.mrb[0].mxu0 %v1512
        %v1803 = vpop.f32.mrb[0].mxu0
        %v1804 = vadd.f32 0.0, %v1803
        %v1805 = vpop.f32.mrb[0].mxu0
        %v1806 = vpop.f32.mrb[0].mxu0
        %v1807 = vadd.f32 0.0, %v1806
        %v1808 = vpop.f32.mrb[0].mxu0
        %1809 = vmatprep.mubr.bf16.mxu0 0
        %1810 = vmatmul.mubr.bf16.gmra.mrb[0].mxu0 %v1520
        %v1811 = vpop.f32.mrb[0].mxu0
        %v1812 = vadd.f32 0.0, %v1811
        %v1813 = vpop.f32.mrb[0].mxu0
        %v1814 = vpop.f32.mrb[0].mxu0
        %v1815 = vadd.f32 0.0, %v1814
        %v1816 = vpop.f32.mrb[0].mxu0
        %1817 = vmatprep.mubr.bf16.mxu0 0
        %1818 = vmatmul.mubr.bf16.gmra.mrb[0].mxu0 %v1528
        %v1819 = vpop.f32.mrb[0].mxu0
        %v1820 = vadd.f32 0.0, %v1819
        %v1821 = vpop.f32.mrb[0].mxu0
        %v1822 = vpop.f32.mrb[0].mxu0
        %v1823 = vadd.f32 0.0, %v1822
        %v1824 = vpop.f32.mrb[0].mxu0
        %1825 = vmatprep.mubr.bf16.mxu0 0
        %1826 = vmatmul.mubr.bf16.gmra.mrb[0].mxu0 %v1536
        %v1827 = vpop.f32.mrb[0].mxu0
        %v1828 = vadd.f32 0.0, %v1827
        %v1829 = vpop.f32.mrb[0].mxu0
        %v1830 = vpop.f32.mrb[0].mxu0
        %v1831 = vadd.f32 0.0, %v1830
        %v1832 = vpop.f32.mrb[0].mxu0
        %1833 = vmatprep.mubr.bf16.mxu0 0
        %1834 = vmatmul.mubr.bf16.gmra.mrb[0].mxu0 %v1544
        %v1835 = vpop.f32.mrb[0].mxu0
        %v1836 = vadd.f32 0.0, %v1835
        %v1837 = vpop.f32.mrb[0].mxu0
        %v1838 = vpop.f32.mrb[0].mxu0
        %v1839 = vadd.f32 0.0, %v1838
        %v1840 = vpop.f32.mrb[0].mxu0
        %1841 = vmatprep.mubr.bf16.mxu0 0
        %1842 = vmatmul.mubr.bf16.gmra.mrb[0].mxu0 %v1552
        %v1843 = vpop.f32.mrb[0].mxu0
        %v1844 = vadd.f32 0.0, %v1843
        %v1845 = vpop.f32.mrb[0].mxu0
        %v1846 = vpop.f32.mrb[0].mxu0
        %v1847 = vadd.f32 0.0, %v1846
        %v1848 = vpop.f32.mrb[0].mxu0
        %1849 = vmatprep.mubr.bf16.mxu0 0
        %1850 = vmatmul.mubr.bf16.gmra.mrb[0].mxu0 %v1560
        %v1851 = vpop.f32.mrb[0].mxu0
        %v1852 = vadd.f32 0.0, %v1851
        %v1853 = vpop.f32.mrb[0].mxu0
        %v1854 = vpop.f32.mrb[0].mxu0
        %v1855 = vadd.f32 0.0, %v1854
        %v1856 = vpop.f32.mrb[0].mxu0
        %1857 = vmatprep.mubr.bf16.mxu0 0
        %1858 = vmatmul.mubr.bf16.gmra.mrb[0].mxu0 %v1568
        %v1859 = vpop.f32.mrb[0].mxu0
        %v1860 = vadd.f32 0.0, %v1859
        %v1861 = vpop.f32.mrb[0].mxu0
        %v1862 = vpop.f32.mrb[0].mxu0
        %v1863 = vadd.f32 0.0, %v1862
        %v1864 = vpop.f32.mrb[0].mxu0
        %1865 = vmatprep.mubr.bf16.mxu0 0
        %1866 = vmatmul.mubr.bf16.gmra.mrb[0].mxu0 %v1576
        %v1867 = vpop.f32.mrb[0].mxu0
        %v1868 = vadd.f32 0.0, %v1867
        %v1869 = vpop.f32.mrb[0].mxu0
        %v1870 = vpop.f32.mrb[0].mxu0
        %v1871 = vadd.f32 0.0, %v1870
        %v1872 = vpop.f32.mrb[0].mxu0
        %1873 = vmatprep.mubr.bf16.mxu0 0
        %1874 = vmatmul.mubr.bf16.gmra.mrb[0].mxu0 %v1584
        %v1875 = vpop.f32.mrb[0].mxu0
        %v1876 = vadd.f32 0.0, %v1875
        %v1877 = vpop.f32.mrb[0].mxu0
        %v1878 = vpop.f32.mrb[0].mxu0
        %v1879 = vadd.f32 0.0, %v1878
        %v1880 = vpop.f32.mrb[0].mxu0
        %1881 = vmatprep.mubr.bf16.mxu0 0
        %1882 = vmatmul.mubr.bf16.gmra.mrb[0].mxu0 %v1592
        %v1883 = vpop.f32.mrb[0].mxu0
        %v1884 = vadd.f32 0.0, %v1883
        %v1885 = vpop.f32.mrb[0].mxu0
        %v1886 = vpop.f32.mrb[0].mxu0
        %v1887 = vadd.f32 0.0, %v1886
        %v1888 = vpop.f32.mrb[0].mxu0
        %1889 = vmatprep.mubr.bf16.mxu0 0
        %1890 = vmatmul.mubr.bf16.gmra.mrb[0].mxu0 %v1600
        %v1891 = vpop.f32.mrb[0].mxu0
        %v1892 = vadd.f32 0.0, %v1891
        %v1893 = vpop.f32.mrb[0].mxu0
        %v1894 = vpop.f32.mrb[0].mxu0
        %v1895 = vadd.f32 0.0, %v1894
        %v1896 = vpop.f32.mrb[0].mxu0
        %1897 = vmatprep.mubr.bf16.mxu0 0
        %1898 = vmatmul.mubr.bf16.gmra.mrb[0].mxu0 %v1608
        %v1899 = vpop.f32.mrb[0].mxu0
        %v1900 = vadd.f32 0.0, %v1899
        %v1901 = vpop.f32.mrb[0].mxu0
        %v1902 = vpop.f32.mrb[0].mxu0
        %v1903 = vadd.f32 0.0, %v1902
        %v1904 = vpop.f32.mrb[0].mxu0
        %1905 = vmatprep.mubr.bf16.mxu0 0
        %1906 = vmatmul.mubr.bf16.gmra.mrb[0].mxu0 %v1616
        %v1907 = vpop.f32.mrb[0].mxu0
        %v1908 = vadd.f32 0.0, %v1907
        %v1909 = vpop.f32.mrb[0].mxu0
        %v1910 = vpop.f32.mrb[0].mxu0
        %v1911 = vadd.f32 0.0, %v1910
        %v1912 = vpop.f32.mrb[0].mxu0
        %1913 = vmatprep.mubr.bf16.mxu0 0
        %1914 = vmatmul.mubr.bf16.gmra.mrb[0].mxu0 %v1624
        %v1915 = vpop.f32.mrb[0].mxu0
        %v1916 = vadd.f32 0.0, %v1915
        %v1917 = vpop.f32.mrb[0].mxu0
        %v1918 = vpop.f32.mrb[0].mxu0
        %v1919 = vadd.f32 0.0, %v1918
        %v1920 = vpop.f32.mrb[0].mxu0
        %1921 = vmatprep.mubr.bf16.mxu0 0
        %1922 = vmatmul.mubr.bf16.gmra.mrb[0].mxu0 %v1632
        %v1923 = vpop.f32.mrb[0].mxu0
        %v1924 = vadd.f32 0.0, %v1923
        %v1925 = vpop.f32.mrb[0].mxu0
        %v1926 = vpop.f32.mrb[0].mxu0
        %v1927 = vadd.f32 0.0, %v1926
        %v1928 = vpop.f32.mrb[0].mxu0
        %1929 = vmatprep.mubr.bf16.mxu0 0
        %1930 = vmatmul.mubr.bf16.gmra.mrb[0].mxu0 %v1640
        %v1931 = vpop.f32.mrb[0].mxu0
        %v1932 = vadd.f32 0.0, %v1931
        %v1933 = vpop.f32.mrb[0].mxu0
        %v1934 = vpop.f32.mrb[0].mxu0
        %v1935 = vadd.f32 0.0, %v1934
        %v1936 = vpop.f32.mrb[0].mxu0
        %1937 = vmatprep.mubr.bf16.mxu0 0
        %1938 = vmatmul.mubr.bf16.gmra.mrb[0].mxu0 %v1648
        %v1939 = vpop.f32.mrb[0].mxu0
        %v1940 = vadd.f32 0.0, %v1939
        %v1941 = vpop.f32.mrb[0].mxu0
        %v1942 = vpop.f32.mrb[0].mxu0
        %v1943 = vadd.f32 0.0, %v1942
        %v1944 = vpop.f32.mrb[0].mxu0
        %1945 = vmatprep.mubr.bf16.mxu0 0
        %1946 = vmatmul.mubr.bf16.gmra.mrb[0].mxu0 %v1656
        %v1947 = vpop.f32.mrb[0].mxu0
        %v1948 = vadd.f32 0.0, %v1947
        %v1949 = vpop.f32.mrb[0].mxu0
        %v1950 = vpop.f32.mrb[0].mxu0
        %v1951 = vadd.f32 0.0, %v1950
        %v1952 = vpop.f32.mrb[0].mxu0
        %1953 = vmatprep.mubr.bf16.mxu0 0
        %1954 = vmatmul.mubr.bf16.gmra.mrb[0].mxu0 %v1664
        %v1955 = vpop.f32.mrb[0].mxu0
        %v1956 = vadd.f32 0.0, %v1955
        %v1957 = vpop.f32.mrb[0].mxu0
        %v1958 = vpop.f32.mrb[0].mxu0
        %v1959 = vadd.f32 0.0, %v1958
        %v1960 = vpop.f32.mrb[0].mxu0
        %1961 = vmatprep.mubr.bf16.mxu0 0
        %1962 = vmatmul.mubr.bf16.gmra.mrb[0].mxu0 %v1672
        %v1963 = vpop.f32.mrb[0].mxu0
        %v1964 = vadd.f32 0.0, %v1963
        %v1965 = vpop.f32.mrb[0].mxu0
        %v1966 = vpop.f32.mrb[0].mxu0
        %v1967 = vadd.f32 0.0, %v1966
        %v1968 = vpop.f32.mrb[0].mxu0
        %1969 = vmatprep.mubr.bf16.mxu0 0
        %1970 = vmatmul.mubr.bf16.gmra.mrb[0].mxu0 %v1680
        %v1971 = vpop.f32.mrb[0].mxu0
        %v1972 = vadd.f32 0.0, %v1971
        %v1973 = vpop.f32.mrb[0].mxu0
        %v1974 = vpop.f32.mrb[0].mxu0
        %v1975 = vadd.f32 0.0, %v1974
        %v1976 = vpop.f32.mrb[0].mxu0
        %1977 = vdwg.mxu0
        %v1978 = vadd.f32 %v1105, %v1788
        %v1979 = vadd.f32 %v1108, %v1791
        %v1980 = vadd.f32 %v1113, %v1796
        %v1981 = vadd.f32 %v1116, %v1799
        %v1982 = vadd.f32 %v1121, %v1804
        %v1983 = vadd.f32 %v1124, %v1807
        %v1984 = vadd.f32 %v1129, %v1812
        %v1985 = vadd.f32 %v1132, %v1815
        %v1986 = vadd.f32 %v1137, %v1820
        %v1987 = vadd.f32 %v1140, %v1823
        %v1988 = vadd.f32 %v1145, %v1828
        %v1989 = vadd.f32 %v1148, %v1831
        %v1990 = vadd.f32 %v1153, %v1836
        %v1991 = vadd.f32 %v1156, %v1839
        %v1992 = vadd.f32 %v1161, %v1844
        %v1993 = vadd.f32 %v1164, %v1847
        %v1994 = vadd.f32 %v1169, %v1852
        %v1995 = vadd.f32 %v1172, %v1855
        %v1996 = vadd.f32 %v1177, %v1860
        %v1997 = vadd.f32 %v1180, %v1863
        %v1998 = vadd.f32 %v1185, %v1868
        %v1999 = vadd.f32 %v1188, %v1871
        %v2000 = vadd.f32 %v1193, %v1876
        %v2001 = vadd.f32 %v1196, %v1879
        %v2002 = vadd.f32 %v1201, %v1884
        %v2003 = vadd.f32 %v1204, %v1887
        %v2004 = vadd.f32 %v1209, %v1892
        %v2005 = vadd.f32 %v1212, %v1895
        %v2006 = vadd.f32 %v1217, %v1900
        %v2007 = vadd.f32 %v1220, %v1903
        %v2008 = vadd.f32 %v1225, %v1908
        %v2009 = vadd.f32 %v1228, %v1911
        %v2010 = vadd.f32 %v1233, %v1916
        %v2011 = vadd.f32 %v1236, %v1919
        %v2012 = vadd.f32 %v1241, %v1924
        %v2013 = vadd.f32 %v1244, %v1927
        %v2014 = vadd.f32 %v1249, %v1932
        %v2015 = vadd.f32 %v1252, %v1935
        %v2016 = vadd.f32 %v1257, %v1940
        %v2017 = vadd.f32 %v1260, %v1943
        %v2018 = vadd.f32 %v1265, %v1948
        %v2019 = vadd.f32 %v1268, %v1951
        %v2020 = vadd.f32 %v1273, %v1956
        %v2021 = vadd.f32 %v1276, %v1959
        %v2022 = vadd.f32 %v1281, %v1964
        %v2023 = vadd.f32 %v1284, %v1967
        %v2024 = vadd.f32 %v1289, %v1972
        %v2025 = vadd.f32 %v1292, %v1975
        %v2026 = vld [vmem:[%s212 + $0x14] sm:$0x8]
        %v2027 = vld [vmem:[%s212 + $0x18] sm:$0xf]
        %v2028 = vld [vmem:[%s212 + $0x1c] sm:$0xf]
        %v2029 = vld [vmem:[%s212 + $0x20] sm:$0xf]
        %v2030 = vld [vmem:[%s212 + $0x24] sm:$0xf]
        %v2031 = vld [vmem:[%s212 + $0x28] sm:$0xf]
        %v2032 = vld [vmem:[%s212 + $0x2c] sm:$0xf]
        %v2033 = vld [vmem:[%s212 + $0x30] sm:$0xf]
        %v2034 = vld [vmem:[%s212 + $0x34] sm:$0xf]
        %v2035 = vld [vmem:[%s212 + $0x38] sm:$0xf]
        %v2036 = vld [vmem:[%s212 + $0x3c] sm:$0xf]
        %v2037 = vld [vmem:[%s212 + $0x40] sm:$0xf]
        %v2038 = vld [vmem:[%s212 + $0x44] sm:$0xf]
        %v2039 = vld [vmem:[%s212 + $0x48] sm:$0xf]
        %v2040 = vld [vmem:[%s212 + $0x4c] sm:$0xf]
        %v2041 = vld [vmem:[%s212 + $0x50] sm:$0xf]
        %v2042 = vld [vmem:[%s212 + $0x54] sm:$0xf]
        %v2043 = vld [vmem:[%s212 + $0x58] sm:$0xf]
        %v2044 = vld [vmem:[%s212 + $0x5c] sm:$0xf]
        %v2045 = vld [vmem:[%s212 + $0x60] sm:$0xf]
        %v2046 = vld [vmem:[%s212 + $0x64] sm:$0xf]
        %v2047 = vld [vmem:[%s212 + $0x68] sm:$0xf]
        %v2048 = vld [vmem:[%s212 + $0x6c] sm:$0xf]
        %v2049 = vld [vmem:[%s212 + $0x70] sm:$0xf]
        %v2050 = vld [vmem:[%s212 + $0x74] sm:$0xf]
        %v2051 = vld [vmem:[%s212 + $0x78] sm:$0xf]
        %v2052 = vld [vmem:[%s212 + $0x7c] sm:$0xf]
        %v2053 = vld [vmem:[%s212 + $0x80] sm:$0xf]
        %v2054 = vld [vmem:[%s212 + $0x84] sm:$0xf]
        %v2055 = vld [vmem:[%s212 + $0x88] sm:$0xf]
        %v2056 = vld [vmem:[%s212 + $0x8c] sm:$0xf]
        %v2057 = vld [vmem:[%s212 + $0x90] sm:$0xf]
        %v2058 = vld [vmem:[%s212 + $0x94] sm:$0xf]
        %v2059 = vld [vmem:[%s212 + $0x98] sm:$0xf]
        %v2060 = vld [vmem:[%s212 + $0x9c] sm:$0xf]
        %v2061 = vld [vmem:[%s212 + $0xa0] sm:$0xf]
        %v2062 = vld [vmem:[%s212 + $0xa4] sm:$0xf]
        %v2063 = vld [vmem:[%s212 + $0xa8] sm:$0xf]
        %v2064 = vld [vmem:[%s212 + $0xac] sm:$0xf]
        %v2065 = vld [vmem:[%s212 + $0xb0] sm:$0xf]
        %v2066 = vld [vmem:[%s212 + $0xb4] sm:$0xf]
        %v2067 = vld [vmem:[%s212 + $0xb8] sm:$0xf]
        %v2068 = vld [vmem:[%s212 + $0xbc] sm:$0xf]
        %v2069 = vld [vmem:[%s212 + $0xc0] sm:$0xf]
        %v2070 = vld [vmem:[%s212 + $0xc4] sm:$0xf]
        %v2071 = vld [vmem:[%s212 + $0xc8] sm:$0xf]
        %v2072 = vld [vmem:[%s212 + $0xcc] sm:$0xf]
        %v2073 = vld [vmem:[%s212 + $0xd0] sm:$0xf]
        %v2074 = vld [vmem:[%s212 + $0xd4] sm:$0xf]
        %s2075 = scalar_lea.vmem [#allocation6], 192
        %v2076 = vld [vmem:[%s2075] sm:$0xf]
        %v2077 = vld [vmem:[%s2075 + $0x4] sm:$0xf]
        %v2078 = vld [vmem:[%s2075 + $0x8] sm:$0xf]
        %v2079 = vld [vmem:[%s2075 + $0xc] sm:$0xf]
        %v2080 = vld [vmem:[%s2075 + $0x10] sm:$0xf]
        %v2081 = vld [vmem:[%s2075 + $0x14] sm:$0xf]
        %v2082 = vld [vmem:[%s2075 + $0x18] sm:$0xf]
        %v2083 = vld [vmem:[%s2075 + $0x1c] sm:$0xf]
        %v2084 = vld [vmem:[%s2075 + $0x20] sm:$0xf]
        %v2085 = vld [vmem:[%s2075 + $0x24] sm:$0xf]
        %v2086 = vld [vmem:[%s2075 + $0x28] sm:$0xf]
        %v2087 = vld [vmem:[%s2075 + $0x2c] sm:$0xf]
        %v2088 = vld [vmem:[%s2075 + $0x30] sm:$0xf]
        %v2089 = vld [vmem:[%s2075 + $0x34] sm:$0xf]
        %v2090 = vld [vmem:[%s2075 + $0x38] sm:$0xf]
        %v2091 = vld [vmem:[%s2075 + $0x3c] sm:$0xf]
        %v2141 = vunpack.c.l.b16 %v2026
        %v2142 = vunpack.c.l.b16 %v2027
        %v2143 = vunpack.c.l.b16 %v2028
        %v2144 = vunpack.c.l.b16 %v2029
        %v2145 = vunpack.c.l.b16 %v2030
        %v2146 = vunpack.c.l.b16 %v2031
        %v2147 = vunpack.c.l.b16 %v2032
        %v2148 = vunpack.c.l.b16 %v2033
        %v2149 = vunpack.c.l.b16 %v2034
        %v2150 = vunpack.c.l.b16 %v2035
        %v2151 = vunpack.c.l.b16 %v2036
        %v2152 = vunpack.c.l.b16 %v2037
        %v2153 = vunpack.c.l.b16 %v2038
        %v2154 = vunpack.c.l.b16 %v2039
        %v2155 = vunpack.c.l.b16 %v2040
        %v2156 = vunpack.c.l.b16 %v2041
        %v2157 = vunpack.c.l.b16 %v2042
        %v2158 = vunpack.c.l.b16 %v2043
        %v2159 = vunpack.c.l.b16 %v2044
        %v2160 = vunpack.c.l.b16 %v2045
        %v2161 = vunpack.c.l.b16 %v2046
        %v2162 = vunpack.c.l.b16 %v2047
        %v2163 = vunpack.c.l.b16 %v2048
        %v2164 = vunpack.c.l.b16 %v2049
        %v2165 = vunpack.c.l.b16 %v2050
        %v2166 = vunpack.c.l.b16 %v2051
        %v2167 = vunpack.c.l.b16 %v2052
        %v2168 = vunpack.c.l.b16 %v2053
        %v2169 = vunpack.c.l.b16 %v2054
        %v2170 = vunpack.c.l.b16 %v2055
        %v2171 = vunpack.c.l.b16 %v2056
        %v2172 = vunpack.c.l.b16 %v2057
        %v2173 = vunpack.c.l.b16 %v2058
        %v2174 = vunpack.c.l.b16 %v2059
        %v2175 = vunpack.c.l.b16 %v2060
        %v2176 = vunpack.c.l.b16 %v2061
        %v2177 = vunpack.c.l.b16 %v2062
        %v2178 = vunpack.c.l.b16 %v2063
        %v2179 = vunpack.c.l.b16 %v2064
        %v2180 = vunpack.c.l.b16 %v2065
        %v2181 = vunpack.c.l.b16 %v2066
        %v2182 = vunpack.c.l.b16 %v2067
        %v2183 = vunpack.c.l.b16 %v2068
        %v2184 = vunpack.c.l.b16 %v2069
        %v2185 = vunpack.c.l.b16 %v2070
        %v2186 = vunpack.c.l.b16 %v2071
        %v2187 = vunpack.c.l.b16 %v2072
        %v2188 = vunpack.c.l.b16 %v2073
        %v2189 = vunpack.c.l.b16 %v2074
        %v2190 = vpack.c.b16 %v2142, %v2141
        %v2191 = vpack.c.b16 %v2144, %v2143
        %v2192 = vpack.c.b16 %v2146, %v2145
        %v2193 = vpack.c.b16 %v2148, %v2147
        %v2194 = vpack.c.b16 %v2150, %v2149
        %v2195 = vpack.c.b16 %v2152, %v2151
        %v2196 = vpack.c.b16 %v2154, %v2153
        %v2197 = vpack.c.b16 %v2156, %v2155
        %v2198 = vpack.c.b16 %v2158, %v2157
        %v2199 = vpack.c.b16 %v2160, %v2159
        %v2200 = vpack.c.b16 %v2162, %v2161
        %v2201 = vpack.c.b16 %v2164, %v2163
        %v2202 = vpack.c.b16 %v2166, %v2165
        %v2203 = vpack.c.b16 %v2168, %v2167
        %v2204 = vpack.c.b16 %v2170, %v2169
        %v2205 = vpack.c.b16 %v2172, %v2171
        %v2206 = vpack.c.b16 %v2174, %v2173
        %v2207 = vpack.c.b16 %v2176, %v2175
        %v2208 = vpack.c.b16 %v2178, %v2177
        %v2209 = vpack.c.b16 %v2180, %v2179
        %v2210 = vpack.c.b16 %v2182, %v2181
        %v2211 = vpack.c.b16 %v2184, %v2183
        %v2212 = vpack.c.b16 %v2186, %v2185
        %v2213 = vpack.c.b16 %v2188, %v2187
        %v2214 = vpack.c.b16 %v2189, %v2189
        %v2216 = vshrl.u32 %v2190, 16
        %v2218 = vrot.slane %v2216, 3
        %v2219 = vshll.u32 %v2190, 16
        %v2221 = vrot.slane %v2219, 4
        %v2222 = vor.u32 %v2218, %v2221
        %v2224 = vshrl.u32 %v2191, 16
        %v2226 = vrot.slane %v2224, 3
        %v2227 = vshll.u32 %v2191, 16
        %v2229 = vrot.slane %v2227, 4
        %v2230 = vor.u32 %v2226, %v2229
        %v2231 = vsel %vm773, %v2222, %v2230
        %v2233 = vshrl.u32 %v2192, 16
        %v2235 = vrot.slane %v2233, 3
        %v2236 = vshll.u32 %v2192, 16
        %v2238 = vrot.slane %v2236, 4
        %v2239 = vor.u32 %v2235, %v2238
        %v2240 = vsel %vm773, %v2230, %v2239
        %v2242 = vshrl.u32 %v2193, 16
        %v2244 = vrot.slane %v2242, 3
        %v2245 = vshll.u32 %v2193, 16
        %v2247 = vrot.slane %v2245, 4
        %v2248 = vor.u32 %v2244, %v2247
        %v2249 = vsel %vm773, %v2239, %v2248
        %v2251 = vshrl.u32 %v2194, 16
        %v2253 = vrot.slane %v2251, 3
        %v2254 = vshll.u32 %v2194, 16
        %v2256 = vrot.slane %v2254, 4
        %v2257 = vor.u32 %v2253, %v2256
        %v2258 = vsel %vm773, %v2248, %v2257
        %v2260 = vshrl.u32 %v2195, 16
        %v2262 = vrot.slane %v2260, 3
        %v2263 = vshll.u32 %v2195, 16
        %v2265 = vrot.slane %v2263, 4
        %v2266 = vor.u32 %v2262, %v2265
        %v2267 = vsel %vm773, %v2257, %v2266
        %v2269 = vshrl.u32 %v2196, 16
        %v2271 = vrot.slane %v2269, 3
        %v2272 = vshll.u32 %v2196, 16
        %v2274 = vrot.slane %v2272, 4
        %v2275 = vor.u32 %v2271, %v2274
        %v2276 = vsel %vm773, %v2266, %v2275
        %v2278 = vshrl.u32 %v2197, 16
        %v2280 = vrot.slane %v2278, 3
        %v2281 = vshll.u32 %v2197, 16
        %v2283 = vrot.slane %v2281, 4
        %v2284 = vor.u32 %v2280, %v2283
        %v2285 = vsel %vm773, %v2275, %v2284
        %v2287 = vshrl.u32 %v2198, 16
        %v2289 = vrot.slane %v2287, 3
        %v2290 = vshll.u32 %v2198, 16
        %v2292 = vrot.slane %v2290, 4
        %v2293 = vor.u32 %v2289, %v2292
        %v2294 = vsel %vm773, %v2284, %v2293
        %v2296 = vshrl.u32 %v2199, 16
        %v2298 = vrot.slane %v2296, 3
        %v2299 = vshll.u32 %v2199, 16
        %v2301 = vrot.slane %v2299, 4
        %v2302 = vor.u32 %v2298, %v2301
        %v2303 = vsel %vm773, %v2293, %v2302
        %v2305 = vshrl.u32 %v2200, 16
        %v2307 = vrot.slane %v2305, 3
        %v2308 = vshll.u32 %v2200, 16
        %v2310 = vrot.slane %v2308, 4
        %v2311 = vor.u32 %v2307, %v2310
        %v2312 = vsel %vm773, %v2302, %v2311
        %v2314 = vshrl.u32 %v2201, 16
        %v2316 = vrot.slane %v2314, 3
        %v2317 = vshll.u32 %v2201, 16
        %v2319 = vrot.slane %v2317, 4
        %v2320 = vor.u32 %v2316, %v2319
        %v2321 = vsel %vm773, %v2311, %v2320
        %v2323 = vshrl.u32 %v2202, 16
        %v2325 = vrot.slane %v2323, 3
        %v2326 = vshll.u32 %v2202, 16
        %v2328 = vrot.slane %v2326, 4
        %v2329 = vor.u32 %v2325, %v2328
        %v2330 = vsel %vm773, %v2320, %v2329
        %v2332 = vshrl.u32 %v2203, 16
        %v2334 = vrot.slane %v2332, 3
        %v2335 = vshll.u32 %v2203, 16
        %v2337 = vrot.slane %v2335, 4
        %v2338 = vor.u32 %v2334, %v2337
        %v2339 = vsel %vm773, %v2329, %v2338
        %v2341 = vshrl.u32 %v2204, 16
        %v2343 = vrot.slane %v2341, 3
        %v2344 = vshll.u32 %v2204, 16
        %v2346 = vrot.slane %v2344, 4
        %v2347 = vor.u32 %v2343, %v2346
        %v2348 = vsel %vm773, %v2338, %v2347
        %v2350 = vshrl.u32 %v2205, 16
        %v2352 = vrot.slane %v2350, 3
        %v2353 = vshll.u32 %v2205, 16
        %v2355 = vrot.slane %v2353, 4
        %v2356 = vor.u32 %v2352, %v2355
        %v2357 = vsel %vm773, %v2347, %v2356
        %v2359 = vshrl.u32 %v2206, 16
        %v2361 = vrot.slane %v2359, 3
        %v2362 = vshll.u32 %v2206, 16
        %v2364 = vrot.slane %v2362, 4
        %v2365 = vor.u32 %v2361, %v2364
        %v2366 = vsel %vm773, %v2356, %v2365
        %v2368 = vshrl.u32 %v2207, 16
        %v2370 = vrot.slane %v2368, 3
        %v2371 = vshll.u32 %v2207, 16
        %v2373 = vrot.slane %v2371, 4
        %v2374 = vor.u32 %v2370, %v2373
        %v2375 = vsel %vm773, %v2365, %v2374
        %v2377 = vshrl.u32 %v2208, 16
        %v2379 = vrot.slane %v2377, 3
        %v2380 = vshll.u32 %v2208, 16
        %v2382 = vrot.slane %v2380, 4
        %v2383 = vor.u32 %v2379, %v2382
        %v2384 = vsel %vm773, %v2374, %v2383
        %v2386 = vshrl.u32 %v2209, 16
        %v2388 = vrot.slane %v2386, 3
        %v2389 = vshll.u32 %v2209, 16
        %v2391 = vrot.slane %v2389, 4
        %v2392 = vor.u32 %v2388, %v2391
        %v2393 = vsel %vm773, %v2383, %v2392
        %v2395 = vshrl.u32 %v2210, 16
        %v2397 = vrot.slane %v2395, 3
        %v2398 = vshll.u32 %v2210, 16
        %v2400 = vrot.slane %v2398, 4
        %v2401 = vor.u32 %v2397, %v2400
        %v2402 = vsel %vm773, %v2392, %v2401
        %v2404 = vshrl.u32 %v2211, 16
        %v2406 = vrot.slane %v2404, 3
        %v2407 = vshll.u32 %v2211, 16
        %v2409 = vrot.slane %v2407, 4
        %v2410 = vor.u32 %v2406, %v2409
        %v2411 = vsel %vm773, %v2401, %v2410
        %v2413 = vshrl.u32 %v2212, 16
        %v2415 = vrot.slane %v2413, 3
        %v2416 = vshll.u32 %v2212, 16
        %v2418 = vrot.slane %v2416, 4
        %v2419 = vor.u32 %v2415, %v2418
        %v2420 = vsel %vm773, %v2410, %v2419
        %v2422 = vshrl.u32 %v2213, 16
        %v2424 = vrot.slane %v2422, 3
        %v2425 = vshll.u32 %v2213, 16
        %v2427 = vrot.slane %v2425, 4
        %v2428 = vor.u32 %v2424, %v2427
        %v2429 = vsel %vm773, %v2419, %v2428
        %v2431 = vshrl.u32 %v2214, 16
        %v2433 = vrot.slane %v2431, 3
        %v2434 = vshll.u32 %v2214, 16
        %v2436 = vrot.slane %v2434, 4
        %v2437 = vor.u32 %v2433, %v2436
        %v2438 = vsel %vm773, %v2428, %v2437
        %v2479 = vunpack.c.l.b16 %v2076
        %v2480 = vunpack.c.l.b16 %v2077
        %v2481 = vunpack.c.l.b16 %v2078
        %v2482 = vunpack.c.l.b16 %v2079
        %v2483 = vunpack.c.l.b16 %v2080
        %v2484 = vunpack.c.l.b16 %v2081
        %v2485 = vunpack.c.l.b16 %v2082
        %v2486 = vunpack.c.l.b16 %v2083
        %v2487 = vunpack.c.l.b16 %v2084
        %v2488 = vunpack.c.l.b16 %v2085
        %v2489 = vunpack.c.l.b16 %v2086
        %v2490 = vunpack.c.l.b16 %v2087
        %v2491 = vunpack.c.l.b16 %v2088
        %v2492 = vunpack.c.l.b16 %v2089
        %v2493 = vunpack.c.l.b16 %v2090
        %v2494 = vunpack.c.l.b16 %v2091
        %v2495 = vpack.c.b16 %v2480, %v2479
        %v2496 = vpack.c.b16 %v2482, %v2481
        %v2497 = vpack.c.b16 %v2484, %v2483
        %v2498 = vpack.c.b16 %v2486, %v2485
        %v2499 = vpack.c.b16 %v2488, %v2487
        %v2500 = vpack.c.b16 %v2490, %v2489
        %v2501 = vpack.c.b16 %v2492, %v2491
        %v2502 = vpack.c.b16 %v2494, %v2493
        %2511 = vmatprep.subr.bf16.mxu0 0
        %2512 = vmatpush1.bf16.msra.mxu0 %v2495
        %2513 = vmatprep.subr.bf16.mxu0 0
        %2514 = vmatpush1.bf16.msra.mxu0 %v2496
        %2515 = vmatprep.subr.bf16.mxu0 0
        %2516 = vmatpush1.bf16.msra.mxu0 %v2497
        %2517 = vmatprep.subr.bf16.mxu0 0
        %2518 = vmatpush1.bf16.msra.mxu0 %v2498
        %2519 = vmatprep.subr.bf16.mxu0 0
        %2520 = vmatpush1.bf16.msra.mxu0 %v2499
        %2521 = vmatprep.subr.bf16.mxu0 0
        %2522 = vmatpush1.bf16.msra.mxu0 %v2500
        %2523 = vmatprep.subr.bf16.mxu0 0
        %2524 = vmatpush1.bf16.msra.mxu0 %v2501
        %2525 = vmatprep.subr.bf16.mxu0 0
        %2526 = vmatpush1.bf16.msra.mxu0 %v2502
        %2527 = vmatprep.subr.bf16.mxu0 0
        %2528 = vmatpush1.bf16.msra.mxu0 0
        %2529 = vmatprep.subr.bf16.mxu0 0
        %2530 = vmatpush1.bf16.msra.mxu0 0
        %2531 = vmatprep.subr.bf16.mxu0 0
        %2532 = vmatpush1.bf16.msra.mxu0 0
        %2533 = vmatprep.subr.bf16.mxu0 0
        %2534 = vmatpush1.bf16.msra.mxu0 0
        %2535 = vmatprep.subr.bf16.mxu0 0
        %2536 = vmatpush1.bf16.msra.mxu0 0
        %2537 = vmatprep.subr.bf16.mxu0 0
        %2538 = vmatpush1.bf16.msra.mxu0 0
        %2539 = vmatprep.subr.bf16.mxu0 0
        %2540 = vmatpush1.bf16.msra.mxu0 0
        %2541 = vmatprep.subr.bf16.mxu0 0
        %2542 = vmatpush1.bf16.msra.mxu0 0
        %2543 = vmatprep.mubr.bf16.mxu0 0
        %2544 = vmatmul.mubr.bf16.gmra.mrb[0].mxu0 %v2231
        %v2545 = vpop.f32.mrb[0].mxu0
        %v2546 = vadd.f32 0.0, %v2545
        %v2547 = vpop.f32.mrb[0].mxu0
        %v2548 = vpop.f32.mrb[0].mxu0
        %v2549 = vadd.f32 0.0, %v2548
        %v2550 = vpop.f32.mrb[0].mxu0
        %2551 = vmatprep.mubr.bf16.mxu0 0
        %2552 = vmatmul.mubr.bf16.gmra.mrb[0].mxu0 %v2240
        %v2553 = vpop.f32.mrb[0].mxu0
        %v2554 = vadd.f32 0.0, %v2553
        %v2555 = vpop.f32.mrb[0].mxu0
        %v2556 = vpop.f32.mrb[0].mxu0
        %v2557 = vadd.f32 0.0, %v2556
        %v2558 = vpop.f32.mrb[0].mxu0
        %2559 = vmatprep.mubr.bf16.mxu0 0
        %2560 = vmatmul.mubr.bf16.gmra.mrb[0].mxu0 %v2249
        %v2561 = vpop.f32.mrb[0].mxu0
        %v2562 = vadd.f32 0.0, %v2561
        %v2563 = vpop.f32.mrb[0].mxu0
        %v2564 = vpop.f32.mrb[0].mxu0
        %v2565 = vadd.f32 0.0, %v2564
        %v2566 = vpop.f32.mrb[0].mxu0
        %2567 = vmatprep.mubr.bf16.mxu0 0
        %2568 = vmatmul.mubr.bf16.gmra.mrb[0].mxu0 %v2258
        %v2569 = vpop.f32.mrb[0].mxu0
        %v2570 = vadd.f32 0.0, %v2569
        %v2571 = vpop.f32.mrb[0].mxu0
        %v2572 = vpop.f32.mrb[0].mxu0
        %v2573 = vadd.f32 0.0, %v2572
        %v2574 = vpop.f32.mrb[0].mxu0
        %2575 = vmatprep.mubr.bf16.mxu0 0
        %2576 = vmatmul.mubr.bf16.gmra.mrb[0].mxu0 %v2267
        %v2577 = vpop.f32.mrb[0].mxu0
        %v2578 = vadd.f32 0.0, %v2577
        %v2579 = vpop.f32.mrb[0].mxu0
        %v2580 = vpop.f32.mrb[0].mxu0
        %v2581 = vadd.f32 0.0, %v2580
        %v2582 = vpop.f32.mrb[0].mxu0
        %2583 = vmatprep.mubr.bf16.mxu0 0
        %2584 = vmatmul.mubr.bf16.gmra.mrb[0].mxu0 %v2276
        %v2585 = vpop.f32.mrb[0].mxu0
        %v2586 = vadd.f32 0.0, %v2585
        %v2587 = vpop.f32.mrb[0].mxu0
        %v2588 = vpop.f32.mrb[0].mxu0
        %v2589 = vadd.f32 0.0, %v2588
        %v2590 = vpop.f32.mrb[0].mxu0
        %2591 = vmatprep.mubr.bf16.mxu0 0
        %2592 = vmatmul.mubr.bf16.gmra.mrb[0].mxu0 %v2285
        %v2593 = vpop.f32.mrb[0].mxu0
        %v2594 = vadd.f32 0.0, %v2593
        %v2595 = vpop.f32.mrb[0].mxu0
        %v2596 = vpop.f32.mrb[0].mxu0
        %v2597 = vadd.f32 0.0, %v2596
        %v2598 = vpop.f32.mrb[0].mxu0
        %2599 = vmatprep.mubr.bf16.mxu0 0
        %2600 = vmatmul.mubr.bf16.gmra.mrb[0].mxu0 %v2294
        %v2601 = vpop.f32.mrb[0].mxu0
        %v2602 = vadd.f32 0.0, %v2601
        %v2603 = vpop.f32.mrb[0].mxu0
        %v2604 = vpop.f32.mrb[0].mxu0
        %v2605 = vadd.f32 0.0, %v2604
        %v2606 = vpop.f32.mrb[0].mxu0
        %2607 = vmatprep.mubr.bf16.mxu0 0
        %2608 = vmatmul.mubr.bf16.gmra.mrb[0].mxu0 %v2303
        %v2609 = vpop.f32.mrb[0].mxu0
        %v2610 = vadd.f32 0.0, %v2609
        %v2611 = vpop.f32.mrb[0].mxu0
        %v2612 = vpop.f32.mrb[0].mxu0
        %v2613 = vadd.f32 0.0, %v2612
        %v2614 = vpop.f32.mrb[0].mxu0
        %2615 = vmatprep.mubr.bf16.mxu0 0
        %2616 = vmatmul.mubr.bf16.gmra.mrb[0].mxu0 %v2312
        %v2617 = vpop.f32.mrb[0].mxu0
        %v2618 = vadd.f32 0.0, %v2617
        %v2619 = vpop.f32.mrb[0].mxu0
        %v2620 = vpop.f32.mrb[0].mxu0
        %v2621 = vadd.f32 0.0, %v2620
        %v2622 = vpop.f32.mrb[0].mxu0
        %2623 = vmatprep.mubr.bf16.mxu0 0
        %2624 = vmatmul.mubr.bf16.gmra.mrb[0].mxu0 %v2321
        %v2625 = vpop.f32.mrb[0].mxu0
        %v2626 = vadd.f32 0.0, %v2625
        %v2627 = vpop.f32.mrb[0].mxu0
        %v2628 = vpop.f32.mrb[0].mxu0
        %v2629 = vadd.f32 0.0, %v2628
        %v2630 = vpop.f32.mrb[0].mxu0
        %2631 = vmatprep.mubr.bf16.mxu0 0
        %2632 = vmatmul.mubr.bf16.gmra.mrb[0].mxu0 %v2330
        %v2633 = vpop.f32.mrb[0].mxu0
        %v2634 = vadd.f32 0.0, %v2633
        %v2635 = vpop.f32.mrb[0].mxu0
        %v2636 = vpop.f32.mrb[0].mxu0
        %v2637 = vadd.f32 0.0, %v2636
        %v2638 = vpop.f32.mrb[0].mxu0
        %2639 = vmatprep.mubr.bf16.mxu0 0
        %2640 = vmatmul.mubr.bf16.gmra.mrb[0].mxu0 %v2339
        %v2641 = vpop.f32.mrb[0].mxu0
        %v2642 = vadd.f32 0.0, %v2641
        %v2643 = vpop.f32.mrb[0].mxu0
        %v2644 = vpop.f32.mrb[0].mxu0
        %v2645 = vadd.f32 0.0, %v2644
        %v2646 = vpop.f32.mrb[0].mxu0
        %2647 = vmatprep.mubr.bf16.mxu0 0
        %2648 = vmatmul.mubr.bf16.gmra.mrb[0].mxu0 %v2348
        %v2649 = vpop.f32.mrb[0].mxu0
        %v2650 = vadd.f32 0.0, %v2649
        %v2651 = vpop.f32.mrb[0].mxu0
        %v2652 = vpop.f32.mrb[0].mxu0
        %v2653 = vadd.f32 0.0, %v2652
        %v2654 = vpop.f32.mrb[0].mxu0
        %2655 = vmatprep.mubr.bf16.mxu0 0
        %2656 = vmatmul.mubr.bf16.gmra.mrb[0].mxu0 %v2357
        %v2657 = vpop.f32.mrb[0].mxu0
        %v2658 = vadd.f32 0.0, %v2657
        %v2659 = vpop.f32.mrb[0].mxu0
        %v2660 = vpop.f32.mrb[0].mxu0
        %v2661 = vadd.f32 0.0, %v2660
        %v2662 = vpop.f32.mrb[0].mxu0
        %2663 = vmatprep.mubr.bf16.mxu0 0
        %2664 = vmatmul.mubr.bf16.gmra.mrb[0].mxu0 %v2366
        %v2665 = vpop.f32.mrb[0].mxu0
        %v2666 = vadd.f32 0.0, %v2665
        %v2667 = vpop.f32.mrb[0].mxu0
        %v2668 = vpop.f32.mrb[0].mxu0
        %v2669 = vadd.f32 0.0, %v2668
        %v2670 = vpop.f32.mrb[0].mxu0
        %2671 = vmatprep.mubr.bf16.mxu0 0
        %2672 = vmatmul.mubr.bf16.gmra.mrb[0].mxu0 %v2375
        %v2673 = vpop.f32.mrb[0].mxu0
        %v2674 = vadd.f32 0.0, %v2673
        %v2675 = vpop.f32.mrb[0].mxu0
        %v2676 = vpop.f32.mrb[0].mxu0
        %v2677 = vadd.f32 0.0, %v2676
        %v2678 = vpop.f32.mrb[0].mxu0
        %2679 = vmatprep.mubr.bf16.mxu0 0
        %2680 = vmatmul.mubr.bf16.gmra.mrb[0].mxu0 %v2384
        %v2681 = vpop.f32.mrb[0].mxu0
        %v2682 = vadd.f32 0.0, %v2681
        %v2683 = vpop.f32.mrb[0].mxu0
        %v2684 = vpop.f32.mrb[0].mxu0
        %v2685 = vadd.f32 0.0, %v2684
        %v2686 = vpop.f32.mrb[0].mxu0
        %2687 = vmatprep.mubr.bf16.mxu0 0
        %2688 = vmatmul.mubr.bf16.gmra.mrb[0].mxu0 %v2393
        %v2689 = vpop.f32.mrb[0].mxu0
        %v2690 = vadd.f32 0.0, %v2689
        %v2691 = vpop.f32.mrb[0].mxu0
        %v2692 = vpop.f32.mrb[0].mxu0
        %v2693 = vadd.f32 0.0, %v2692
        %v2694 = vpop.f32.mrb[0].mxu0
        %2695 = vmatprep.mubr.bf16.mxu0 0
        %2696 = vmatmul.mubr.bf16.gmra.mrb[0].mxu0 %v2402
        %v2697 = vpop.f32.mrb[0].mxu0
        %v2698 = vadd.f32 0.0, %v2697
        %v2699 = vpop.f32.mrb[0].mxu0
        %v2700 = vpop.f32.mrb[0].mxu0
        %v2701 = vadd.f32 0.0, %v2700
        %v2702 = vpop.f32.mrb[0].mxu0
        %2703 = vmatprep.mubr.bf16.mxu0 0
        %2704 = vmatmul.mubr.bf16.gmra.mrb[0].mxu0 %v2411
        %v2705 = vpop.f32.mrb[0].mxu0
        %v2706 = vadd.f32 0.0, %v2705
        %v2707 = vpop.f32.mrb[0].mxu0
        %v2708 = vpop.f32.mrb[0].mxu0
        %v2709 = vadd.f32 0.0, %v2708
        %v2710 = vpop.f32.mrb[0].mxu0
        %2711 = vmatprep.mubr.bf16.mxu0 0
        %2712 = vmatmul.mubr.bf16.gmra.mrb[0].mxu0 %v2420
        %v2713 = vpop.f32.mrb[0].mxu0
        %v2714 = vadd.f32 0.0, %v2713
        %v2715 = vpop.f32.mrb[0].mxu0
        %v2716 = vpop.f32.mrb[0].mxu0
        %v2717 = vadd.f32 0.0, %v2716
        %v2718 = vpop.f32.mrb[0].mxu0
        %2719 = vmatprep.mubr.bf16.mxu0 0
        %2720 = vmatmul.mubr.bf16.gmra.mrb[0].mxu0 %v2429
        %v2721 = vpop.f32.mrb[0].mxu0
        %v2722 = vadd.f32 0.0, %v2721
        %v2723 = vpop.f32.mrb[0].mxu0
        %v2724 = vpop.f32.mrb[0].mxu0
        %v2725 = vadd.f32 0.0, %v2724
        %v2726 = vpop.f32.mrb[0].mxu0
        %2727 = vmatprep.mubr.bf16.mxu0 0
        %2728 = vmatmul.mubr.bf16.gmra.mrb[0].mxu0 %v2438
        %v2729 = vpop.f32.mrb[0].mxu0
        %v2730 = vadd.f32 0.0, %v2729
        %v2731 = vpop.f32.mrb[0].mxu0
        %v2732 = vpop.f32.mrb[0].mxu0
        %v2733 = vadd.f32 0.0, %v2732
        %v2734 = vpop.f32.mrb[0].mxu0
        %2735 = vdwg.mxu0
        %v2736 = vadd.f32 %v1978, %v2546
        %v2737 = vadd.f32 %v1979, %v2549
        %v2738 = vadd.f32 %v1980, %v2554
        %v2739 = vadd.f32 %v1981, %v2557
        %v2740 = vadd.f32 %v1982, %v2562
        %v2741 = vadd.f32 %v1983, %v2565
        %v2742 = vadd.f32 %v1984, %v2570
        %v2743 = vadd.f32 %v1985, %v2573
        %v2744 = vadd.f32 %v1986, %v2578
        %v2745 = vadd.f32 %v1987, %v2581
        %v2746 = vadd.f32 %v1988, %v2586
        %v2747 = vadd.f32 %v1989, %v2589
        %v2748 = vadd.f32 %v1990, %v2594
        %v2749 = vadd.f32 %v1991, %v2597
        %v2750 = vadd.f32 %v1992, %v2602
        %v2751 = vadd.f32 %v1993, %v2605
        %v2752 = vadd.f32 %v1994, %v2610
        %v2753 = vadd.f32 %v1995, %v2613
        %v2754 = vadd.f32 %v1996, %v2618
        %v2755 = vadd.f32 %v1997, %v2621
        %v2756 = vadd.f32 %v1998, %v2626
        %v2757 = vadd.f32 %v1999, %v2629
        %v2758 = vadd.f32 %v2000, %v2634
        %v2759 = vadd.f32 %v2001, %v2637
        %v2760 = vadd.f32 %v2002, %v2642
        %v2761 = vadd.f32 %v2003, %v2645
        %v2762 = vadd.f32 %v2004, %v2650
        %v2763 = vadd.f32 %v2005, %v2653
        %v2764 = vadd.f32 %v2006, %v2658
        %v2765 = vadd.f32 %v2007, %v2661
        %v2766 = vadd.f32 %v2008, %v2666
        %v2767 = vadd.f32 %v2009, %v2669
        %v2768 = vadd.f32 %v2010, %v2674
        %v2769 = vadd.f32 %v2011, %v2677
        %v2770 = vadd.f32 %v2012, %v2682
        %v2771 = vadd.f32 %v2013, %v2685
        %v2772 = vadd.f32 %v2014, %v2690
        %v2773 = vadd.f32 %v2015, %v2693
        %v2774 = vadd.f32 %v2016, %v2698
        %v2775 = vadd.f32 %v2017, %v2701
        %v2776 = vadd.f32 %v2018, %v2706
        %v2777 = vadd.f32 %v2019, %v2709
        %v2778 = vadd.f32 %v2020, %v2714
        %v2779 = vadd.f32 %v2021, %v2717
        %v2780 = vadd.f32 %v2022, %v2722
        %v2781 = vadd.f32 %v2023, %v2725
        %v2782 = vadd.f32 %v2024, %v2730
        %v2783 = vadd.f32 %v2025, %v2733
        %s2784 = scalar_lea.vmem [#allocation6], 256
        %v2785 = vld [vmem:[%s2784] sm:$0xf]
        %v2786 = vld [vmem:[%s2784 + $0x4] sm:$0xf]
        %v2787 = vld [vmem:[%s2784 + $0x8] sm:$0xf]
        %v2788 = vld [vmem:[%s2784 + $0xc] sm:$0xf]
        %v2789 = vld [vmem:[%s2784 + $0x10] sm:$0xf]
        %v2790 = vld [vmem:[%s2784 + $0x14] sm:$0xf]
        %v2791 = vld [vmem:[%s2784 + $0x18] sm:$0xf]
        %v2792 = vld [vmem:[%s2784 + $0x1c] sm:$0xf]
        %v2793 = vld [vmem:[%s2784 + $0x20] sm:$0xf]
        %v2794 = vld [vmem:[%s2784 + $0x24] sm:$0xf]
        %v2795 = vld [vmem:[%s2784 + $0x28] sm:$0xf]
        %v2796 = vld [vmem:[%s2784 + $0x2c] sm:$0xf]
        %v2797 = vld [vmem:[%s2784 + $0x30] sm:$0xf]
        %v2798 = vld [vmem:[%s2784 + $0x34] sm:$0xf]
        %v2799 = vld [vmem:[%s2784 + $0x38] sm:$0xf]
        %v2800 = vld [vmem:[%s2784 + $0x3c] sm:$0xf]
        %v2801 = vpack.c.b16 %v2143, %v2142
        %v2802 = vpack.c.b16 %v2145, %v2144
        %v2803 = vpack.c.b16 %v2147, %v2146
        %v2804 = vpack.c.b16 %v2149, %v2148
        %v2805 = vpack.c.b16 %v2151, %v2150
        %v2806 = vpack.c.b16 %v2153, %v2152
        %v2807 = vpack.c.b16 %v2155, %v2154
        %v2808 = vpack.c.b16 %v2157, %v2156
        %v2809 = vpack.c.b16 %v2159, %v2158
        %v2810 = vpack.c.b16 %v2161, %v2160
        %v2811 = vpack.c.b16 %v2163, %v2162
        %v2812 = vpack.c.b16 %v2165, %v2164
        %v2813 = vpack.c.b16 %v2167, %v2166
        %v2814 = vpack.c.b16 %v2169, %v2168
        %v2815 = vpack.c.b16 %v2171, %v2170
        %v2816 = vpack.c.b16 %v2173, %v2172
        %v2817 = vpack.c.b16 %v2175, %v2174
        %v2818 = vpack.c.b16 %v2177, %v2176
        %v2819 = vpack.c.b16 %v2179, %v2178
        %v2820 = vpack.c.b16 %v2181, %v2180
        %v2821 = vpack.c.b16 %v2183, %v2182
        %v2822 = vpack.c.b16 %v2185, %v2184
        %v2823 = vpack.c.b16 %v2187, %v2186
        %v2824 = vpack.c.b16 %v2189, %v2188
        %v2865 = vunpack.c.l.b16 %v2785
        %v2866 = vunpack.c.l.b16 %v2786
        %v2867 = vunpack.c.l.b16 %v2787
        %v2868 = vunpack.c.l.b16 %v2788
        %v2869 = vunpack.c.l.b16 %v2789
        %v2870 = vunpack.c.l.b16 %v2790
        %v2871 = vunpack.c.l.b16 %v2791
        %v2872 = vunpack.c.l.b16 %v2792
        %v2873 = vunpack.c.l.b16 %v2793
        %v2874 = vunpack.c.l.b16 %v2794
        %v2875 = vunpack.c.l.b16 %v2795
        %v2876 = vunpack.c.l.b16 %v2796
        %v2877 = vunpack.c.l.b16 %v2797
        %v2878 = vunpack.c.l.b16 %v2798
        %v2879 = vunpack.c.l.b16 %v2799
        %v2880 = vunpack.c.l.b16 %v2800
        %v2881 = vpack.c.b16 %v2866, %v2865
        %v2882 = vpack.c.b16 %v2868, %v2867
        %v2883 = vpack.c.b16 %v2870, %v2869
        %v2884 = vpack.c.b16 %v2872, %v2871
        %v2885 = vpack.c.b16 %v2874, %v2873
        %v2886 = vpack.c.b16 %v2876, %v2875
        %v2887 = vpack.c.b16 %v2878, %v2877
        %v2888 = vpack.c.b16 %v2880, %v2879
        %2897 = vmatprep.subr.bf16.mxu0 0
        %2898 = vmatpush1.bf16.msra.mxu0 %v2881
        %2899 = vmatprep.subr.bf16.mxu0 0
        %2900 = vmatpush1.bf16.msra.mxu0 %v2882
        %2901 = vmatprep.subr.bf16.mxu0 0
        %2902 = vmatpush1.bf16.msra.mxu0 %v2883
        %2903 = vmatprep.subr.bf16.mxu0 0
        %2904 = vmatpush1.bf16.msra.mxu0 %v2884
        %2905 = vmatprep.subr.bf16.mxu0 0
        %2906 = vmatpush1.bf16.msra.mxu0 %v2885
        %2907 = vmatprep.subr.bf16.mxu0 0
        %2908 = vmatpush1.bf16.msra.mxu0 %v2886
        %2909 = vmatprep.subr.bf16.mxu0 0
        %2910 = vmatpush1.bf16.msra.mxu0 %v2887
        %2911 = vmatprep.subr.bf16.mxu0 0
        %2912 = vmatpush1.bf16.msra.mxu0 %v2888
        %2913 = vmatprep.subr.bf16.mxu0 0
        %2914 = vmatpush1.bf16.msra.mxu0 0
        %2915 = vmatprep.subr.bf16.mxu0 0
        %2916 = vmatpush1.bf16.msra.mxu0 0
        %2917 = vmatprep.subr.bf16.mxu0 0
        %2918 = vmatpush1.bf16.msra.mxu0 0
        %2919 = vmatprep.subr.bf16.mxu0 0
        %2920 = vmatpush1.bf16.msra.mxu0 0
        %2921 = vmatprep.subr.bf16.mxu0 0
        %2922 = vmatpush1.bf16.msra.mxu0 0
        %2923 = vmatprep.subr.bf16.mxu0 0
        %2924 = vmatpush1.bf16.msra.mxu0 0
        %2925 = vmatprep.subr.bf16.mxu0 0
        %2926 = vmatpush1.bf16.msra.mxu0 0
        %2927 = vmatprep.subr.bf16.mxu0 0
        %2928 = vmatpush1.bf16.msra.mxu0 0
        %2929 = vmatprep.mubr.bf16.mxu0 0
        %2930 = vmatmul.mubr.bf16.gmra.mrb[0].mxu0 %v2801
        %v2931 = vpop.f32.mrb[0].mxu0
        %v2932 = vadd.f32 0.0, %v2931
        %v2933 = vpop.f32.mrb[0].mxu0
        %v2934 = vpop.f32.mrb[0].mxu0
        %v2935 = vadd.f32 0.0, %v2934
        %v2936 = vpop.f32.mrb[0].mxu0
        %2937 = vmatprep.mubr.bf16.mxu0 0
        %2938 = vmatmul.mubr.bf16.gmra.mrb[0].mxu0 %v2802
        %v2939 = vpop.f32.mrb[0].mxu0
        %v2940 = vadd.f32 0.0, %v2939
        %v2941 = vpop.f32.mrb[0].mxu0
        %v2942 = vpop.f32.mrb[0].mxu0
        %v2943 = vadd.f32 0.0, %v2942
        %v2944 = vpop.f32.mrb[0].mxu0
        %2945 = vmatprep.mubr.bf16.mxu0 0
        %2946 = vmatmul.mubr.bf16.gmra.mrb[0].mxu0 %v2803
        %v2947 = vpop.f32.mrb[0].mxu0
        %v2948 = vadd.f32 0.0, %v2947
        %v2949 = vpop.f32.mrb[0].mxu0
        %v2950 = vpop.f32.mrb[0].mxu0
        %v2951 = vadd.f32 0.0, %v2950
        %v2952 = vpop.f32.mrb[0].mxu0
        %2953 = vmatprep.mubr.bf16.mxu0 0
        %2954 = vmatmul.mubr.bf16.gmra.mrb[0].mxu0 %v2804
        %v2955 = vpop.f32.mrb[0].mxu0
        %v2956 = vadd.f32 0.0, %v2955
        %v2957 = vpop.f32.mrb[0].mxu0
        %v2958 = vpop.f32.mrb[0].mxu0
        %v2959 = vadd.f32 0.0, %v2958
        %v2960 = vpop.f32.mrb[0].mxu0
        %2961 = vmatprep.mubr.bf16.mxu0 0
        %2962 = vmatmul.mubr.bf16.gmra.mrb[0].mxu0 %v2805
        %v2963 = vpop.f32.mrb[0].mxu0
        %v2964 = vadd.f32 0.0, %v2963
        %v2965 = vpop.f32.mrb[0].mxu0
        %v2966 = vpop.f32.mrb[0].mxu0
        %v2967 = vadd.f32 0.0, %v2966
        %v2968 = vpop.f32.mrb[0].mxu0
        %2969 = vmatprep.mubr.bf16.mxu0 0
        %2970 = vmatmul.mubr.bf16.gmra.mrb[0].mxu0 %v2806
        %v2971 = vpop.f32.mrb[0].mxu0
        %v2972 = vadd.f32 0.0, %v2971
        %v2973 = vpop.f32.mrb[0].mxu0
        %v2974 = vpop.f32.mrb[0].mxu0
        %v2975 = vadd.f32 0.0, %v2974
        %v2976 = vpop.f32.mrb[0].mxu0
        %2977 = vmatprep.mubr.bf16.mxu0 0
        %2978 = vmatmul.mubr.bf16.gmra.mrb[0].mxu0 %v2807
        %v2979 = vpop.f32.mrb[0].mxu0
        %v2980 = vadd.f32 0.0, %v2979
        %v2981 = vpop.f32.mrb[0].mxu0
        %v2982 = vpop.f32.mrb[0].mxu0
        %v2983 = vadd.f32 0.0, %v2982
        %v2984 = vpop.f32.mrb[0].mxu0
        %2985 = vmatprep.mubr.bf16.mxu0 0
        %2986 = vmatmul.mubr.bf16.gmra.mrb[0].mxu0 %v2808
        %v2987 = vpop.f32.mrb[0].mxu0
        %v2988 = vadd.f32 0.0, %v2987
        %v2989 = vpop.f32.mrb[0].mxu0
        %v2990 = vpop.f32.mrb[0].mxu0
        %v2991 = vadd.f32 0.0, %v2990
        %v2992 = vpop.f32.mrb[0].mxu0
        %2993 = vmatprep.mubr.bf16.mxu0 0
        %2994 = vmatmul.mubr.bf16.gmra.mrb[0].mxu0 %v2809
        %v2995 = vpop.f32.mrb[0].mxu0
        %v2996 = vadd.f32 0.0, %v2995
        %v2997 = vpop.f32.mrb[0].mxu0
        %v2998 = vpop.f32.mrb[0].mxu0
        %v2999 = vadd.f32 0.0, %v2998
        %v3000 = vpop.f32.mrb[0].mxu0
        %3001 = vmatprep.mubr.bf16.mxu0 0
        %3002 = vmatmul.mubr.bf16.gmra.mrb[0].mxu0 %v2810
        %v3003 = vpop.f32.mrb[0].mxu0
        %v3004 = vadd.f32 0.0, %v3003
        %v3005 = vpop.f32.mrb[0].mxu0
        %v3006 = vpop.f32.mrb[0].mxu0
        %v3007 = vadd.f32 0.0, %v3006
        %v3008 = vpop.f32.mrb[0].mxu0
        %3009 = vmatprep.mubr.bf16.mxu0 0
        %3010 = vmatmul.mubr.bf16.gmra.mrb[0].mxu0 %v2811
        %v3011 = vpop.f32.mrb[0].mxu0
        %v3012 = vadd.f32 0.0, %v3011
        %v3013 = vpop.f32.mrb[0].mxu0
        %v3014 = vpop.f32.mrb[0].mxu0
        %v3015 = vadd.f32 0.0, %v3014
        %v3016 = vpop.f32.mrb[0].mxu0
        %3017 = vmatprep.mubr.bf16.mxu0 0
        %3018 = vmatmul.mubr.bf16.gmra.mrb[0].mxu0 %v2812
        %v3019 = vpop.f32.mrb[0].mxu0
        %v3020 = vadd.f32 0.0, %v3019
        %v3021 = vpop.f32.mrb[0].mxu0
        %v3022 = vpop.f32.mrb[0].mxu0
        %v3023 = vadd.f32 0.0, %v3022
        %v3024 = vpop.f32.mrb[0].mxu0
        %3025 = vmatprep.mubr.bf16.mxu0 0
        %3026 = vmatmul.mubr.bf16.gmra.mrb[0].mxu0 %v2813
        %v3027 = vpop.f32.mrb[0].mxu0
        %v3028 = vadd.f32 0.0, %v3027
        %v3029 = vpop.f32.mrb[0].mxu0
        %v3030 = vpop.f32.mrb[0].mxu0
        %v3031 = vadd.f32 0.0, %v3030
        %v3032 = vpop.f32.mrb[0].mxu0
        %3033 = vmatprep.mubr.bf16.mxu0 0
        %3034 = vmatmul.mubr.bf16.gmra.mrb[0].mxu0 %v2814
        %v3035 = vpop.f32.mrb[0].mxu0
        %v3036 = vadd.f32 0.0, %v3035
        %v3037 = vpop.f32.mrb[0].mxu0
        %v3038 = vpop.f32.mrb[0].mxu0
        %v3039 = vadd.f32 0.0, %v3038
        %v3040 = vpop.f32.mrb[0].mxu0
        %3041 = vmatprep.mubr.bf16.mxu0 0
        %3042 = vmatmul.mubr.bf16.gmra.mrb[0].mxu0 %v2815
        %v3043 = vpop.f32.mrb[0].mxu0
        %v3044 = vadd.f32 0.0, %v3043
        %v3045 = vpop.f32.mrb[0].mxu0
        %v3046 = vpop.f32.mrb[0].mxu0
        %v3047 = vadd.f32 0.0, %v3046
        %v3048 = vpop.f32.mrb[0].mxu0
        %3049 = vmatprep.mubr.bf16.mxu0 0
        %3050 = vmatmul.mubr.bf16.gmra.mrb[0].mxu0 %v2816
        %v3051 = vpop.f32.mrb[0].mxu0
        %v3052 = vadd.f32 0.0, %v3051
        %v3053 = vpop.f32.mrb[0].mxu0
        %v3054 = vpop.f32.mrb[0].mxu0
        %v3055 = vadd.f32 0.0, %v3054
        %v3056 = vpop.f32.mrb[0].mxu0
        %3057 = vmatprep.mubr.bf16.mxu0 0
        %3058 = vmatmul.mubr.bf16.gmra.mrb[0].mxu0 %v2817
        %v3059 = vpop.f32.mrb[0].mxu0
        %v3060 = vadd.f32 0.0, %v3059
        %v3061 = vpop.f32.mrb[0].mxu0
        %v3062 = vpop.f32.mrb[0].mxu0
        %v3063 = vadd.f32 0.0, %v3062
        %v3064 = vpop.f32.mrb[0].mxu0
        %3065 = vmatprep.mubr.bf16.mxu0 0
        %3066 = vmatmul.mubr.bf16.gmra.mrb[0].mxu0 %v2818
        %v3067 = vpop.f32.mrb[0].mxu0
        %v3068 = vadd.f32 0.0, %v3067
        %v3069 = vpop.f32.mrb[0].mxu0
        %v3070 = vpop.f32.mrb[0].mxu0
        %v3071 = vadd.f32 0.0, %v3070
        %v3072 = vpop.f32.mrb[0].mxu0
        %3073 = vmatprep.mubr.bf16.mxu0 0
        %3074 = vmatmul.mubr.bf16.gmra.mrb[0].mxu0 %v2819
        %v3075 = vpop.f32.mrb[0].mxu0
        %v3076 = vadd.f32 0.0, %v3075
        %v3077 = vpop.f32.mrb[0].mxu0
        %v3078 = vpop.f32.mrb[0].mxu0
        %v3079 = vadd.f32 0.0, %v3078
        %v3080 = vpop.f32.mrb[0].mxu0
        %3081 = vmatprep.mubr.bf16.mxu0 0
        %3082 = vmatmul.mubr.bf16.gmra.mrb[0].mxu0 %v2820
        %v3083 = vpop.f32.mrb[0].mxu0
        %v3084 = vadd.f32 0.0, %v3083
        %v3085 = vpop.f32.mrb[0].mxu0
        %v3086 = vpop.f32.mrb[0].mxu0
        %v3087 = vadd.f32 0.0, %v3086
        %v3088 = vpop.f32.mrb[0].mxu0
        %3089 = vmatprep.mubr.bf16.mxu0 0
        %3090 = vmatmul.mubr.bf16.gmra.mrb[0].mxu0 %v2821
        %v3091 = vpop.f32.mrb[0].mxu0
        %v3092 = vadd.f32 0.0, %v3091
        %v3093 = vpop.f32.mrb[0].mxu0
        %v3094 = vpop.f32.mrb[0].mxu0
        %v3095 = vadd.f32 0.0, %v3094
        %v3096 = vpop.f32.mrb[0].mxu0
        %3097 = vmatprep.mubr.bf16.mxu0 0
        %3098 = vmatmul.mubr.bf16.gmra.mrb[0].mxu0 %v2822
        %v3099 = vpop.f32.mrb[0].mxu0
        %v3100 = vadd.f32 0.0, %v3099
        %v3101 = vpop.f32.mrb[0].mxu0
        %v3102 = vpop.f32.mrb[0].mxu0
        %v3103 = vadd.f32 0.0, %v3102
        %v3104 = vpop.f32.mrb[0].mxu0
        %3105 = vmatprep.mubr.bf16.mxu0 0
        %3106 = vmatmul.mubr.bf16.gmra.mrb[0].mxu0 %v2823
        %v3107 = vpop.f32.mrb[0].mxu0
        %v3108 = vadd.f32 0.0, %v3107
        %v3109 = vpop.f32.mrb[0].mxu0
        %v3110 = vpop.f32.mrb[0].mxu0
        %v3111 = vadd.f32 0.0, %v3110
        %v3112 = vpop.f32.mrb[0].mxu0
        %3113 = vmatprep.mubr.bf16.mxu0 0
        %3114 = vmatmul.mubr.bf16.gmra.mrb[0].mxu0 %v2824
        %v3115 = vpop.f32.mrb[0].mxu0
        %v3116 = vadd.f32 0.0, %v3115
        %v3117 = vpop.f32.mrb[0].mxu0
        %v3118 = vpop.f32.mrb[0].mxu0
        %v3119 = vadd.f32 0.0, %v3118
        %v3120 = vpop.f32.mrb[0].mxu0
        %3121 = vdwg.mxu0
        %v3122 = vadd.f32 %v2736, %v2932
        %v3123 = vadd.f32 %v2737, %v2935
        %v3124 = vadd.f32 %v2738, %v2940
        %v3125 = vadd.f32 %v2739, %v2943
        %v3126 = vadd.f32 %v2740, %v2948
        %v3127 = vadd.f32 %v2741, %v2951
        %v3128 = vadd.f32 %v2742, %v2956
        %v3129 = vadd.f32 %v2743, %v2959
        %v3130 = vadd.f32 %v2744, %v2964
        %v3131 = vadd.f32 %v2745, %v2967
        %v3132 = vadd.f32 %v2746, %v2972
        %v3133 = vadd.f32 %v2747, %v2975
        %v3134 = vadd.f32 %v2748, %v2980
        %v3135 = vadd.f32 %v2749, %v2983
        %v3136 = vadd.f32 %v2750, %v2988
        %v3137 = vadd.f32 %v2751, %v2991
        %v3138 = vadd.f32 %v2752, %v2996
        %v3139 = vadd.f32 %v2753, %v2999
        %v3140 = vadd.f32 %v2754, %v3004
        %v3141 = vadd.f32 %v2755, %v3007
        %v3142 = vadd.f32 %v2756, %v3012
        %v3143 = vadd.f32 %v2757, %v3015
        %v3144 = vadd.f32 %v2758, %v3020
        %v3145 = vadd.f32 %v2759, %v3023
        %v3146 = vadd.f32 %v2760, %v3028
        %v3147 = vadd.f32 %v2761, %v3031
        %v3148 = vadd.f32 %v2762, %v3036
        %v3149 = vadd.f32 %v2763, %v3039
        %v3150 = vadd.f32 %v2764, %v3044
        %v3151 = vadd.f32 %v2765, %v3047
        %v3152 = vadd.f32 %v2766, %v3052
        %v3153 = vadd.f32 %v2767, %v3055
        %v3154 = vadd.f32 %v2768, %v3060
        %v3155 = vadd.f32 %v2769, %v3063
        %v3156 = vadd.f32 %v2770, %v3068
        %v3157 = vadd.f32 %v2771, %v3071
        %v3158 = vadd.f32 %v2772, %v3076
        %v3159 = vadd.f32 %v2773, %v3079
        %v3160 = vadd.f32 %v2774, %v3084
        %v3161 = vadd.f32 %v2775, %v3087
        %v3162 = vadd.f32 %v2776, %v3092
        %v3163 = vadd.f32 %v2777, %v3095
        %v3164 = vadd.f32 %v2778, %v3100
        %v3165 = vadd.f32 %v2779, %v3103
        %v3166 = vadd.f32 %v2780, %v3108
        %v3167 = vadd.f32 %v2781, %v3111
        %v3168 = vadd.f32 %v2782, %v3116
        %v3169 = vadd.f32 %v2783, %v3119
        %v3170 = vld [vmem:[%s212 + $0x18] sm:$0xf]
        %v3171 = vld [vmem:[%s212 + $0x1c] sm:$0xf]
        %v3172 = vld [vmem:[%s212 + $0x20] sm:$0xf]
        %v3173 = vld [vmem:[%s212 + $0x24] sm:$0xf]
        %v3174 = vld [vmem:[%s212 + $0x28] sm:$0xf]
        %v3175 = vld [vmem:[%s212 + $0x2c] sm:$0xf]
        %v3176 = vld [vmem:[%s212 + $0x30] sm:$0xf]
        %v3177 = vld [vmem:[%s212 + $0x34] sm:$0xf]
        %v3178 = vld [vmem:[%s212 + $0x38] sm:$0xf]
        %v3179 = vld [vmem:[%s212 + $0x3c] sm:$0xf]
        %v3180 = vld [vmem:[%s212 + $0x40] sm:$0xf]
        %v3181 = vld [vmem:[%s212 + $0x44] sm:$0xf]
        %v3182 = vld [vmem:[%s212 + $0x48] sm:$0xf]
        %v3183 = vld [vmem:[%s212 + $0x4c] sm:$0xf]
        %v3184 = vld [vmem:[%s212 + $0x50] sm:$0xf]
        %v3185 = vld [vmem:[%s212 + $0x54] sm:$0xf]
        %v3186 = vld [vmem:[%s212 + $0x58] sm:$0xf]
        %v3187 = vld [vmem:[%s212 + $0x5c] sm:$0xf]
        %v3188 = vld [vmem:[%s212 + $0x60] sm:$0xf]
        %v3189 = vld [vmem:[%s212 + $0x64] sm:$0xf]
        %v3190 = vld [vmem:[%s212 + $0x68] sm:$0xf]
        %v3191 = vld [vmem:[%s212 + $0x6c] sm:$0xf]
        %v3192 = vld [vmem:[%s212 + $0x70] sm:$0xf]
        %v3193 = vld [vmem:[%s212 + $0x74] sm:$0xf]
        %v3194 = vld [vmem:[%s212 + $0x78] sm:$0xf]
        %v3195 = vld [vmem:[%s212 + $0x7c] sm:$0xf]
        %v3196 = vld [vmem:[%s212 + $0x80] sm:$0xf]
        %v3197 = vld [vmem:[%s212 + $0x84] sm:$0xf]
        %v3198 = vld [vmem:[%s212 + $0x88] sm:$0xf]
        %v3199 = vld [vmem:[%s212 + $0x8c] sm:$0xf]
        %v3200 = vld [vmem:[%s212 + $0x90] sm:$0xf]
        %v3201 = vld [vmem:[%s212 + $0x94] sm:$0xf]
        %v3202 = vld [vmem:[%s212 + $0x98] sm:$0xf]
        %v3203 = vld [vmem:[%s212 + $0x9c] sm:$0xf]
        %v3204 = vld [vmem:[%s212 + $0xa0] sm:$0xf]
        %v3205 = vld [vmem:[%s212 + $0xa4] sm:$0xf]
        %v3206 = vld [vmem:[%s212 + $0xa8] sm:$0xf]
        %v3207 = vld [vmem:[%s212 + $0xac] sm:$0xf]
        %v3208 = vld [vmem:[%s212 + $0xb0] sm:$0xf]
        %v3209 = vld [vmem:[%s212 + $0xb4] sm:$0xf]
        %v3210 = vld [vmem:[%s212 + $0xb8] sm:$0xf]
        %v3211 = vld [vmem:[%s212 + $0xbc] sm:$0xf]
        %v3212 = vld [vmem:[%s212 + $0xc0] sm:$0xf]
        %v3213 = vld [vmem:[%s212 + $0xc4] sm:$0xf]
        %v3214 = vld [vmem:[%s212 + $0xc8] sm:$0xf]
        %v3215 = vld [vmem:[%s212 + $0xcc] sm:$0xf]
        %v3216 = vld [vmem:[%s212 + $0xd0] sm:$0xf]
        %v3217 = vld [vmem:[%s212 + $0xd4] sm:$0xf]
        %v3218 = vld [vmem:[%s212 + $0xd8] sm:$0x1]
        %s3219 = scalar_lea.vmem [#allocation6], 320
        %v3220 = vld [vmem:[%s3219] sm:$0xf]
        %v3221 = vld [vmem:[%s3219 + $0x4] sm:$0xf]
        %v3222 = vld [vmem:[%s3219 + $0x8] sm:$0xf]
        %v3223 = vld [vmem:[%s3219 + $0xc] sm:$0xf]
        %v3224 = vld [vmem:[%s3219 + $0x10] sm:$0xf]
        %v3225 = vld [vmem:[%s3219 + $0x14] sm:$0xf]
        %v3226 = vld [vmem:[%s3219 + $0x18] sm:$0xf]
        %v3227 = vld [vmem:[%s3219 + $0x1c] sm:$0xf]
        %v3228 = vld [vmem:[%s3219 + $0x20] sm:$0xf]
        %v3229 = vld [vmem:[%s3219 + $0x24] sm:$0xf]
        %v3230 = vld [vmem:[%s3219 + $0x28] sm:$0xf]
        %v3231 = vld [vmem:[%s3219 + $0x2c] sm:$0xf]
        %v3232 = vld [vmem:[%s3219 + $0x30] sm:$0xf]
        %v3233 = vld [vmem:[%s3219 + $0x34] sm:$0xf]
        %v3234 = vld [vmem:[%s3219 + $0x38] sm:$0xf]
        %v3235 = vld [vmem:[%s3219 + $0x3c] sm:$0xf]
        %v3285 = vunpack.c.l.b16 %v3170
        %v3286 = vunpack.c.l.b16 %v3171
        %v3287 = vunpack.c.l.b16 %v3172
        %v3288 = vunpack.c.l.b16 %v3173
        %v3289 = vunpack.c.l.b16 %v3174
        %v3290 = vunpack.c.l.b16 %v3175
        %v3291 = vunpack.c.l.b16 %v3176
        %v3292 = vunpack.c.l.b16 %v3177
        %v3293 = vunpack.c.l.b16 %v3178
        %v3294 = vunpack.c.l.b16 %v3179
        %v3295 = vunpack.c.l.b16 %v3180
        %v3296 = vunpack.c.l.b16 %v3181
        %v3297 = vunpack.c.l.b16 %v3182
        %v3298 = vunpack.c.l.b16 %v3183
        %v3299 = vunpack.c.l.b16 %v3184
        %v3300 = vunpack.c.l.b16 %v3185
        %v3301 = vunpack.c.l.b16 %v3186
        %v3302 = vunpack.c.l.b16 %v3187
        %v3303 = vunpack.c.l.b16 %v3188
        %v3304 = vunpack.c.l.b16 %v3189
        %v3305 = vunpack.c.l.b16 %v3190
        %v3306 = vunpack.c.l.b16 %v3191
        %v3307 = vunpack.c.l.b16 %v3192
        %v3308 = vunpack.c.l.b16 %v3193
        %v3309 = vunpack.c.l.b16 %v3194
        %v3310 = vunpack.c.l.b16 %v3195
        %v3311 = vunpack.c.l.b16 %v3196
        %v3312 = vunpack.c.l.b16 %v3197
        %v3313 = vunpack.c.l.b16 %v3198
        %v3314 = vunpack.c.l.b16 %v3199
        %v3315 = vunpack.c.l.b16 %v3200
        %v3316 = vunpack.c.l.b16 %v3201
        %v3317 = vunpack.c.l.b16 %v3202
        %v3318 = vunpack.c.l.b16 %v3203
        %v3319 = vunpack.c.l.b16 %v3204
        %v3320 = vunpack.c.l.b16 %v3205
        %v3321 = vunpack.c.l.b16 %v3206
        %v3322 = vunpack.c.l.b16 %v3207
        %v3323 = vunpack.c.l.b16 %v3208
        %v3324 = vunpack.c.l.b16 %v3209
        %v3325 = vunpack.c.l.b16 %v3210
        %v3326 = vunpack.c.l.b16 %v3211
        %v3327 = vunpack.c.l.b16 %v3212
        %v3328 = vunpack.c.l.b16 %v3213
        %v3329 = vunpack.c.l.b16 %v3214
        %v3330 = vunpack.c.l.b16 %v3215
        %v3331 = vunpack.c.l.b16 %v3216
        %v3332 = vunpack.c.l.b16 %v3217
        %v3333 = vunpack.c.l.b16 %v3218
        %v3334 = vpack.c.b16 %v3286, %v3285
        %v3335 = vpack.c.b16 %v3288, %v3287
        %v3336 = vpack.c.b16 %v3290, %v3289
        %v3337 = vpack.c.b16 %v3292, %v3291
        %v3338 = vpack.c.b16 %v3294, %v3293
        %v3339 = vpack.c.b16 %v3296, %v3295
        %v3340 = vpack.c.b16 %v3298, %v3297
        %v3341 = vpack.c.b16 %v3300, %v3299
        %v3342 = vpack.c.b16 %v3302, %v3301
        %v3343 = vpack.c.b16 %v3304, %v3303
        %v3344 = vpack.c.b16 %v3306, %v3305
        %v3345 = vpack.c.b16 %v3308, %v3307
        %v3346 = vpack.c.b16 %v3310, %v3309
        %v3347 = vpack.c.b16 %v3312, %v3311
        %v3348 = vpack.c.b16 %v3314, %v3313
        %v3349 = vpack.c.b16 %v3316, %v3315
        %v3350 = vpack.c.b16 %v3318, %v3317
        %v3351 = vpack.c.b16 %v3320, %v3319
        %v3352 = vpack.c.b16 %v3322, %v3321
        %v3353 = vpack.c.b16 %v3324, %v3323
        %v3354 = vpack.c.b16 %v3326, %v3325
        %v3355 = vpack.c.b16 %v3328, %v3327
        %v3356 = vpack.c.b16 %v3330, %v3329
        %v3357 = vpack.c.b16 %v3332, %v3331
        %v3358 = vpack.c.b16 %v3333, %v3333
        %v3360 = vshrl.u32 %v3334, 16
        %v3362 = vshll.u32 %v3334, 16
        %v3364 = vrot.slane %v3362, 1
        %v3365 = vor.u32 %v3360, %v3364
        %v3367 = vshll.u32 %v3335, 16
        %v3369 = vrot.slane %v3367, 1
        %v3370 = vsel %vm1484, %v3365, %v3369
        %v3371 = vshrl.u32 %v3335, 16
        %v3373 = vor.u32 %v3371, %v3369
        %v3375 = vshll.u32 %v3336, 16
        %v3377 = vrot.slane %v3375, 1
        %v3378 = vsel %vm1484, %v3373, %v3377
        %v3379 = vshrl.u32 %v3336, 16
        %v3381 = vor.u32 %v3379, %v3377
        %v3383 = vshll.u32 %v3337, 16
        %v3385 = vrot.slane %v3383, 1
        %v3386 = vsel %vm1484, %v3381, %v3385
        %v3387 = vshrl.u32 %v3337, 16
        %v3389 = vor.u32 %v3387, %v3385
        %v3391 = vshll.u32 %v3338, 16
        %v3393 = vrot.slane %v3391, 1
        %v3394 = vsel %vm1484, %v3389, %v3393
        %v3395 = vshrl.u32 %v3338, 16
        %v3397 = vor.u32 %v3395, %v3393
        %v3399 = vshll.u32 %v3339, 16
        %v3401 = vrot.slane %v3399, 1
        %v3402 = vsel %vm1484, %v3397, %v3401
        %v3403 = vshrl.u32 %v3339, 16
        %v3405 = vor.u32 %v3403, %v3401
        %v3407 = vshll.u32 %v3340, 16
        %v3409 = vrot.slane %v3407, 1
        %v3410 = vsel %vm1484, %v3405, %v3409
        %v3411 = vshrl.u32 %v3340, 16
        %v3413 = vor.u32 %v3411, %v3409
        %v3415 = vshll.u32 %v3341, 16
        %v3417 = vrot.slane %v3415, 1
        %v3418 = vsel %vm1484, %v3413, %v3417
        %v3419 = vshrl.u32 %v3341, 16
        %v3421 = vor.u32 %v3419, %v3417
        %v3423 = vshll.u32 %v3342, 16
        %v3425 = vrot.slane %v3423, 1
        %v3426 = vsel %vm1484, %v3421, %v3425
        %v3427 = vshrl.u32 %v3342, 16
        %v3429 = vor.u32 %v3427, %v3425
        %v3431 = vshll.u32 %v3343, 16
        %v3433 = vrot.slane %v3431, 1
        %v3434 = vsel %vm1484, %v3429, %v3433
        %v3435 = vshrl.u32 %v3343, 16
        %v3437 = vor.u32 %v3435, %v3433
        %v3439 = vshll.u32 %v3344, 16
        %v3441 = vrot.slane %v3439, 1
        %v3442 = vsel %vm1484, %v3437, %v3441
        %v3443 = vshrl.u32 %v3344, 16
        %v3445 = vor.u32 %v3443, %v3441
        %v3447 = vshll.u32 %v3345, 16
        %v3449 = vrot.slane %v3447, 1
        %v3450 = vsel %vm1484, %v3445, %v3449
        %v3451 = vshrl.u32 %v3345, 16
        %v3453 = vor.u32 %v3451, %v3449
        %v3455 = vshll.u32 %v3346, 16
        %v3457 = vrot.slane %v3455, 1
        %v3458 = vsel %vm1484, %v3453, %v3457
        %v3459 = vshrl.u32 %v3346, 16
        %v3461 = vor.u32 %v3459, %v3457
        %v3463 = vshll.u32 %v3347, 16
        %v3465 = vrot.slane %v3463, 1
        %v3466 = vsel %vm1484, %v3461, %v3465
        %v3467 = vshrl.u32 %v3347, 16
        %v3469 = vor.u32 %v3467, %v3465
        %v3471 = vshll.u32 %v3348, 16
        %v3473 = vrot.slane %v3471, 1
        %v3474 = vsel %vm1484, %v3469, %v3473
        %v3475 = vshrl.u32 %v3348, 16
        %v3477 = vor.u32 %v3475, %v3473
        %v3479 = vshll.u32 %v3349, 16
        %v3481 = vrot.slane %v3479, 1
        %v3482 = vsel %vm1484, %v3477, %v3481
        %v3483 = vshrl.u32 %v3349, 16
        %v3485 = vor.u32 %v3483, %v3481
        %v3487 = vshll.u32 %v3350, 16
        %v3489 = vrot.slane %v3487, 1
        %v3490 = vsel %vm1484, %v3485, %v3489
        %v3491 = vshrl.u32 %v3350, 16
        %v3493 = vor.u32 %v3491, %v3489
        %v3495 = vshll.u32 %v3351, 16
        %v3497 = vrot.slane %v3495, 1
        %v3498 = vsel %vm1484, %v3493, %v3497
        %v3499 = vshrl.u32 %v3351, 16
        %v3501 = vor.u32 %v3499, %v3497
        %v3503 = vshll.u32 %v3352, 16
        %v3505 = vrot.slane %v3503, 1
        %v3506 = vsel %vm1484, %v3501, %v3505
        %v3507 = vshrl.u32 %v3352, 16
        %v3509 = vor.u32 %v3507, %v3505
        %v3511 = vshll.u32 %v3353, 16
        %v3513 = vrot.slane %v3511, 1
        %v3514 = vsel %vm1484, %v3509, %v3513
        %v3515 = vshrl.u32 %v3353, 16
        %v3517 = vor.u32 %v3515, %v3513
        %v3519 = vshll.u32 %v3354, 16
        %v3521 = vrot.slane %v3519, 1
        %v3522 = vsel %vm1484, %v3517, %v3521
        %v3523 = vshrl.u32 %v3354, 16
        %v3525 = vor.u32 %v3523, %v3521
        %v3527 = vshll.u32 %v3355, 16
        %v3529 = vrot.slane %v3527, 1
        %v3530 = vsel %vm1484, %v3525, %v3529
        %v3531 = vshrl.u32 %v3355, 16
        %v3533 = vor.u32 %v3531, %v3529
        %v3535 = vshll.u32 %v3356, 16
        %v3537 = vrot.slane %v3535, 1
        %v3538 = vsel %vm1484, %v3533, %v3537
        %v3539 = vshrl.u32 %v3356, 16
        %v3541 = vor.u32 %v3539, %v3537
        %v3543 = vshll.u32 %v3357, 16
        %v3545 = vrot.slane %v3543, 1
        %v3546 = vsel %vm1484, %v3541, %v3545
        %v3547 = vshrl.u32 %v3357, 16
        %v3549 = vor.u32 %v3547, %v3545
        %v3551 = vshll.u32 %v3358, 16
        %v3553 = vrot.slane %v3551, 1
        %v3554 = vsel %vm1484, %v3549, %v3553
        %v3595 = vunpack.c.l.b16 %v3220
        %v3596 = vunpack.c.l.b16 %v3221
        %v3597 = vunpack.c.l.b16 %v3222
        %v3598 = vunpack.c.l.b16 %v3223
        %v3599 = vunpack.c.l.b16 %v3224
        %v3600 = vunpack.c.l.b16 %v3225
        %v3601 = vunpack.c.l.b16 %v3226
        %v3602 = vunpack.c.l.b16 %v3227
        %v3603 = vunpack.c.l.b16 %v3228
        %v3604 = vunpack.c.l.b16 %v3229
        %v3605 = vunpack.c.l.b16 %v3230
        %v3606 = vunpack.c.l.b16 %v3231
        %v3607 = vunpack.c.l.b16 %v3232
        %v3608 = vunpack.c.l.b16 %v3233
        %v3609 = vunpack.c.l.b16 %v3234
        %v3610 = vunpack.c.l.b16 %v3235
        %v3611 = vpack.c.b16 %v3596, %v3595
        %v3612 = vpack.c.b16 %v3598, %v3597
        %v3613 = vpack.c.b16 %v3600, %v3599
        %v3614 = vpack.c.b16 %v3602, %v3601
        %v3615 = vpack.c.b16 %v3604, %v3603
        %v3616 = vpack.c.b16 %v3606, %v3605
        %v3617 = vpack.c.b16 %v3608, %v3607
        %v3618 = vpack.c.b16 %v3610, %v3609
        %3627 = vmatprep.subr.bf16.mxu0 0
        %3628 = vmatpush1.bf16.msra.mxu0 %v3611
        %3629 = vmatprep.subr.bf16.mxu0 0
        %3630 = vmatpush1.bf16.msra.mxu0 %v3612
        %3631 = vmatprep.subr.bf16.mxu0 0
        %3632 = vmatpush1.bf16.msra.mxu0 %v3613
        %3633 = vmatprep.subr.bf16.mxu0 0
        %3634 = vmatpush1.bf16.msra.mxu0 %v3614
        %3635 = vmatprep.subr.bf16.mxu0 0
        %3636 = vmatpush1.bf16.msra.mxu0 %v3615
        %3637 = vmatprep.subr.bf16.mxu0 0
        %3638 = vmatpush1.bf16.msra.mxu0 %v3616
        %3639 = vmatprep.subr.bf16.mxu0 0
        %3640 = vmatpush1.bf16.msra.mxu0 %v3617
        %3641 = vmatprep.subr.bf16.mxu0 0
        %3642 = vmatpush1.bf16.msra.mxu0 %v3618
        %3643 = vmatprep.subr.bf16.mxu0 0
        %3644 = vmatpush1.bf16.msra.mxu0 0
        %3645 = vmatprep.subr.bf16.mxu0 0
        %3646 = vmatpush1.bf16.msra.mxu0 0
        %3647 = vmatprep.subr.bf16.mxu0 0
        %3648 = vmatpush1.bf16.msra.mxu0 0
        %3649 = vmatprep.subr.bf16.mxu0 0
        %3650 = vmatpush1.bf16.msra.mxu0 0
        %3651 = vmatprep.subr.bf16.mxu0 0
        %3652 = vmatpush1.bf16.msra.mxu0 0
        %3653 = vmatprep.subr.bf16.mxu0 0
        %3654 = vmatpush1.bf16.msra.mxu0 0
        %3655 = vmatprep.subr.bf16.mxu0 0
        %3656 = vmatpush1.bf16.msra.mxu0 0
        %3657 = vmatprep.subr.bf16.mxu0 0
        %3658 = vmatpush1.bf16.msra.mxu0 0
        %3659 = vmatprep.mubr.bf16.mxu0 0
        %3660 = vmatmul.mubr.bf16.gmra.mrb[0].mxu0 %v3370
        %v3661 = vpop.f32.mrb[0].mxu0
        %v3662 = vadd.f32 0.0, %v3661
        %v3663 = vpop.f32.mrb[0].mxu0
        %v3664 = vpop.f32.mrb[0].mxu0
        %v3665 = vadd.f32 0.0, %v3664
        %v3666 = vpop.f32.mrb[0].mxu0
        %3667 = vmatprep.mubr.bf16.mxu0 0
        %3668 = vmatmul.mubr.bf16.gmra.mrb[0].mxu0 %v3378
        %v3669 = vpop.f32.mrb[0].mxu0
        %v3670 = vadd.f32 0.0, %v3669
        %v3671 = vpop.f32.mrb[0].mxu0
        %v3672 = vpop.f32.mrb[0].mxu0
        %v3673 = vadd.f32 0.0, %v3672
        %v3674 = vpop.f32.mrb[0].mxu0
        %3675 = vmatprep.mubr.bf16.mxu0 0
        %3676 = vmatmul.mubr.bf16.gmra.mrb[0].mxu0 %v3386
        %v3677 = vpop.f32.mrb[0].mxu0
        %v3678 = vadd.f32 0.0, %v3677
        %v3679 = vpop.f32.mrb[0].mxu0
        %v3680 = vpop.f32.mrb[0].mxu0
        %v3681 = vadd.f32 0.0, %v3680
        %v3682 = vpop.f32.mrb[0].mxu0
        %3683 = vmatprep.mubr.bf16.mxu0 0
        %3684 = vmatmul.mubr.bf16.gmra.mrb[0].mxu0 %v3394
        %v3685 = vpop.f32.mrb[0].mxu0
        %v3686 = vadd.f32 0.0, %v3685
        %v3687 = vpop.f32.mrb[0].mxu0
        %v3688 = vpop.f32.mrb[0].mxu0
        %v3689 = vadd.f32 0.0, %v3688
        %v3690 = vpop.f32.mrb[0].mxu0
        %3691 = vmatprep.mubr.bf16.mxu0 0
        %3692 = vmatmul.mubr.bf16.gmra.mrb[0].mxu0 %v3402
        %v3693 = vpop.f32.mrb[0].mxu0
        %v3694 = vadd.f32 0.0, %v3693
        %v3695 = vpop.f32.mrb[0].mxu0
        %v3696 = vpop.f32.mrb[0].mxu0
        %v3697 = vadd.f32 0.0, %v3696
        %v3698 = vpop.f32.mrb[0].mxu0
        %3699 = vmatprep.mubr.bf16.mxu0 0
        %3700 = vmatmul.mubr.bf16.gmra.mrb[0].mxu0 %v3410
        %v3701 = vpop.f32.mrb[0].mxu0
        %v3702 = vadd.f32 0.0, %v3701
        %v3703 = vpop.f32.mrb[0].mxu0
        %v3704 = vpop.f32.mrb[0].mxu0
        %v3705 = vadd.f32 0.0, %v3704
        %v3706 = vpop.f32.mrb[0].mxu0
        %3707 = vmatprep.mubr.bf16.mxu0 0
        %3708 = vmatmul.mubr.bf16.gmra.mrb[0].mxu0 %v3418
        %v3709 = vpop.f32.mrb[0].mxu0
        %v3710 = vadd.f32 0.0, %v3709
        %v3711 = vpop.f32.mrb[0].mxu0
        %v3712 = vpop.f32.mrb[0].mxu0
        %v3713 = vadd.f32 0.0, %v3712
        %v3714 = vpop.f32.mrb[0].mxu0
        %3715 = vmatprep.mubr.bf16.mxu0 0
        %3716 = vmatmul.mubr.bf16.gmra.mrb[0].mxu0 %v3426
        %v3717 = vpop.f32.mrb[0].mxu0
        %v3718 = vadd.f32 0.0, %v3717
        %v3719 = vpop.f32.mrb[0].mxu0
        %v3720 = vpop.f32.mrb[0].mxu0
        %v3721 = vadd.f32 0.0, %v3720
        %v3722 = vpop.f32.mrb[0].mxu0
        %3723 = vmatprep.mubr.bf16.mxu0 0
        %3724 = vmatmul.mubr.bf16.gmra.mrb[0].mxu0 %v3434
        %v3725 = vpop.f32.mrb[0].mxu0
        %v3726 = vadd.f32 0.0, %v3725
        %v3727 = vpop.f32.mrb[0].mxu0
        %v3728 = vpop.f32.mrb[0].mxu0
        %v3729 = vadd.f32 0.0, %v3728
        %v3730 = vpop.f32.mrb[0].mxu0
        %3731 = vmatprep.mubr.bf16.mxu0 0
        %3732 = vmatmul.mubr.bf16.gmra.mrb[0].mxu0 %v3442
        %v3733 = vpop.f32.mrb[0].mxu0
        %v3734 = vadd.f32 0.0, %v3733
        %v3735 = vpop.f32.mrb[0].mxu0
        %v3736 = vpop.f32.mrb[0].mxu0
        %v3737 = vadd.f32 0.0, %v3736
        %v3738 = vpop.f32.mrb[0].mxu0
        %3739 = vmatprep.mubr.bf16.mxu0 0
        %3740 = vmatmul.mubr.bf16.gmra.mrb[0].mxu0 %v3450
        %v3741 = vpop.f32.mrb[0].mxu0
        %v3742 = vadd.f32 0.0, %v3741
        %v3743 = vpop.f32.mrb[0].mxu0
        %v3744 = vpop.f32.mrb[0].mxu0
        %v3745 = vadd.f32 0.0, %v3744
        %v3746 = vpop.f32.mrb[0].mxu0
        %3747 = vmatprep.mubr.bf16.mxu0 0
        %3748 = vmatmul.mubr.bf16.gmra.mrb[0].mxu0 %v3458
        %v3749 = vpop.f32.mrb[0].mxu0
        %v3750 = vadd.f32 0.0, %v3749
        %v3751 = vpop.f32.mrb[0].mxu0
        %v3752 = vpop.f32.mrb[0].mxu0
        %v3753 = vadd.f32 0.0, %v3752
        %v3754 = vpop.f32.mrb[0].mxu0
        %3755 = vmatprep.mubr.bf16.mxu0 0
        %3756 = vmatmul.mubr.bf16.gmra.mrb[0].mxu0 %v3466
        %v3757 = vpop.f32.mrb[0].mxu0
        %v3758 = vadd.f32 0.0, %v3757
        %v3759 = vpop.f32.mrb[0].mxu0
        %v3760 = vpop.f32.mrb[0].mxu0
        %v3761 = vadd.f32 0.0, %v3760
        %v3762 = vpop.f32.mrb[0].mxu0
        %3763 = vmatprep.mubr.bf16.mxu0 0
        %3764 = vmatmul.mubr.bf16.gmra.mrb[0].mxu0 %v3474
        %v3765 = vpop.f32.mrb[0].mxu0
        %v3766 = vadd.f32 0.0, %v3765
        %v3767 = vpop.f32.mrb[0].mxu0
        %v3768 = vpop.f32.mrb[0].mxu0
        %v3769 = vadd.f32 0.0, %v3768
        %v3770 = vpop.f32.mrb[0].mxu0
        %3771 = vmatprep.mubr.bf16.mxu0 0
        %3772 = vmatmul.mubr.bf16.gmra.mrb[0].mxu0 %v3482
        %v3773 = vpop.f32.mrb[0].mxu0
        %v3774 = vadd.f32 0.0, %v3773
        %v3775 = vpop.f32.mrb[0].mxu0
        %v3776 = vpop.f32.mrb[0].mxu0
        %v3777 = vadd.f32 0.0, %v3776
        %v3778 = vpop.f32.mrb[0].mxu0
        %3779 = vmatprep.mubr.bf16.mxu0 0
        %3780 = vmatmul.mubr.bf16.gmra.mrb[0].mxu0 %v3490
        %v3781 = vpop.f32.mrb[0].mxu0
        %v3782 = vadd.f32 0.0, %v3781
        %v3783 = vpop.f32.mrb[0].mxu0
        %v3784 = vpop.f32.mrb[0].mxu0
        %v3785 = vadd.f32 0.0, %v3784
        %v3786 = vpop.f32.mrb[0].mxu0
        %3787 = vmatprep.mubr.bf16.mxu0 0
        %3788 = vmatmul.mubr.bf16.gmra.mrb[0].mxu0 %v3498
        %v3789 = vpop.f32.mrb[0].mxu0
        %v3790 = vadd.f32 0.0, %v3789
        %v3791 = vpop.f32.mrb[0].mxu0
        %v3792 = vpop.f32.mrb[0].mxu0
        %v3793 = vadd.f32 0.0, %v3792
        %v3794 = vpop.f32.mrb[0].mxu0
        %3795 = vmatprep.mubr.bf16.mxu0 0
        %3796 = vmatmul.mubr.bf16.gmra.mrb[0].mxu0 %v3506
        %v3797 = vpop.f32.mrb[0].mxu0
        %v3798 = vadd.f32 0.0, %v3797
        %v3799 = vpop.f32.mrb[0].mxu0
        %v3800 = vpop.f32.mrb[0].mxu0
        %v3801 = vadd.f32 0.0, %v3800
        %v3802 = vpop.f32.mrb[0].mxu0
        %3803 = vmatprep.mubr.bf16.mxu0 0
        %3804 = vmatmul.mubr.bf16.gmra.mrb[0].mxu0 %v3514
        %v3805 = vpop.f32.mrb[0].mxu0
        %v3806 = vadd.f32 0.0, %v3805
        %v3807 = vpop.f32.mrb[0].mxu0
        %v3808 = vpop.f32.mrb[0].mxu0
        %v3809 = vadd.f32 0.0, %v3808
        %v3810 = vpop.f32.mrb[0].mxu0
        %3811 = vmatprep.mubr.bf16.mxu0 0
        %3812 = vmatmul.mubr.bf16.gmra.mrb[0].mxu0 %v3522
        %v3813 = vpop.f32.mrb[0].mxu0
        %v3814 = vadd.f32 0.0, %v3813
        %v3815 = vpop.f32.mrb[0].mxu0
        %v3816 = vpop.f32.mrb[0].mxu0
        %v3817 = vadd.f32 0.0, %v3816
        %v3818 = vpop.f32.mrb[0].mxu0
        %3819 = vmatprep.mubr.bf16.mxu0 0
        %3820 = vmatmul.mubr.bf16.gmra.mrb[0].mxu0 %v3530
        %v3821 = vpop.f32.mrb[0].mxu0
        %v3822 = vadd.f32 0.0, %v3821
        %v3823 = vpop.f32.mrb[0].mxu0
        %v3824 = vpop.f32.mrb[0].mxu0
        %v3825 = vadd.f32 0.0, %v3824
        %v3826 = vpop.f32.mrb[0].mxu0
        %3827 = vmatprep.mubr.bf16.mxu0 0
        %3828 = vmatmul.mubr.bf16.gmra.mrb[0].mxu0 %v3538
        %v3829 = vpop.f32.mrb[0].mxu0
        %v3830 = vadd.f32 0.0, %v3829
        %v3831 = vpop.f32.mrb[0].mxu0
        %v3832 = vpop.f32.mrb[0].mxu0
        %v3833 = vadd.f32 0.0, %v3832
        %v3834 = vpop.f32.mrb[0].mxu0
        %3835 = vmatprep.mubr.bf16.mxu0 0
        %3836 = vmatmul.mubr.bf16.gmra.mrb[0].mxu0 %v3546
        %v3837 = vpop.f32.mrb[0].mxu0
        %v3838 = vadd.f32 0.0, %v3837
        %v3839 = vpop.f32.mrb[0].mxu0
        %v3840 = vpop.f32.mrb[0].mxu0
        %v3841 = vadd.f32 0.0, %v3840
        %v3842 = vpop.f32.mrb[0].mxu0
        %3843 = vmatprep.mubr.bf16.mxu0 0
        %3844 = vmatmul.mubr.bf16.gmra.mrb[0].mxu0 %v3554
        %v3845 = vpop.f32.mrb[0].mxu0
        %v3846 = vadd.f32 0.0, %v3845
        %v3847 = vpop.f32.mrb[0].mxu0
        %v3848 = vpop.f32.mrb[0].mxu0
        %v3849 = vadd.f32 0.0, %v3848
        %v3850 = vpop.f32.mrb[0].mxu0
        %3851 = vdwg.mxu0
        %v3852 = vadd.f32 %v3122, %v3662
        %v3853 = vadd.f32 %v3123, %v3665
        %v3854 = vadd.f32 %v3124, %v3670
        %v3855 = vadd.f32 %v3125, %v3673
        %v3856 = vadd.f32 %v3126, %v3678
        %v3857 = vadd.f32 %v3127, %v3681
        %v3858 = vadd.f32 %v3128, %v3686
        %v3859 = vadd.f32 %v3129, %v3689
        %v3860 = vadd.f32 %v3130, %v3694
        %v3861 = vadd.f32 %v3131, %v3697
        %v3862 = vadd.f32 %v3132, %v3702
        %v3863 = vadd.f32 %v3133, %v3705
        %v3864 = vadd.f32 %v3134, %v3710
        %v3865 = vadd.f32 %v3135, %v3713
        %v3866 = vadd.f32 %v3136, %v3718
        %v3867 = vadd.f32 %v3137, %v3721
        %v3868 = vadd.f32 %v3138, %v3726
        %v3869 = vadd.f32 %v3139, %v3729
        %v3870 = vadd.f32 %v3140, %v3734
        %v3871 = vadd.f32 %v3141, %v3737
        %v3872 = vadd.f32 %v3142, %v3742
        %v3873 = vadd.f32 %v3143, %v3745
        %v3874 = vadd.f32 %v3144, %v3750
        %v3875 = vadd.f32 %v3145, %v3753
        %v3876 = vadd.f32 %v3146, %v3758
        %v3877 = vadd.f32 %v3147, %v3761
        %v3878 = vadd.f32 %v3148, %v3766
        %v3879 = vadd.f32 %v3149, %v3769
        %v3880 = vadd.f32 %v3150, %v3774
        %v3881 = vadd.f32 %v3151, %v3777
        %v3882 = vadd.f32 %v3152, %v3782
        %v3883 = vadd.f32 %v3153, %v3785
        %v3884 = vadd.f32 %v3154, %v3790
        %v3885 = vadd.f32 %v3155, %v3793
        %v3886 = vadd.f32 %v3156, %v3798
        %v3887 = vadd.f32 %v3157, %v3801
        %v3888 = vadd.f32 %v3158, %v3806
        %v3889 = vadd.f32 %v3159, %v3809
        %v3890 = vadd.f32 %v3160, %v3814
        %v3891 = vadd.f32 %v3161, %v3817
        %v3892 = vadd.f32 %v3162, %v3822
        %v3893 = vadd.f32 %v3163, %v3825
        %v3894 = vadd.f32 %v3164, %v3830
        %v3895 = vadd.f32 %v3165, %v3833
        %v3896 = vadd.f32 %v3166, %v3838
        %v3897 = vadd.f32 %v3167, %v3841
        %v3898 = vadd.f32 %v3168, %v3846
        %v3899 = vadd.f32 %v3169, %v3849
        %v3900 = vld [vmem:[%s212 + $0x20] sm:$0x8]
        %v3901 = vld [vmem:[%s212 + $0x24] sm:$0xf]
        %v3902 = vld [vmem:[%s212 + $0x28] sm:$0xf]
        %v3903 = vld [vmem:[%s212 + $0x2c] sm:$0xf]
        %v3904 = vld [vmem:[%s212 + $0x30] sm:$0xf]
        %v3905 = vld [vmem:[%s212 + $0x34] sm:$0xf]
        %v3906 = vld [vmem:[%s212 + $0x38] sm:$0xf]
        %v3907 = vld [vmem:[%s212 + $0x3c] sm:$0xf]
        %v3908 = vld [vmem:[%s212 + $0x40] sm:$0xf]
        %v3909 = vld [vmem:[%s212 + $0x44] sm:$0xf]
        %v3910 = vld [vmem:[%s212 + $0x48] sm:$0xf]
        %v3911 = vld [vmem:[%s212 + $0x4c] sm:$0xf]
        %v3912 = vld [vmem:[%s212 + $0x50] sm:$0xf]
        %v3913 = vld [vmem:[%s212 + $0x54] sm:$0xf]
        %v3914 = vld [vmem:[%s212 + $0x58] sm:$0xf]
        %v3915 = vld [vmem:[%s212 + $0x5c] sm:$0xf]
        %v3916 = vld [vmem:[%s212 + $0x60] sm:$0xf]
        %v3917 = vld [vmem:[%s212 + $0x64] sm:$0xf]
        %v3918 = vld [vmem:[%s212 + $0x68] sm:$0xf]
        %v3919 = vld [vmem:[%s212 + $0x6c] sm:$0xf]
        %v3920 = vld [vmem:[%s212 + $0x70] sm:$0xf]
        %v3921 = vld [vmem:[%s212 + $0x74] sm:$0xf]
        %v3922 = vld [vmem:[%s212 + $0x78] sm:$0xf]
        %v3923 = vld [vmem:[%s212 + $0x7c] sm:$0xf]
        %v3924 = vld [vmem:[%s212 + $0x80] sm:$0xf]
        %v3925 = vld [vmem:[%s212 + $0x84] sm:$0xf]
        %v3926 = vld [vmem:[%s212 + $0x88] sm:$0xf]
        %v3927 = vld [vmem:[%s212 + $0x8c] sm:$0xf]
        %v3928 = vld [vmem:[%s212 + $0x90] sm:$0xf]
        %v3929 = vld [vmem:[%s212 + $0x94] sm:$0xf]
        %v3930 = vld [vmem:[%s212 + $0x98] sm:$0xf]
        %v3931 = vld [vmem:[%s212 + $0x9c] sm:$0xf]
        %v3932 = vld [vmem:[%s212 + $0xa0] sm:$0xf]
        %v3933 = vld [vmem:[%s212 + $0xa4] sm:$0xf]
        %v3934 = vld [vmem:[%s212 + $0xa8] sm:$0xf]
        %v3935 = vld [vmem:[%s212 + $0xac] sm:$0xf]
        %v3936 = vld [vmem:[%s212 + $0xb0] sm:$0xf]
        %v3937 = vld [vmem:[%s212 + $0xb4] sm:$0xf]
        %v3938 = vld [vmem:[%s212 + $0xb8] sm:$0xf]
        %v3939 = vld [vmem:[%s212 + $0xbc] sm:$0xf]
        %v3940 = vld [vmem:[%s212 + $0xc0] sm:$0xf]
        %v3941 = vld [vmem:[%s212 + $0xc4] sm:$0xf]
        %v3942 = vld [vmem:[%s212 + $0xc8] sm:$0xf]
        %v3943 = vld [vmem:[%s212 + $0xcc] sm:$0xf]
        %v3944 = vld [vmem:[%s212 + $0xd0] sm:$0xf]
        %v3945 = vld [vmem:[%s212 + $0xd4] sm:$0xf]
        %v3946 = vld [vmem:[%s212 + $0xd8] sm:$0xf]
        %v3947 = vld [vmem:[%s212 + $0xdc] sm:$0xf]
        %v3948 = vld [vmem:[%s212 + $0xe0] sm:$0xf]
        %s3949 = scalar_lea.vmem [#allocation6], 384
        %v3950 = vld [vmem:[%s3949] sm:$0xf]
        %v3951 = vld [vmem:[%s3949 + $0x4] sm:$0xf]
        %v3952 = vld [vmem:[%s3949 + $0x8] sm:$0xf]
        %v3953 = vld [vmem:[%s3949 + $0xc] sm:$0xf]
        %v3954 = vld [vmem:[%s3949 + $0x10] sm:$0xf]
        %v3955 = vld [vmem:[%s3949 + $0x14] sm:$0xf]
        %v3956 = vld [vmem:[%s3949 + $0x18] sm:$0xf]
        %v3957 = vld [vmem:[%s3949 + $0x1c] sm:$0xf]
        %v3958 = vld [vmem:[%s3949 + $0x20] sm:$0xf]
        %v3959 = vld [vmem:[%s3949 + $0x24] sm:$0xf]
        %v3960 = vld [vmem:[%s3949 + $0x28] sm:$0xf]
        %v3961 = vld [vmem:[%s3949 + $0x2c] sm:$0xf]
        %v3962 = vld [vmem:[%s3949 + $0x30] sm:$0xf]
        %v3963 = vld [vmem:[%s3949 + $0x34] sm:$0xf]
        %v3964 = vld [vmem:[%s3949 + $0x38] sm:$0xf]
        %v3965 = vld [vmem:[%s3949 + $0x3c] sm:$0xf]
        %v4015 = vunpack.c.l.b16 %v3900
        %v4016 = vunpack.c.l.b16 %v3901
        %v4017 = vunpack.c.l.b16 %v3902
        %v4018 = vunpack.c.l.b16 %v3903
        %v4019 = vunpack.c.l.b16 %v3904
        %v4020 = vunpack.c.l.b16 %v3905
        %v4021 = vunpack.c.l.b16 %v3906
        %v4022 = vunpack.c.l.b16 %v3907
        %v4023 = vunpack.c.l.b16 %v3908
        %v4024 = vunpack.c.l.b16 %v3909
        %v4025 = vunpack.c.l.b16 %v3910
        %v4026 = vunpack.c.l.b16 %v3911
        %v4027 = vunpack.c.l.b16 %v3912
        %v4028 = vunpack.c.l.b16 %v3913
        %v4029 = vunpack.c.l.b16 %v3914
        %v4030 = vunpack.c.l.b16 %v3915
        %v4031 = vunpack.c.l.b16 %v3916
        %v4032 = vunpack.c.l.b16 %v3917
        %v4033 = vunpack.c.l.b16 %v3918
        %v4034 = vunpack.c.l.b16 %v3919
        %v4035 = vunpack.c.l.b16 %v3920
        %v4036 = vunpack.c.l.b16 %v3921
        %v4037 = vunpack.c.l.b16 %v3922
        %v4038 = vunpack.c.l.b16 %v3923
        %v4039 = vunpack.c.l.b16 %v3924
        %v4040 = vunpack.c.l.b16 %v3925
        %v4041 = vunpack.c.l.b16 %v3926
        %v4042 = vunpack.c.l.b16 %v3927
        %v4043 = vunpack.c.l.b16 %v3928
        %v4044 = vunpack.c.l.b16 %v3929
        %v4045 = vunpack.c.l.b16 %v3930
        %v4046 = vunpack.c.l.b16 %v3931
        %v4047 = vunpack.c.l.b16 %v3932
        %v4048 = vunpack.c.l.b16 %v3933
        %v4049 = vunpack.c.l.b16 %v3934
        %v4050 = vunpack.c.l.b16 %v3935
        %v4051 = vunpack.c.l.b16 %v3936
        %v4052 = vunpack.c.l.b16 %v3937
        %v4053 = vunpack.c.l.b16 %v3938
        %v4054 = vunpack.c.l.b16 %v3939
        %v4055 = vunpack.c.l.b16 %v3940
        %v4056 = vunpack.c.l.b16 %v3941
        %v4057 = vunpack.c.l.b16 %v3942
        %v4058 = vunpack.c.l.b16 %v3943
        %v4059 = vunpack.c.l.b16 %v3944
        %v4060 = vunpack.c.l.b16 %v3945
        %v4061 = vunpack.c.l.b16 %v3946
        %v4062 = vunpack.c.l.b16 %v3947
        %v4063 = vunpack.c.l.b16 %v3948
        %v4064 = vpack.c.b16 %v4016, %v4015
        %v4065 = vpack.c.b16 %v4018, %v4017
        %v4066 = vpack.c.b16 %v4020, %v4019
        %v4067 = vpack.c.b16 %v4022, %v4021
        %v4068 = vpack.c.b16 %v4024, %v4023
        %v4069 = vpack.c.b16 %v4026, %v4025
        %v4070 = vpack.c.b16 %v4028, %v4027
        %v4071 = vpack.c.b16 %v4030, %v4029
        %v4072 = vpack.c.b16 %v4032, %v4031
        %v4073 = vpack.c.b16 %v4034, %v4033
        %v4074 = vpack.c.b16 %v4036, %v4035
        %v4075 = vpack.c.b16 %v4038, %v4037
        %v4076 = vpack.c.b16 %v4040, %v4039
        %v4077 = vpack.c.b16 %v4042, %v4041
        %v4078 = vpack.c.b16 %v4044, %v4043
        %v4079 = vpack.c.b16 %v4046, %v4045
        %v4080 = vpack.c.b16 %v4048, %v4047
        %v4081 = vpack.c.b16 %v4050, %v4049
        %v4082 = vpack.c.b16 %v4052, %v4051
        %v4083 = vpack.c.b16 %v4054, %v4053
        %v4084 = vpack.c.b16 %v4056, %v4055
        %v4085 = vpack.c.b16 %v4058, %v4057
        %v4086 = vpack.c.b16 %v4060, %v4059
        %v4087 = vpack.c.b16 %v4062, %v4061
        %v4088 = vpack.c.b16 %v4063, %v4063
        %v4090 = vshrl.u32 %v4064, 16
        %v4092 = vrot.slane %v4090, 3
        %v4093 = vshll.u32 %v4064, 16
        %v4095 = vrot.slane %v4093, 4
        %v4096 = vor.u32 %v4092, %v4095
        %v4098 = vshrl.u32 %v4065, 16
        %v4100 = vrot.slane %v4098, 3
        %v4101 = vshll.u32 %v4065, 16
        %v4103 = vrot.slane %v4101, 4
        %v4104 = vor.u32 %v4100, %v4103
        %v4105 = vsel %vm773, %v4096, %v4104
        %v4107 = vshrl.u32 %v4066, 16
        %v4109 = vrot.slane %v4107, 3
        %v4110 = vshll.u32 %v4066, 16
        %v4112 = vrot.slane %v4110, 4
        %v4113 = vor.u32 %v4109, %v4112
        %v4114 = vsel %vm773, %v4104, %v4113
        %v4116 = vshrl.u32 %v4067, 16
        %v4118 = vrot.slane %v4116, 3
        %v4119 = vshll.u32 %v4067, 16
        %v4121 = vrot.slane %v4119, 4
        %v4122 = vor.u32 %v4118, %v4121
        %v4123 = vsel %vm773, %v4113, %v4122
        %v4125 = vshrl.u32 %v4068, 16
        %v4127 = vrot.slane %v4125, 3
        %v4128 = vshll.u32 %v4068, 16
        %v4130 = vrot.slane %v4128, 4
        %v4131 = vor.u32 %v4127, %v4130
        %v4132 = vsel %vm773, %v4122, %v4131
        %v4134 = vshrl.u32 %v4069, 16
        %v4136 = vrot.slane %v4134, 3
        %v4137 = vshll.u32 %v4069, 16
        %v4139 = vrot.slane %v4137, 4
        %v4140 = vor.u32 %v4136, %v4139
        %v4141 = vsel %vm773, %v4131, %v4140
        %v4143 = vshrl.u32 %v4070, 16
        %v4145 = vrot.slane %v4143, 3
        %v4146 = vshll.u32 %v4070, 16
        %v4148 = vrot.slane %v4146, 4
        %v4149 = vor.u32 %v4145, %v4148
        %v4150 = vsel %vm773, %v4140, %v4149
        %v4152 = vshrl.u32 %v4071, 16
        %v4154 = vrot.slane %v4152, 3
        %v4155 = vshll.u32 %v4071, 16
        %v4157 = vrot.slane %v4155, 4
        %v4158 = vor.u32 %v4154, %v4157
        %v4159 = vsel %vm773, %v4149, %v4158
        %v4161 = vshrl.u32 %v4072, 16
        %v4163 = vrot.slane %v4161, 3
        %v4164 = vshll.u32 %v4072, 16
        %v4166 = vrot.slane %v4164, 4
        %v4167 = vor.u32 %v4163, %v4166
        %v4168 = vsel %vm773, %v4158, %v4167
        %v4170 = vshrl.u32 %v4073, 16
        %v4172 = vrot.slane %v4170, 3
        %v4173 = vshll.u32 %v4073, 16
        %v4175 = vrot.slane %v4173, 4
        %v4176 = vor.u32 %v4172, %v4175
        %v4177 = vsel %vm773, %v4167, %v4176
        %v4179 = vshrl.u32 %v4074, 16
        %v4181 = vrot.slane %v4179, 3
        %v4182 = vshll.u32 %v4074, 16
        %v4184 = vrot.slane %v4182, 4
        %v4185 = vor.u32 %v4181, %v4184
        %v4186 = vsel %vm773, %v4176, %v4185
        %v4188 = vshrl.u32 %v4075, 16
        %v4190 = vrot.slane %v4188, 3
        %v4191 = vshll.u32 %v4075, 16
        %v4193 = vrot.slane %v4191, 4
        %v4194 = vor.u32 %v4190, %v4193
        %v4195 = vsel %vm773, %v4185, %v4194
        %v4197 = vshrl.u32 %v4076, 16
        %v4199 = vrot.slane %v4197, 3
        %v4200 = vshll.u32 %v4076, 16
        %v4202 = vrot.slane %v4200, 4
        %v4203 = vor.u32 %v4199, %v4202
        %v4204 = vsel %vm773, %v4194, %v4203
        %v4206 = vshrl.u32 %v4077, 16
        %v4208 = vrot.slane %v4206, 3
        %v4209 = vshll.u32 %v4077, 16
        %v4211 = vrot.slane %v4209, 4
        %v4212 = vor.u32 %v4208, %v4211
        %v4213 = vsel %vm773, %v4203, %v4212
        %v4215 = vshrl.u32 %v4078, 16
        %v4217 = vrot.slane %v4215, 3
        %v4218 = vshll.u32 %v4078, 16
        %v4220 = vrot.slane %v4218, 4
        %v4221 = vor.u32 %v4217, %v4220
        %v4222 = vsel %vm773, %v4212, %v4221
        %v4224 = vshrl.u32 %v4079, 16
        %v4226 = vrot.slane %v4224, 3
        %v4227 = vshll.u32 %v4079, 16
        %v4229 = vrot.slane %v4227, 4
        %v4230 = vor.u32 %v4226, %v4229
        %v4231 = vsel %vm773, %v4221, %v4230
        %v4233 = vshrl.u32 %v4080, 16
        %v4235 = vrot.slane %v4233, 3
        %v4236 = vshll.u32 %v4080, 16
        %v4238 = vrot.slane %v4236, 4
        %v4239 = vor.u32 %v4235, %v4238
        %v4240 = vsel %vm773, %v4230, %v4239
        %v4242 = vshrl.u32 %v4081, 16
        %v4244 = vrot.slane %v4242, 3
        %v4245 = vshll.u32 %v4081, 16
        %v4247 = vrot.slane %v4245, 4
        %v4248 = vor.u32 %v4244, %v4247
        %v4249 = vsel %vm773, %v4239, %v4248
        %v4251 = vshrl.u32 %v4082, 16
        %v4253 = vrot.slane %v4251, 3
        %v4254 = vshll.u32 %v4082, 16
        %v4256 = vrot.slane %v4254, 4
        %v4257 = vor.u32 %v4253, %v4256
        %v4258 = vsel %vm773, %v4248, %v4257
        %v4260 = vshrl.u32 %v4083, 16
        %v4262 = vrot.slane %v4260, 3
        %v4263 = vshll.u32 %v4083, 16
        %v4265 = vrot.slane %v4263, 4
        %v4266 = vor.u32 %v4262, %v4265
        %v4267 = vsel %vm773, %v4257, %v4266
        %v4269 = vshrl.u32 %v4084, 16
        %v4271 = vrot.slane %v4269, 3
        %v4272 = vshll.u32 %v4084, 16
        %v4274 = vrot.slane %v4272, 4
        %v4275 = vor.u32 %v4271, %v4274
        %v4276 = vsel %vm773, %v4266, %v4275
        %v4278 = vshrl.u32 %v4085, 16
        %v4280 = vrot.slane %v4278, 3
        %v4281 = vshll.u32 %v4085, 16
        %v4283 = vrot.slane %v4281, 4
        %v4284 = vor.u32 %v4280, %v4283
        %v4285 = vsel %vm773, %v4275, %v4284
        %v4287 = vshrl.u32 %v4086, 16
        %v4289 = vrot.slane %v4287, 3
        %v4290 = vshll.u32 %v4086, 16
        %v4292 = vrot.slane %v4290, 4
        %v4293 = vor.u32 %v4289, %v4292
        %v4294 = vsel %vm773, %v4284, %v4293
        %v4296 = vshrl.u32 %v4087, 16
        %v4298 = vrot.slane %v4296, 3
        %v4299 = vshll.u32 %v4087, 16
        %v4301 = vrot.slane %v4299, 4
        %v4302 = vor.u32 %v4298, %v4301
        %v4303 = vsel %vm773, %v4293, %v4302
        %v4305 = vshrl.u32 %v4088, 16
        %v4307 = vrot.slane %v4305, 3
        %v4308 = vshll.u32 %v4088, 16
        %v4310 = vrot.slane %v4308, 4
        %v4311 = vor.u32 %v4307, %v4310
        %v4312 = vsel %vm773, %v4302, %v4311
        %v4353 = vunpack.c.l.b16 %v3950
        %v4354 = vunpack.c.l.b16 %v3951
        %v4355 = vunpack.c.l.b16 %v3952
        %v4356 = vunpack.c.l.b16 %v3953
        %v4357 = vunpack.c.l.b16 %v3954
        %v4358 = vunpack.c.l.b16 %v3955
        %v4359 = vunpack.c.l.b16 %v3956
        %v4360 = vunpack.c.l.b16 %v3957
        %v4361 = vunpack.c.l.b16 %v3958
        %v4362 = vunpack.c.l.b16 %v3959
        %v4363 = vunpack.c.l.b16 %v3960
        %v4364 = vunpack.c.l.b16 %v3961
        %v4365 = vunpack.c.l.b16 %v3962
        %v4366 = vunpack.c.l.b16 %v3963
        %v4367 = vunpack.c.l.b16 %v3964
        %v4368 = vunpack.c.l.b16 %v3965
        %v4369 = vpack.c.b16 %v4354, %v4353
        %v4370 = vpack.c.b16 %v4356, %v4355
        %v4371 = vpack.c.b16 %v4358, %v4357
        %v4372 = vpack.c.b16 %v4360, %v4359
        %v4373 = vpack.c.b16 %v4362, %v4361
        %v4374 = vpack.c.b16 %v4364, %v4363
        %v4375 = vpack.c.b16 %v4366, %v4365
        %v4376 = vpack.c.b16 %v4368, %v4367
        %4385 = vmatprep.subr.bf16.mxu0 0
        %4386 = vmatpush1.bf16.msra.mxu0 %v4369
        %4387 = vmatprep.subr.bf16.mxu0 0
        %4388 = vmatpush1.bf16.msra.mxu0 %v4370
        %4389 = vmatprep.subr.bf16.mxu0 0
        %4390 = vmatpush1.bf16.msra.mxu0 %v4371
        %4391 = vmatprep.subr.bf16.mxu0 0
        %4392 = vmatpush1.bf16.msra.mxu0 %v4372
        %4393 = vmatprep.subr.bf16.mxu0 0
        %4394 = vmatpush1.bf16.msra.mxu0 %v4373
        %4395 = vmatprep.subr.bf16.mxu0 0
        %4396 = vmatpush1.bf16.msra.mxu0 %v4374
        %4397 = vmatprep.subr.bf16.mxu0 0
        %4398 = vmatpush1.bf16.msra.mxu0 %v4375
        %4399 = vmatprep.subr.bf16.mxu0 0
        %4400 = vmatpush1.bf16.msra.mxu0 %v4376
        %4401 = vmatprep.subr.bf16.mxu0 0
        %4402 = vmatpush1.bf16.msra.mxu0 0
        %4403 = vmatprep.subr.bf16.mxu0 0
        %4404 = vmatpush1.bf16.msra.mxu0 0
        %4405 = vmatprep.subr.bf16.mxu0 0
        %4406 = vmatpush1.bf16.msra.mxu0 0
        %4407 = vmatprep.subr.bf16.mxu0 0
        %4408 = vmatpush1.bf16.msra.mxu0 0
        %4409 = vmatprep.subr.bf16.mxu0 0
        %4410 = vmatpush1.bf16.msra.mxu0 0
        %4411 = vmatprep.subr.bf16.mxu0 0
        %4412 = vmatpush1.bf16.msra.mxu0 0
        %4413 = vmatprep.subr.bf16.mxu0 0
        %4414 = vmatpush1.bf16.msra.mxu0 0
        %4415 = vmatprep.subr.bf16.mxu0 0
        %4416 = vmatpush1.bf16.msra.mxu0 0
        %4417 = vmatprep.mubr.bf16.mxu0 0
        %4418 = vmatmul.mubr.bf16.gmra.mrb[0].mxu0 %v4105
        %v4419 = vpop.f32.mrb[0].mxu0
        %v4420 = vadd.f32 0.0, %v4419
        %v4421 = vpop.f32.mrb[0].mxu0
        %v4422 = vpop.f32.mrb[0].mxu0
        %v4423 = vadd.f32 0.0, %v4422
        %v4424 = vpop.f32.mrb[0].mxu0
        %4425 = vmatprep.mubr.bf16.mxu0 0
        %4426 = vmatmul.mubr.bf16.gmra.mrb[0].mxu0 %v4114
        %v4427 = vpop.f32.mrb[0].mxu0
        %v4428 = vadd.f32 0.0, %v4427
        %v4429 = vpop.f32.mrb[0].mxu0
        %v4430 = vpop.f32.mrb[0].mxu0
        %v4431 = vadd.f32 0.0, %v4430
        %v4432 = vpop.f32.mrb[0].mxu0
        %4433 = vmatprep.mubr.bf16.mxu0 0
        %4434 = vmatmul.mubr.bf16.gmra.mrb[0].mxu0 %v4123
        %v4435 = vpop.f32.mrb[0].mxu0
        %v4436 = vadd.f32 0.0, %v4435
        %v4437 = vpop.f32.mrb[0].mxu0
        %v4438 = vpop.f32.mrb[0].mxu0
        %v4439 = vadd.f32 0.0, %v4438
        %v4440 = vpop.f32.mrb[0].mxu0
        %4441 = vmatprep.mubr.bf16.mxu0 0
        %4442 = vmatmul.mubr.bf16.gmra.mrb[0].mxu0 %v4132
        %v4443 = vpop.f32.mrb[0].mxu0
        %v4444 = vadd.f32 0.0, %v4443
        %v4445 = vpop.f32.mrb[0].mxu0
        %v4446 = vpop.f32.mrb[0].mxu0
        %v4447 = vadd.f32 0.0, %v4446
        %v4448 = vpop.f32.mrb[0].mxu0
        %4449 = vmatprep.mubr.bf16.mxu0 0
        %4450 = vmatmul.mubr.bf16.gmra.mrb[0].mxu0 %v4141
        %v4451 = vpop.f32.mrb[0].mxu0
        %v4452 = vadd.f32 0.0, %v4451
        %v4453 = vpop.f32.mrb[0].mxu0
        %v4454 = vpop.f32.mrb[0].mxu0
        %v4455 = vadd.f32 0.0, %v4454
        %v4456 = vpop.f32.mrb[0].mxu0
        %4457 = vmatprep.mubr.bf16.mxu0 0
        %4458 = vmatmul.mubr.bf16.gmra.mrb[0].mxu0 %v4150
        %v4459 = vpop.f32.mrb[0].mxu0
        %v4460 = vadd.f32 0.0, %v4459
        %v4461 = vpop.f32.mrb[0].mxu0
        %v4462 = vpop.f32.mrb[0].mxu0
        %v4463 = vadd.f32 0.0, %v4462
        %v4464 = vpop.f32.mrb[0].mxu0
        %4465 = vmatprep.mubr.bf16.mxu0 0
        %4466 = vmatmul.mubr.bf16.gmra.mrb[0].mxu0 %v4159
        %v4467 = vpop.f32.mrb[0].mxu0
        %v4468 = vadd.f32 0.0, %v4467
        %v4469 = vpop.f32.mrb[0].mxu0
        %v4470 = vpop.f32.mrb[0].mxu0
        %v4471 = vadd.f32 0.0, %v4470
        %v4472 = vpop.f32.mrb[0].mxu0
        %4473 = vmatprep.mubr.bf16.mxu0 0
        %4474 = vmatmul.mubr.bf16.gmra.mrb[0].mxu0 %v4168
        %v4475 = vpop.f32.mrb[0].mxu0
        %v4476 = vadd.f32 0.0, %v4475
        %v4477 = vpop.f32.mrb[0].mxu0
        %v4478 = vpop.f32.mrb[0].mxu0
        %v4479 = vadd.f32 0.0, %v4478
        %v4480 = vpop.f32.mrb[0].mxu0
        %4481 = vmatprep.mubr.bf16.mxu0 0
        %4482 = vmatmul.mubr.bf16.gmra.mrb[0].mxu0 %v4177
        %v4483 = vpop.f32.mrb[0].mxu0
        %v4484 = vadd.f32 0.0, %v4483
        %v4485 = vpop.f32.mrb[0].mxu0
        %v4486 = vpop.f32.mrb[0].mxu0
        %v4487 = vadd.f32 0.0, %v4486
        %v4488 = vpop.f32.mrb[0].mxu0
        %4489 = vmatprep.mubr.bf16.mxu0 0
        %4490 = vmatmul.mubr.bf16.gmra.mrb[0].mxu0 %v4186
        %v4491 = vpop.f32.mrb[0].mxu0
        %v4492 = vadd.f32 0.0, %v4491
        %v4493 = vpop.f32.mrb[0].mxu0
        %v4494 = vpop.f32.mrb[0].mxu0
        %v4495 = vadd.f32 0.0, %v4494
        %v4496 = vpop.f32.mrb[0].mxu0
        %4497 = vmatprep.mubr.bf16.mxu0 0
        %4498 = vmatmul.mubr.bf16.gmra.mrb[0].mxu0 %v4195
        %v4499 = vpop.f32.mrb[0].mxu0
        %v4500 = vadd.f32 0.0, %v4499
        %v4501 = vpop.f32.mrb[0].mxu0
        %v4502 = vpop.f32.mrb[0].mxu0
        %v4503 = vadd.f32 0.0, %v4502
        %v4504 = vpop.f32.mrb[0].mxu0
        %4505 = vmatprep.mubr.bf16.mxu0 0
        %4506 = vmatmul.mubr.bf16.gmra.mrb[0].mxu0 %v4204
        %v4507 = vpop.f32.mrb[0].mxu0
        %v4508 = vadd.f32 0.0, %v4507
        %v4509 = vpop.f32.mrb[0].mxu0
        %v4510 = vpop.f32.mrb[0].mxu0
        %v4511 = vadd.f32 0.0, %v4510
        %v4512 = vpop.f32.mrb[0].mxu0
        %4513 = vmatprep.mubr.bf16.mxu0 0
        %4514 = vmatmul.mubr.bf16.gmra.mrb[0].mxu0 %v4213
        %v4515 = vpop.f32.mrb[0].mxu0
        %v4516 = vadd.f32 0.0, %v4515
        %v4517 = vpop.f32.mrb[0].mxu0
        %v4518 = vpop.f32.mrb[0].mxu0
        %v4519 = vadd.f32 0.0, %v4518
        %v4520 = vpop.f32.mrb[0].mxu0
        %4521 = vmatprep.mubr.bf16.mxu0 0
        %4522 = vmatmul.mubr.bf16.gmra.mrb[0].mxu0 %v4222
        %v4523 = vpop.f32.mrb[0].mxu0
        %v4524 = vadd.f32 0.0, %v4523
        %v4525 = vpop.f32.mrb[0].mxu0
        %v4526 = vpop.f32.mrb[0].mxu0
        %v4527 = vadd.f32 0.0, %v4526
        %v4528 = vpop.f32.mrb[0].mxu0
        %4529 = vmatprep.mubr.bf16.mxu0 0
        %4530 = vmatmul.mubr.bf16.gmra.mrb[0].mxu0 %v4231
        %v4531 = vpop.f32.mrb[0].mxu0
        %v4532 = vadd.f32 0.0, %v4531
        %v4533 = vpop.f32.mrb[0].mxu0
        %v4534 = vpop.f32.mrb[0].mxu0
        %v4535 = vadd.f32 0.0, %v4534
        %v4536 = vpop.f32.mrb[0].mxu0
        %4537 = vmatprep.mubr.bf16.mxu0 0
        %4538 = vmatmul.mubr.bf16.gmra.mrb[0].mxu0 %v4240
        %v4539 = vpop.f32.mrb[0].mxu0
        %v4540 = vadd.f32 0.0, %v4539
        %v4541 = vpop.f32.mrb[0].mxu0
        %v4542 = vpop.f32.mrb[0].mxu0
        %v4543 = vadd.f32 0.0, %v4542
        %v4544 = vpop.f32.mrb[0].mxu0
        %4545 = vmatprep.mubr.bf16.mxu0 0
        %4546 = vmatmul.mubr.bf16.gmra.mrb[0].mxu0 %v4249
        %v4547 = vpop.f32.mrb[0].mxu0
        %v4548 = vadd.f32 0.0, %v4547
        %v4549 = vpop.f32.mrb[0].mxu0
        %v4550 = vpop.f32.mrb[0].mxu0
        %v4551 = vadd.f32 0.0, %v4550
        %v4552 = vpop.f32.mrb[0].mxu0
        %4553 = vmatprep.mubr.bf16.mxu0 0
        %4554 = vmatmul.mubr.bf16.gmra.mrb[0].mxu0 %v4258
        %v4555 = vpop.f32.mrb[0].mxu0
        %v4556 = vadd.f32 0.0, %v4555
        %v4557 = vpop.f32.mrb[0].mxu0
        %v4558 = vpop.f32.mrb[0].mxu0
        %v4559 = vadd.f32 0.0, %v4558
        %v4560 = vpop.f32.mrb[0].mxu0
        %4561 = vmatprep.mubr.bf16.mxu0 0
        %4562 = vmatmul.mubr.bf16.gmra.mrb[0].mxu0 %v4267
        %v4563 = vpop.f32.mrb[0].mxu0
        %v4564 = vadd.f32 0.0, %v4563
        %v4565 = vpop.f32.mrb[0].mxu0
        %v4566 = vpop.f32.mrb[0].mxu0
        %v4567 = vadd.f32 0.0, %v4566
        %v4568 = vpop.f32.mrb[0].mxu0
        %4569 = vmatprep.mubr.bf16.mxu0 0
        %4570 = vmatmul.mubr.bf16.gmra.mrb[0].mxu0 %v4276
        %v4571 = vpop.f32.mrb[0].mxu0
        %v4572 = vadd.f32 0.0, %v4571
        %v4573 = vpop.f32.mrb[0].mxu0
        %v4574 = vpop.f32.mrb[0].mxu0
        %v4575 = vadd.f32 0.0, %v4574
        %v4576 = vpop.f32.mrb[0].mxu0
        %4577 = vmatprep.mubr.bf16.mxu0 0
        %4578 = vmatmul.mubr.bf16.gmra.mrb[0].mxu0 %v4285
        %v4579 = vpop.f32.mrb[0].mxu0
        %v4580 = vadd.f32 0.0, %v4579
        %v4581 = vpop.f32.mrb[0].mxu0
        %v4582 = vpop.f32.mrb[0].mxu0
        %v4583 = vadd.f32 0.0, %v4582
        %v4584 = vpop.f32.mrb[0].mxu0
        %4585 = vmatprep.mubr.bf16.mxu0 0
        %4586 = vmatmul.mubr.bf16.gmra.mrb[0].mxu0 %v4294
        %v4587 = vpop.f32.mrb[0].mxu0
        %v4588 = vadd.f32 0.0, %v4587
        %v4589 = vpop.f32.mrb[0].mxu0
        %v4590 = vpop.f32.mrb[0].mxu0
        %v4591 = vadd.f32 0.0, %v4590
        %v4592 = vpop.f32.mrb[0].mxu0
        %4593 = vmatprep.mubr.bf16.mxu0 0
        %4594 = vmatmul.mubr.bf16.gmra.mrb[0].mxu0 %v4303
        %v4595 = vpop.f32.mrb[0].mxu0
        %v4596 = vadd.f32 0.0, %v4595
        %v4597 = vpop.f32.mrb[0].mxu0
        %v4598 = vpop.f32.mrb[0].mxu0
        %v4599 = vadd.f32 0.0, %v4598
        %v4600 = vpop.f32.mrb[0].mxu0
        %4601 = vmatprep.mubr.bf16.mxu0 0
        %4602 = vmatmul.mubr.bf16.gmra.mrb[0].mxu0 %v4312
        %v4603 = vpop.f32.mrb[0].mxu0
        %v4604 = vadd.f32 0.0, %v4603
        %v4605 = vpop.f32.mrb[0].mxu0
        %v4606 = vpop.f32.mrb[0].mxu0
        %v4607 = vadd.f32 0.0, %v4606
        %v4608 = vpop.f32.mrb[0].mxu0
        %4609 = vdwg.mxu0
        %v4610 = vadd.f32 %v3852, %v4420
        %v4611 = vadd.f32 %v3853, %v4423
        %v4612 = vadd.f32 %v3854, %v4428
        %v4613 = vadd.f32 %v3855, %v4431
        %v4614 = vadd.f32 %v3856, %v4436
        %v4615 = vadd.f32 %v3857, %v4439
        %v4616 = vadd.f32 %v3858, %v4444
        %v4617 = vadd.f32 %v3859, %v4447
        %v4618 = vadd.f32 %v3860, %v4452
        %v4619 = vadd.f32 %v3861, %v4455
        %v4620 = vadd.f32 %v3862, %v4460
        %v4621 = vadd.f32 %v3863, %v4463
        %v4622 = vadd.f32 %v3864, %v4468
        %v4623 = vadd.f32 %v3865, %v4471
        %v4624 = vadd.f32 %v3866, %v4476
        %v4625 = vadd.f32 %v3867, %v4479
        %v4626 = vadd.f32 %v3868, %v4484
        %v4627 = vadd.f32 %v3869, %v4487
        %v4628 = vadd.f32 %v3870, %v4492
        %v4629 = vadd.f32 %v3871, %v4495
        %v4630 = vadd.f32 %v3872, %v4500
        %v4631 = vadd.f32 %v3873, %v4503
        %v4632 = vadd.f32 %v3874, %v4508
        %v4633 = vadd.f32 %v3875, %v4511
        %v4634 = vadd.f32 %v3876, %v4516
        %v4635 = vadd.f32 %v3877, %v4519
        %v4636 = vadd.f32 %v3878, %v4524
        %v4637 = vadd.f32 %v3879, %v4527
        %v4638 = vadd.f32 %v3880, %v4532
        %v4639 = vadd.f32 %v3881, %v4535
        %v4640 = vadd.f32 %v3882, %v4540
        %v4641 = vadd.f32 %v3883, %v4543
        %v4642 = vadd.f32 %v3884, %v4548
        %v4643 = vadd.f32 %v3885, %v4551
        %v4644 = vadd.f32 %v3886, %v4556
        %v4645 = vadd.f32 %v3887, %v4559
        %v4646 = vadd.f32 %v3888, %v4564
        %v4647 = vadd.f32 %v3889, %v4567
        %v4648 = vadd.f32 %v3890, %v4572
        %v4649 = vadd.f32 %v3891, %v4575
        %v4650 = vadd.f32 %v3892, %v4580
        %v4651 = vadd.f32 %v3893, %v4583
        %v4652 = vadd.f32 %v3894, %v4588
        %v4653 = vadd.f32 %v3895, %v4591
        %v4654 = vadd.f32 %v3896, %v4596
        %v4655 = vadd.f32 %v3897, %v4599
        %v4656 = vadd.f32 %v3898, %v4604
        %v4657 = vadd.f32 %v3899, %v4607
        %s4658 = scalar_lea.vmem [#allocation6], 448
        %v4659 = vld [vmem:[%s4658] sm:$0xf]
        %v4660 = vld [vmem:[%s4658 + $0x4] sm:$0xf]
        %v4661 = vld [vmem:[%s4658 + $0x8] sm:$0xf]
        %v4662 = vld [vmem:[%s4658 + $0xc] sm:$0xf]
        %v4663 = vld [vmem:[%s4658 + $0x10] sm:$0xf]
        %v4664 = vld [vmem:[%s4658 + $0x14] sm:$0xf]
        %v4665 = vld [vmem:[%s4658 + $0x18] sm:$0xf]
        %v4666 = vld [vmem:[%s4658 + $0x1c] sm:$0xf]
        %v4667 = vld [vmem:[%s4658 + $0x20] sm:$0xf]
        %v4668 = vld [vmem:[%s4658 + $0x24] sm:$0xf]
        %v4669 = vld [vmem:[%s4658 + $0x28] sm:$0xf]
        %v4670 = vld [vmem:[%s4658 + $0x2c] sm:$0xf]
        %v4671 = vld [vmem:[%s4658 + $0x30] sm:$0xf]
        %v4672 = vld [vmem:[%s4658 + $0x34] sm:$0xf]
        %v4673 = vld [vmem:[%s4658 + $0x38] sm:$0xf]
        %v4674 = vld [vmem:[%s4658 + $0x3c] sm:$0xf]
        %v4675 = vpack.c.b16 %v4017, %v4016
        %v4676 = vpack.c.b16 %v4019, %v4018
        %v4677 = vpack.c.b16 %v4021, %v4020
        %v4678 = vpack.c.b16 %v4023, %v4022
        %v4679 = vpack.c.b16 %v4025, %v4024
        %v4680 = vpack.c.b16 %v4027, %v4026
        %v4681 = vpack.c.b16 %v4029, %v4028
        %v4682 = vpack.c.b16 %v4031, %v4030
        %v4683 = vpack.c.b16 %v4033, %v4032
        %v4684 = vpack.c.b16 %v4035, %v4034
        %v4685 = vpack.c.b16 %v4037, %v4036
        %v4686 = vpack.c.b16 %v4039, %v4038
        %v4687 = vpack.c.b16 %v4041, %v4040
        %v4688 = vpack.c.b16 %v4043, %v4042
        %v4689 = vpack.c.b16 %v4045, %v4044
        %v4690 = vpack.c.b16 %v4047, %v4046
        %v4691 = vpack.c.b16 %v4049, %v4048
        %v4692 = vpack.c.b16 %v4051, %v4050
        %v4693 = vpack.c.b16 %v4053, %v4052
        %v4694 = vpack.c.b16 %v4055, %v4054
        %v4695 = vpack.c.b16 %v4057, %v4056
        %v4696 = vpack.c.b16 %v4059, %v4058
        %v4697 = vpack.c.b16 %v4061, %v4060
        %v4698 = vpack.c.b16 %v4063, %v4062
        %v4739 = vunpack.c.l.b16 %v4659
        %v4740 = vunpack.c.l.b16 %v4660
        %v4741 = vunpack.c.l.b16 %v4661
        %v4742 = vunpack.c.l.b16 %v4662
        %v4743 = vunpack.c.l.b16 %v4663
        %v4744 = vunpack.c.l.b16 %v4664
        %v4745 = vunpack.c.l.b16 %v4665
        %v4746 = vunpack.c.l.b16 %v4666
        %v4747 = vunpack.c.l.b16 %v4667
        %v4748 = vunpack.c.l.b16 %v4668
        %v4749 = vunpack.c.l.b16 %v4669
        %v4750 = vunpack.c.l.b16 %v4670
        %v4751 = vunpack.c.l.b16 %v4671
        %v4752 = vunpack.c.l.b16 %v4672
        %v4753 = vunpack.c.l.b16 %v4673
        %v4754 = vunpack.c.l.b16 %v4674
        %v4755 = vpack.c.b16 %v4740, %v4739
        %v4756 = vpack.c.b16 %v4742, %v4741
        %v4757 = vpack.c.b16 %v4744, %v4743
        %v4758 = vpack.c.b16 %v4746, %v4745
        %v4759 = vpack.c.b16 %v4748, %v4747
        %v4760 = vpack.c.b16 %v4750, %v4749
        %v4761 = vpack.c.b16 %v4752, %v4751
        %v4762 = vpack.c.b16 %v4754, %v4753
        %4771 = vmatprep.subr.bf16.mxu0 0
        %4772 = vmatpush1.bf16.msra.mxu0 %v4755
        %4773 = vmatprep.subr.bf16.mxu0 0
        %4774 = vmatpush1.bf16.msra.mxu0 %v4756
        %4775 = vmatprep.subr.bf16.mxu0 0
        %4776 = vmatpush1.bf16.msra.mxu0 %v4757
        %4777 = vmatprep.subr.bf16.mxu0 0
        %4778 = vmatpush1.bf16.msra.mxu0 %v4758
        %4779 = vmatprep.subr.bf16.mxu0 0
        %4780 = vmatpush1.bf16.msra.mxu0 %v4759
        %4781 = vmatprep.subr.bf16.mxu0 0
        %4782 = vmatpush1.bf16.msra.mxu0 %v4760
        %4783 = vmatprep.subr.bf16.mxu0 0
        %4784 = vmatpush1.bf16.msra.mxu0 %v4761
        %4785 = vmatprep.subr.bf16.mxu0 0
        %4786 = vmatpush1.bf16.msra.mxu0 %v4762
        %4787 = vmatprep.subr.bf16.mxu0 0
        %4788 = vmatpush1.bf16.msra.mxu0 0
        %4789 = vmatprep.subr.bf16.mxu0 0
        %4790 = vmatpush1.bf16.msra.mxu0 0
        %4791 = vmatprep.subr.bf16.mxu0 0
        %4792 = vmatpush1.bf16.msra.mxu0 0
        %4793 = vmatprep.subr.bf16.mxu0 0
        %4794 = vmatpush1.bf16.msra.mxu0 0
        %4795 = vmatprep.subr.bf16.mxu0 0
        %4796 = vmatpush1.bf16.msra.mxu0 0
        %4797 = vmatprep.subr.bf16.mxu0 0
        %4798 = vmatpush1.bf16.msra.mxu0 0
        %4799 = vmatprep.subr.bf16.mxu0 0
        %4800 = vmatpush1.bf16.msra.mxu0 0
        %4801 = vmatprep.subr.bf16.mxu0 0
        %4802 = vmatpush1.bf16.msra.mxu0 0
        %4803 = vmatprep.mubr.bf16.mxu0 0
        %4804 = vmatmul.mubr.bf16.gmra.mrb[0].mxu0 %v4675
        %v4805 = vpop.f32.mrb[0].mxu0
        %v4806 = vadd.f32 0.0, %v4805
        %v4807 = vpop.f32.mrb[0].mxu0
        %v4808 = vpop.f32.mrb[0].mxu0
        %v4809 = vadd.f32 0.0, %v4808
        %v4810 = vpop.f32.mrb[0].mxu0
        %4811 = vmatprep.mubr.bf16.mxu0 0
        %4812 = vmatmul.mubr.bf16.gmra.mrb[0].mxu0 %v4676
        %v4813 = vpop.f32.mrb[0].mxu0
        %v4814 = vadd.f32 0.0, %v4813
        %v4815 = vpop.f32.mrb[0].mxu0
        %v4816 = vpop.f32.mrb[0].mxu0
        %v4817 = vadd.f32 0.0, %v4816
        %v4818 = vpop.f32.mrb[0].mxu0
        %4819 = vmatprep.mubr.bf16.mxu0 0
        %4820 = vmatmul.mubr.bf16.gmra.mrb[0].mxu0 %v4677
        %v4821 = vpop.f32.mrb[0].mxu0
        %v4822 = vadd.f32 0.0, %v4821
        %v4823 = vpop.f32.mrb[0].mxu0
        %v4824 = vpop.f32.mrb[0].mxu0
        %v4825 = vadd.f32 0.0, %v4824
        %v4826 = vpop.f32.mrb[0].mxu0
        %4827 = vmatprep.mubr.bf16.mxu0 0
        %4828 = vmatmul.mubr.bf16.gmra.mrb[0].mxu0 %v4678
        %v4829 = vpop.f32.mrb[0].mxu0
        %v4830 = vadd.f32 0.0, %v4829
        %v4831 = vpop.f32.mrb[0].mxu0
        %v4832 = vpop.f32.mrb[0].mxu0
        %v4833 = vadd.f32 0.0, %v4832
        %v4834 = vpop.f32.mrb[0].mxu0
        %4835 = vmatprep.mubr.bf16.mxu0 0
        %4836 = vmatmul.mubr.bf16.gmra.mrb[0].mxu0 %v4679
        %v4837 = vpop.f32.mrb[0].mxu0
        %v4838 = vadd.f32 0.0, %v4837
        %v4839 = vpop.f32.mrb[0].mxu0
        %v4840 = vpop.f32.mrb[0].mxu0
        %v4841 = vadd.f32 0.0, %v4840
        %v4842 = vpop.f32.mrb[0].mxu0
        %4843 = vmatprep.mubr.bf16.mxu0 0
        %4844 = vmatmul.mubr.bf16.gmra.mrb[0].mxu0 %v4680
        %v4845 = vpop.f32.mrb[0].mxu0
        %v4846 = vadd.f32 0.0, %v4845
        %v4847 = vpop.f32.mrb[0].mxu0
        %v4848 = vpop.f32.mrb[0].mxu0
        %v4849 = vadd.f32 0.0, %v4848
        %v4850 = vpop.f32.mrb[0].mxu0
        %4851 = vmatprep.mubr.bf16.mxu0 0
        %4852 = vmatmul.mubr.bf16.gmra.mrb[0].mxu0 %v4681
        %v4853 = vpop.f32.mrb[0].mxu0
        %v4854 = vadd.f32 0.0, %v4853
        %v4855 = vpop.f32.mrb[0].mxu0
        %v4856 = vpop.f32.mrb[0].mxu0
        %v4857 = vadd.f32 0.0, %v4856
        %v4858 = vpop.f32.mrb[0].mxu0
        %4859 = vmatprep.mubr.bf16.mxu0 0
        %4860 = vmatmul.mubr.bf16.gmra.mrb[0].mxu0 %v4682
        %v4861 = vpop.f32.mrb[0].mxu0
        %v4862 = vadd.f32 0.0, %v4861
        %v4863 = vpop.f32.mrb[0].mxu0
        %v4864 = vpop.f32.mrb[0].mxu0
        %v4865 = vadd.f32 0.0, %v4864
        %v4866 = vpop.f32.mrb[0].mxu0
        %4867 = vmatprep.mubr.bf16.mxu0 0
        %4868 = vmatmul.mubr.bf16.gmra.mrb[0].mxu0 %v4683
        %v4869 = vpop.f32.mrb[0].mxu0
        %v4870 = vadd.f32 0.0, %v4869
        %v4871 = vpop.f32.mrb[0].mxu0
        %v4872 = vpop.f32.mrb[0].mxu0
        %v4873 = vadd.f32 0.0, %v4872
        %v4874 = vpop.f32.mrb[0].mxu0
        %4875 = vmatprep.mubr.bf16.mxu0 0
        %4876 = vmatmul.mubr.bf16.gmra.mrb[0].mxu0 %v4684
        %v4877 = vpop.f32.mrb[0].mxu0
        %v4878 = vadd.f32 0.0, %v4877
        %v4879 = vpop.f32.mrb[0].mxu0
        %v4880 = vpop.f32.mrb[0].mxu0
        %v4881 = vadd.f32 0.0, %v4880
        %v4882 = vpop.f32.mrb[0].mxu0
        %4883 = vmatprep.mubr.bf16.mxu0 0
        %4884 = vmatmul.mubr.bf16.gmra.mrb[0].mxu0 %v4685
        %v4885 = vpop.f32.mrb[0].mxu0
        %v4886 = vadd.f32 0.0, %v4885
        %v4887 = vpop.f32.mrb[0].mxu0
        %v4888 = vpop.f32.mrb[0].mxu0
        %v4889 = vadd.f32 0.0, %v4888
        %v4890 = vpop.f32.mrb[0].mxu0
        %4891 = vmatprep.mubr.bf16.mxu0 0
        %4892 = vmatmul.mubr.bf16.gmra.mrb[0].mxu0 %v4686
        %v4893 = vpop.f32.mrb[0].mxu0
        %v4894 = vadd.f32 0.0, %v4893
        %v4895 = vpop.f32.mrb[0].mxu0
        %v4896 = vpop.f32.mrb[0].mxu0
        %v4897 = vadd.f32 0.0, %v4896
        %v4898 = vpop.f32.mrb[0].mxu0
        %4899 = vmatprep.mubr.bf16.mxu0 0
        %4900 = vmatmul.mubr.bf16.gmra.mrb[0].mxu0 %v4687
        %v4901 = vpop.f32.mrb[0].mxu0
        %v4902 = vadd.f32 0.0, %v4901
        %v4903 = vpop.f32.mrb[0].mxu0
        %v4904 = vpop.f32.mrb[0].mxu0
        %v4905 = vadd.f32 0.0, %v4904
        %v4906 = vpop.f32.mrb[0].mxu0
        %4907 = vmatprep.mubr.bf16.mxu0 0
        %4908 = vmatmul.mubr.bf16.gmra.mrb[0].mxu0 %v4688
        %v4909 = vpop.f32.mrb[0].mxu0
        %v4910 = vadd.f32 0.0, %v4909
        %v4911 = vpop.f32.mrb[0].mxu0
        %v4912 = vpop.f32.mrb[0].mxu0
        %v4913 = vadd.f32 0.0, %v4912
        %v4914 = vpop.f32.mrb[0].mxu0
        %4915 = vmatprep.mubr.bf16.mxu0 0
        %4916 = vmatmul.mubr.bf16.gmra.mrb[0].mxu0 %v4689
        %v4917 = vpop.f32.mrb[0].mxu0
        %v4918 = vadd.f32 0.0, %v4917
        %v4919 = vpop.f32.mrb[0].mxu0
        %v4920 = vpop.f32.mrb[0].mxu0
        %v4921 = vadd.f32 0.0, %v4920
        %v4922 = vpop.f32.mrb[0].mxu0
        %4923 = vmatprep.mubr.bf16.mxu0 0
        %4924 = vmatmul.mubr.bf16.gmra.mrb[0].mxu0 %v4690
        %v4925 = vpop.f32.mrb[0].mxu0
        %v4926 = vadd.f32 0.0, %v4925
        %v4927 = vpop.f32.mrb[0].mxu0
        %v4928 = vpop.f32.mrb[0].mxu0
        %v4929 = vadd.f32 0.0, %v4928
        %v4930 = vpop.f32.mrb[0].mxu0
        %4931 = vmatprep.mubr.bf16.mxu0 0
        %4932 = vmatmul.mubr.bf16.gmra.mrb[0].mxu0 %v4691
        %v4933 = vpop.f32.mrb[0].mxu0
        %v4934 = vadd.f32 0.0, %v4933
        %v4935 = vpop.f32.mrb[0].mxu0
        %v4936 = vpop.f32.mrb[0].mxu0
        %v4937 = vadd.f32 0.0, %v4936
        %v4938 = vpop.f32.mrb[0].mxu0
        %4939 = vmatprep.mubr.bf16.mxu0 0
        %4940 = vmatmul.mubr.bf16.gmra.mrb[0].mxu0 %v4692
        %v4941 = vpop.f32.mrb[0].mxu0
        %v4942 = vadd.f32 0.0, %v4941
        %v4943 = vpop.f32.mrb[0].mxu0
        %v4944 = vpop.f32.mrb[0].mxu0
        %v4945 = vadd.f32 0.0, %v4944
        %v4946 = vpop.f32.mrb[0].mxu0
        %4947 = vmatprep.mubr.bf16.mxu0 0
        %4948 = vmatmul.mubr.bf16.gmra.mrb[0].mxu0 %v4693
        %v4949 = vpop.f32.mrb[0].mxu0
        %v4950 = vadd.f32 0.0, %v4949
        %v4951 = vpop.f32.mrb[0].mxu0
        %v4952 = vpop.f32.mrb[0].mxu0
        %v4953 = vadd.f32 0.0, %v4952
        %v4954 = vpop.f32.mrb[0].mxu0
        %4955 = vmatprep.mubr.bf16.mxu0 0
        %4956 = vmatmul.mubr.bf16.gmra.mrb[0].mxu0 %v4694
        %v4957 = vpop.f32.mrb[0].mxu0
        %v4958 = vadd.f32 0.0, %v4957
        %v4959 = vpop.f32.mrb[0].mxu0
        %v4960 = vpop.f32.mrb[0].mxu0
        %v4961 = vadd.f32 0.0, %v4960
        %v4962 = vpop.f32.mrb[0].mxu0
        %4963 = vmatprep.mubr.bf16.mxu0 0
        %4964 = vmatmul.mubr.bf16.gmra.mrb[0].mxu0 %v4695
        %v4965 = vpop.f32.mrb[0].mxu0
        %v4966 = vadd.f32 0.0, %v4965
        %v4967 = vpop.f32.mrb[0].mxu0
        %v4968 = vpop.f32.mrb[0].mxu0
        %v4969 = vadd.f32 0.0, %v4968
        %v4970 = vpop.f32.mrb[0].mxu0
        %4971 = vmatprep.mubr.bf16.mxu0 0
        %4972 = vmatmul.mubr.bf16.gmra.mrb[0].mxu0 %v4696
        %v4973 = vpop.f32.mrb[0].mxu0
        %v4974 = vadd.f32 0.0, %v4973
        %v4975 = vpop.f32.mrb[0].mxu0
        %v4976 = vpop.f32.mrb[0].mxu0
        %v4977 = vadd.f32 0.0, %v4976
        %v4978 = vpop.f32.mrb[0].mxu0
        %4979 = vmatprep.mubr.bf16.mxu0 0
        %4980 = vmatmul.mubr.bf16.gmra.mrb[0].mxu0 %v4697
        %v4981 = vpop.f32.mrb[0].mxu0
        %v4982 = vadd.f32 0.0, %v4981
        %v4983 = vpop.f32.mrb[0].mxu0
        %v4984 = vpop.f32.mrb[0].mxu0
        %v4985 = vadd.f32 0.0, %v4984
        %v4986 = vpop.f32.mrb[0].mxu0
        %4987 = vmatprep.mubr.bf16.mxu0 0
        %4988 = vmatmul.mubr.bf16.gmra.mrb[0].mxu0 %v4698
        %v4989 = vpop.f32.mrb[0].mxu0
        %v4990 = vadd.f32 0.0, %v4989
        %v4991 = vpop.f32.mrb[0].mxu0
        %v4992 = vpop.f32.mrb[0].mxu0
        %v4993 = vadd.f32 0.0, %v4992
        %v4994 = vpop.f32.mrb[0].mxu0
        %4995 = vdwg.mxu0
        %v4996 = vadd.f32 %v4610, %v4806
        %v4997 = vadd.f32 %v4611, %v4809
        %v4998 = vadd.f32 %v4612, %v4814
        %v4999 = vadd.f32 %v4613, %v4817
        %v5000 = vadd.f32 %v4614, %v4822
        %v5001 = vadd.f32 %v4615, %v4825
        %v5002 = vadd.f32 %v4616, %v4830
        %v5003 = vadd.f32 %v4617, %v4833
        %v5004 = vadd.f32 %v4618, %v4838
        %v5005 = vadd.f32 %v4619, %v4841
        %v5006 = vadd.f32 %v4620, %v4846
        %v5007 = vadd.f32 %v4621, %v4849
        %v5008 = vadd.f32 %v4622, %v4854
        %v5009 = vadd.f32 %v4623, %v4857
        %v5010 = vadd.f32 %v4624, %v4862
        %v5011 = vadd.f32 %v4625, %v4865
        %v5012 = vadd.f32 %v4626, %v4870
        %v5013 = vadd.f32 %v4627, %v4873
        %v5014 = vadd.f32 %v4628, %v4878
        %v5015 = vadd.f32 %v4629, %v4881
        %v5016 = vadd.f32 %v4630, %v4886
        %v5017 = vadd.f32 %v4631, %v4889
        %v5018 = vadd.f32 %v4632, %v4894
        %v5019 = vadd.f32 %v4633, %v4897
        %v5020 = vadd.f32 %v4634, %v4902
        %v5021 = vadd.f32 %v4635, %v4905
        %v5022 = vadd.f32 %v4636, %v4910
        %v5023 = vadd.f32 %v4637, %v4913
        %v5024 = vadd.f32 %v4638, %v4918
        %v5025 = vadd.f32 %v4639, %v4921
        %v5026 = vadd.f32 %v4640, %v4926
        %v5027 = vadd.f32 %v4641, %v4929
        %v5028 = vadd.f32 %v4642, %v4934
        %v5029 = vadd.f32 %v4643, %v4937
        %v5030 = vadd.f32 %v4644, %v4942
        %v5031 = vadd.f32 %v4645, %v4945
        %v5032 = vadd.f32 %v4646, %v4950
        %v5033 = vadd.f32 %v4647, %v4953
        %v5034 = vadd.f32 %v4648, %v4958
        %v5035 = vadd.f32 %v4649, %v4961
        %v5036 = vadd.f32 %v4650, %v4966
        %v5037 = vadd.f32 %v4651, %v4969
        %v5038 = vadd.f32 %v4652, %v4974
        %v5039 = vadd.f32 %v4653, %v4977
        %v5040 = vadd.f32 %v4654, %v4982
        %v5041 = vadd.f32 %v4655, %v4985
        %v5042 = vadd.f32 %v4656, %v4990
        %v5043 = vadd.f32 %v4657, %v4993
        %v5044 = vld [vmem:[%s212 + $0x24] sm:$0xf]
        %v5045 = vld [vmem:[%s212 + $0x28] sm:$0xf]
        %v5046 = vld [vmem:[%s212 + $0x2c] sm:$0xf]
        %v5047 = vld [vmem:[%s212 + $0x30] sm:$0xf]
        %v5048 = vld [vmem:[%s212 + $0x34] sm:$0xf]
        %v5049 = vld [vmem:[%s212 + $0x38] sm:$0xf]
        %v5050 = vld [vmem:[%s212 + $0x3c] sm:$0xf]
        %v5051 = vld [vmem:[%s212 + $0x40] sm:$0xf]
        %v5052 = vld [vmem:[%s212 + $0x44] sm:$0xf]
        %v5053 = vld [vmem:[%s212 + $0x48] sm:$0xf]
        %v5054 = vld [vmem:[%s212 + $0x4c] sm:$0xf]
        %v5055 = vld [vmem:[%s212 + $0x50] sm:$0xf]
        %v5056 = vld [vmem:[%s212 + $0x54] sm:$0xf]
        %v5057 = vld [vmem:[%s212 + $0x58] sm:$0xf]
        %v5058 = vld [vmem:[%s212 + $0x5c] sm:$0xf]
        %v5059 = vld [vmem:[%s212 + $0x60] sm:$0xf]
        %v5060 = vld [vmem:[%s212 + $0x64] sm:$0xf]
        %v5061 = vld [vmem:[%s212 + $0x68] sm:$0xf]
        %v5062 = vld [vmem:[%s212 + $0x6c] sm:$0xf]
        %v5063 = vld [vmem:[%s212 + $0x70] sm:$0xf]
        %v5064 = vld [vmem:[%s212 + $0x74] sm:$0xf]
        %v5065 = vld [vmem:[%s212 + $0x78] sm:$0xf]
        %v5066 = vld [vmem:[%s212 + $0x7c] sm:$0xf]
        %v5067 = vld [vmem:[%s212 + $0x80] sm:$0xf]
        %v5068 = vld [vmem:[%s212 + $0x84] sm:$0xf]
        %v5069 = vld [vmem:[%s212 + $0x88] sm:$0xf]
        %v5070 = vld [vmem:[%s212 + $0x8c] sm:$0xf]
        %v5071 = vld [vmem:[%s212 + $0x90] sm:$0xf]
        %v5072 = vld [vmem:[%s212 + $0x94] sm:$0xf]
        %v5073 = vld [vmem:[%s212 + $0x98] sm:$0xf]
        %v5074 = vld [vmem:[%s212 + $0x9c] sm:$0xf]
        %v5075 = vld [vmem:[%s212 + $0xa0] sm:$0xf]
        %v5076 = vld [vmem:[%s212 + $0xa4] sm:$0xf]
        %v5077 = vld [vmem:[%s212 + $0xa8] sm:$0xf]
        %v5078 = vld [vmem:[%s212 + $0xac] sm:$0xf]
        %v5079 = vld [vmem:[%s212 + $0xb0] sm:$0xf]
        %v5080 = vld [vmem:[%s212 + $0xb4] sm:$0xf]
        %v5081 = vld [vmem:[%s212 + $0xb8] sm:$0xf]
        %v5082 = vld [vmem:[%s212 + $0xbc] sm:$0xf]
        %v5083 = vld [vmem:[%s212 + $0xc0] sm:$0xf]
        %v5084 = vld [vmem:[%s212 + $0xc4] sm:$0xf]
        %v5085 = vld [vmem:[%s212 + $0xc8] sm:$0xf]
        %v5086 = vld [vmem:[%s212 + $0xcc] sm:$0xf]
        %v5087 = vld [vmem:[%s212 + $0xd0] sm:$0xf]
        %v5088 = vld [vmem:[%s212 + $0xd4] sm:$0xf]
        %v5089 = vld [vmem:[%s212 + $0xd8] sm:$0xf]
        %v5090 = vld [vmem:[%s212 + $0xdc] sm:$0xf]
        %v5091 = vld [vmem:[%s212 + $0xe0] sm:$0xf]
        %v5092 = vld [vmem:[%s212 + $0xe4] sm:$0x1]
        %s5093 = scalar_lea.vmem [#allocation6], 512
        %v5094 = vld [vmem:[%s5093] sm:$0xf]
        %v5095 = vld [vmem:[%s5093 + $0x4] sm:$0xf]
        %v5096 = vld [vmem:[%s5093 + $0x8] sm:$0xf]
        %v5097 = vld [vmem:[%s5093 + $0xc] sm:$0xf]
        %v5098 = vld [vmem:[%s5093 + $0x10] sm:$0xf]
        %v5099 = vld [vmem:[%s5093 + $0x14] sm:$0xf]
        %v5100 = vld [vmem:[%s5093 + $0x18] sm:$0xf]
        %v5101 = vld [vmem:[%s5093 + $0x1c] sm:$0xf]
        %v5102 = vld [vmem:[%s5093 + $0x20] sm:$0xf]
        %v5103 = vld [vmem:[%s5093 + $0x24] sm:$0xf]
        %v5104 = vld [vmem:[%s5093 + $0x28] sm:$0xf]
        %v5105 = vld [vmem:[%s5093 + $0x2c] sm:$0xf]
        %v5106 = vld [vmem:[%s5093 + $0x30] sm:$0xf]
        %v5107 = vld [vmem:[%s5093 + $0x34] sm:$0xf]
        %v5108 = vld [vmem:[%s5093 + $0x38] sm:$0xf]
        %v5109 = vld [vmem:[%s5093 + $0x3c] sm:$0xf]
        %v5159 = vunpack.c.l.b16 %v5044
        %v5160 = vunpack.c.l.b16 %v5045
        %v5161 = vunpack.c.l.b16 %v5046
        %v5162 = vunpack.c.l.b16 %v5047
        %v5163 = vunpack.c.l.b16 %v5048
        %v5164 = vunpack.c.l.b16 %v5049
        %v5165 = vunpack.c.l.b16 %v5050
        %v5166 = vunpack.c.l.b16 %v5051
        %v5167 = vunpack.c.l.b16 %v5052
        %v5168 = vunpack.c.l.b16 %v5053
        %v5169 = vunpack.c.l.b16 %v5054
        %v5170 = vunpack.c.l.b16 %v5055
        %v5171 = vunpack.c.l.b16 %v5056
        %v5172 = vunpack.c.l.b16 %v5057
        %v5173 = vunpack.c.l.b16 %v5058
        %v5174 = vunpack.c.l.b16 %v5059
        %v5175 = vunpack.c.l.b16 %v5060
        %v5176 = vunpack.c.l.b16 %v5061
        %v5177 = vunpack.c.l.b16 %v5062
        %v5178 = vunpack.c.l.b16 %v5063
        %v5179 = vunpack.c.l.b16 %v5064
        %v5180 = vunpack.c.l.b16 %v5065
        %v5181 = vunpack.c.l.b16 %v5066
        %v5182 = vunpack.c.l.b16 %v5067
        %v5183 = vunpack.c.l.b16 %v5068
        %v5184 = vunpack.c.l.b16 %v5069
        %v5185 = vunpack.c.l.b16 %v5070
        %v5186 = vunpack.c.l.b16 %v5071
        %v5187 = vunpack.c.l.b16 %v5072
        %v5188 = vunpack.c.l.b16 %v5073
        %v5189 = vunpack.c.l.b16 %v5074
        %v5190 = vunpack.c.l.b16 %v5075
        %v5191 = vunpack.c.l.b16 %v5076
        %v5192 = vunpack.c.l.b16 %v5077
        %v5193 = vunpack.c.l.b16 %v5078
        %v5194 = vunpack.c.l.b16 %v5079
        %v5195 = vunpack.c.l.b16 %v5080
        %v5196 = vunpack.c.l.b16 %v5081
        %v5197 = vunpack.c.l.b16 %v5082
        %v5198 = vunpack.c.l.b16 %v5083
        %v5199 = vunpack.c.l.b16 %v5084
        %v5200 = vunpack.c.l.b16 %v5085
        %v5201 = vunpack.c.l.b16 %v5086
        %v5202 = vunpack.c.l.b16 %v5087
        %v5203 = vunpack.c.l.b16 %v5088
        %v5204 = vunpack.c.l.b16 %v5089
        %v5205 = vunpack.c.l.b16 %v5090
        %v5206 = vunpack.c.l.b16 %v5091
        %v5207 = vunpack.c.l.b16 %v5092
        %v5208 = vpack.c.b16 %v5160, %v5159
        %v5209 = vpack.c.b16 %v5162, %v5161
        %v5210 = vpack.c.b16 %v5164, %v5163
        %v5211 = vpack.c.b16 %v5166, %v5165
        %v5212 = vpack.c.b16 %v5168, %v5167
        %v5213 = vpack.c.b16 %v5170, %v5169
        %v5214 = vpack.c.b16 %v5172, %v5171
        %v5215 = vpack.c.b16 %v5174, %v5173
        %v5216 = vpack.c.b16 %v5176, %v5175
        %v5217 = vpack.c.b16 %v5178, %v5177
        %v5218 = vpack.c.b16 %v5180, %v5179
        %v5219 = vpack.c.b16 %v5182, %v5181
        %v5220 = vpack.c.b16 %v5184, %v5183
        %v5221 = vpack.c.b16 %v5186, %v5185
        %v5222 = vpack.c.b16 %v5188, %v5187
        %v5223 = vpack.c.b16 %v5190, %v5189
        %v5224 = vpack.c.b16 %v5192, %v5191
        %v5225 = vpack.c.b16 %v5194, %v5193
        %v5226 = vpack.c.b16 %v5196, %v5195
        %v5227 = vpack.c.b16 %v5198, %v5197
        %v5228 = vpack.c.b16 %v5200, %v5199
        %v5229 = vpack.c.b16 %v5202, %v5201
        %v5230 = vpack.c.b16 %v5204, %v5203
        %v5231 = vpack.c.b16 %v5206, %v5205
        %v5232 = vpack.c.b16 %v5207, %v5207
        %v5234 = vshrl.u32 %v5208, 16
        %v5236 = vshll.u32 %v5208, 16
        %v5238 = vrot.slane %v5236, 1
        %v5239 = vor.u32 %v5234, %v5238
        %v5241 = vshll.u32 %v5209, 16
        %v5243 = vrot.slane %v5241, 1
        %v5244 = vsel %vm1484, %v5239, %v5243
        %v5245 = vshrl.u32 %v5209, 16
        %v5247 = vor.u32 %v5245, %v5243
        %v5249 = vshll.u32 %v5210, 16
        %v5251 = vrot.slane %v5249, 1
        %v5252 = vsel %vm1484, %v5247, %v5251
        %v5253 = vshrl.u32 %v5210, 16
        %v5255 = vor.u32 %v5253, %v5251
        %v5257 = vshll.u32 %v5211, 16
        %v5259 = vrot.slane %v5257, 1
        %v5260 = vsel %vm1484, %v5255, %v5259
        %v5261 = vshrl.u32 %v5211, 16
        %v5263 = vor.u32 %v5261, %v5259
        %v5265 = vshll.u32 %v5212, 16
        %v5267 = vrot.slane %v5265, 1
        %v5268 = vsel %vm1484, %v5263, %v5267
        %v5269 = vshrl.u32 %v5212, 16
        %v5271 = vor.u32 %v5269, %v5267
        %v5273 = vshll.u32 %v5213, 16
        %v5275 = vrot.slane %v5273, 1
        %v5276 = vsel %vm1484, %v5271, %v5275
        %v5277 = vshrl.u32 %v5213, 16
        %v5279 = vor.u32 %v5277, %v5275
        %v5281 = vshll.u32 %v5214, 16
        %v5283 = vrot.slane %v5281, 1
        %v5284 = vsel %vm1484, %v5279, %v5283
        %v5285 = vshrl.u32 %v5214, 16
        %v5287 = vor.u32 %v5285, %v5283
        %v5289 = vshll.u32 %v5215, 16
        %v5291 = vrot.slane %v5289, 1
        %v5292 = vsel %vm1484, %v5287, %v5291
        %v5293 = vshrl.u32 %v5215, 16
        %v5295 = vor.u32 %v5293, %v5291
        %v5297 = vshll.u32 %v5216, 16
        %v5299 = vrot.slane %v5297, 1
        %v5300 = vsel %vm1484, %v5295, %v5299
        %v5301 = vshrl.u32 %v5216, 16
        %v5303 = vor.u32 %v5301, %v5299
        %v5305 = vshll.u32 %v5217, 16
        %v5307 = vrot.slane %v5305, 1
        %v5308 = vsel %vm1484, %v5303, %v5307
        %v5309 = vshrl.u32 %v5217, 16
        %v5311 = vor.u32 %v5309, %v5307
        %v5313 = vshll.u32 %v5218, 16
        %v5315 = vrot.slane %v5313, 1
        %v5316 = vsel %vm1484, %v5311, %v5315
        %v5317 = vshrl.u32 %v5218, 16
        %v5319 = vor.u32 %v5317, %v5315
        %v5321 = vshll.u32 %v5219, 16
        %v5323 = vrot.slane %v5321, 1
        %v5324 = vsel %vm1484, %v5319, %v5323
        %v5325 = vshrl.u32 %v5219, 16
        %v5327 = vor.u32 %v5325, %v5323
        %v5329 = vshll.u32 %v5220, 16
        %v5331 = vrot.slane %v5329, 1
        %v5332 = vsel %vm1484, %v5327, %v5331
        %v5333 = vshrl.u32 %v5220, 16
        %v5335 = vor.u32 %v5333, %v5331
        %v5337 = vshll.u32 %v5221, 16
        %v5339 = vrot.slane %v5337, 1
        %v5340 = vsel %vm1484, %v5335, %v5339
        %v5341 = vshrl.u32 %v5221, 16
        %v5343 = vor.u32 %v5341, %v5339
        %v5345 = vshll.u32 %v5222, 16
        %v5347 = vrot.slane %v5345, 1
        %v5348 = vsel %vm1484, %v5343, %v5347
        %v5349 = vshrl.u32 %v5222, 16
        %v5351 = vor.u32 %v5349, %v5347
        %v5353 = vshll.u32 %v5223, 16
        %v5355 = vrot.slane %v5353, 1
        %v5356 = vsel %vm1484, %v5351, %v5355
        %v5357 = vshrl.u32 %v5223, 16
        %v5359 = vor.u32 %v5357, %v5355
        %v5361 = vshll.u32 %v5224, 16
        %v5363 = vrot.slane %v5361, 1
        %v5364 = vsel %vm1484, %v5359, %v5363
        %v5365 = vshrl.u32 %v5224, 16
        %v5367 = vor.u32 %v5365, %v5363
        %v5369 = vshll.u32 %v5225, 16
        %v5371 = vrot.slane %v5369, 1
        %v5372 = vsel %vm1484, %v5367, %v5371
        %v5373 = vshrl.u32 %v5225, 16
        %v5375 = vor.u32 %v5373, %v5371
        %v5377 = vshll.u32 %v5226, 16
        %v5379 = vrot.slane %v5377, 1
        %v5380 = vsel %vm1484, %v5375, %v5379
        %v5381 = vshrl.u32 %v5226, 16
        %v5383 = vor.u32 %v5381, %v5379
        %v5385 = vshll.u32 %v5227, 16
        %v5387 = vrot.slane %v5385, 1
        %v5388 = vsel %vm1484, %v5383, %v5387
        %v5389 = vshrl.u32 %v5227, 16
        %v5391 = vor.u32 %v5389, %v5387
        %v5393 = vshll.u32 %v5228, 16
        %v5395 = vrot.slane %v5393, 1
        %v5396 = vsel %vm1484, %v5391, %v5395
        %v5397 = vshrl.u32 %v5228, 16
        %v5399 = vor.u32 %v5397, %v5395
        %v5401 = vshll.u32 %v5229, 16
        %v5403 = vrot.slane %v5401, 1
        %v5404 = vsel %vm1484, %v5399, %v5403
        %v5405 = vshrl.u32 %v5229, 16
        %v5407 = vor.u32 %v5405, %v5403
        %v5409 = vshll.u32 %v5230, 16
        %v5411 = vrot.slane %v5409, 1
        %v5412 = vsel %vm1484, %v5407, %v5411
        %v5413 = vshrl.u32 %v5230, 16
        %v5415 = vor.u32 %v5413, %v5411
        %v5417 = vshll.u32 %v5231, 16
        %v5419 = vrot.slane %v5417, 1
        %v5420 = vsel %vm1484, %v5415, %v5419
        %v5421 = vshrl.u32 %v5231, 16
        %v5423 = vor.u32 %v5421, %v5419
        %v5425 = vshll.u32 %v5232, 16
        %v5427 = vrot.slane %v5425, 1
        %v5428 = vsel %vm1484, %v5423, %v5427
        %v5469 = vunpack.c.l.b16 %v5094
        %v5470 = vunpack.c.l.b16 %v5095
        %v5471 = vunpack.c.l.b16 %v5096
        %v5472 = vunpack.c.l.b16 %v5097
        %v5473 = vunpack.c.l.b16 %v5098
        %v5474 = vunpack.c.l.b16 %v5099
        %v5475 = vunpack.c.l.b16 %v5100
        %v5476 = vunpack.c.l.b16 %v5101
        %v5477 = vunpack.c.l.b16 %v5102
        %v5478 = vunpack.c.l.b16 %v5103
        %v5479 = vunpack.c.l.b16 %v5104
        %v5480 = vunpack.c.l.b16 %v5105
        %v5481 = vunpack.c.l.b16 %v5106
        %v5482 = vunpack.c.l.b16 %v5107
        %v5483 = vunpack.c.l.b16 %v5108
        %v5484 = vunpack.c.l.b16 %v5109
        %v5485 = vpack.c.b16 %v5470, %v5469
        %v5486 = vpack.c.b16 %v5472, %v5471
        %v5487 = vpack.c.b16 %v5474, %v5473
        %v5488 = vpack.c.b16 %v5476, %v5475
        %v5489 = vpack.c.b16 %v5478, %v5477
        %v5490 = vpack.c.b16 %v5480, %v5479
        %v5491 = vpack.c.b16 %v5482, %v5481
        %v5492 = vpack.c.b16 %v5484, %v5483
        %5501 = vmatprep.subr.bf16.mxu0 0
        %5502 = vmatpush1.bf16.msra.mxu0 %v5485
        %5503 = vmatprep.subr.bf16.mxu0 0
        %5504 = vmatpush1.bf16.msra.mxu0 %v5486
        %5505 = vmatprep.subr.bf16.mxu0 0
        %5506 = vmatpush1.bf16.msra.mxu0 %v5487
        %5507 = vmatprep.subr.bf16.mxu0 0
        %5508 = vmatpush1.bf16.msra.mxu0 %v5488
        %5509 = vmatprep.subr.bf16.mxu0 0
        %5510 = vmatpush1.bf16.msra.mxu0 %v5489
        %5511 = vmatprep.subr.bf16.mxu0 0
        %5512 = vmatpush1.bf16.msra.mxu0 %v5490
        %5513 = vmatprep.subr.bf16.mxu0 0
        %5514 = vmatpush1.bf16.msra.mxu0 %v5491
        %5515 = vmatprep.subr.bf16.mxu0 0
        %5516 = vmatpush1.bf16.msra.mxu0 %v5492
        %5517 = vmatprep.subr.bf16.mxu0 0
        %5518 = vmatpush1.bf16.msra.mxu0 0
        %5519 = vmatprep.subr.bf16.mxu0 0
        %5520 = vmatpush1.bf16.msra.mxu0 0
        %5521 = vmatprep.subr.bf16.mxu0 0
        %5522 = vmatpush1.bf16.msra.mxu0 0
        %5523 = vmatprep.subr.bf16.mxu0 0
        %5524 = vmatpush1.bf16.msra.mxu0 0
        %5525 = vmatprep.subr.bf16.mxu0 0
        %5526 = vmatpush1.bf16.msra.mxu0 0
        %5527 = vmatprep.subr.bf16.mxu0 0
        %5528 = vmatpush1.bf16.msra.mxu0 0
        %5529 = vmatprep.subr.bf16.mxu0 0
        %5530 = vmatpush1.bf16.msra.mxu0 0
        %5531 = vmatprep.subr.bf16.mxu0 0
        %5532 = vmatpush1.bf16.msra.mxu0 0
        %5533 = vmatprep.mubr.bf16.mxu0 0
        %5534 = vmatmul.mubr.bf16.gmra.mrb[0].mxu0 %v5244
        %v5535 = vpop.f32.mrb[0].mxu0
        %v5536 = vadd.f32 0.0, %v5535
        %v5537 = vpop.f32.mrb[0].mxu0
        %v5538 = vpop.f32.mrb[0].mxu0
        %v5539 = vadd.f32 0.0, %v5538
        %v5540 = vpop.f32.mrb[0].mxu0
        %5541 = vmatprep.mubr.bf16.mxu0 0
        %5542 = vmatmul.mubr.bf16.gmra.mrb[0].mxu0 %v5252
        %v5543 = vpop.f32.mrb[0].mxu0
        %v5544 = vadd.f32 0.0, %v5543
        %v5545 = vpop.f32.mrb[0].mxu0
        %v5546 = vpop.f32.mrb[0].mxu0
        %v5547 = vadd.f32 0.0, %v5546
        %v5548 = vpop.f32.mrb[0].mxu0
        %5549 = vmatprep.mubr.bf16.mxu0 0
        %5550 = vmatmul.mubr.bf16.gmra.mrb[0].mxu0 %v5260
        %v5551 = vpop.f32.mrb[0].mxu0
        %v5552 = vadd.f32 0.0, %v5551
        %v5553 = vpop.f32.mrb[0].mxu0
        %v5554 = vpop.f32.mrb[0].mxu0
        %v5555 = vadd.f32 0.0, %v5554
        %v5556 = vpop.f32.mrb[0].mxu0
        %5557 = vmatprep.mubr.bf16.mxu0 0
        %5558 = vmatmul.mubr.bf16.gmra.mrb[0].mxu0 %v5268
        %v5559 = vpop.f32.mrb[0].mxu0
        %v5560 = vadd.f32 0.0, %v5559
        %v5561 = vpop.f32.mrb[0].mxu0
        %v5562 = vpop.f32.mrb[0].mxu0
        %v5563 = vadd.f32 0.0, %v5562
        %v5564 = vpop.f32.mrb[0].mxu0
        %5565 = vmatprep.mubr.bf16.mxu0 0
        %5566 = vmatmul.mubr.bf16.gmra.mrb[0].mxu0 %v5276
        %v5567 = vpop.f32.mrb[0].mxu0
        %v5568 = vadd.f32 0.0, %v5567
        %v5569 = vpop.f32.mrb[0].mxu0
        %v5570 = vpop.f32.mrb[0].mxu0
        %v5571 = vadd.f32 0.0, %v5570
        %v5572 = vpop.f32.mrb[0].mxu0
        %5573 = vmatprep.mubr.bf16.mxu0 0
        %5574 = vmatmul.mubr.bf16.gmra.mrb[0].mxu0 %v5284
        %v5575 = vpop.f32.mrb[0].mxu0
        %v5576 = vadd.f32 0.0, %v5575
        %v5577 = vpop.f32.mrb[0].mxu0
        %v5578 = vpop.f32.mrb[0].mxu0
        %v5579 = vadd.f32 0.0, %v5578
        %v5580 = vpop.f32.mrb[0].mxu0
        %5581 = vmatprep.mubr.bf16.mxu0 0
        %5582 = vmatmul.mubr.bf16.gmra.mrb[0].mxu0 %v5292
        %v5583 = vpop.f32.mrb[0].mxu0
        %v5584 = vadd.f32 0.0, %v5583
        %v5585 = vpop.f32.mrb[0].mxu0
        %v5586 = vpop.f32.mrb[0].mxu0
        %v5587 = vadd.f32 0.0, %v5586
        %v5588 = vpop.f32.mrb[0].mxu0
        %5589 = vmatprep.mubr.bf16.mxu0 0
        %5590 = vmatmul.mubr.bf16.gmra.mrb[0].mxu0 %v5300
        %v5591 = vpop.f32.mrb[0].mxu0
        %v5592 = vadd.f32 0.0, %v5591
        %v5593 = vpop.f32.mrb[0].mxu0
        %v5594 = vpop.f32.mrb[0].mxu0
        %v5595 = vadd.f32 0.0, %v5594
        %v5596 = vpop.f32.mrb[0].mxu0
        %5597 = vmatprep.mubr.bf16.mxu0 0
        %5598 = vmatmul.mubr.bf16.gmra.mrb[0].mxu0 %v5308
        %v5599 = vpop.f32.mrb[0].mxu0
        %v5600 = vadd.f32 0.0, %v5599
        %v5601 = vpop.f32.mrb[0].mxu0
        %v5602 = vpop.f32.mrb[0].mxu0
        %v5603 = vadd.f32 0.0, %v5602
        %v5604 = vpop.f32.mrb[0].mxu0
        %5605 = vmatprep.mubr.bf16.mxu0 0
        %5606 = vmatmul.mubr.bf16.gmra.mrb[0].mxu0 %v5316
        %v5607 = vpop.f32.mrb[0].mxu0
        %v5608 = vadd.f32 0.0, %v5607
        %v5609 = vpop.f32.mrb[0].mxu0
        %v5610 = vpop.f32.mrb[0].mxu0
        %v5611 = vadd.f32 0.0, %v5610
        %v5612 = vpop.f32.mrb[0].mxu0
        %5613 = vmatprep.mubr.bf16.mxu0 0
        %5614 = vmatmul.mubr.bf16.gmra.mrb[0].mxu0 %v5324
        %v5615 = vpop.f32.mrb[0].mxu0
        %v5616 = vadd.f32 0.0, %v5615
        %v5617 = vpop.f32.mrb[0].mxu0
        %v5618 = vpop.f32.mrb[0].mxu0
        %v5619 = vadd.f32 0.0, %v5618
        %v5620 = vpop.f32.mrb[0].mxu0
        %5621 = vmatprep.mubr.bf16.mxu0 0
        %5622 = vmatmul.mubr.bf16.gmra.mrb[0].mxu0 %v5332
        %v5623 = vpop.f32.mrb[0].mxu0
        %v5624 = vadd.f32 0.0, %v5623
        %v5625 = vpop.f32.mrb[0].mxu0
        %v5626 = vpop.f32.mrb[0].mxu0
        %v5627 = vadd.f32 0.0, %v5626
        %v5628 = vpop.f32.mrb[0].mxu0
        %5629 = vmatprep.mubr.bf16.mxu0 0
        %5630 = vmatmul.mubr.bf16.gmra.mrb[0].mxu0 %v5340
        %v5631 = vpop.f32.mrb[0].mxu0
        %v5632 = vadd.f32 0.0, %v5631
        %v5633 = vpop.f32.mrb[0].mxu0
        %v5634 = vpop.f32.mrb[0].mxu0
        %v5635 = vadd.f32 0.0, %v5634
        %v5636 = vpop.f32.mrb[0].mxu0
        %5637 = vmatprep.mubr.bf16.mxu0 0
        %5638 = vmatmul.mubr.bf16.gmra.mrb[0].mxu0 %v5348
        %v5639 = vpop.f32.mrb[0].mxu0
        %v5640 = vadd.f32 0.0, %v5639
        %v5641 = vpop.f32.mrb[0].mxu0
        %v5642 = vpop.f32.mrb[0].mxu0
        %v5643 = vadd.f32 0.0, %v5642
        %v5644 = vpop.f32.mrb[0].mxu0
        %5645 = vmatprep.mubr.bf16.mxu0 0
        %5646 = vmatmul.mubr.bf16.gmra.mrb[0].mxu0 %v5356
        %v5647 = vpop.f32.mrb[0].mxu0
        %v5648 = vadd.f32 0.0, %v5647
        %v5649 = vpop.f32.mrb[0].mxu0
        %v5650 = vpop.f32.mrb[0].mxu0
        %v5651 = vadd.f32 0.0, %v5650
        %v5652 = vpop.f32.mrb[0].mxu0
        %5653 = vmatprep.mubr.bf16.mxu0 0
        %5654 = vmatmul.mubr.bf16.gmra.mrb[0].mxu0 %v5364
        %v5655 = vpop.f32.mrb[0].mxu0
        %v5656 = vadd.f32 0.0, %v5655
        %v5657 = vpop.f32.mrb[0].mxu0
        %v5658 = vpop.f32.mrb[0].mxu0
        %v5659 = vadd.f32 0.0, %v5658
        %v5660 = vpop.f32.mrb[0].mxu0
        %5661 = vmatprep.mubr.bf16.mxu0 0
        %5662 = vmatmul.mubr.bf16.gmra.mrb[0].mxu0 %v5372
        %v5663 = vpop.f32.mrb[0].mxu0
        %v5664 = vadd.f32 0.0, %v5663
        %v5665 = vpop.f32.mrb[0].mxu0
        %v5666 = vpop.f32.mrb[0].mxu0
        %v5667 = vadd.f32 0.0, %v5666
        %v5668 = vpop.f32.mrb[0].mxu0
        %5669 = vmatprep.mubr.bf16.mxu0 0
        %5670 = vmatmul.mubr.bf16.gmra.mrb[0].mxu0 %v5380
        %v5671 = vpop.f32.mrb[0].mxu0
        %v5672 = vadd.f32 0.0, %v5671
        %v5673 = vpop.f32.mrb[0].mxu0
        %v5674 = vpop.f32.mrb[0].mxu0
        %v5675 = vadd.f32 0.0, %v5674
        %v5676 = vpop.f32.mrb[0].mxu0
        %5677 = vmatprep.mubr.bf16.mxu0 0
        %5678 = vmatmul.mubr.bf16.gmra.mrb[0].mxu0 %v5388
        %v5679 = vpop.f32.mrb[0].mxu0
        %v5680 = vadd.f32 0.0, %v5679
        %v5681 = vpop.f32.mrb[0].mxu0
        %v5682 = vpop.f32.mrb[0].mxu0
        %v5683 = vadd.f32 0.0, %v5682
        %v5684 = vpop.f32.mrb[0].mxu0
        %5685 = vmatprep.mubr.bf16.mxu0 0
        %5686 = vmatmul.mubr.bf16.gmra.mrb[0].mxu0 %v5396
        %v5687 = vpop.f32.mrb[0].mxu0
        %v5688 = vadd.f32 0.0, %v5687
        %v5689 = vpop.f32.mrb[0].mxu0
        %v5690 = vpop.f32.mrb[0].mxu0
        %v5691 = vadd.f32 0.0, %v5690
        %v5692 = vpop.f32.mrb[0].mxu0
        %5693 = vmatprep.mubr.bf16.mxu0 0
        %5694 = vmatmul.mubr.bf16.gmra.mrb[0].mxu0 %v5404
        %v5695 = vpop.f32.mrb[0].mxu0
        %v5696 = vadd.f32 0.0, %v5695
        %v5697 = vpop.f32.mrb[0].mxu0
        %v5698 = vpop.f32.mrb[0].mxu0
        %v5699 = vadd.f32 0.0, %v5698
        %v5700 = vpop.f32.mrb[0].mxu0
        %5701 = vmatprep.mubr.bf16.mxu0 0
        %5702 = vmatmul.mubr.bf16.gmra.mrb[0].mxu0 %v5412
        %v5703 = vpop.f32.mrb[0].mxu0
        %v5704 = vadd.f32 0.0, %v5703
        %v5705 = vpop.f32.mrb[0].mxu0
        %v5706 = vpop.f32.mrb[0].mxu0
        %v5707 = vadd.f32 0.0, %v5706
        %v5708 = vpop.f32.mrb[0].mxu0
        %5709 = vmatprep.mubr.bf16.mxu0 0
        %5710 = vmatmul.mubr.bf16.gmra.mrb[0].mxu0 %v5420
        %v5711 = vpop.f32.mrb[0].mxu0
        %v5712 = vadd.f32 0.0, %v5711
        %v5713 = vpop.f32.mrb[0].mxu0
        %v5714 = vpop.f32.mrb[0].mxu0
        %v5715 = vadd.f32 0.0, %v5714
        %v5716 = vpop.f32.mrb[0].mxu0
        %5717 = vmatprep.mubr.bf16.mxu0 0
        %5718 = vmatmul.mubr.bf16.gmra.mrb[0].mxu0 %v5428
        %v5719 = vpop.f32.mrb[0].mxu0
        %v5720 = vadd.f32 0.0, %v5719
        %v5721 = vpop.f32.mrb[0].mxu0
        %v5722 = vpop.f32.mrb[0].mxu0
        %v5723 = vadd.f32 0.0, %v5722
        %v5724 = vpop.f32.mrb[0].mxu0
        %5725 = vdwg.mxu0
        %v5726 = vadd.f32 %v4996, %v5536
        %v5727 = vadd.f32 %v4997, %v5539
        %v5728 = vadd.f32 %v4998, %v5544
        %v5729 = vadd.f32 %v4999, %v5547
        %v5730 = vadd.f32 %v5000, %v5552
        %v5731 = vadd.f32 %v5001, %v5555
        %v5732 = vadd.f32 %v5002, %v5560
        %v5733 = vadd.f32 %v5003, %v5563
        %v5734 = vadd.f32 %v5004, %v5568
        %v5735 = vadd.f32 %v5005, %v5571
        %v5736 = vadd.f32 %v5006, %v5576
        %v5737 = vadd.f32 %v5007, %v5579
        %v5738 = vadd.f32 %v5008, %v5584
        %v5739 = vadd.f32 %v5009, %v5587
        %v5740 = vadd.f32 %v5010, %v5592
        %v5741 = vadd.f32 %v5011, %v5595
        %v5742 = vadd.f32 %v5012, %v5600
        %v5743 = vadd.f32 %v5013, %v5603
        %v5744 = vadd.f32 %v5014, %v5608
        %v5745 = vadd.f32 %v5015, %v5611
        %v5746 = vadd.f32 %v5016, %v5616
        %v5747 = vadd.f32 %v5017, %v5619
        %v5748 = vadd.f32 %v5018, %v5624
        %v5749 = vadd.f32 %v5019, %v5627
        %v5750 = vadd.f32 %v5020, %v5632
        %v5751 = vadd.f32 %v5021, %v5635
        %v5752 = vadd.f32 %v5022, %v5640
        %v5753 = vadd.f32 %v5023, %v5643
        %v5754 = vadd.f32 %v5024, %v5648
        %v5755 = vadd.f32 %v5025, %v5651
        %v5756 = vadd.f32 %v5026, %v5656
        %v5757 = vadd.f32 %v5027, %v5659
        %v5758 = vadd.f32 %v5028, %v5664
        %v5759 = vadd.f32 %v5029, %v5667
        %v5760 = vadd.f32 %v5030, %v5672
        %v5761 = vadd.f32 %v5031, %v5675
        %v5762 = vadd.f32 %v5032, %v5680
        %v5763 = vadd.f32 %v5033, %v5683
        %v5764 = vadd.f32 %v5034, %v5688
        %v5765 = vadd.f32 %v5035, %v5691
        %v5766 = vadd.f32 %v5036, %v5696
        %v5767 = vadd.f32 %v5037, %v5699
        %v5768 = vadd.f32 %v5038, %v5704
        %v5769 = vadd.f32 %v5039, %v5707
        %v5770 = vadd.f32 %v5040, %v5712
        %v5771 = vadd.f32 %v5041, %v5715
        %v5772 = vadd.f32 %v5042, %v5720
        %v5773 = vadd.f32 %v5043, %v5723
        %v5774 = vlaneseq
        %v5775 = vshrl.u32 %v5774, 7
        %v5776 = vsub.s32 0, %v5775
        %v5777 = vrot.slane %v246, %v5776
        %v5778 = vmul.f32 %v5726, %v5777
        %v5779 = vmul.f32 %v5727, %v5777
        %v5780 = vmul.f32 %v5728, %v5777
        %v5781 = vmul.f32 %v5729, %v5777
        %v5782 = vmul.f32 %v5730, %v5777
        %v5783 = vmul.f32 %v5731, %v5777
        %v5784 = vmul.f32 %v5732, %v5777
        %v5785 = vmul.f32 %v5733, %v5777
        %v5786 = vmul.f32 %v5734, %v5777
        %v5787 = vmul.f32 %v5735, %v5777
        %v5788 = vmul.f32 %v5736, %v5777
        %v5789 = vmul.f32 %v5737, %v5777
        %v5790 = vmul.f32 %v5738, %v5777
        %v5791 = vmul.f32 %v5739, %v5777
        %v5792 = vmul.f32 %v5740, %v5777
        %v5793 = vmul.f32 %v5741, %v5777
        %v5794 = vmul.f32 %v5742, %v5777
        %v5795 = vmul.f32 %v5743, %v5777
        %v5796 = vmul.f32 %v5744, %v5777
        %v5797 = vmul.f32 %v5745, %v5777
        %v5798 = vmul.f32 %v5746, %v5777
        %v5799 = vmul.f32 %v5747, %v5777
        %v5800 = vmul.f32 %v5748, %v5777
        %v5801 = vmul.f32 %v5749, %v5777
        %v5802 = vmul.f32 %v5750, %v5777
        %v5803 = vmul.f32 %v5751, %v5777
        %v5804 = vmul.f32 %v5752, %v5777
        %v5805 = vmul.f32 %v5753, %v5777
        %v5806 = vmul.f32 %v5754, %v5777
        %v5807 = vmul.f32 %v5755, %v5777
        %v5808 = vmul.f32 %v5756, %v5777
        %v5809 = vmul.f32 %v5757, %v5777
        %v5810 = vmul.f32 %v5758, %v5777
        %v5811 = vmul.f32 %v5759, %v5777
        %v5812 = vmul.f32 %v5760, %v5777
        %v5813 = vmul.f32 %v5761, %v5777
        %v5814 = vmul.f32 %v5762, %v5777
        %v5815 = vmul.f32 %v5763, %v5777
        %v5816 = vmul.f32 %v5764, %v5777
        %v5817 = vmul.f32 %v5765, %v5777
        %v5818 = vmul.f32 %v5766, %v5777
        %v5819 = vmul.f32 %v5767, %v5777
        %v5820 = vmul.f32 %v5768, %v5777
        %v5821 = vmul.f32 %v5769, %v5777
        %v5822 = vmul.f32 %v5770, %v5777
        %v5823 = vmul.f32 %v5771, %v5777
        %v5824 = vmul.f32 %v5772, %v5777
        %v5825 = vmul.f32 %v5773, %v5777
        %v5826 = vlaneseq
        %v5827 = vshrl.u32 %v5826, 7
        %v5828 = vsub.s32 1, %v5827
        %v5829 = vrot.slane %v246, %v5828
        %v5830 = vadd.f32 %v5778, %v5829
        %v5831 = vadd.f32 %v5779, %v5829
        %v5832 = vadd.f32 %v5780, %v5829
        %v5833 = vadd.f32 %v5781, %v5829
        %v5834 = vadd.f32 %v5782, %v5829
        %v5835 = vadd.f32 %v5783, %v5829
        %v5836 = vadd.f32 %v5784, %v5829
        %v5837 = vadd.f32 %v5785, %v5829
        %v5838 = vadd.f32 %v5786, %v5829
        %v5839 = vadd.f32 %v5787, %v5829
        %v5840 = vadd.f32 %v5788, %v5829
        %v5841 = vadd.f32 %v5789, %v5829
        %v5842 = vadd.f32 %v5790, %v5829
        %v5843 = vadd.f32 %v5791, %v5829
        %v5844 = vadd.f32 %v5792, %v5829
        %v5845 = vadd.f32 %v5793, %v5829
        %v5846 = vadd.f32 %v5794, %v5829
        %v5847 = vadd.f32 %v5795, %v5829
        %v5848 = vadd.f32 %v5796, %v5829
        %v5849 = vadd.f32 %v5797, %v5829
        %v5850 = vadd.f32 %v5798, %v5829
        %v5851 = vadd.f32 %v5799, %v5829
        %v5852 = vadd.f32 %v5800, %v5829
        %v5853 = vadd.f32 %v5801, %v5829
        %v5854 = vadd.f32 %v5802, %v5829
        %v5855 = vadd.f32 %v5803, %v5829
        %v5856 = vadd.f32 %v5804, %v5829
        %v5857 = vadd.f32 %v5805, %v5829
        %v5858 = vadd.f32 %v5806, %v5829
        %v5859 = vadd.f32 %v5807, %v5829
        %v5860 = vadd.f32 %v5808, %v5829
        %v5861 = vadd.f32 %v5809, %v5829
        %v5862 = vadd.f32 %v5810, %v5829
        %v5863 = vadd.f32 %v5811, %v5829
        %v5864 = vadd.f32 %v5812, %v5829
        %v5865 = vadd.f32 %v5813, %v5829
        %v5866 = vadd.f32 %v5814, %v5829
        %v5867 = vadd.f32 %v5815, %v5829
        %v5868 = vadd.f32 %v5816, %v5829
        %v5869 = vadd.f32 %v5817, %v5829
        %v5870 = vadd.f32 %v5818, %v5829
        %v5871 = vadd.f32 %v5819, %v5829
        %v5872 = vadd.f32 %v5820, %v5829
        %v5873 = vadd.f32 %v5821, %v5829
        %v5874 = vadd.f32 %v5822, %v5829
        %v5875 = vadd.f32 %v5823, %v5829
        %v5876 = vadd.f32 %v5824, %v5829
        %v5877 = vadd.f32 %v5825, %v5829
        %v5878 = vmax.f32 %v5830, 0.0
        %v5879 = vmax.f32 %v5831, 0.0
        %v5880 = vmax.f32 %v5832, 0.0
        %v5881 = vmax.f32 %v5833, 0.0
        %v5882 = vmax.f32 %v5834, 0.0
        %v5883 = vmax.f32 %v5835, 0.0
        %v5884 = vmax.f32 %v5836, 0.0
        %v5885 = vmax.f32 %v5837, 0.0
        %v5886 = vmax.f32 %v5838, 0.0
        %v5887 = vmax.f32 %v5839, 0.0
        %v5888 = vmax.f32 %v5840, 0.0
        %v5889 = vmax.f32 %v5841, 0.0
        %v5890 = vmax.f32 %v5842, 0.0
        %v5891 = vmax.f32 %v5843, 0.0
        %v5892 = vmax.f32 %v5844, 0.0
        %v5893 = vmax.f32 %v5845, 0.0
        %v5894 = vmax.f32 %v5846, 0.0
        %v5895 = vmax.f32 %v5847, 0.0
        %v5896 = vmax.f32 %v5848, 0.0
        %v5897 = vmax.f32 %v5849, 0.0
        %v5898 = vmax.f32 %v5850, 0.0
        %v5899 = vmax.f32 %v5851, 0.0
        %v5900 = vmax.f32 %v5852, 0.0
        %v5901 = vmax.f32 %v5853, 0.0
        %v5902 = vmax.f32 %v5854, 0.0
        %v5903 = vmax.f32 %v5855, 0.0
        %v5904 = vmax.f32 %v5856, 0.0
        %v5905 = vmax.f32 %v5857, 0.0
        %v5906 = vmax.f32 %v5858, 0.0
        %v5907 = vmax.f32 %v5859, 0.0
        %v5908 = vmax.f32 %v5860, 0.0
        %v5909 = vmax.f32 %v5861, 0.0
        %v5910 = vmax.f32 %v5862, 0.0
        %v5911 = vmax.f32 %v5863, 0.0
        %v5912 = vmax.f32 %v5864, 0.0
        %v5913 = vmax.f32 %v5865, 0.0
        %v5914 = vmax.f32 %v5866, 0.0
        %v5915 = vmax.f32 %v5867, 0.0
        %v5916 = vmax.f32 %v5868, 0.0
        %v5917 = vmax.f32 %v5869, 0.0
        %v5918 = vmax.f32 %v5870, 0.0
        %v5919 = vmax.f32 %v5871, 0.0
        %v5920 = vmax.f32 %v5872, 0.0
        %v5921 = vmax.f32 %v5873, 0.0
        %v5922 = vmax.f32 %v5874, 0.0
        %v5923 = vmax.f32 %v5875, 0.0
        %v5924 = vmax.f32 %v5876, 0.0
        %v5925 = vmax.f32 %v5877, 0.0
        %v5926 = vlaneseq
        %v5927 = vshrl.u32 %v5926, 7
        %v5928 = vadd.s32 %v5927, 8
        %v5929 = vadd.s32 %v5927, 16
        %vm5930 = vcmp.ge.s32.totalorder %v5927, 1
        %vm5931 = vcmp.ge.s32.totalorder %v5928, 1
        %vm5932 = vcmp.ge.s32.totalorder %v5929, 1
        %vm5933 = vcmp.le.s32.totalorder %v5927, 16
        %vm5934 = vcmp.le.s32.totalorder %v5928, 16
        %vm5935 = vcmp.le.s32.totalorder %v5929, 16
        %vm5936 = vmand %vm5930, %vm5933
        %vm5937 = vmand %vm5931, %vm5934
        %vm5938 = vmand %vm5932, %vm5935
        %v5939 = vsel %vm5936, %v5878, 0.0
        %v5940 = vsel %vm5937, %v5879, 0.0
        %v5941 = vsel %vm5938, %v5880, 0.0
        %v5942 = vsel %vm5936, %v5881, 0.0
        %v5943 = vsel %vm5937, %v5882, 0.0
        %v5944 = vsel %vm5938, %v5883, 0.0
        %v5945 = vsel %vm5936, %v5884, 0.0
        %v5946 = vsel %vm5937, %v5885, 0.0
        %v5947 = vsel %vm5938, %v5886, 0.0
        %v5948 = vsel %vm5936, %v5887, 0.0
        %v5949 = vsel %vm5937, %v5888, 0.0
        %v5950 = vsel %vm5938, %v5889, 0.0
        %v5951 = vsel %vm5936, %v5890, 0.0
        %v5952 = vsel %vm5937, %v5891, 0.0
        %v5953 = vsel %vm5938, %v5892, 0.0
        %v5954 = vsel %vm5936, %v5893, 0.0
        %v5955 = vsel %vm5937, %v5894, 0.0
        %v5956 = vsel %vm5938, %v5895, 0.0
        %v5957 = vsel %vm5936, %v5896, 0.0
        %v5958 = vsel %vm5937, %v5897, 0.0
        %v5959 = vsel %vm5938, %v5898, 0.0
        %v5960 = vsel %vm5936, %v5899, 0.0
        %v5961 = vsel %vm5937, %v5900, 0.0
        %v5962 = vsel %vm5938, %v5901, 0.0
        %v5963 = vsel %vm5936, %v5902, 0.0
        %v5964 = vsel %vm5937, %v5903, 0.0
        %v5965 = vsel %vm5938, %v5904, 0.0
        %v5966 = vsel %vm5936, %v5905, 0.0
        %v5967 = vsel %vm5937, %v5906, 0.0
        %v5968 = vsel %vm5938, %v5907, 0.0
        %v5969 = vsel %vm5936, %v5908, 0.0
        %v5970 = vsel %vm5937, %v5909, 0.0
        %v5971 = vsel %vm5938, %v5910, 0.0
        %v5972 = vsel %vm5936, %v5911, 0.0
        %v5973 = vsel %vm5937, %v5912, 0.0
        %v5974 = vsel %vm5938, %v5913, 0.0
        %v5975 = vsel %vm5936, %v5914, 0.0
        %v5976 = vsel %vm5937, %v5915, 0.0
        %v5977 = vsel %vm5938, %v5916, 0.0
        %v5978 = vsel %vm5936, %v5917, 0.0
        %v5979 = vsel %vm5937, %v5918, 0.0
        %v5980 = vsel %vm5938, %v5919, 0.0
        %v5981 = vsel %vm5936, %v5920, 0.0
        %v5982 = vsel %vm5937, %v5921, 0.0
        %v5983 = vsel %vm5938, %v5922, 0.0
        %v5984 = vsel %vm5936, %v5923, 0.0
        %v5985 = vsel %vm5937, %v5924, 0.0
        %v5986 = vsel %vm5938, %v5925, 0.0
        %v5987 = vpack.c.bf16 %v5940, %v5939
        %v5988 = vpack.c.bf16 %v5942, %v5941
        %v5989 = vpack.c.bf16 %v5944, %v5943
        %v5990 = vpack.c.bf16 %v5946, %v5945
        %v5991 = vpack.c.bf16 %v5948, %v5947
        %v5992 = vpack.c.bf16 %v5950, %v5949
        %v5993 = vpack.c.bf16 %v5952, %v5951
        %v5994 = vpack.c.bf16 %v5954, %v5953
        %v5995 = vpack.c.bf16 %v5956, %v5955
        %v5996 = vpack.c.bf16 %v5958, %v5957
        %v5997 = vpack.c.bf16 %v5960, %v5959
        %v5998 = vpack.c.bf16 %v5962, %v5961
        %v5999 = vpack.c.bf16 %v5964, %v5963
        %v6000 = vpack.c.bf16 %v5966, %v5965
        %v6001 = vpack.c.bf16 %v5968, %v5967
        %v6002 = vpack.c.bf16 %v5970, %v5969
        %v6003 = vpack.c.bf16 %v5972, %v5971
        %v6004 = vpack.c.bf16 %v5974, %v5973
        %v6005 = vpack.c.bf16 %v5976, %v5975
        %v6006 = vpack.c.bf16 %v5978, %v5977
        %v6007 = vpack.c.bf16 %v5980, %v5979
        %v6008 = vpack.c.bf16 %v5982, %v5981
        %v6009 = vpack.c.bf16 %v5984, %v5983
        %v6010 = vpack.c.bf16 %v5986, %v5985
        %6011 = vst [vmem:[#allocation2] sm:$0xff] 0
        %6012 = vst [vmem:[#allocation2 + $0x8] sm:$0xff] 0
        %6013 = vst [vmem:[#allocation2 + $0x10] sm:$0xff] 0
        %6014 = vst [vmem:[#allocation2 + $0xd8] sm:$0xff] 0
        %6015 = vst [vmem:[#allocation2 + $0xe0] sm:$0xff] 0
        %6016 = vst [vmem:[#allocation2 + $0xe8] sm:$0xff] 0
        %6017 = vst [vmem:[#allocation2 + $0x18] sm:$0xff] %v5987
        %6018 = vst [vmem:[#allocation2 + $0x20] sm:$0xff] %v5988
        %6019 = vst [vmem:[#allocation2 + $0x28] sm:$0xff] %v5989
        %6020 = vst [vmem:[#allocation2 + $0x30] sm:$0xff] %v5990
        %6021 = vst [vmem:[#allocation2 + $0x38] sm:$0xff] %v5991
        %6022 = vst [vmem:[#allocation2 + $0x40] sm:$0xff] %v5992
        %6023 = vst [vmem:[#allocation2 + $0x48] sm:$0xff] %v5993
        %6024 = vst [vmem:[#allocation2 + $0x50] sm:$0xff] %v5994
        %6025 = vst [vmem:[#allocation2 + $0x58] sm:$0xff] %v5995
        %6026 = vst [vmem:[#allocation2 + $0x60] sm:$0xff] %v5996
        %6027 = vst [vmem:[#allocation2 + $0x68] sm:$0xff] %v5997
        %6028 = vst [vmem:[#allocation2 + $0x70] sm:$0xff] %v5998
        %6029 = vst [vmem:[#allocation2 + $0x78] sm:$0xff] %v5999
        %6030 = vst [vmem:[#allocation2 + $0x80] sm:$0xff] %v6000
        %6031 = vst [vmem:[#allocation2 + $0x88] sm:$0xff] %v6001
        %6032 = vst [vmem:[#allocation2 + $0x90] sm:$0xff] %v6002
        %6033 = vst [vmem:[#allocation2 + $0x98] sm:$0xff] %v6003
        %6034 = vst [vmem:[#allocation2 + $0xa0] sm:$0xff] %v6004
        %6035 = vst [vmem:[#allocation2 + $0xa8] sm:$0xff] %v6005
        %6036 = vst [vmem:[#allocation2 + $0xb0] sm:$0xff] %v6006
        %6037 = vst [vmem:[#allocation2 + $0xb8] sm:$0xff] %v6007
        %6038 = vst [vmem:[#allocation2 + $0xc0] sm:$0xff] %v6008
        %6039 = vst [vmem:[#allocation2 + $0xc8] sm:$0xff] %v6009
        %6040 = vst [vmem:[#allocation2 + $0xd0] sm:$0xff] %v6010
        %v6041 = vld [vmem:[#allocation2 + $0x8] sm:$0xf8]
        %v6042 = vld [vmem:[#allocation2 + $0x10] sm:$0xff]
        %v6043 = vld [vmem:[#allocation2 + $0x18] sm:$0xff]
        %v6044 = vld [vmem:[#allocation2 + $0x20] sm:$0xff]
        %v6045 = vld [vmem:[#allocation2 + $0x28] sm:$0xff]
        %v6046 = vld [vmem:[#allocation2 + $0x30] sm:$0xff]
        %v6047 = vld [vmem:[#allocation2 + $0x38] sm:$0xff]
        %v6048 = vld [vmem:[#allocation2 + $0x40] sm:$0xff]
        %v6049 = vld [vmem:[#allocation2 + $0x48] sm:$0xff]
        %v6050 = vld [vmem:[#allocation2 + $0x50] sm:$0xff]
        %v6051 = vld [vmem:[#allocation2 + $0x58] sm:$0xff]
        %v6052 = vld [vmem:[#allocation2 + $0x60] sm:$0xff]
        %v6053 = vld [vmem:[#allocation2 + $0x68] sm:$0xff]
        %v6054 = vld [vmem:[#allocation2 + $0x70] sm:$0xff]
        %v6055 = vld [vmem:[#allocation2 + $0x78] sm:$0xff]
        %v6056 = vld [vmem:[#allocation2 + $0x80] sm:$0xff]
        %v6057 = vld [vmem:[#allocation2 + $0x88] sm:$0xff]
        %v6058 = vld [vmem:[#allocation2 + $0x90] sm:$0xff]
        %v6059 = vld [vmem:[#allocation2 + $0x98] sm:$0xff]
        %v6060 = vld [vmem:[#allocation2 + $0xa0] sm:$0xff]
        %v6061 = vld [vmem:[#allocation2 + $0xa8] sm:$0xff]
        %v6062 = vld [vmem:[#allocation2 + $0xb0] sm:$0xff]
        %v6063 = vld [vmem:[#allocation2 + $0xb8] sm:$0xff]
        %v6064 = vld [vmem:[#allocation2 + $0xc0] sm:$0xff]
        %v6065 = vld [vmem:[#allocation2 + $0xc8] sm:$0xf]
        %v6066 = vld [vmem:[#allocation8] sm:$0xf]
        %v6067 = vld [vmem:[#allocation8 + $0x4] sm:$0xf]
        %v6068 = vld [vmem:[#allocation8 + $0x8] sm:$0xf]
        %v6069 = vld [vmem:[#allocation8 + $0xc] sm:$0xf]
        %v6070 = vld [vmem:[#allocation8 + $0x10] sm:$0xf]
        %v6071 = vld [vmem:[#allocation8 + $0x14] sm:$0xf]
        %v6072 = vld [vmem:[#allocation8 + $0x18] sm:$0xf]
        %v6073 = vld [vmem:[#allocation8 + $0x1c] sm:$0xf]
        %v6074 = vld [vmem:[#allocation8 + $0x20] sm:$0xf]
        %v6075 = vld [vmem:[#allocation8 + $0x24] sm:$0xf]
        %v6076 = vld [vmem:[#allocation8 + $0x28] sm:$0xf]
        %v6077 = vld [vmem:[#allocation8 + $0x2c] sm:$0xf]
        %v6078 = vld [vmem:[#allocation8 + $0x30] sm:$0xf]
        %v6079 = vld [vmem:[#allocation8 + $0x34] sm:$0xf]
        %v6080 = vld [vmem:[#allocation8 + $0x38] sm:$0xf]
        %v6081 = vld [vmem:[#allocation8 + $0x3c] sm:$0xf]
        %v6082 = vld [vmem:[#allocation2 + $0x8] sm:$0xf0]
        %s6083 = scalar_lea.vmem [#allocation8], 64
        %v6084 = vld [vmem:[%s6083] sm:$0xf]
        %v6085 = vld [vmem:[%s6083 + $0x4] sm:$0xf]
        %v6086 = vld [vmem:[%s6083 + $0x8] sm:$0xf]
        %v6087 = vld [vmem:[%s6083 + $0xc] sm:$0xf]
        %v6088 = vld [vmem:[%s6083 + $0x10] sm:$0xf]
        %v6089 = vld [vmem:[%s6083 + $0x14] sm:$0xf]
        %v6090 = vld [vmem:[%s6083 + $0x18] sm:$0xf]
        %v6091 = vld [vmem:[%s6083 + $0x1c] sm:$0xf]
        %v6092 = vld [vmem:[%s6083 + $0x20] sm:$0xf]
        %v6093 = vld [vmem:[%s6083 + $0x24] sm:$0xf]
        %v6094 = vld [vmem:[%s6083 + $0x28] sm:$0xf]
        %v6095 = vld [vmem:[%s6083 + $0x2c] sm:$0xf]
        %v6096 = vld [vmem:[%s6083 + $0x30] sm:$0xf]
        %v6097 = vld [vmem:[%s6083 + $0x34] sm:$0xf]
        %v6098 = vld [vmem:[%s6083 + $0x38] sm:$0xf]
        %v6099 = vld [vmem:[%s6083 + $0x3c] sm:$0xf]
        %vm6125 = vcmask 1043456
        %v6126 = vrot.slane %v6082, 4
        %v6127 = vrot.slane %v6042, 4
        %v6128 = vsel %vm6125, %v6126, %v6127
        %v6129 = vrot.slane %v6043, 4
        %v6130 = vsel %vm6125, %v6127, %v6129
        %v6131 = vrot.slane %v6044, 4
        %v6132 = vsel %vm6125, %v6129, %v6131
        %v6133 = vrot.slane %v6045, 4
        %v6134 = vsel %vm6125, %v6131, %v6133
        %v6135 = vrot.slane %v6046, 4
        %v6136 = vsel %vm6125, %v6133, %v6135
        %v6137 = vrot.slane %v6047, 4
        %v6138 = vsel %vm6125, %v6135, %v6137
        %v6139 = vrot.slane %v6048, 4
        %v6140 = vsel %vm6125, %v6137, %v6139
        %v6141 = vrot.slane %v6049, 4
        %v6142 = vsel %vm6125, %v6139, %v6141
        %v6143 = vrot.slane %v6050, 4
        %v6144 = vsel %vm6125, %v6141, %v6143
        %v6145 = vrot.slane %v6051, 4
        %v6146 = vsel %vm6125, %v6143, %v6145
        %v6147 = vrot.slane %v6052, 4
        %v6148 = vsel %vm6125, %v6145, %v6147
        %v6149 = vrot.slane %v6053, 4
        %v6150 = vsel %vm6125, %v6147, %v6149
        %v6151 = vrot.slane %v6054, 4
        %v6152 = vsel %vm6125, %v6149, %v6151
        %v6153 = vrot.slane %v6055, 4
        %v6154 = vsel %vm6125, %v6151, %v6153
        %v6155 = vrot.slane %v6056, 4
        %v6156 = vsel %vm6125, %v6153, %v6155
        %v6157 = vrot.slane %v6057, 4
        %v6158 = vsel %vm6125, %v6155, %v6157
        %v6159 = vrot.slane %v6058, 4
        %v6160 = vsel %vm6125, %v6157, %v6159
        %v6161 = vrot.slane %v6059, 4
        %v6162 = vsel %vm6125, %v6159, %v6161
        %v6163 = vrot.slane %v6060, 4
        %v6164 = vsel %vm6125, %v6161, %v6163
        %v6165 = vrot.slane %v6061, 4
        %v6166 = vsel %vm6125, %v6163, %v6165
        %v6167 = vrot.slane %v6062, 4
        %v6168 = vsel %vm6125, %v6165, %v6167
        %v6169 = vrot.slane %v6063, 4
        %v6170 = vsel %vm6125, %v6167, %v6169
        %v6171 = vrot.slane %v6064, 4
        %v6172 = vsel %vm6125, %v6169, %v6171
        %v6173 = vrot.slane %v6065, 4
        %v6174 = vsel %vm6125, %v6171, %v6173
        %v6215 = vunpack.c.l.b16 %v6084
        %v6216 = vunpack.c.l.b16 %v6085
        %v6217 = vunpack.c.l.b16 %v6086
        %v6218 = vunpack.c.l.b16 %v6087
        %v6219 = vunpack.c.l.b16 %v6088
        %v6220 = vunpack.c.l.b16 %v6089
        %v6221 = vunpack.c.l.b16 %v6090
        %v6222 = vunpack.c.l.b16 %v6091
        %v6223 = vunpack.c.l.b16 %v6092
        %v6224 = vunpack.c.l.b16 %v6093
        %v6225 = vunpack.c.l.b16 %v6094
        %v6226 = vunpack.c.l.b16 %v6095
        %v6227 = vunpack.c.l.b16 %v6096
        %v6228 = vunpack.c.l.b16 %v6097
        %v6229 = vunpack.c.l.b16 %v6098
        %v6230 = vunpack.c.l.b16 %v6099
        %v6231 = vpack.c.b16 %v6216, %v6215
        %v6232 = vpack.c.b16 %v6218, %v6217
        %v6233 = vpack.c.b16 %v6220, %v6219
        %v6234 = vpack.c.b16 %v6222, %v6221
        %v6235 = vpack.c.b16 %v6224, %v6223
        %v6236 = vpack.c.b16 %v6226, %v6225
        %v6237 = vpack.c.b16 %v6228, %v6227
        %v6238 = vpack.c.b16 %v6230, %v6229
        %6247 = vmatprep.subr.bf16.mxu0 0
        %6248 = vmatpush1.bf16.msra.mxu0 %v6231
        %6249 = vmatprep.subr.bf16.mxu0 0
        %6250 = vmatpush1.bf16.msra.mxu0 %v6232
        %6251 = vmatprep.subr.bf16.mxu0 0
        %6252 = vmatpush1.bf16.msra.mxu0 %v6233
        %6253 = vmatprep.subr.bf16.mxu0 0
        %6254 = vmatpush1.bf16.msra.mxu0 %v6234
        %6255 = vmatprep.subr.bf16.mxu0 0
        %6256 = vmatpush1.bf16.msra.mxu0 %v6235
        %6257 = vmatprep.subr.bf16.mxu0 0
        %6258 = vmatpush1.bf16.msra.mxu0 %v6236
        %6259 = vmatprep.subr.bf16.mxu0 0
        %6260 = vmatpush1.bf16.msra.mxu0 %v6237
        %6261 = vmatprep.subr.bf16.mxu0 0
        %6262 = vmatpush1.bf16.msra.mxu0 %v6238
        %6263 = vmatprep.subr.bf16.mxu0 0
        %6264 = vmatpush1.bf16.msra.mxu0 0
        %6265 = vmatprep.subr.bf16.mxu0 0
        %6266 = vmatpush1.bf16.msra.mxu0 0
        %6267 = vmatprep.subr.bf16.mxu0 0
        %6268 = vmatpush1.bf16.msra.mxu0 0
        %6269 = vmatprep.subr.bf16.mxu0 0
        %6270 = vmatpush1.bf16.msra.mxu0 0
        %6271 = vmatprep.subr.bf16.mxu0 0
        %6272 = vmatpush1.bf16.msra.mxu0 0
        %6273 = vmatprep.subr.bf16.mxu0 0
        %6274 = vmatpush1.bf16.msra.mxu0 0
        %6275 = vmatprep.subr.bf16.mxu0 0
        %6276 = vmatpush1.bf16.msra.mxu0 0
        %6277 = vmatprep.subr.bf16.mxu0 0
        %6278 = vmatpush1.bf16.msra.mxu0 0
        %6279 = vmatprep.mubr.bf16.mxu0 0
        %6280 = vmatmul.mubr.bf16.gmra.mrb[0].mxu0 %v6128
        %v6281 = vpop.f32.mrb[0].mxu0
        %v6282 = vadd.f32 0.0, %v6281
        %v6283 = vpop.f32.mrb[0].mxu0
        %v6284 = vpop.f32.mrb[0].mxu0
        %v6285 = vadd.f32 0.0, %v6284
        %v6286 = vpop.f32.mrb[0].mxu0
        %6287 = vmatprep.mubr.bf16.mxu0 0
        %6288 = vmatmul.mubr.bf16.gmra.mrb[0].mxu0 %v6130
        %v6289 = vpop.f32.mrb[0].mxu0
        %v6290 = vadd.f32 0.0, %v6289
        %v6291 = vpop.f32.mrb[0].mxu0
        %v6292 = vpop.f32.mrb[0].mxu0
        %v6293 = vadd.f32 0.0, %v6292
        %v6294 = vpop.f32.mrb[0].mxu0
        %6295 = vmatprep.mubr.bf16.mxu0 0
        %6296 = vmatmul.mubr.bf16.gmra.mrb[0].mxu0 %v6132
        %v6297 = vpop.f32.mrb[0].mxu0
        %v6298 = vadd.f32 0.0, %v6297
        %v6299 = vpop.f32.mrb[0].mxu0
        %v6300 = vpop.f32.mrb[0].mxu0
        %v6301 = vadd.f32 0.0, %v6300
        %v6302 = vpop.f32.mrb[0].mxu0
        %6303 = vmatprep.mubr.bf16.mxu0 0
        %6304 = vmatmul.mubr.bf16.gmra.mrb[0].mxu0 %v6134
        %v6305 = vpop.f32.mrb[0].mxu0
        %v6306 = vadd.f32 0.0, %v6305
        %v6307 = vpop.f32.mrb[0].mxu0
        %v6308 = vpop.f32.mrb[0].mxu0
        %v6309 = vadd.f32 0.0, %v6308
        %v6310 = vpop.f32.mrb[0].mxu0
        %6311 = vmatprep.mubr.bf16.mxu0 0
        %6312 = vmatmul.mubr.bf16.gmra.mrb[0].mxu0 %v6136
        %v6313 = vpop.f32.mrb[0].mxu0
        %v6314 = vadd.f32 0.0, %v6313
        %v6315 = vpop.f32.mrb[0].mxu0
        %v6316 = vpop.f32.mrb[0].mxu0
        %v6317 = vadd.f32 0.0, %v6316
        %v6318 = vpop.f32.mrb[0].mxu0
        %6319 = vmatprep.mubr.bf16.mxu0 0
        %6320 = vmatmul.mubr.bf16.gmra.mrb[0].mxu0 %v6138
        %v6321 = vpop.f32.mrb[0].mxu0
        %v6322 = vadd.f32 0.0, %v6321
        %v6323 = vpop.f32.mrb[0].mxu0
        %v6324 = vpop.f32.mrb[0].mxu0
        %v6325 = vadd.f32 0.0, %v6324
        %v6326 = vpop.f32.mrb[0].mxu0
        %6327 = vmatprep.mubr.bf16.mxu0 0
        %6328 = vmatmul.mubr.bf16.gmra.mrb[0].mxu0 %v6140
        %v6329 = vpop.f32.mrb[0].mxu0
        %v6330 = vadd.f32 0.0, %v6329
        %v6331 = vpop.f32.mrb[0].mxu0
        %v6332 = vpop.f32.mrb[0].mxu0
        %v6333 = vadd.f32 0.0, %v6332
        %v6334 = vpop.f32.mrb[0].mxu0
        %6335 = vmatprep.mubr.bf16.mxu0 0
        %6336 = vmatmul.mubr.bf16.gmra.mrb[0].mxu0 %v6142
        %v6337 = vpop.f32.mrb[0].mxu0
        %v6338 = vadd.f32 0.0, %v6337
        %v6339 = vpop.f32.mrb[0].mxu0
        %v6340 = vpop.f32.mrb[0].mxu0
        %v6341 = vadd.f32 0.0, %v6340
        %v6342 = vpop.f32.mrb[0].mxu0
        %6343 = vmatprep.mubr.bf16.mxu0 0
        %6344 = vmatmul.mubr.bf16.gmra.mrb[0].mxu0 %v6144
        %v6345 = vpop.f32.mrb[0].mxu0
        %v6346 = vadd.f32 0.0, %v6345
        %v6347 = vpop.f32.mrb[0].mxu0
        %v6348 = vpop.f32.mrb[0].mxu0
        %v6349 = vadd.f32 0.0, %v6348
        %v6350 = vpop.f32.mrb[0].mxu0
        %6351 = vmatprep.mubr.bf16.mxu0 0
        %6352 = vmatmul.mubr.bf16.gmra.mrb[0].mxu0 %v6146
        %v6353 = vpop.f32.mrb[0].mxu0
        %v6354 = vadd.f32 0.0, %v6353
        %v6355 = vpop.f32.mrb[0].mxu0
        %v6356 = vpop.f32.mrb[0].mxu0
        %v6357 = vadd.f32 0.0, %v6356
        %v6358 = vpop.f32.mrb[0].mxu0
        %6359 = vmatprep.mubr.bf16.mxu0 0
        %6360 = vmatmul.mubr.bf16.gmra.mrb[0].mxu0 %v6148
        %v6361 = vpop.f32.mrb[0].mxu0
        %v6362 = vadd.f32 0.0, %v6361
        %v6363 = vpop.f32.mrb[0].mxu0
        %v6364 = vpop.f32.mrb[0].mxu0
        %v6365 = vadd.f32 0.0, %v6364
        %v6366 = vpop.f32.mrb[0].mxu0
        %6367 = vmatprep.mubr.bf16.mxu0 0
        %6368 = vmatmul.mubr.bf16.gmra.mrb[0].mxu0 %v6150
        %v6369 = vpop.f32.mrb[0].mxu0
        %v6370 = vadd.f32 0.0, %v6369
        %v6371 = vpop.f32.mrb[0].mxu0
        %v6372 = vpop.f32.mrb[0].mxu0
        %v6373 = vadd.f32 0.0, %v6372
        %v6374 = vpop.f32.mrb[0].mxu0
        %6375 = vmatprep.mubr.bf16.mxu0 0
        %6376 = vmatmul.mubr.bf16.gmra.mrb[0].mxu0 %v6152
        %v6377 = vpop.f32.mrb[0].mxu0
        %v6378 = vadd.f32 0.0, %v6377
        %v6379 = vpop.f32.mrb[0].mxu0
        %v6380 = vpop.f32.mrb[0].mxu0
        %v6381 = vadd.f32 0.0, %v6380
        %v6382 = vpop.f32.mrb[0].mxu0
        %6383 = vmatprep.mubr.bf16.mxu0 0
        %6384 = vmatmul.mubr.bf16.gmra.mrb[0].mxu0 %v6154
        %v6385 = vpop.f32.mrb[0].mxu0
        %v6386 = vadd.f32 0.0, %v6385
        %v6387 = vpop.f32.mrb[0].mxu0
        %v6388 = vpop.f32.mrb[0].mxu0
        %v6389 = vadd.f32 0.0, %v6388
        %v6390 = vpop.f32.mrb[0].mxu0
        %6391 = vmatprep.mubr.bf16.mxu0 0
        %6392 = vmatmul.mubr.bf16.gmra.mrb[0].mxu0 %v6156
        %v6393 = vpop.f32.mrb[0].mxu0
        %v6394 = vadd.f32 0.0, %v6393
        %v6395 = vpop.f32.mrb[0].mxu0
        %v6396 = vpop.f32.mrb[0].mxu0
        %v6397 = vadd.f32 0.0, %v6396
        %v6398 = vpop.f32.mrb[0].mxu0
        %6399 = vmatprep.mubr.bf16.mxu0 0
        %6400 = vmatmul.mubr.bf16.gmra.mrb[0].mxu0 %v6158
        %v6401 = vpop.f32.mrb[0].mxu0
        %v6402 = vadd.f32 0.0, %v6401
        %v6403 = vpop.f32.mrb[0].mxu0
        %v6404 = vpop.f32.mrb[0].mxu0
        %v6405 = vadd.f32 0.0, %v6404
        %v6406 = vpop.f32.mrb[0].mxu0
        %6407 = vmatprep.mubr.bf16.mxu0 0
        %6408 = vmatmul.mubr.bf16.gmra.mrb[0].mxu0 %v6160
        %v6409 = vpop.f32.mrb[0].mxu0
        %v6410 = vadd.f32 0.0, %v6409
        %v6411 = vpop.f32.mrb[0].mxu0
        %v6412 = vpop.f32.mrb[0].mxu0
        %v6413 = vadd.f32 0.0, %v6412
        %v6414 = vpop.f32.mrb[0].mxu0
        %6415 = vmatprep.mubr.bf16.mxu0 0
        %6416 = vmatmul.mubr.bf16.gmra.mrb[0].mxu0 %v6162
        %v6417 = vpop.f32.mrb[0].mxu0
        %v6418 = vadd.f32 0.0, %v6417
        %v6419 = vpop.f32.mrb[0].mxu0
        %v6420 = vpop.f32.mrb[0].mxu0
        %v6421 = vadd.f32 0.0, %v6420
        %v6422 = vpop.f32.mrb[0].mxu0
        %6423 = vmatprep.mubr.bf16.mxu0 0
        %6424 = vmatmul.mubr.bf16.gmra.mrb[0].mxu0 %v6164
        %v6425 = vpop.f32.mrb[0].mxu0
        %v6426 = vadd.f32 0.0, %v6425
        %v6427 = vpop.f32.mrb[0].mxu0
        %v6428 = vpop.f32.mrb[0].mxu0
        %v6429 = vadd.f32 0.0, %v6428
        %v6430 = vpop.f32.mrb[0].mxu0
        %6431 = vmatprep.mubr.bf16.mxu0 0
        %6432 = vmatmul.mubr.bf16.gmra.mrb[0].mxu0 %v6166
        %v6433 = vpop.f32.mrb[0].mxu0
        %v6434 = vadd.f32 0.0, %v6433
        %v6435 = vpop.f32.mrb[0].mxu0
        %v6436 = vpop.f32.mrb[0].mxu0
        %v6437 = vadd.f32 0.0, %v6436
        %v6438 = vpop.f32.mrb[0].mxu0
        %6439 = vmatprep.mubr.bf16.mxu0 0
        %6440 = vmatmul.mubr.bf16.gmra.mrb[0].mxu0 %v6168
        %v6441 = vpop.f32.mrb[0].mxu0
        %v6442 = vadd.f32 0.0, %v6441
        %v6443 = vpop.f32.mrb[0].mxu0
        %v6444 = vpop.f32.mrb[0].mxu0
        %v6445 = vadd.f32 0.0, %v6444
        %v6446 = vpop.f32.mrb[0].mxu0
        %6447 = vmatprep.mubr.bf16.mxu0 0
        %6448 = vmatmul.mubr.bf16.gmra.mrb[0].mxu0 %v6170
        %v6449 = vpop.f32.mrb[0].mxu0
        %v6450 = vadd.f32 0.0, %v6449
        %v6451 = vpop.f32.mrb[0].mxu0
        %v6452 = vpop.f32.mrb[0].mxu0
        %v6453 = vadd.f32 0.0, %v6452
        %v6454 = vpop.f32.mrb[0].mxu0
        %6455 = vmatprep.mubr.bf16.mxu0 0
        %6456 = vmatmul.mubr.bf16.gmra.mrb[0].mxu0 %v6172
        %v6457 = vpop.f32.mrb[0].mxu0
        %v6458 = vadd.f32 0.0, %v6457
        %v6459 = vpop.f32.mrb[0].mxu0
        %v6460 = vpop.f32.mrb[0].mxu0
        %v6461 = vadd.f32 0.0, %v6460
        %v6462 = vpop.f32.mrb[0].mxu0
        %6463 = vmatprep.mubr.bf16.mxu0 0
        %6464 = vmatmul.mubr.bf16.gmra.mrb[0].mxu0 %v6174
        %v6465 = vpop.f32.mrb[0].mxu0
        %v6466 = vadd.f32 0.0, %v6465
        %v6467 = vpop.f32.mrb[0].mxu0
        %v6468 = vpop.f32.mrb[0].mxu0
        %v6469 = vadd.f32 0.0, %v6468
        %v6470 = vpop.f32.mrb[0].mxu0
        %6471 = vdwg.mxu0
        %v6473 = vshrl.u32 %v6041, 16
        %v6475 = vrot.slane %v6473, 3
        %v6476 = vshll.u32 %v6041, 16
        %v6478 = vrot.slane %v6476, 4
        %v6479 = vor.u32 %v6475, %v6478
        %v6481 = vshrl.u32 %v6042, 16
        %v6483 = vrot.slane %v6481, 3
        %v6484 = vshll.u32 %v6042, 16
        %v6486 = vrot.slane %v6484, 4
        %v6487 = vor.u32 %v6483, %v6486
        %v6488 = vsel %vm773, %v6479, %v6487
        %v6490 = vshrl.u32 %v6043, 16
        %v6492 = vrot.slane %v6490, 3
        %v6493 = vshll.u32 %v6043, 16
        %v6495 = vrot.slane %v6493, 4
        %v6496 = vor.u32 %v6492, %v6495
        %v6497 = vsel %vm773, %v6487, %v6496
        %v6499 = vshrl.u32 %v6044, 16
        %v6501 = vrot.slane %v6499, 3
        %v6502 = vshll.u32 %v6044, 16
        %v6504 = vrot.slane %v6502, 4
        %v6505 = vor.u32 %v6501, %v6504
        %v6506 = vsel %vm773, %v6496, %v6505
        %v6508 = vshrl.u32 %v6045, 16
        %v6510 = vrot.slane %v6508, 3
        %v6511 = vshll.u32 %v6045, 16
        %v6513 = vrot.slane %v6511, 4
        %v6514 = vor.u32 %v6510, %v6513
        %v6515 = vsel %vm773, %v6505, %v6514
        %v6517 = vshrl.u32 %v6046, 16
        %v6519 = vrot.slane %v6517, 3
        %v6520 = vshll.u32 %v6046, 16
        %v6522 = vrot.slane %v6520, 4
        %v6523 = vor.u32 %v6519, %v6522
        %v6524 = vsel %vm773, %v6514, %v6523
        %v6526 = vshrl.u32 %v6047, 16
        %v6528 = vrot.slane %v6526, 3
        %v6529 = vshll.u32 %v6047, 16
        %v6531 = vrot.slane %v6529, 4
        %v6532 = vor.u32 %v6528, %v6531
        %v6533 = vsel %vm773, %v6523, %v6532
        %v6535 = vshrl.u32 %v6048, 16
        %v6537 = vrot.slane %v6535, 3
        %v6538 = vshll.u32 %v6048, 16
        %v6540 = vrot.slane %v6538, 4
        %v6541 = vor.u32 %v6537, %v6540
        %v6542 = vsel %vm773, %v6532, %v6541
        %v6544 = vshrl.u32 %v6049, 16
        %v6546 = vrot.slane %v6544, 3
        %v6547 = vshll.u32 %v6049, 16
        %v6549 = vrot.slane %v6547, 4
        %v6550 = vor.u32 %v6546, %v6549
        %v6551 = vsel %vm773, %v6541, %v6550
        %v6553 = vshrl.u32 %v6050, 16
        %v6555 = vrot.slane %v6553, 3
        %v6556 = vshll.u32 %v6050, 16
        %v6558 = vrot.slane %v6556, 4
        %v6559 = vor.u32 %v6555, %v6558
        %v6560 = vsel %vm773, %v6550, %v6559
        %v6562 = vshrl.u32 %v6051, 16
        %v6564 = vrot.slane %v6562, 3
        %v6565 = vshll.u32 %v6051, 16
        %v6567 = vrot.slane %v6565, 4
        %v6568 = vor.u32 %v6564, %v6567
        %v6569 = vsel %vm773, %v6559, %v6568
        %v6571 = vshrl.u32 %v6052, 16
        %v6573 = vrot.slane %v6571, 3
        %v6574 = vshll.u32 %v6052, 16
        %v6576 = vrot.slane %v6574, 4
        %v6577 = vor.u32 %v6573, %v6576
        %v6578 = vsel %vm773, %v6568, %v6577
        %v6580 = vshrl.u32 %v6053, 16
        %v6582 = vrot.slane %v6580, 3
        %v6583 = vshll.u32 %v6053, 16
        %v6585 = vrot.slane %v6583, 4
        %v6586 = vor.u32 %v6582, %v6585
        %v6587 = vsel %vm773, %v6577, %v6586
        %v6589 = vshrl.u32 %v6054, 16
        %v6591 = vrot.slane %v6589, 3
        %v6592 = vshll.u32 %v6054, 16
        %v6594 = vrot.slane %v6592, 4
        %v6595 = vor.u32 %v6591, %v6594
        %v6596 = vsel %vm773, %v6586, %v6595
        %v6598 = vshrl.u32 %v6055, 16
        %v6600 = vrot.slane %v6598, 3
        %v6601 = vshll.u32 %v6055, 16
        %v6603 = vrot.slane %v6601, 4
        %v6604 = vor.u32 %v6600, %v6603
        %v6605 = vsel %vm773, %v6595, %v6604
        %v6607 = vshrl.u32 %v6056, 16
        %v6609 = vrot.slane %v6607, 3
        %v6610 = vshll.u32 %v6056, 16
        %v6612 = vrot.slane %v6610, 4
        %v6613 = vor.u32 %v6609, %v6612
        %v6614 = vsel %vm773, %v6604, %v6613
        %v6616 = vshrl.u32 %v6057, 16
        %v6618 = vrot.slane %v6616, 3
        %v6619 = vshll.u32 %v6057, 16
        %v6621 = vrot.slane %v6619, 4
        %v6622 = vor.u32 %v6618, %v6621
        %v6623 = vsel %vm773, %v6613, %v6622
        %v6625 = vshrl.u32 %v6058, 16
        %v6627 = vrot.slane %v6625, 3
        %v6628 = vshll.u32 %v6058, 16
        %v6630 = vrot.slane %v6628, 4
        %v6631 = vor.u32 %v6627, %v6630
        %v6632 = vsel %vm773, %v6622, %v6631
        %v6634 = vshrl.u32 %v6059, 16
        %v6636 = vrot.slane %v6634, 3
        %v6637 = vshll.u32 %v6059, 16
        %v6639 = vrot.slane %v6637, 4
        %v6640 = vor.u32 %v6636, %v6639
        %v6641 = vsel %vm773, %v6631, %v6640
        %v6643 = vshrl.u32 %v6060, 16
        %v6645 = vrot.slane %v6643, 3
        %v6646 = vshll.u32 %v6060, 16
        %v6648 = vrot.slane %v6646, 4
        %v6649 = vor.u32 %v6645, %v6648
        %v6650 = vsel %vm773, %v6640, %v6649
        %v6652 = vshrl.u32 %v6061, 16
        %v6654 = vrot.slane %v6652, 3
        %v6655 = vshll.u32 %v6061, 16
        %v6657 = vrot.slane %v6655, 4
        %v6658 = vor.u32 %v6654, %v6657
        %v6659 = vsel %vm773, %v6649, %v6658
        %v6661 = vshrl.u32 %v6062, 16
        %v6663 = vrot.slane %v6661, 3
        %v6664 = vshll.u32 %v6062, 16
        %v6666 = vrot.slane %v6664, 4
        %v6667 = vor.u32 %v6663, %v6666
        %v6668 = vsel %vm773, %v6658, %v6667
        %v6670 = vshrl.u32 %v6063, 16
        %v6672 = vrot.slane %v6670, 3
        %v6673 = vshll.u32 %v6063, 16
        %v6675 = vrot.slane %v6673, 4
        %v6676 = vor.u32 %v6672, %v6675
        %v6677 = vsel %vm773, %v6667, %v6676
        %v6679 = vshrl.u32 %v6064, 16
        %v6681 = vrot.slane %v6679, 3
        %v6682 = vshll.u32 %v6064, 16
        %v6684 = vrot.slane %v6682, 4
        %v6685 = vor.u32 %v6681, %v6684
        %v6686 = vsel %vm773, %v6676, %v6685
        %v6688 = vshrl.u32 %v6065, 16
        %v6690 = vrot.slane %v6688, 3
        %v6691 = vshll.u32 %v6065, 16
        %v6693 = vrot.slane %v6691, 4
        %v6694 = vor.u32 %v6690, %v6693
        %v6695 = vsel %vm773, %v6685, %v6694
        %v6736 = vunpack.c.l.b16 %v6066
        %v6737 = vunpack.c.l.b16 %v6067
        %v6738 = vunpack.c.l.b16 %v6068
        %v6739 = vunpack.c.l.b16 %v6069
        %v6740 = vunpack.c.l.b16 %v6070
        %v6741 = vunpack.c.l.b16 %v6071
        %v6742 = vunpack.c.l.b16 %v6072
        %v6743 = vunpack.c.l.b16 %v6073
        %v6744 = vunpack.c.l.b16 %v6074
        %v6745 = vunpack.c.l.b16 %v6075
        %v6746 = vunpack.c.l.b16 %v6076
        %v6747 = vunpack.c.l.b16 %v6077
        %v6748 = vunpack.c.l.b16 %v6078
        %v6749 = vunpack.c.l.b16 %v6079
        %v6750 = vunpack.c.l.b16 %v6080
        %v6751 = vunpack.c.l.b16 %v6081
        %v6752 = vpack.c.b16 %v6737, %v6736
        %v6753 = vpack.c.b16 %v6739, %v6738
        %v6754 = vpack.c.b16 %v6741, %v6740
        %v6755 = vpack.c.b16 %v6743, %v6742
        %v6756 = vpack.c.b16 %v6745, %v6744
        %v6757 = vpack.c.b16 %v6747, %v6746
        %v6758 = vpack.c.b16 %v6749, %v6748
        %v6759 = vpack.c.b16 %v6751, %v6750
        %6768 = vmatprep.subr.bf16.mxu0 0
        %6769 = vmatpush1.bf16.msra.mxu0 %v6752
        %6770 = vmatprep.subr.bf16.mxu0 0
        %6771 = vmatpush1.bf16.msra.mxu0 %v6753
        %6772 = vmatprep.subr.bf16.mxu0 0
        %6773 = vmatpush1.bf16.msra.mxu0 %v6754
        %6774 = vmatprep.subr.bf16.mxu0 0
        %6775 = vmatpush1.bf16.msra.mxu0 %v6755
        %6776 = vmatprep.subr.bf16.mxu0 0
        %6777 = vmatpush1.bf16.msra.mxu0 %v6756
        %6778 = vmatprep.subr.bf16.mxu0 0
        %6779 = vmatpush1.bf16.msra.mxu0 %v6757
        %6780 = vmatprep.subr.bf16.mxu0 0
        %6781 = vmatpush1.bf16.msra.mxu0 %v6758
        %6782 = vmatprep.subr.bf16.mxu0 0
        %6783 = vmatpush1.bf16.msra.mxu0 %v6759
        %6784 = vmatprep.subr.bf16.mxu0 0
        %6785 = vmatpush1.bf16.msra.mxu0 0
        %6786 = vmatprep.subr.bf16.mxu0 0
        %6787 = vmatpush1.bf16.msra.mxu0 0
        %6788 = vmatprep.subr.bf16.mxu0 0
        %6789 = vmatpush1.bf16.msra.mxu0 0
        %6790 = vmatprep.subr.bf16.mxu0 0
        %6791 = vmatpush1.bf16.msra.mxu0 0
        %6792 = vmatprep.subr.bf16.mxu0 0
        %6793 = vmatpush1.bf16.msra.mxu0 0
        %6794 = vmatprep.subr.bf16.mxu0 0
        %6795 = vmatpush1.bf16.msra.mxu0 0
        %6796 = vmatprep.subr.bf16.mxu0 0
        %6797 = vmatpush1.bf16.msra.mxu0 0
        %6798 = vmatprep.subr.bf16.mxu0 0
        %6799 = vmatpush1.bf16.msra.mxu0 0
        %6800 = vmatprep.mubr.bf16.mxu0 0
        %6801 = vmatmul.mubr.bf16.gmra.mrb[0].mxu0 %v6488
        %v6802 = vpop.f32.mrb[0].mxu0
        %v6803 = vadd.f32 %v6282, %v6802
        %v6804 = vpop.f32.mrb[0].mxu0
        %v6805 = vpop.f32.mrb[0].mxu0
        %v6806 = vadd.f32 %v6285, %v6805
        %v6807 = vpop.f32.mrb[0].mxu0
        %6808 = vmatprep.mubr.bf16.mxu0 0
        %6809 = vmatmul.mubr.bf16.gmra.mrb[0].mxu0 %v6497
        %v6810 = vpop.f32.mrb[0].mxu0
        %v6811 = vadd.f32 %v6290, %v6810
        %v6812 = vpop.f32.mrb[0].mxu0
        %v6813 = vpop.f32.mrb[0].mxu0
        %v6814 = vadd.f32 %v6293, %v6813
        %v6815 = vpop.f32.mrb[0].mxu0
        %6816 = vmatprep.mubr.bf16.mxu0 0
        %6817 = vmatmul.mubr.bf16.gmra.mrb[0].mxu0 %v6506
        %v6818 = vpop.f32.mrb[0].mxu0
        %v6819 = vadd.f32 %v6298, %v6818
        %v6820 = vpop.f32.mrb[0].mxu0
        %v6821 = vpop.f32.mrb[0].mxu0
        %v6822 = vadd.f32 %v6301, %v6821
        %v6823 = vpop.f32.mrb[0].mxu0
        %6824 = vmatprep.mubr.bf16.mxu0 0
        %6825 = vmatmul.mubr.bf16.gmra.mrb[0].mxu0 %v6515
        %v6826 = vpop.f32.mrb[0].mxu0
        %v6827 = vadd.f32 %v6306, %v6826
        %v6828 = vpop.f32.mrb[0].mxu0
        %v6829 = vpop.f32.mrb[0].mxu0
        %v6830 = vadd.f32 %v6309, %v6829
        %v6831 = vpop.f32.mrb[0].mxu0
        %6832 = vmatprep.mubr.bf16.mxu0 0
        %6833 = vmatmul.mubr.bf16.gmra.mrb[0].mxu0 %v6524
        %v6834 = vpop.f32.mrb[0].mxu0
        %v6835 = vadd.f32 %v6314, %v6834
        %v6836 = vpop.f32.mrb[0].mxu0
        %v6837 = vpop.f32.mrb[0].mxu0
        %v6838 = vadd.f32 %v6317, %v6837
        %v6839 = vpop.f32.mrb[0].mxu0
        %6840 = vmatprep.mubr.bf16.mxu0 0
        %6841 = vmatmul.mubr.bf16.gmra.mrb[0].mxu0 %v6533
        %v6842 = vpop.f32.mrb[0].mxu0
        %v6843 = vadd.f32 %v6322, %v6842
        %v6844 = vpop.f32.mrb[0].mxu0
        %v6845 = vpop.f32.mrb[0].mxu0
        %v6846 = vadd.f32 %v6325, %v6845
        %v6847 = vpop.f32.mrb[0].mxu0
        %6848 = vmatprep.mubr.bf16.mxu0 0
        %6849 = vmatmul.mubr.bf16.gmra.mrb[0].mxu0 %v6542
        %v6850 = vpop.f32.mrb[0].mxu0
        %v6851 = vadd.f32 %v6330, %v6850
        %v6852 = vpop.f32.mrb[0].mxu0
        %v6853 = vpop.f32.mrb[0].mxu0
        %v6854 = vadd.f32 %v6333, %v6853
        %v6855 = vpop.f32.mrb[0].mxu0
        %6856 = vmatprep.mubr.bf16.mxu0 0
        %6857 = vmatmul.mubr.bf16.gmra.mrb[0].mxu0 %v6551
        %v6858 = vpop.f32.mrb[0].mxu0
        %v6859 = vadd.f32 %v6338, %v6858
        %v6860 = vpop.f32.mrb[0].mxu0
        %v6861 = vpop.f32.mrb[0].mxu0
        %v6862 = vadd.f32 %v6341, %v6861
        %v6863 = vpop.f32.mrb[0].mxu0
        %6864 = vmatprep.mubr.bf16.mxu0 0
        %6865 = vmatmul.mubr.bf16.gmra.mrb[0].mxu0 %v6560
        %v6866 = vpop.f32.mrb[0].mxu0
        %v6867 = vadd.f32 %v6346, %v6866
        %v6868 = vpop.f32.mrb[0].mxu0
        %v6869 = vpop.f32.mrb[0].mxu0
        %v6870 = vadd.f32 %v6349, %v6869
        %v6871 = vpop.f32.mrb[0].mxu0
        %6872 = vmatprep.mubr.bf16.mxu0 0
        %6873 = vmatmul.mubr.bf16.gmra.mrb[0].mxu0 %v6569
        %v6874 = vpop.f32.mrb[0].mxu0
        %v6875 = vadd.f32 %v6354, %v6874
        %v6876 = vpop.f32.mrb[0].mxu0
        %v6877 = vpop.f32.mrb[0].mxu0
        %v6878 = vadd.f32 %v6357, %v6877
        %v6879 = vpop.f32.mrb[0].mxu0
        %6880 = vmatprep.mubr.bf16.mxu0 0
        %6881 = vmatmul.mubr.bf16.gmra.mrb[0].mxu0 %v6578
        %v6882 = vpop.f32.mrb[0].mxu0
        %v6883 = vadd.f32 %v6362, %v6882
        %v6884 = vpop.f32.mrb[0].mxu0
        %v6885 = vpop.f32.mrb[0].mxu0
        %v6886 = vadd.f32 %v6365, %v6885
        %v6887 = vpop.f32.mrb[0].mxu0
        %6888 = vmatprep.mubr.bf16.mxu0 0
        %6889 = vmatmul.mubr.bf16.gmra.mrb[0].mxu0 %v6587
        %v6890 = vpop.f32.mrb[0].mxu0
        %v6891 = vadd.f32 %v6370, %v6890
        %v6892 = vpop.f32.mrb[0].mxu0
        %v6893 = vpop.f32.mrb[0].mxu0
        %v6894 = vadd.f32 %v6373, %v6893
        %v6895 = vpop.f32.mrb[0].mxu0
        %6896 = vmatprep.mubr.bf16.mxu0 0
        %6897 = vmatmul.mubr.bf16.gmra.mrb[0].mxu0 %v6596
        %v6898 = vpop.f32.mrb[0].mxu0
        %v6899 = vadd.f32 %v6378, %v6898
        %v6900 = vpop.f32.mrb[0].mxu0
        %v6901 = vpop.f32.mrb[0].mxu0
        %v6902 = vadd.f32 %v6381, %v6901
        %v6903 = vpop.f32.mrb[0].mxu0
        %6904 = vmatprep.mubr.bf16.mxu0 0
        %6905 = vmatmul.mubr.bf16.gmra.mrb[0].mxu0 %v6605
        %v6906 = vpop.f32.mrb[0].mxu0
        %v6907 = vadd.f32 %v6386, %v6906
        %v6908 = vpop.f32.mrb[0].mxu0
        %v6909 = vpop.f32.mrb[0].mxu0
        %v6910 = vadd.f32 %v6389, %v6909
        %v6911 = vpop.f32.mrb[0].mxu0
        %6912 = vmatprep.mubr.bf16.mxu0 0
        %6913 = vmatmul.mubr.bf16.gmra.mrb[0].mxu0 %v6614
        %v6914 = vpop.f32.mrb[0].mxu0
        %v6915 = vadd.f32 %v6394, %v6914
        %v6916 = vpop.f32.mrb[0].mxu0
        %v6917 = vpop.f32.mrb[0].mxu0
        %v6918 = vadd.f32 %v6397, %v6917
        %v6919 = vpop.f32.mrb[0].mxu0
        %6920 = vmatprep.mubr.bf16.mxu0 0
        %6921 = vmatmul.mubr.bf16.gmra.mrb[0].mxu0 %v6623
        %v6922 = vpop.f32.mrb[0].mxu0
        %v6923 = vadd.f32 %v6402, %v6922
        %v6924 = vpop.f32.mrb[0].mxu0
        %v6925 = vpop.f32.mrb[0].mxu0
        %v6926 = vadd.f32 %v6405, %v6925
        %v6927 = vpop.f32.mrb[0].mxu0
        %6928 = vmatprep.mubr.bf16.mxu0 0
        %6929 = vmatmul.mubr.bf16.gmra.mrb[0].mxu0 %v6632
        %v6930 = vpop.f32.mrb[0].mxu0
        %v6931 = vadd.f32 %v6410, %v6930
        %v6932 = vpop.f32.mrb[0].mxu0
        %v6933 = vpop.f32.mrb[0].mxu0
        %v6934 = vadd.f32 %v6413, %v6933
        %v6935 = vpop.f32.mrb[0].mxu0
        %6936 = vmatprep.mubr.bf16.mxu0 0
        %6937 = vmatmul.mubr.bf16.gmra.mrb[0].mxu0 %v6641
        %v6938 = vpop.f32.mrb[0].mxu0
        %v6939 = vadd.f32 %v6418, %v6938
        %v6940 = vpop.f32.mrb[0].mxu0
        %v6941 = vpop.f32.mrb[0].mxu0
        %v6942 = vadd.f32 %v6421, %v6941
        %v6943 = vpop.f32.mrb[0].mxu0
        %6944 = vmatprep.mubr.bf16.mxu0 0
        %6945 = vmatmul.mubr.bf16.gmra.mrb[0].mxu0 %v6650
        %v6946 = vpop.f32.mrb[0].mxu0
        %v6947 = vadd.f32 %v6426, %v6946
        %v6948 = vpop.f32.mrb[0].mxu0
        %v6949 = vpop.f32.mrb[0].mxu0
        %v6950 = vadd.f32 %v6429, %v6949
        %v6951 = vpop.f32.mrb[0].mxu0
        %6952 = vmatprep.mubr.bf16.mxu0 0
        %6953 = vmatmul.mubr.bf16.gmra.mrb[0].mxu0 %v6659
        %v6954 = vpop.f32.mrb[0].mxu0
        %v6955 = vadd.f32 %v6434, %v6954
        %v6956 = vpop.f32.mrb[0].mxu0
        %v6957 = vpop.f32.mrb[0].mxu0
        %v6958 = vadd.f32 %v6437, %v6957
        %v6959 = vpop.f32.mrb[0].mxu0
        %6960 = vmatprep.mubr.bf16.mxu0 0
        %6961 = vmatmul.mubr.bf16.gmra.mrb[0].mxu0 %v6668
        %v6962 = vpop.f32.mrb[0].mxu0
        %v6963 = vadd.f32 %v6442, %v6962
        %v6964 = vpop.f32.mrb[0].mxu0
        %v6965 = vpop.f32.mrb[0].mxu0
        %v6966 = vadd.f32 %v6445, %v6965
        %v6967 = vpop.f32.mrb[0].mxu0
        %6968 = vmatprep.mubr.bf16.mxu0 0
        %6969 = vmatmul.mubr.bf16.gmra.mrb[0].mxu0 %v6677
        %v6970 = vpop.f32.mrb[0].mxu0
        %v6971 = vadd.f32 %v6450, %v6970
        %v6972 = vpop.f32.mrb[0].mxu0
        %v6973 = vpop.f32.mrb[0].mxu0
        %v6974 = vadd.f32 %v6453, %v6973
        %v6975 = vpop.f32.mrb[0].mxu0
        %6976 = vmatprep.mubr.bf16.mxu0 0
        %6977 = vmatmul.mubr.bf16.gmra.mrb[0].mxu0 %v6686
        %v6978 = vpop.f32.mrb[0].mxu0
        %v6979 = vadd.f32 %v6458, %v6978
        %v6980 = vpop.f32.mrb[0].mxu0
        %v6981 = vpop.f32.mrb[0].mxu0
        %v6982 = vadd.f32 %v6461, %v6981
        %v6983 = vpop.f32.mrb[0].mxu0
        %6984 = vmatprep.mubr.bf16.mxu0 0
        %6985 = vmatmul.mubr.bf16.gmra.mrb[0].mxu0 %v6695
        %v6986 = vpop.f32.mrb[0].mxu0
        %v6987 = vadd.f32 %v6466, %v6986
        %v6988 = vpop.f32.mrb[0].mxu0
        %v6989 = vpop.f32.mrb[0].mxu0
        %v6990 = vadd.f32 %v6469, %v6989
        %v6991 = vpop.f32.mrb[0].mxu0
        %6992 = vdwg.mxu0
        %v6993 = vld [vmem:[#allocation2 + $0xc8] sm:$0x1f]
        %s6994 = scalar_lea.vmem [#allocation8], 128
        %v6995 = vld [vmem:[%s6994] sm:$0xf]
        %v6996 = vld [vmem:[%s6994 + $0x4] sm:$0xf]
        %v6997 = vld [vmem:[%s6994 + $0x8] sm:$0xf]
        %v6998 = vld [vmem:[%s6994 + $0xc] sm:$0xf]
        %v6999 = vld [vmem:[%s6994 + $0x10] sm:$0xf]
        %v7000 = vld [vmem:[%s6994 + $0x14] sm:$0xf]
        %v7001 = vld [vmem:[%s6994 + $0x18] sm:$0xf]
        %v7002 = vld [vmem:[%s6994 + $0x1c] sm:$0xf]
        %v7003 = vld [vmem:[%s6994 + $0x20] sm:$0xf]
        %v7004 = vld [vmem:[%s6994 + $0x24] sm:$0xf]
        %v7005 = vld [vmem:[%s6994 + $0x28] sm:$0xf]
        %v7006 = vld [vmem:[%s6994 + $0x2c] sm:$0xf]
        %v7007 = vld [vmem:[%s6994 + $0x30] sm:$0xf]
        %v7008 = vld [vmem:[%s6994 + $0x34] sm:$0xf]
        %v7009 = vld [vmem:[%s6994 + $0x38] sm:$0xf]
        %v7010 = vld [vmem:[%s6994 + $0x3c] sm:$0xf]
        %vm7011 = vsmask.f32 3328
        %v7013 = vshrl.u32 %v6082, 16
        %v7015 = vrot.slane %v7013, 4
        %v7016 = vshll.u32 %v6082, 16
        %v7018 = vrot.slane %v7016, 5
        %v7019 = vor.u32 %v7015, %v7018
        %v7020 = vrot.slane %v6481, 4
        %v7021 = vrot.slane %v6484, 5
        %v7022 = vor.u32 %v7020, %v7021
        %v7023 = vsel %vm7011, %v7019, %v7022
        %v7024 = vrot.slane %v6490, 4
        %v7025 = vrot.slane %v6493, 5
        %v7026 = vor.u32 %v7024, %v7025
        %v7027 = vsel %vm7011, %v7022, %v7026
        %v7028 = vrot.slane %v6499, 4
        %v7029 = vrot.slane %v6502, 5
        %v7030 = vor.u32 %v7028, %v7029
        %v7031 = vsel %vm7011, %v7026, %v7030
        %v7032 = vrot.slane %v6508, 4
        %v7033 = vrot.slane %v6511, 5
        %v7034 = vor.u32 %v7032, %v7033
        %v7035 = vsel %vm7011, %v7030, %v7034
        %v7036 = vrot.slane %v6517, 4
        %v7037 = vrot.slane %v6520, 5
        %v7038 = vor.u32 %v7036, %v7037
        %v7039 = vsel %vm7011, %v7034, %v7038
        %v7040 = vrot.slane %v6526, 4
        %v7041 = vrot.slane %v6529, 5
        %v7042 = vor.u32 %v7040, %v7041
        %v7043 = vsel %vm7011, %v7038, %v7042
        %v7044 = vrot.slane %v6535, 4
        %v7045 = vrot.slane %v6538, 5
        %v7046 = vor.u32 %v7044, %v7045
        %v7047 = vsel %vm7011, %v7042, %v7046
        %v7048 = vrot.slane %v6544, 4
        %v7049 = vrot.slane %v6547, 5
        %v7050 = vor.u32 %v7048, %v7049
        %v7051 = vsel %vm7011, %v7046, %v7050
        %v7052 = vrot.slane %v6553, 4
        %v7053 = vrot.slane %v6556, 5
        %v7054 = vor.u32 %v7052, %v7053
        %v7055 = vsel %vm7011, %v7050, %v7054
        %v7056 = vrot.slane %v6562, 4
        %v7057 = vrot.slane %v6565, 5
        %v7058 = vor.u32 %v7056, %v7057
        %v7059 = vsel %vm7011, %v7054, %v7058
        %v7060 = vrot.slane %v6571, 4
        %v7061 = vrot.slane %v6574, 5
        %v7062 = vor.u32 %v7060, %v7061
        %v7063 = vsel %vm7011, %v7058, %v7062
        %v7064 = vrot.slane %v6580, 4
        %v7065 = vrot.slane %v6583, 5
        %v7066 = vor.u32 %v7064, %v7065
        %v7067 = vsel %vm7011, %v7062, %v7066
        %v7068 = vrot.slane %v6589, 4
        %v7069 = vrot.slane %v6592, 5
        %v7070 = vor.u32 %v7068, %v7069
        %v7071 = vsel %vm7011, %v7066, %v7070
        %v7072 = vrot.slane %v6598, 4
        %v7073 = vrot.slane %v6601, 5
        %v7074 = vor.u32 %v7072, %v7073
        %v7075 = vsel %vm7011, %v7070, %v7074
        %v7076 = vrot.slane %v6607, 4
        %v7077 = vrot.slane %v6610, 5
        %v7078 = vor.u32 %v7076, %v7077
        %v7079 = vsel %vm7011, %v7074, %v7078
        %v7080 = vrot.slane %v6616, 4
        %v7081 = vrot.slane %v6619, 5
        %v7082 = vor.u32 %v7080, %v7081
        %v7083 = vsel %vm7011, %v7078, %v7082
        %v7084 = vrot.slane %v6625, 4
        %v7085 = vrot.slane %v6628, 5
        %v7086 = vor.u32 %v7084, %v7085
        %v7087 = vsel %vm7011, %v7082, %v7086
        %v7088 = vrot.slane %v6634, 4
        %v7089 = vrot.slane %v6637, 5
        %v7090 = vor.u32 %v7088, %v7089
        %v7091 = vsel %vm7011, %v7086, %v7090
        %v7092 = vrot.slane %v6643, 4
        %v7093 = vrot.slane %v6646, 5
        %v7094 = vor.u32 %v7092, %v7093
        %v7095 = vsel %vm7011, %v7090, %v7094
        %v7096 = vrot.slane %v6652, 4
        %v7097 = vrot.slane %v6655, 5
        %v7098 = vor.u32 %v7096, %v7097
        %v7099 = vsel %vm7011, %v7094, %v7098
        %v7100 = vrot.slane %v6661, 4
        %v7101 = vrot.slane %v6664, 5
        %v7102 = vor.u32 %v7100, %v7101
        %v7103 = vsel %vm7011, %v7098, %v7102
        %v7104 = vrot.slane %v6670, 4
        %v7105 = vrot.slane %v6673, 5
        %v7106 = vor.u32 %v7104, %v7105
        %v7107 = vsel %vm7011, %v7102, %v7106
        %v7108 = vrot.slane %v6679, 4
        %v7109 = vrot.slane %v6682, 5
        %v7110 = vor.u32 %v7108, %v7109
        %v7111 = vsel %vm7011, %v7106, %v7110
        %v7113 = vshrl.u32 %v6993, 16
        %v7115 = vrot.slane %v7113, 4
        %v7116 = vshll.u32 %v6993, 16
        %v7118 = vrot.slane %v7116, 5
        %v7119 = vor.u32 %v7115, %v7118
        %v7120 = vsel %vm7011, %v7110, %v7119
        %v7161 = vunpack.c.l.b16 %v6995
        %v7162 = vunpack.c.l.b16 %v6996
        %v7163 = vunpack.c.l.b16 %v6997
        %v7164 = vunpack.c.l.b16 %v6998
        %v7165 = vunpack.c.l.b16 %v6999
        %v7166 = vunpack.c.l.b16 %v7000
        %v7167 = vunpack.c.l.b16 %v7001
        %v7168 = vunpack.c.l.b16 %v7002
        %v7169 = vunpack.c.l.b16 %v7003
        %v7170 = vunpack.c.l.b16 %v7004
        %v7171 = vunpack.c.l.b16 %v7005
        %v7172 = vunpack.c.l.b16 %v7006
        %v7173 = vunpack.c.l.b16 %v7007
        %v7174 = vunpack.c.l.b16 %v7008
        %v7175 = vunpack.c.l.b16 %v7009
        %v7176 = vunpack.c.l.b16 %v7010
        %v7177 = vpack.c.b16 %v7162, %v7161
        %v7178 = vpack.c.b16 %v7164, %v7163
        %v7179 = vpack.c.b16 %v7166, %v7165
        %v7180 = vpack.c.b16 %v7168, %v7167
        %v7181 = vpack.c.b16 %v7170, %v7169
        %v7182 = vpack.c.b16 %v7172, %v7171
        %v7183 = vpack.c.b16 %v7174, %v7173
        %v7184 = vpack.c.b16 %v7176, %v7175
        %7193 = vmatprep.subr.bf16.mxu0 0
        %7194 = vmatpush1.bf16.msra.mxu0 %v7177
        %7195 = vmatprep.subr.bf16.mxu0 0
        %7196 = vmatpush1.bf16.msra.mxu0 %v7178
        %7197 = vmatprep.subr.bf16.mxu0 0
        %7198 = vmatpush1.bf16.msra.mxu0 %v7179
        %7199 = vmatprep.subr.bf16.mxu0 0
        %7200 = vmatpush1.bf16.msra.mxu0 %v7180
        %7201 = vmatprep.subr.bf16.mxu0 0
        %7202 = vmatpush1.bf16.msra.mxu0 %v7181
        %7203 = vmatprep.subr.bf16.mxu0 0
        %7204 = vmatpush1.bf16.msra.mxu0 %v7182
        %7205 = vmatprep.subr.bf16.mxu0 0
        %7206 = vmatpush1.bf16.msra.mxu0 %v7183
        %7207 = vmatprep.subr.bf16.mxu0 0
        %7208 = vmatpush1.bf16.msra.mxu0 %v7184
        %7209 = vmatprep.subr.bf16.mxu0 0
        %7210 = vmatpush1.bf16.msra.mxu0 0
        %7211 = vmatprep.subr.bf16.mxu0 0
        %7212 = vmatpush1.bf16.msra.mxu0 0
        %7213 = vmatprep.subr.bf16.mxu0 0
        %7214 = vmatpush1.bf16.msra.mxu0 0
        %7215 = vmatprep.subr.bf16.mxu0 0
        %7216 = vmatpush1.bf16.msra.mxu0 0
        %7217 = vmatprep.subr.bf16.mxu0 0
        %7218 = vmatpush1.bf16.msra.mxu0 0
        %7219 = vmatprep.subr.bf16.mxu0 0
        %7220 = vmatpush1.bf16.msra.mxu0 0
        %7221 = vmatprep.subr.bf16.mxu0 0
        %7222 = vmatpush1.bf16.msra.mxu0 0
        %7223 = vmatprep.subr.bf16.mxu0 0
        %7224 = vmatpush1.bf16.msra.mxu0 0
        %7225 = vmatprep.mubr.bf16.mxu0 0
        %7226 = vmatmul.mubr.bf16.gmra.mrb[0].mxu0 %v7023
        %v7227 = vpop.f32.mrb[0].mxu0
        %v7228 = vadd.f32 0.0, %v7227
        %v7229 = vpop.f32.mrb[0].mxu0
        %v7230 = vpop.f32.mrb[0].mxu0
        %v7231 = vadd.f32 0.0, %v7230
        %v7232 = vpop.f32.mrb[0].mxu0
        %7233 = vmatprep.mubr.bf16.mxu0 0
        %7234 = vmatmul.mubr.bf16.gmra.mrb[0].mxu0 %v7027
        %v7235 = vpop.f32.mrb[0].mxu0
        %v7236 = vadd.f32 0.0, %v7235
        %v7237 = vpop.f32.mrb[0].mxu0
        %v7238 = vpop.f32.mrb[0].mxu0
        %v7239 = vadd.f32 0.0, %v7238
        %v7240 = vpop.f32.mrb[0].mxu0
        %7241 = vmatprep.mubr.bf16.mxu0 0
        %7242 = vmatmul.mubr.bf16.gmra.mrb[0].mxu0 %v7031
        %v7243 = vpop.f32.mrb[0].mxu0
        %v7244 = vadd.f32 0.0, %v7243
        %v7245 = vpop.f32.mrb[0].mxu0
        %v7246 = vpop.f32.mrb[0].mxu0
        %v7247 = vadd.f32 0.0, %v7246
        %v7248 = vpop.f32.mrb[0].mxu0
        %7249 = vmatprep.mubr.bf16.mxu0 0
        %7250 = vmatmul.mubr.bf16.gmra.mrb[0].mxu0 %v7035
        %v7251 = vpop.f32.mrb[0].mxu0
        %v7252 = vadd.f32 0.0, %v7251
        %v7253 = vpop.f32.mrb[0].mxu0
        %v7254 = vpop.f32.mrb[0].mxu0
        %v7255 = vadd.f32 0.0, %v7254
        %v7256 = vpop.f32.mrb[0].mxu0
        %7257 = vmatprep.mubr.bf16.mxu0 0
        %7258 = vmatmul.mubr.bf16.gmra.mrb[0].mxu0 %v7039
        %v7259 = vpop.f32.mrb[0].mxu0
        %v7260 = vadd.f32 0.0, %v7259
        %v7261 = vpop.f32.mrb[0].mxu0
        %v7262 = vpop.f32.mrb[0].mxu0
        %v7263 = vadd.f32 0.0, %v7262
        %v7264 = vpop.f32.mrb[0].mxu0
        %7265 = vmatprep.mubr.bf16.mxu0 0
        %7266 = vmatmul.mubr.bf16.gmra.mrb[0].mxu0 %v7043
        %v7267 = vpop.f32.mrb[0].mxu0
        %v7268 = vadd.f32 0.0, %v7267
        %v7269 = vpop.f32.mrb[0].mxu0
        %v7270 = vpop.f32.mrb[0].mxu0
        %v7271 = vadd.f32 0.0, %v7270
        %v7272 = vpop.f32.mrb[0].mxu0
        %7273 = vmatprep.mubr.bf16.mxu0 0
        %7274 = vmatmul.mubr.bf16.gmra.mrb[0].mxu0 %v7047
        %v7275 = vpop.f32.mrb[0].mxu0
        %v7276 = vadd.f32 0.0, %v7275
        %v7277 = vpop.f32.mrb[0].mxu0
        %v7278 = vpop.f32.mrb[0].mxu0
        %v7279 = vadd.f32 0.0, %v7278
        %v7280 = vpop.f32.mrb[0].mxu0
        %7281 = vmatprep.mubr.bf16.mxu0 0
        %7282 = vmatmul.mubr.bf16.gmra.mrb[0].mxu0 %v7051
        %v7283 = vpop.f32.mrb[0].mxu0
        %v7284 = vadd.f32 0.0, %v7283
        %v7285 = vpop.f32.mrb[0].mxu0
        %v7286 = vpop.f32.mrb[0].mxu0
        %v7287 = vadd.f32 0.0, %v7286
        %v7288 = vpop.f32.mrb[0].mxu0
        %7289 = vmatprep.mubr.bf16.mxu0 0
        %7290 = vmatmul.mubr.bf16.gmra.mrb[0].mxu0 %v7055
        %v7291 = vpop.f32.mrb[0].mxu0
        %v7292 = vadd.f32 0.0, %v7291
        %v7293 = vpop.f32.mrb[0].mxu0
        %v7294 = vpop.f32.mrb[0].mxu0
        %v7295 = vadd.f32 0.0, %v7294
        %v7296 = vpop.f32.mrb[0].mxu0
        %7297 = vmatprep.mubr.bf16.mxu0 0
        %7298 = vmatmul.mubr.bf16.gmra.mrb[0].mxu0 %v7059
        %v7299 = vpop.f32.mrb[0].mxu0
        %v7300 = vadd.f32 0.0, %v7299
        %v7301 = vpop.f32.mrb[0].mxu0
        %v7302 = vpop.f32.mrb[0].mxu0
        %v7303 = vadd.f32 0.0, %v7302
        %v7304 = vpop.f32.mrb[0].mxu0
        %7305 = vmatprep.mubr.bf16.mxu0 0
        %7306 = vmatmul.mubr.bf16.gmra.mrb[0].mxu0 %v7063
        %v7307 = vpop.f32.mrb[0].mxu0
        %v7308 = vadd.f32 0.0, %v7307
        %v7309 = vpop.f32.mrb[0].mxu0
        %v7310 = vpop.f32.mrb[0].mxu0
        %v7311 = vadd.f32 0.0, %v7310
        %v7312 = vpop.f32.mrb[0].mxu0
        %7313 = vmatprep.mubr.bf16.mxu0 0
        %7314 = vmatmul.mubr.bf16.gmra.mrb[0].mxu0 %v7067
        %v7315 = vpop.f32.mrb[0].mxu0
        %v7316 = vadd.f32 0.0, %v7315
        %v7317 = vpop.f32.mrb[0].mxu0
        %v7318 = vpop.f32.mrb[0].mxu0
        %v7319 = vadd.f32 0.0, %v7318
        %v7320 = vpop.f32.mrb[0].mxu0
        %7321 = vmatprep.mubr.bf16.mxu0 0
        %7322 = vmatmul.mubr.bf16.gmra.mrb[0].mxu0 %v7071
        %v7323 = vpop.f32.mrb[0].mxu0
        %v7324 = vadd.f32 0.0, %v7323
        %v7325 = vpop.f32.mrb[0].mxu0
        %v7326 = vpop.f32.mrb[0].mxu0
        %v7327 = vadd.f32 0.0, %v7326
        %v7328 = vpop.f32.mrb[0].mxu0
        %7329 = vmatprep.mubr.bf16.mxu0 0
        %7330 = vmatmul.mubr.bf16.gmra.mrb[0].mxu0 %v7075
        %v7331 = vpop.f32.mrb[0].mxu0
        %v7332 = vadd.f32 0.0, %v7331
        %v7333 = vpop.f32.mrb[0].mxu0
        %v7334 = vpop.f32.mrb[0].mxu0
        %v7335 = vadd.f32 0.0, %v7334
        %v7336 = vpop.f32.mrb[0].mxu0
        %7337 = vmatprep.mubr.bf16.mxu0 0
        %7338 = vmatmul.mubr.bf16.gmra.mrb[0].mxu0 %v7079
        %v7339 = vpop.f32.mrb[0].mxu0
        %v7340 = vadd.f32 0.0, %v7339
        %v7341 = vpop.f32.mrb[0].mxu0
        %v7342 = vpop.f32.mrb[0].mxu0
        %v7343 = vadd.f32 0.0, %v7342
        %v7344 = vpop.f32.mrb[0].mxu0
        %7345 = vmatprep.mubr.bf16.mxu0 0
        %7346 = vmatmul.mubr.bf16.gmra.mrb[0].mxu0 %v7083
        %v7347 = vpop.f32.mrb[0].mxu0
        %v7348 = vadd.f32 0.0, %v7347
        %v7349 = vpop.f32.mrb[0].mxu0
        %v7350 = vpop.f32.mrb[0].mxu0
        %v7351 = vadd.f32 0.0, %v7350
        %v7352 = vpop.f32.mrb[0].mxu0
        %7353 = vmatprep.mubr.bf16.mxu0 0
        %7354 = vmatmul.mubr.bf16.gmra.mrb[0].mxu0 %v7087
        %v7355 = vpop.f32.mrb[0].mxu0
        %v7356 = vadd.f32 0.0, %v7355
        %v7357 = vpop.f32.mrb[0].mxu0
        %v7358 = vpop.f32.mrb[0].mxu0
        %v7359 = vadd.f32 0.0, %v7358
        %v7360 = vpop.f32.mrb[0].mxu0
        %7361 = vmatprep.mubr.bf16.mxu0 0
        %7362 = vmatmul.mubr.bf16.gmra.mrb[0].mxu0 %v7091
        %v7363 = vpop.f32.mrb[0].mxu0
        %v7364 = vadd.f32 0.0, %v7363
        %v7365 = vpop.f32.mrb[0].mxu0
        %v7366 = vpop.f32.mrb[0].mxu0
        %v7367 = vadd.f32 0.0, %v7366
        %v7368 = vpop.f32.mrb[0].mxu0
        %7369 = vmatprep.mubr.bf16.mxu0 0
        %7370 = vmatmul.mubr.bf16.gmra.mrb[0].mxu0 %v7095
        %v7371 = vpop.f32.mrb[0].mxu0
        %v7372 = vadd.f32 0.0, %v7371
        %v7373 = vpop.f32.mrb[0].mxu0
        %v7374 = vpop.f32.mrb[0].mxu0
        %v7375 = vadd.f32 0.0, %v7374
        %v7376 = vpop.f32.mrb[0].mxu0
        %7377 = vmatprep.mubr.bf16.mxu0 0
        %7378 = vmatmul.mubr.bf16.gmra.mrb[0].mxu0 %v7099
        %v7379 = vpop.f32.mrb[0].mxu0
        %v7380 = vadd.f32 0.0, %v7379
        %v7381 = vpop.f32.mrb[0].mxu0
        %v7382 = vpop.f32.mrb[0].mxu0
        %v7383 = vadd.f32 0.0, %v7382
        %v7384 = vpop.f32.mrb[0].mxu0
        %7385 = vmatprep.mubr.bf16.mxu0 0
        %7386 = vmatmul.mubr.bf16.gmra.mrb[0].mxu0 %v7103
        %v7387 = vpop.f32.mrb[0].mxu0
        %v7388 = vadd.f32 0.0, %v7387
        %v7389 = vpop.f32.mrb[0].mxu0
        %v7390 = vpop.f32.mrb[0].mxu0
        %v7391 = vadd.f32 0.0, %v7390
        %v7392 = vpop.f32.mrb[0].mxu0
        %7393 = vmatprep.mubr.bf16.mxu0 0
        %7394 = vmatmul.mubr.bf16.gmra.mrb[0].mxu0 %v7107
        %v7395 = vpop.f32.mrb[0].mxu0
        %v7396 = vadd.f32 0.0, %v7395
        %v7397 = vpop.f32.mrb[0].mxu0
        %v7398 = vpop.f32.mrb[0].mxu0
        %v7399 = vadd.f32 0.0, %v7398
        %v7400 = vpop.f32.mrb[0].mxu0
        %7401 = vmatprep.mubr.bf16.mxu0 0
        %7402 = vmatmul.mubr.bf16.gmra.mrb[0].mxu0 %v7111
        %v7403 = vpop.f32.mrb[0].mxu0
        %v7404 = vadd.f32 0.0, %v7403
        %v7405 = vpop.f32.mrb[0].mxu0
        %v7406 = vpop.f32.mrb[0].mxu0
        %v7407 = vadd.f32 0.0, %v7406
        %v7408 = vpop.f32.mrb[0].mxu0
        %7409 = vmatprep.mubr.bf16.mxu0 0
        %7410 = vmatmul.mubr.bf16.gmra.mrb[0].mxu0 %v7120
        %v7411 = vpop.f32.mrb[0].mxu0
        %v7412 = vadd.f32 0.0, %v7411
        %v7413 = vpop.f32.mrb[0].mxu0
        %v7414 = vpop.f32.mrb[0].mxu0
        %v7415 = vadd.f32 0.0, %v7414
        %v7416 = vpop.f32.mrb[0].mxu0
        %7417 = vdwg.mxu0
        %v7418 = vadd.f32 %v6803, %v7228
        %v7419 = vadd.f32 %v6806, %v7231
        %v7420 = vadd.f32 %v6811, %v7236
        %v7421 = vadd.f32 %v6814, %v7239
        %v7422 = vadd.f32 %v6819, %v7244
        %v7423 = vadd.f32 %v6822, %v7247
        %v7424 = vadd.f32 %v6827, %v7252
        %v7425 = vadd.f32 %v6830, %v7255
        %v7426 = vadd.f32 %v6835, %v7260
        %v7427 = vadd.f32 %v6838, %v7263
        %v7428 = vadd.f32 %v6843, %v7268
        %v7429 = vadd.f32 %v6846, %v7271
        %v7430 = vadd.f32 %v6851, %v7276
        %v7431 = vadd.f32 %v6854, %v7279
        %v7432 = vadd.f32 %v6859, %v7284
        %v7433 = vadd.f32 %v6862, %v7287
        %v7434 = vadd.f32 %v6867, %v7292
        %v7435 = vadd.f32 %v6870, %v7295
        %v7436 = vadd.f32 %v6875, %v7300
        %v7437 = vadd.f32 %v6878, %v7303
        %v7438 = vadd.f32 %v6883, %v7308
        %v7439 = vadd.f32 %v6886, %v7311
        %v7440 = vadd.f32 %v6891, %v7316
        %v7441 = vadd.f32 %v6894, %v7319
        %v7442 = vadd.f32 %v6899, %v7324
        %v7443 = vadd.f32 %v6902, %v7327
        %v7444 = vadd.f32 %v6907, %v7332
        %v7445 = vadd.f32 %v6910, %v7335
        %v7446 = vadd.f32 %v6915, %v7340
        %v7447 = vadd.f32 %v6918, %v7343
        %v7448 = vadd.f32 %v6923, %v7348
        %v7449 = vadd.f32 %v6926, %v7351
        %v7450 = vadd.f32 %v6931, %v7356
        %v7451 = vadd.f32 %v6934, %v7359
        %v7452 = vadd.f32 %v6939, %v7364
        %v7453 = vadd.f32 %v6942, %v7367
        %v7454 = vadd.f32 %v6947, %v7372
        %v7455 = vadd.f32 %v6950, %v7375
        %v7456 = vadd.f32 %v6955, %v7380
        %v7457 = vadd.f32 %v6958, %v7383
        %v7458 = vadd.f32 %v6963, %v7388
        %v7459 = vadd.f32 %v6966, %v7391
        %v7460 = vadd.f32 %v6971, %v7396
        %v7461 = vadd.f32 %v6974, %v7399
        %v7462 = vadd.f32 %v6979, %v7404
        %v7463 = vadd.f32 %v6982, %v7407
        %v7464 = vadd.f32 %v6987, %v7412
        %v7465 = vadd.f32 %v6990, %v7415
        %v7466 = vld [vmem:[#allocation2 + $0x10] sm:$0x80]
        %v7467 = vld [vmem:[#allocation2 + $0x18] sm:$0xff]
        %v7468 = vld [vmem:[#allocation2 + $0x20] sm:$0xff]
        %v7469 = vld [vmem:[#allocation2 + $0x28] sm:$0xff]
        %v7470 = vld [vmem:[#allocation2 + $0x30] sm:$0xff]
        %v7471 = vld [vmem:[#allocation2 + $0x38] sm:$0xff]
        %v7472 = vld [vmem:[#allocation2 + $0x40] sm:$0xff]
        %v7473 = vld [vmem:[#allocation2 + $0x48] sm:$0xff]
        %v7474 = vld [vmem:[#allocation2 + $0x50] sm:$0xff]
        %v7475 = vld [vmem:[#allocation2 + $0x58] sm:$0xff]
        %v7476 = vld [vmem:[#allocation2 + $0x60] sm:$0xff]
        %v7477 = vld [vmem:[#allocation2 + $0x68] sm:$0xff]
        %v7478 = vld [vmem:[#allocation2 + $0x70] sm:$0xff]
        %v7479 = vld [vmem:[#allocation2 + $0x78] sm:$0xff]
        %v7480 = vld [vmem:[#allocation2 + $0x80] sm:$0xff]
        %v7481 = vld [vmem:[#allocation2 + $0x88] sm:$0xff]
        %v7482 = vld [vmem:[#allocation2 + $0x90] sm:$0xff]
        %v7483 = vld [vmem:[#allocation2 + $0x98] sm:$0xff]
        %v7484 = vld [vmem:[#allocation2 + $0xa0] sm:$0xff]
        %v7485 = vld [vmem:[#allocation2 + $0xa8] sm:$0xff]
        %v7486 = vld [vmem:[#allocation2 + $0xb0] sm:$0xff]
        %v7487 = vld [vmem:[#allocation2 + $0xb8] sm:$0xff]
        %v7488 = vld [vmem:[#allocation2 + $0xc0] sm:$0xff]
        %v7489 = vld [vmem:[#allocation2 + $0xc8] sm:$0xff]
        %v7490 = vld [vmem:[#allocation2 + $0xd0] sm:$0xff]
        %s7491 = scalar_lea.vmem [#allocation8], 192
        %v7492 = vld [vmem:[%s7491] sm:$0xf]
        %v7493 = vld [vmem:[%s7491 + $0x4] sm:$0xf]
        %v7494 = vld [vmem:[%s7491 + $0x8] sm:$0xf]
        %v7495 = vld [vmem:[%s7491 + $0xc] sm:$0xf]
        %v7496 = vld [vmem:[%s7491 + $0x10] sm:$0xf]
        %v7497 = vld [vmem:[%s7491 + $0x14] sm:$0xf]
        %v7498 = vld [vmem:[%s7491 + $0x18] sm:$0xf]
        %v7499 = vld [vmem:[%s7491 + $0x1c] sm:$0xf]
        %v7500 = vld [vmem:[%s7491 + $0x20] sm:$0xf]
        %v7501 = vld [vmem:[%s7491 + $0x24] sm:$0xf]
        %v7502 = vld [vmem:[%s7491 + $0x28] sm:$0xf]
        %v7503 = vld [vmem:[%s7491 + $0x2c] sm:$0xf]
        %v7504 = vld [vmem:[%s7491 + $0x30] sm:$0xf]
        %v7505 = vld [vmem:[%s7491 + $0x34] sm:$0xf]
        %v7506 = vld [vmem:[%s7491 + $0x38] sm:$0xf]
        %v7507 = vld [vmem:[%s7491 + $0x3c] sm:$0xf]
        %vm7508 = vsmask.f32 256
        %v7510 = vshrl.u32 %v7466, 16
        %v7512 = vrot.slane %v7510, 7
        %v7514 = vshrl.u32 %v7467, 16
        %v7516 = vrot.slane %v7514, 7
        %v7517 = vshll.u32 %v7467, 16
        %v7519 = vor.u32 %v7516, %v7517
        %v7520 = vsel %vm7508, %v7512, %v7519
        %v7522 = vshrl.u32 %v7468, 16
        %v7524 = vrot.slane %v7522, 7
        %v7525 = vshll.u32 %v7468, 16
        %v7527 = vor.u32 %v7524, %v7525
        %v7528 = vsel %vm7508, %v7516, %v7527
        %v7530 = vshrl.u32 %v7469, 16
        %v7532 = vrot.slane %v7530, 7
        %v7533 = vshll.u32 %v7469, 16
        %v7535 = vor.u32 %v7532, %v7533
        %v7536 = vsel %vm7508, %v7524, %v7535
        %v7538 = vshrl.u32 %v7470, 16
        %v7540 = vrot.slane %v7538, 7
        %v7541 = vshll.u32 %v7470, 16
        %v7543 = vor.u32 %v7540, %v7541
        %v7544 = vsel %vm7508, %v7532, %v7543
        %v7546 = vshrl.u32 %v7471, 16
        %v7548 = vrot.slane %v7546, 7
        %v7549 = vshll.u32 %v7471, 16
        %v7551 = vor.u32 %v7548, %v7549
        %v7552 = vsel %vm7508, %v7540, %v7551
        %v7554 = vshrl.u32 %v7472, 16
        %v7556 = vrot.slane %v7554, 7
        %v7557 = vshll.u32 %v7472, 16
        %v7559 = vor.u32 %v7556, %v7557
        %v7560 = vsel %vm7508, %v7548, %v7559
        %v7562 = vshrl.u32 %v7473, 16
        %v7564 = vrot.slane %v7562, 7
        %v7565 = vshll.u32 %v7473, 16
        %v7567 = vor.u32 %v7564, %v7565
        %v7568 = vsel %vm7508, %v7556, %v7567
        %v7570 = vshrl.u32 %v7474, 16
        %v7572 = vrot.slane %v7570, 7
        %v7573 = vshll.u32 %v7474, 16
        %v7575 = vor.u32 %v7572, %v7573
        %v7576 = vsel %vm7508, %v7564, %v7575
        %v7578 = vshrl.u32 %v7475, 16
        %v7580 = vrot.slane %v7578, 7
        %v7581 = vshll.u32 %v7475, 16
        %v7583 = vor.u32 %v7580, %v7581
        %v7584 = vsel %vm7508, %v7572, %v7583
        %v7586 = vshrl.u32 %v7476, 16
        %v7588 = vrot.slane %v7586, 7
        %v7589 = vshll.u32 %v7476, 16
        %v7591 = vor.u32 %v7588, %v7589
        %v7592 = vsel %vm7508, %v7580, %v7591
        %v7594 = vshrl.u32 %v7477, 16
        %v7596 = vrot.slane %v7594, 7
        %v7597 = vshll.u32 %v7477, 16
        %v7599 = vor.u32 %v7596, %v7597
        %v7600 = vsel %vm7508, %v7588, %v7599
        %v7602 = vshrl.u32 %v7478, 16
        %v7604 = vrot.slane %v7602, 7
        %v7605 = vshll.u32 %v7478, 16
        %v7607 = vor.u32 %v7604, %v7605
        %v7608 = vsel %vm7508, %v7596, %v7607
        %v7610 = vshrl.u32 %v7479, 16
        %v7612 = vrot.slane %v7610, 7
        %v7613 = vshll.u32 %v7479, 16
        %v7615 = vor.u32 %v7612, %v7613
        %v7616 = vsel %vm7508, %v7604, %v7615
        %v7618 = vshrl.u32 %v7480, 16
        %v7620 = vrot.slane %v7618, 7
        %v7621 = vshll.u32 %v7480, 16
        %v7623 = vor.u32 %v7620, %v7621
        %v7624 = vsel %vm7508, %v7612, %v7623
        %v7626 = vshrl.u32 %v7481, 16
        %v7628 = vrot.slane %v7626, 7
        %v7629 = vshll.u32 %v7481, 16
        %v7631 = vor.u32 %v7628, %v7629
        %v7632 = vsel %vm7508, %v7620, %v7631
        %v7634 = vshrl.u32 %v7482, 16
        %v7636 = vrot.slane %v7634, 7
        %v7637 = vshll.u32 %v7482, 16
        %v7639 = vor.u32 %v7636, %v7637
        %v7640 = vsel %vm7508, %v7628, %v7639
        %v7642 = vshrl.u32 %v7483, 16
        %v7644 = vrot.slane %v7642, 7
        %v7645 = vshll.u32 %v7483, 16
        %v7647 = vor.u32 %v7644, %v7645
        %v7648 = vsel %vm7508, %v7636, %v7647
        %v7650 = vshrl.u32 %v7484, 16
        %v7652 = vrot.slane %v7650, 7
        %v7653 = vshll.u32 %v7484, 16
        %v7655 = vor.u32 %v7652, %v7653
        %v7656 = vsel %vm7508, %v7644, %v7655
        %v7658 = vshrl.u32 %v7485, 16
        %v7660 = vrot.slane %v7658, 7
        %v7661 = vshll.u32 %v7485, 16
        %v7663 = vor.u32 %v7660, %v7661
        %v7664 = vsel %vm7508, %v7652, %v7663
        %v7666 = vshrl.u32 %v7486, 16
        %v7668 = vrot.slane %v7666, 7
        %v7669 = vshll.u32 %v7486, 16
        %v7671 = vor.u32 %v7668, %v7669
        %v7672 = vsel %vm7508, %v7660, %v7671
        %v7674 = vshrl.u32 %v7487, 16
        %v7676 = vrot.slane %v7674, 7
        %v7677 = vshll.u32 %v7487, 16
        %v7679 = vor.u32 %v7676, %v7677
        %v7680 = vsel %vm7508, %v7668, %v7679
        %v7682 = vshrl.u32 %v7488, 16
        %v7684 = vrot.slane %v7682, 7
        %v7685 = vshll.u32 %v7488, 16
        %v7687 = vor.u32 %v7684, %v7685
        %v7688 = vsel %vm7508, %v7676, %v7687
        %v7690 = vshrl.u32 %v7489, 16
        %v7692 = vrot.slane %v7690, 7
        %v7693 = vshll.u32 %v7489, 16
        %v7695 = vor.u32 %v7692, %v7693
        %v7696 = vsel %vm7508, %v7684, %v7695
        %v7698 = vshrl.u32 %v7490, 16
        %v7700 = vrot.slane %v7698, 7
        %v7701 = vshll.u32 %v7490, 16
        %v7703 = vor.u32 %v7700, %v7701
        %v7704 = vsel %vm7508, %v7692, %v7703
        %v7745 = vunpack.c.l.b16 %v7492
        %v7746 = vunpack.c.l.b16 %v7493
        %v7747 = vunpack.c.l.b16 %v7494
        %v7748 = vunpack.c.l.b16 %v7495
        %v7749 = vunpack.c.l.b16 %v7496
        %v7750 = vunpack.c.l.b16 %v7497
        %v7751 = vunpack.c.l.b16 %v7498
        %v7752 = vunpack.c.l.b16 %v7499
        %v7753 = vunpack.c.l.b16 %v7500
        %v7754 = vunpack.c.l.b16 %v7501
        %v7755 = vunpack.c.l.b16 %v7502
        %v7756 = vunpack.c.l.b16 %v7503
        %v7757 = vunpack.c.l.b16 %v7504
        %v7758 = vunpack.c.l.b16 %v7505
        %v7759 = vunpack.c.l.b16 %v7506
        %v7760 = vunpack.c.l.b16 %v7507
        %v7761 = vpack.c.b16 %v7746, %v7745
        %v7762 = vpack.c.b16 %v7748, %v7747
        %v7763 = vpack.c.b16 %v7750, %v7749
        %v7764 = vpack.c.b16 %v7752, %v7751
        %v7765 = vpack.c.b16 %v7754, %v7753
        %v7766 = vpack.c.b16 %v7756, %v7755
        %v7767 = vpack.c.b16 %v7758, %v7757
        %v7768 = vpack.c.b16 %v7760, %v7759
        %7777 = vmatprep.subr.bf16.mxu0 0
        %7778 = vmatpush1.bf16.msra.mxu0 %v7761
        %7779 = vmatprep.subr.bf16.mxu0 0
        %7780 = vmatpush1.bf16.msra.mxu0 %v7762
        %7781 = vmatprep.subr.bf16.mxu0 0
        %7782 = vmatpush1.bf16.msra.mxu0 %v7763
        %7783 = vmatprep.subr.bf16.mxu0 0
        %7784 = vmatpush1.bf16.msra.mxu0 %v7764
        %7785 = vmatprep.subr.bf16.mxu0 0
        %7786 = vmatpush1.bf16.msra.mxu0 %v7765
        %7787 = vmatprep.subr.bf16.mxu0 0
        %7788 = vmatpush1.bf16.msra.mxu0 %v7766
        %7789 = vmatprep.subr.bf16.mxu0 0
        %7790 = vmatpush1.bf16.msra.mxu0 %v7767
        %7791 = vmatprep.subr.bf16.mxu0 0
        %7792 = vmatpush1.bf16.msra.mxu0 %v7768
        %7793 = vmatprep.subr.bf16.mxu0 0
        %7794 = vmatpush1.bf16.msra.mxu0 0
        %7795 = vmatprep.subr.bf16.mxu0 0
        %7796 = vmatpush1.bf16.msra.mxu0 0
        %7797 = vmatprep.subr.bf16.mxu0 0
        %7798 = vmatpush1.bf16.msra.mxu0 0
        %7799 = vmatprep.subr.bf16.mxu0 0
        %7800 = vmatpush1.bf16.msra.mxu0 0
        %7801 = vmatprep.subr.bf16.mxu0 0
        %7802 = vmatpush1.bf16.msra.mxu0 0
        %7803 = vmatprep.subr.bf16.mxu0 0
        %7804 = vmatpush1.bf16.msra.mxu0 0
        %7805 = vmatprep.subr.bf16.mxu0 0
        %7806 = vmatpush1.bf16.msra.mxu0 0
        %7807 = vmatprep.subr.bf16.mxu0 0
        %7808 = vmatpush1.bf16.msra.mxu0 0
        %7809 = vmatprep.mubr.bf16.mxu0 0
        %7810 = vmatmul.mubr.bf16.gmra.mrb[0].mxu0 %v7520
        %v7811 = vpop.f32.mrb[0].mxu0
        %v7812 = vadd.f32 0.0, %v7811
        %v7813 = vpop.f32.mrb[0].mxu0
        %v7814 = vpop.f32.mrb[0].mxu0
        %v7815 = vadd.f32 0.0, %v7814
        %v7816 = vpop.f32.mrb[0].mxu0
        %7817 = vmatprep.mubr.bf16.mxu0 0
        %7818 = vmatmul.mubr.bf16.gmra.mrb[0].mxu0 %v7528
        %v7819 = vpop.f32.mrb[0].mxu0
        %v7820 = vadd.f32 0.0, %v7819
        %v7821 = vpop.f32.mrb[0].mxu0
        %v7822 = vpop.f32.mrb[0].mxu0
        %v7823 = vadd.f32 0.0, %v7822
        %v7824 = vpop.f32.mrb[0].mxu0
        %7825 = vmatprep.mubr.bf16.mxu0 0
        %7826 = vmatmul.mubr.bf16.gmra.mrb[0].mxu0 %v7536
        %v7827 = vpop.f32.mrb[0].mxu0
        %v7828 = vadd.f32 0.0, %v7827
        %v7829 = vpop.f32.mrb[0].mxu0
        %v7830 = vpop.f32.mrb[0].mxu0
        %v7831 = vadd.f32 0.0, %v7830
        %v7832 = vpop.f32.mrb[0].mxu0
        %7833 = vmatprep.mubr.bf16.mxu0 0
        %7834 = vmatmul.mubr.bf16.gmra.mrb[0].mxu0 %v7544
        %v7835 = vpop.f32.mrb[0].mxu0
        %v7836 = vadd.f32 0.0, %v7835
        %v7837 = vpop.f32.mrb[0].mxu0
        %v7838 = vpop.f32.mrb[0].mxu0
        %v7839 = vadd.f32 0.0, %v7838
        %v7840 = vpop.f32.mrb[0].mxu0
        %7841 = vmatprep.mubr.bf16.mxu0 0
        %7842 = vmatmul.mubr.bf16.gmra.mrb[0].mxu0 %v7552
        %v7843 = vpop.f32.mrb[0].mxu0
        %v7844 = vadd.f32 0.0, %v7843
        %v7845 = vpop.f32.mrb[0].mxu0
        %v7846 = vpop.f32.mrb[0].mxu0
        %v7847 = vadd.f32 0.0, %v7846
        %v7848 = vpop.f32.mrb[0].mxu0
        %7849 = vmatprep.mubr.bf16.mxu0 0
        %7850 = vmatmul.mubr.bf16.gmra.mrb[0].mxu0 %v7560
        %v7851 = vpop.f32.mrb[0].mxu0
        %v7852 = vadd.f32 0.0, %v7851
        %v7853 = vpop.f32.mrb[0].mxu0
        %v7854 = vpop.f32.mrb[0].mxu0
        %v7855 = vadd.f32 0.0, %v7854
        %v7856 = vpop.f32.mrb[0].mxu0
        %7857 = vmatprep.mubr.bf16.mxu0 0
        %7858 = vmatmul.mubr.bf16.gmra.mrb[0].mxu0 %v7568
        %v7859 = vpop.f32.mrb[0].mxu0
        %v7860 = vadd.f32 0.0, %v7859
        %v7861 = vpop.f32.mrb[0].mxu0
        %v7862 = vpop.f32.mrb[0].mxu0
        %v7863 = vadd.f32 0.0, %v7862
        %v7864 = vpop.f32.mrb[0].mxu0
        %7865 = vmatprep.mubr.bf16.mxu0 0
        %7866 = vmatmul.mubr.bf16.gmra.mrb[0].mxu0 %v7576
        %v7867 = vpop.f32.mrb[0].mxu0
        %v7868 = vadd.f32 0.0, %v7867
        %v7869 = vpop.f32.mrb[0].mxu0
        %v7870 = vpop.f32.mrb[0].mxu0
        %v7871 = vadd.f32 0.0, %v7870
        %v7872 = vpop.f32.mrb[0].mxu0
        %7873 = vmatprep.mubr.bf16.mxu0 0
        %7874 = vmatmul.mubr.bf16.gmra.mrb[0].mxu0 %v7584
        %v7875 = vpop.f32.mrb[0].mxu0
        %v7876 = vadd.f32 0.0, %v7875
        %v7877 = vpop.f32.mrb[0].mxu0
        %v7878 = vpop.f32.mrb[0].mxu0
        %v7879 = vadd.f32 0.0, %v7878
        %v7880 = vpop.f32.mrb[0].mxu0
        %7881 = vmatprep.mubr.bf16.mxu0 0
        %7882 = vmatmul.mubr.bf16.gmra.mrb[0].mxu0 %v7592
        %v7883 = vpop.f32.mrb[0].mxu0
        %v7884 = vadd.f32 0.0, %v7883
        %v7885 = vpop.f32.mrb[0].mxu0
        %v7886 = vpop.f32.mrb[0].mxu0
        %v7887 = vadd.f32 0.0, %v7886
        %v7888 = vpop.f32.mrb[0].mxu0
        %7889 = vmatprep.mubr.bf16.mxu0 0
        %7890 = vmatmul.mubr.bf16.gmra.mrb[0].mxu0 %v7600
        %v7891 = vpop.f32.mrb[0].mxu0
        %v7892 = vadd.f32 0.0, %v7891
        %v7893 = vpop.f32.mrb[0].mxu0
        %v7894 = vpop.f32.mrb[0].mxu0
        %v7895 = vadd.f32 0.0, %v7894
        %v7896 = vpop.f32.mrb[0].mxu0
        %7897 = vmatprep.mubr.bf16.mxu0 0
        %7898 = vmatmul.mubr.bf16.gmra.mrb[0].mxu0 %v7608
        %v7899 = vpop.f32.mrb[0].mxu0
        %v7900 = vadd.f32 0.0, %v7899
        %v7901 = vpop.f32.mrb[0].mxu0
        %v7902 = vpop.f32.mrb[0].mxu0
        %v7903 = vadd.f32 0.0, %v7902
        %v7904 = vpop.f32.mrb[0].mxu0
        %7905 = vmatprep.mubr.bf16.mxu0 0
        %7906 = vmatmul.mubr.bf16.gmra.mrb[0].mxu0 %v7616
        %v7907 = vpop.f32.mrb[0].mxu0
        %v7908 = vadd.f32 0.0, %v7907
        %v7909 = vpop.f32.mrb[0].mxu0
        %v7910 = vpop.f32.mrb[0].mxu0
        %v7911 = vadd.f32 0.0, %v7910
        %v7912 = vpop.f32.mrb[0].mxu0
        %7913 = vmatprep.mubr.bf16.mxu0 0
        %7914 = vmatmul.mubr.bf16.gmra.mrb[0].mxu0 %v7624
        %v7915 = vpop.f32.mrb[0].mxu0
        %v7916 = vadd.f32 0.0, %v7915
        %v7917 = vpop.f32.mrb[0].mxu0
        %v7918 = vpop.f32.mrb[0].mxu0
        %v7919 = vadd.f32 0.0, %v7918
        %v7920 = vpop.f32.mrb[0].mxu0
        %7921 = vmatprep.mubr.bf16.mxu0 0
        %7922 = vmatmul.mubr.bf16.gmra.mrb[0].mxu0 %v7632
        %v7923 = vpop.f32.mrb[0].mxu0
        %v7924 = vadd.f32 0.0, %v7923
        %v7925 = vpop.f32.mrb[0].mxu0
        %v7926 = vpop.f32.mrb[0].mxu0
        %v7927 = vadd.f32 0.0, %v7926
        %v7928 = vpop.f32.mrb[0].mxu0
        %7929 = vmatprep.mubr.bf16.mxu0 0
        %7930 = vmatmul.mubr.bf16.gmra.mrb[0].mxu0 %v7640
        %v7931 = vpop.f32.mrb[0].mxu0
        %v7932 = vadd.f32 0.0, %v7931
        %v7933 = vpop.f32.mrb[0].mxu0
        %v7934 = vpop.f32.mrb[0].mxu0
        %v7935 = vadd.f32 0.0, %v7934
        %v7936 = vpop.f32.mrb[0].mxu0
        %7937 = vmatprep.mubr.bf16.mxu0 0
        %7938 = vmatmul.mubr.bf16.gmra.mrb[0].mxu0 %v7648
        %v7939 = vpop.f32.mrb[0].mxu0
        %v7940 = vadd.f32 0.0, %v7939
        %v7941 = vpop.f32.mrb[0].mxu0
        %v7942 = vpop.f32.mrb[0].mxu0
        %v7943 = vadd.f32 0.0, %v7942
        %v7944 = vpop.f32.mrb[0].mxu0
        %7945 = vmatprep.mubr.bf16.mxu0 0
        %7946 = vmatmul.mubr.bf16.gmra.mrb[0].mxu0 %v7656
        %v7947 = vpop.f32.mrb[0].mxu0
        %v7948 = vadd.f32 0.0, %v7947
        %v7949 = vpop.f32.mrb[0].mxu0
        %v7950 = vpop.f32.mrb[0].mxu0
        %v7951 = vadd.f32 0.0, %v7950
        %v7952 = vpop.f32.mrb[0].mxu0
        %7953 = vmatprep.mubr.bf16.mxu0 0
        %7954 = vmatmul.mubr.bf16.gmra.mrb[0].mxu0 %v7664
        %v7955 = vpop.f32.mrb[0].mxu0
        %v7956 = vadd.f32 0.0, %v7955
        %v7957 = vpop.f32.mrb[0].mxu0
        %v7958 = vpop.f32.mrb[0].mxu0
        %v7959 = vadd.f32 0.0, %v7958
        %v7960 = vpop.f32.mrb[0].mxu0
        %7961 = vmatprep.mubr.bf16.mxu0 0
        %7962 = vmatmul.mubr.bf16.gmra.mrb[0].mxu0 %v7672
        %v7963 = vpop.f32.mrb[0].mxu0
        %v7964 = vadd.f32 0.0, %v7963
        %v7965 = vpop.f32.mrb[0].mxu0
        %v7966 = vpop.f32.mrb[0].mxu0
        %v7967 = vadd.f32 0.0, %v7966
        %v7968 = vpop.f32.mrb[0].mxu0
        %7969 = vmatprep.mubr.bf16.mxu0 0
        %7970 = vmatmul.mubr.bf16.gmra.mrb[0].mxu0 %v7680
        %v7971 = vpop.f32.mrb[0].mxu0
        %v7972 = vadd.f32 0.0, %v7971
        %v7973 = vpop.f32.mrb[0].mxu0
        %v7974 = vpop.f32.mrb[0].mxu0
        %v7975 = vadd.f32 0.0, %v7974
        %v7976 = vpop.f32.mrb[0].mxu0
        %7977 = vmatprep.mubr.bf16.mxu0 0
        %7978 = vmatmul.mubr.bf16.gmra.mrb[0].mxu0 %v7688
        %v7979 = vpop.f32.mrb[0].mxu0
        %v7980 = vadd.f32 0.0, %v7979
        %v7981 = vpop.f32.mrb[0].mxu0
        %v7982 = vpop.f32.mrb[0].mxu0
        %v7983 = vadd.f32 0.0, %v7982
        %v7984 = vpop.f32.mrb[0].mxu0
        %7985 = vmatprep.mubr.bf16.mxu0 0
        %7986 = vmatmul.mubr.bf16.gmra.mrb[0].mxu0 %v7696
        %v7987 = vpop.f32.mrb[0].mxu0
        %v7988 = vadd.f32 0.0, %v7987
        %v7989 = vpop.f32.mrb[0].mxu0
        %v7990 = vpop.f32.mrb[0].mxu0
        %v7991 = vadd.f32 0.0, %v7990
        %v7992 = vpop.f32.mrb[0].mxu0
        %7993 = vmatprep.mubr.bf16.mxu0 0
        %7994 = vmatmul.mubr.bf16.gmra.mrb[0].mxu0 %v7704
        %v7995 = vpop.f32.mrb[0].mxu0
        %v7996 = vadd.f32 0.0, %v7995
        %v7997 = vpop.f32.mrb[0].mxu0
        %v7998 = vpop.f32.mrb[0].mxu0
        %v7999 = vadd.f32 0.0, %v7998
        %v8000 = vpop.f32.mrb[0].mxu0
        %8001 = vdwg.mxu0
        %v8002 = vadd.f32 %v7418, %v7812
        %v8003 = vadd.f32 %v7419, %v7815
        %v8004 = vadd.f32 %v7420, %v7820
        %v8005 = vadd.f32 %v7421, %v7823
        %v8006 = vadd.f32 %v7422, %v7828
        %v8007 = vadd.f32 %v7423, %v7831
        %v8008 = vadd.f32 %v7424, %v7836
        %v8009 = vadd.f32 %v7425, %v7839
        %v8010 = vadd.f32 %v7426, %v7844
        %v8011 = vadd.f32 %v7427, %v7847
        %v8012 = vadd.f32 %v7428, %v7852
        %v8013 = vadd.f32 %v7429, %v7855
        %v8014 = vadd.f32 %v7430, %v7860
        %v8015 = vadd.f32 %v7431, %v7863
        %v8016 = vadd.f32 %v7432, %v7868
        %v8017 = vadd.f32 %v7433, %v7871
        %v8018 = vadd.f32 %v7434, %v7876
        %v8019 = vadd.f32 %v7435, %v7879
        %v8020 = vadd.f32 %v7436, %v7884
        %v8021 = vadd.f32 %v7437, %v7887
        %v8022 = vadd.f32 %v7438, %v7892
        %v8023 = vadd.f32 %v7439, %v7895
        %v8024 = vadd.f32 %v7440, %v7900
        %v8025 = vadd.f32 %v7441, %v7903
        %v8026 = vadd.f32 %v7442, %v7908
        %v8027 = vadd.f32 %v7443, %v7911
        %v8028 = vadd.f32 %v7444, %v7916
        %v8029 = vadd.f32 %v7445, %v7919
        %v8030 = vadd.f32 %v7446, %v7924
        %v8031 = vadd.f32 %v7447, %v7927
        %v8032 = vadd.f32 %v7448, %v7932
        %v8033 = vadd.f32 %v7449, %v7935
        %v8034 = vadd.f32 %v7450, %v7940
        %v8035 = vadd.f32 %v7451, %v7943
        %v8036 = vadd.f32 %v7452, %v7948
        %v8037 = vadd.f32 %v7453, %v7951
        %v8038 = vadd.f32 %v7454, %v7956
        %v8039 = vadd.f32 %v7455, %v7959
        %v8040 = vadd.f32 %v7456, %v7964
        %v8041 = vadd.f32 %v7457, %v7967
        %v8042 = vadd.f32 %v7458, %v7972
        %v8043 = vadd.f32 %v7459, %v7975
        %v8044 = vadd.f32 %v7460, %v7980
        %v8045 = vadd.f32 %v7461, %v7983
        %v8046 = vadd.f32 %v7462, %v7988
        %v8047 = vadd.f32 %v7463, %v7991
        %v8048 = vadd.f32 %v7464, %v7996
        %v8049 = vadd.f32 %v7465, %v7999
        %s8050 = scalar_lea.vmem [#allocation8], 256
        %v8051 = vld [vmem:[%s8050] sm:$0xf]
        %v8052 = vld [vmem:[%s8050 + $0x4] sm:$0xf]
        %v8053 = vld [vmem:[%s8050 + $0x8] sm:$0xf]
        %v8054 = vld [vmem:[%s8050 + $0xc] sm:$0xf]
        %v8055 = vld [vmem:[%s8050 + $0x10] sm:$0xf]
        %v8056 = vld [vmem:[%s8050 + $0x14] sm:$0xf]
        %v8057 = vld [vmem:[%s8050 + $0x18] sm:$0xf]
        %v8058 = vld [vmem:[%s8050 + $0x1c] sm:$0xf]
        %v8059 = vld [vmem:[%s8050 + $0x20] sm:$0xf]
        %v8060 = vld [vmem:[%s8050 + $0x24] sm:$0xf]
        %v8061 = vld [vmem:[%s8050 + $0x28] sm:$0xf]
        %v8062 = vld [vmem:[%s8050 + $0x2c] sm:$0xf]
        %v8063 = vld [vmem:[%s8050 + $0x30] sm:$0xf]
        %v8064 = vld [vmem:[%s8050 + $0x34] sm:$0xf]
        %v8065 = vld [vmem:[%s8050 + $0x38] sm:$0xf]
        %v8066 = vld [vmem:[%s8050 + $0x3c] sm:$0xf]
        %v8083 = vunpack.c.l.b16 %v8051
        %v8084 = vunpack.c.l.b16 %v8052
        %v8085 = vunpack.c.l.b16 %v8053
        %v8086 = vunpack.c.l.b16 %v8054
        %v8087 = vunpack.c.l.b16 %v8055
        %v8088 = vunpack.c.l.b16 %v8056
        %v8089 = vunpack.c.l.b16 %v8057
        %v8090 = vunpack.c.l.b16 %v8058
        %v8091 = vunpack.c.l.b16 %v8059
        %v8092 = vunpack.c.l.b16 %v8060
        %v8093 = vunpack.c.l.b16 %v8061
        %v8094 = vunpack.c.l.b16 %v8062
        %v8095 = vunpack.c.l.b16 %v8063
        %v8096 = vunpack.c.l.b16 %v8064
        %v8097 = vunpack.c.l.b16 %v8065
        %v8098 = vunpack.c.l.b16 %v8066
        %v8099 = vpack.c.b16 %v8084, %v8083
        %v8100 = vpack.c.b16 %v8086, %v8085
        %v8101 = vpack.c.b16 %v8088, %v8087
        %v8102 = vpack.c.b16 %v8090, %v8089
        %v8103 = vpack.c.b16 %v8092, %v8091
        %v8104 = vpack.c.b16 %v8094, %v8093
        %v8105 = vpack.c.b16 %v8096, %v8095
        %v8106 = vpack.c.b16 %v8098, %v8097
        %8115 = vmatprep.subr.bf16.mxu0 0
        %8116 = vmatpush1.bf16.msra.mxu0 %v8099
        %8117 = vmatprep.subr.bf16.mxu0 0
        %8118 = vmatpush1.bf16.msra.mxu0 %v8100
        %8119 = vmatprep.subr.bf16.mxu0 0
        %8120 = vmatpush1.bf16.msra.mxu0 %v8101
        %8121 = vmatprep.subr.bf16.mxu0 0
        %8122 = vmatpush1.bf16.msra.mxu0 %v8102
        %8123 = vmatprep.subr.bf16.mxu0 0
        %8124 = vmatpush1.bf16.msra.mxu0 %v8103
        %8125 = vmatprep.subr.bf16.mxu0 0
        %8126 = vmatpush1.bf16.msra.mxu0 %v8104
        %8127 = vmatprep.subr.bf16.mxu0 0
        %8128 = vmatpush1.bf16.msra.mxu0 %v8105
        %8129 = vmatprep.subr.bf16.mxu0 0
        %8130 = vmatpush1.bf16.msra.mxu0 %v8106
        %8131 = vmatprep.subr.bf16.mxu0 0
        %8132 = vmatpush1.bf16.msra.mxu0 0
        %8133 = vmatprep.subr.bf16.mxu0 0
        %8134 = vmatpush1.bf16.msra.mxu0 0
        %8135 = vmatprep.subr.bf16.mxu0 0
        %8136 = vmatpush1.bf16.msra.mxu0 0
        %8137 = vmatprep.subr.bf16.mxu0 0
        %8138 = vmatpush1.bf16.msra.mxu0 0
        %8139 = vmatprep.subr.bf16.mxu0 0
        %8140 = vmatpush1.bf16.msra.mxu0 0
        %8141 = vmatprep.subr.bf16.mxu0 0
        %8142 = vmatpush1.bf16.msra.mxu0 0
        %8143 = vmatprep.subr.bf16.mxu0 0
        %8144 = vmatpush1.bf16.msra.mxu0 0
        %8145 = vmatprep.subr.bf16.mxu0 0
        %8146 = vmatpush1.bf16.msra.mxu0 0
        %8147 = vmatprep.mubr.bf16.mxu0 0
        %8148 = vmatmul.mubr.bf16.gmra.mrb[0].mxu0 %v7467
        %v8149 = vpop.f32.mrb[0].mxu0
        %v8150 = vadd.f32 0.0, %v8149
        %v8151 = vpop.f32.mrb[0].mxu0
        %v8152 = vpop.f32.mrb[0].mxu0
        %v8153 = vadd.f32 0.0, %v8152
        %v8154 = vpop.f32.mrb[0].mxu0
        %8155 = vmatprep.mubr.bf16.mxu0 0
        %8156 = vmatmul.mubr.bf16.gmra.mrb[0].mxu0 %v7468
        %v8157 = vpop.f32.mrb[0].mxu0
        %v8158 = vadd.f32 0.0, %v8157
        %v8159 = vpop.f32.mrb[0].mxu0
        %v8160 = vpop.f32.mrb[0].mxu0
        %v8161 = vadd.f32 0.0, %v8160
        %v8162 = vpop.f32.mrb[0].mxu0
        %8163 = vmatprep.mubr.bf16.mxu0 0
        %8164 = vmatmul.mubr.bf16.gmra.mrb[0].mxu0 %v7469
        %v8165 = vpop.f32.mrb[0].mxu0
        %v8166 = vadd.f32 0.0, %v8165
        %v8167 = vpop.f32.mrb[0].mxu0
        %v8168 = vpop.f32.mrb[0].mxu0
        %v8169 = vadd.f32 0.0, %v8168
        %v8170 = vpop.f32.mrb[0].mxu0
        %8171 = vmatprep.mubr.bf16.mxu0 0
        %8172 = vmatmul.mubr.bf16.gmra.mrb[0].mxu0 %v7470
        %v8173 = vpop.f32.mrb[0].mxu0
        %v8174 = vadd.f32 0.0, %v8173
        %v8175 = vpop.f32.mrb[0].mxu0
        %v8176 = vpop.f32.mrb[0].mxu0
        %v8177 = vadd.f32 0.0, %v8176
        %v8178 = vpop.f32.mrb[0].mxu0
        %8179 = vmatprep.mubr.bf16.mxu0 0
        %8180 = vmatmul.mubr.bf16.gmra.mrb[0].mxu0 %v7471
        %v8181 = vpop.f32.mrb[0].mxu0
        %v8182 = vadd.f32 0.0, %v8181
        %v8183 = vpop.f32.mrb[0].mxu0
        %v8184 = vpop.f32.mrb[0].mxu0
        %v8185 = vadd.f32 0.0, %v8184
        %v8186 = vpop.f32.mrb[0].mxu0
        %8187 = vmatprep.mubr.bf16.mxu0 0
        %8188 = vmatmul.mubr.bf16.gmra.mrb[0].mxu0 %v7472
        %v8189 = vpop.f32.mrb[0].mxu0
        %v8190 = vadd.f32 0.0, %v8189
        %v8191 = vpop.f32.mrb[0].mxu0
        %v8192 = vpop.f32.mrb[0].mxu0
        %v8193 = vadd.f32 0.0, %v8192
        %v8194 = vpop.f32.mrb[0].mxu0
        %8195 = vmatprep.mubr.bf16.mxu0 0
        %8196 = vmatmul.mubr.bf16.gmra.mrb[0].mxu0 %v7473
        %v8197 = vpop.f32.mrb[0].mxu0
        %v8198 = vadd.f32 0.0, %v8197
        %v8199 = vpop.f32.mrb[0].mxu0
        %v8200 = vpop.f32.mrb[0].mxu0
        %v8201 = vadd.f32 0.0, %v8200
        %v8202 = vpop.f32.mrb[0].mxu0
        %8203 = vmatprep.mubr.bf16.mxu0 0
        %8204 = vmatmul.mubr.bf16.gmra.mrb[0].mxu0 %v7474
        %v8205 = vpop.f32.mrb[0].mxu0
        %v8206 = vadd.f32 0.0, %v8205
        %v8207 = vpop.f32.mrb[0].mxu0
        %v8208 = vpop.f32.mrb[0].mxu0
        %v8209 = vadd.f32 0.0, %v8208
        %v8210 = vpop.f32.mrb[0].mxu0
        %8211 = vmatprep.mubr.bf16.mxu0 0
        %8212 = vmatmul.mubr.bf16.gmra.mrb[0].mxu0 %v7475
        %v8213 = vpop.f32.mrb[0].mxu0
        %v8214 = vadd.f32 0.0, %v8213
        %v8215 = vpop.f32.mrb[0].mxu0
        %v8216 = vpop.f32.mrb[0].mxu0
        %v8217 = vadd.f32 0.0, %v8216
        %v8218 = vpop.f32.mrb[0].mxu0
        %8219 = vmatprep.mubr.bf16.mxu0 0
        %8220 = vmatmul.mubr.bf16.gmra.mrb[0].mxu0 %v7476
        %v8221 = vpop.f32.mrb[0].mxu0
        %v8222 = vadd.f32 0.0, %v8221
        %v8223 = vpop.f32.mrb[0].mxu0
        %v8224 = vpop.f32.mrb[0].mxu0
        %v8225 = vadd.f32 0.0, %v8224
        %v8226 = vpop.f32.mrb[0].mxu0
        %8227 = vmatprep.mubr.bf16.mxu0 0
        %8228 = vmatmul.mubr.bf16.gmra.mrb[0].mxu0 %v7477
        %v8229 = vpop.f32.mrb[0].mxu0
        %v8230 = vadd.f32 0.0, %v8229
        %v8231 = vpop.f32.mrb[0].mxu0
        %v8232 = vpop.f32.mrb[0].mxu0
        %v8233 = vadd.f32 0.0, %v8232
        %v8234 = vpop.f32.mrb[0].mxu0
        %8235 = vmatprep.mubr.bf16.mxu0 0
        %8236 = vmatmul.mubr.bf16.gmra.mrb[0].mxu0 %v7478
        %v8237 = vpop.f32.mrb[0].mxu0
        %v8238 = vadd.f32 0.0, %v8237
        %v8239 = vpop.f32.mrb[0].mxu0
        %v8240 = vpop.f32.mrb[0].mxu0
        %v8241 = vadd.f32 0.0, %v8240
        %v8242 = vpop.f32.mrb[0].mxu0
        %8243 = vmatprep.mubr.bf16.mxu0 0
        %8244 = vmatmul.mubr.bf16.gmra.mrb[0].mxu0 %v7479
        %v8245 = vpop.f32.mrb[0].mxu0
        %v8246 = vadd.f32 0.0, %v8245
        %v8247 = vpop.f32.mrb[0].mxu0
        %v8248 = vpop.f32.mrb[0].mxu0
        %v8249 = vadd.f32 0.0, %v8248
        %v8250 = vpop.f32.mrb[0].mxu0
        %8251 = vmatprep.mubr.bf16.mxu0 0
        %8252 = vmatmul.mubr.bf16.gmra.mrb[0].mxu0 %v7480
        %v8253 = vpop.f32.mrb[0].mxu0
        %v8254 = vadd.f32 0.0, %v8253
        %v8255 = vpop.f32.mrb[0].mxu0
        %v8256 = vpop.f32.mrb[0].mxu0
        %v8257 = vadd.f32 0.0, %v8256
        %v8258 = vpop.f32.mrb[0].mxu0
        %8259 = vmatprep.mubr.bf16.mxu0 0
        %8260 = vmatmul.mubr.bf16.gmra.mrb[0].mxu0 %v7481
        %v8261 = vpop.f32.mrb[0].mxu0
        %v8262 = vadd.f32 0.0, %v8261
        %v8263 = vpop.f32.mrb[0].mxu0
        %v8264 = vpop.f32.mrb[0].mxu0
        %v8265 = vadd.f32 0.0, %v8264
        %v8266 = vpop.f32.mrb[0].mxu0
        %8267 = vmatprep.mubr.bf16.mxu0 0
        %8268 = vmatmul.mubr.bf16.gmra.mrb[0].mxu0 %v7482
        %v8269 = vpop.f32.mrb[0].mxu0
        %v8270 = vadd.f32 0.0, %v8269
        %v8271 = vpop.f32.mrb[0].mxu0
        %v8272 = vpop.f32.mrb[0].mxu0
        %v8273 = vadd.f32 0.0, %v8272
        %v8274 = vpop.f32.mrb[0].mxu0
        %8275 = vmatprep.mubr.bf16.mxu0 0
        %8276 = vmatmul.mubr.bf16.gmra.mrb[0].mxu0 %v7483
        %v8277 = vpop.f32.mrb[0].mxu0
        %v8278 = vadd.f32 0.0, %v8277
        %v8279 = vpop.f32.mrb[0].mxu0
        %v8280 = vpop.f32.mrb[0].mxu0
        %v8281 = vadd.f32 0.0, %v8280
        %v8282 = vpop.f32.mrb[0].mxu0
        %8283 = vmatprep.mubr.bf16.mxu0 0
        %8284 = vmatmul.mubr.bf16.gmra.mrb[0].mxu0 %v7484
        %v8285 = vpop.f32.mrb[0].mxu0
        %v8286 = vadd.f32 0.0, %v8285
        %v8287 = vpop.f32.mrb[0].mxu0
        %v8288 = vpop.f32.mrb[0].mxu0
        %v8289 = vadd.f32 0.0, %v8288
        %v8290 = vpop.f32.mrb[0].mxu0
        %8291 = vmatprep.mubr.bf16.mxu0 0
        %8292 = vmatmul.mubr.bf16.gmra.mrb[0].mxu0 %v7485
        %v8293 = vpop.f32.mrb[0].mxu0
        %v8294 = vadd.f32 0.0, %v8293
        %v8295 = vpop.f32.mrb[0].mxu0
        %v8296 = vpop.f32.mrb[0].mxu0
        %v8297 = vadd.f32 0.0, %v8296
        %v8298 = vpop.f32.mrb[0].mxu0
        %8299 = vmatprep.mubr.bf16.mxu0 0
        %8300 = vmatmul.mubr.bf16.gmra.mrb[0].mxu0 %v7486
        %v8301 = vpop.f32.mrb[0].mxu0
        %v8302 = vadd.f32 0.0, %v8301
        %v8303 = vpop.f32.mrb[0].mxu0
        %v8304 = vpop.f32.mrb[0].mxu0
        %v8305 = vadd.f32 0.0, %v8304
        %v8306 = vpop.f32.mrb[0].mxu0
        %8307 = vmatprep.mubr.bf16.mxu0 0
        %8308 = vmatmul.mubr.bf16.gmra.mrb[0].mxu0 %v7487
        %v8309 = vpop.f32.mrb[0].mxu0
        %v8310 = vadd.f32 0.0, %v8309
        %v8311 = vpop.f32.mrb[0].mxu0
        %v8312 = vpop.f32.mrb[0].mxu0
        %v8313 = vadd.f32 0.0, %v8312
        %v8314 = vpop.f32.mrb[0].mxu0
        %8315 = vmatprep.mubr.bf16.mxu0 0
        %8316 = vmatmul.mubr.bf16.gmra.mrb[0].mxu0 %v7488
        %v8317 = vpop.f32.mrb[0].mxu0
        %v8318 = vadd.f32 0.0, %v8317
        %v8319 = vpop.f32.mrb[0].mxu0
        %v8320 = vpop.f32.mrb[0].mxu0
        %v8321 = vadd.f32 0.0, %v8320
        %v8322 = vpop.f32.mrb[0].mxu0
        %8323 = vmatprep.mubr.bf16.mxu0 0
        %8324 = vmatmul.mubr.bf16.gmra.mrb[0].mxu0 %v7489
        %v8325 = vpop.f32.mrb[0].mxu0
        %v8326 = vadd.f32 0.0, %v8325
        %v8327 = vpop.f32.mrb[0].mxu0
        %v8328 = vpop.f32.mrb[0].mxu0
        %v8329 = vadd.f32 0.0, %v8328
        %v8330 = vpop.f32.mrb[0].mxu0
        %8331 = vmatprep.mubr.bf16.mxu0 0
        %8332 = vmatmul.mubr.bf16.gmra.mrb[0].mxu0 %v7490
        %v8333 = vpop.f32.mrb[0].mxu0
        %v8334 = vadd.f32 0.0, %v8333
        %v8335 = vpop.f32.mrb[0].mxu0
        %v8336 = vpop.f32.mrb[0].mxu0
        %v8337 = vadd.f32 0.0, %v8336
        %v8338 = vpop.f32.mrb[0].mxu0
        %8339 = vdwg.mxu0
        %v8340 = vadd.f32 %v8002, %v8150
        %v8341 = vadd.f32 %v8003, %v8153
        %v8342 = vadd.f32 %v8004, %v8158
        %v8343 = vadd.f32 %v8005, %v8161
        %v8344 = vadd.f32 %v8006, %v8166
        %v8345 = vadd.f32 %v8007, %v8169
        %v8346 = vadd.f32 %v8008, %v8174
        %v8347 = vadd.f32 %v8009, %v8177
        %v8348 = vadd.f32 %v8010, %v8182
        %v8349 = vadd.f32 %v8011, %v8185
        %v8350 = vadd.f32 %v8012, %v8190
        %v8351 = vadd.f32 %v8013, %v8193
        %v8352 = vadd.f32 %v8014, %v8198
        %v8353 = vadd.f32 %v8015, %v8201
        %v8354 = vadd.f32 %v8016, %v8206
        %v8355 = vadd.f32 %v8017, %v8209
        %v8356 = vadd.f32 %v8018, %v8214
        %v8357 = vadd.f32 %v8019, %v8217
        %v8358 = vadd.f32 %v8020, %v8222
        %v8359 = vadd.f32 %v8021, %v8225
        %v8360 = vadd.f32 %v8022, %v8230
        %v8361 = vadd.f32 %v8023, %v8233
        %v8362 = vadd.f32 %v8024, %v8238
        %v8363 = vadd.f32 %v8025, %v8241
        %v8364 = vadd.f32 %v8026, %v8246
        %v8365 = vadd.f32 %v8027, %v8249
        %v8366 = vadd.f32 %v8028, %v8254
        %v8367 = vadd.f32 %v8029, %v8257
        %v8368 = vadd.f32 %v8030, %v8262
        %v8369 = vadd.f32 %v8031, %v8265
        %v8370 = vadd.f32 %v8032, %v8270
        %v8371 = vadd.f32 %v8033, %v8273
        %v8372 = vadd.f32 %v8034, %v8278
        %v8373 = vadd.f32 %v8035, %v8281
        %v8374 = vadd.f32 %v8036, %v8286
        %v8375 = vadd.f32 %v8037, %v8289
        %v8376 = vadd.f32 %v8038, %v8294
        %v8377 = vadd.f32 %v8039, %v8297
        %v8378 = vadd.f32 %v8040, %v8302
        %v8379 = vadd.f32 %v8041, %v8305
        %v8380 = vadd.f32 %v8042, %v8310
        %v8381 = vadd.f32 %v8043, %v8313
        %v8382 = vadd.f32 %v8044, %v8318
        %v8383 = vadd.f32 %v8045, %v8321
        %v8384 = vadd.f32 %v8046, %v8326
        %v8385 = vadd.f32 %v8047, %v8329
        %v8386 = vadd.f32 %v8048, %v8334
        %v8387 = vadd.f32 %v8049, %v8337
        %v8388 = vld [vmem:[#allocation2 + $0x18] sm:$0xff]
        %v8389 = vld [vmem:[#allocation2 + $0x20] sm:$0xff]
        %v8390 = vld [vmem:[#allocation2 + $0x28] sm:$0xff]
        %v8391 = vld [vmem:[#allocation2 + $0x30] sm:$0xff]
        %v8392 = vld [vmem:[#allocation2 + $0x38] sm:$0xff]
        %v8393 = vld [vmem:[#allocation2 + $0x40] sm:$0xff]
        %v8394 = vld [vmem:[#allocation2 + $0x48] sm:$0xff]
        %v8395 = vld [vmem:[#allocation2 + $0x50] sm:$0xff]
        %v8396 = vld [vmem:[#allocation2 + $0x58] sm:$0xff]
        %v8397 = vld [vmem:[#allocation2 + $0x60] sm:$0xff]
        %v8398 = vld [vmem:[#allocation2 + $0x68] sm:$0xff]
        %v8399 = vld [vmem:[#allocation2 + $0x70] sm:$0xff]
        %v8400 = vld [vmem:[#allocation2 + $0x78] sm:$0xff]
        %v8401 = vld [vmem:[#allocation2 + $0x80] sm:$0xff]
        %v8402 = vld [vmem:[#allocation2 + $0x88] sm:$0xff]
        %v8403 = vld [vmem:[#allocation2 + $0x90] sm:$0xff]
        %v8404 = vld [vmem:[#allocation2 + $0x98] sm:$0xff]
        %v8405 = vld [vmem:[#allocation2 + $0xa0] sm:$0xff]
        %v8406 = vld [vmem:[#allocation2 + $0xa8] sm:$0xff]
        %v8407 = vld [vmem:[#allocation2 + $0xb0] sm:$0xff]
        %v8408 = vld [vmem:[#allocation2 + $0xb8] sm:$0xff]
        %v8409 = vld [vmem:[#allocation2 + $0xc0] sm:$0xff]
        %v8410 = vld [vmem:[#allocation2 + $0xc8] sm:$0xff]
        %v8411 = vld [vmem:[#allocation2 + $0xd0] sm:$0xff]
        %v8412 = vld [vmem:[#allocation2 + $0xd8] sm:$0x1]
        %s8413 = scalar_lea.vmem [#allocation8], 320
        %v8414 = vld [vmem:[%s8413] sm:$0xf]
        %v8415 = vld [vmem:[%s8413 + $0x4] sm:$0xf]
        %v8416 = vld [vmem:[%s8413 + $0x8] sm:$0xf]
        %v8417 = vld [vmem:[%s8413 + $0xc] sm:$0xf]
        %v8418 = vld [vmem:[%s8413 + $0x10] sm:$0xf]
        %v8419 = vld [vmem:[%s8413 + $0x14] sm:$0xf]
        %v8420 = vld [vmem:[%s8413 + $0x18] sm:$0xf]
        %v8421 = vld [vmem:[%s8413 + $0x1c] sm:$0xf]
        %v8422 = vld [vmem:[%s8413 + $0x20] sm:$0xf]
        %v8423 = vld [vmem:[%s8413 + $0x24] sm:$0xf]
        %v8424 = vld [vmem:[%s8413 + $0x28] sm:$0xf]
        %v8425 = vld [vmem:[%s8413 + $0x2c] sm:$0xf]
        %v8426 = vld [vmem:[%s8413 + $0x30] sm:$0xf]
        %v8427 = vld [vmem:[%s8413 + $0x34] sm:$0xf]
        %v8428 = vld [vmem:[%s8413 + $0x38] sm:$0xf]
        %v8429 = vld [vmem:[%s8413 + $0x3c] sm:$0xf]
        %v8431 = vshrl.u32 %v8388, 16
        %v8433 = vshll.u32 %v8388, 16
        %v8435 = vrot.slane %v8433, 1
        %v8436 = vor.u32 %v8431, %v8435
        %v8438 = vshll.u32 %v8389, 16
        %v8440 = vrot.slane %v8438, 1
        %v8441 = vsel %vm1484, %v8436, %v8440
        %v8442 = vshrl.u32 %v8389, 16
        %v8444 = vor.u32 %v8442, %v8440
        %v8446 = vshll.u32 %v8390, 16
        %v8448 = vrot.slane %v8446, 1
        %v8449 = vsel %vm1484, %v8444, %v8448
        %v8450 = vshrl.u32 %v8390, 16
        %v8452 = vor.u32 %v8450, %v8448
        %v8454 = vshll.u32 %v8391, 16
        %v8456 = vrot.slane %v8454, 1
        %v8457 = vsel %vm1484, %v8452, %v8456
        %v8458 = vshrl.u32 %v8391, 16
        %v8460 = vor.u32 %v8458, %v8456
        %v8462 = vshll.u32 %v8392, 16
        %v8464 = vrot.slane %v8462, 1
        %v8465 = vsel %vm1484, %v8460, %v8464
        %v8466 = vshrl.u32 %v8392, 16
        %v8468 = vor.u32 %v8466, %v8464
        %v8470 = vshll.u32 %v8393, 16
        %v8472 = vrot.slane %v8470, 1
        %v8473 = vsel %vm1484, %v8468, %v8472
        %v8474 = vshrl.u32 %v8393, 16
        %v8476 = vor.u32 %v8474, %v8472
        %v8478 = vshll.u32 %v8394, 16
        %v8480 = vrot.slane %v8478, 1
        %v8481 = vsel %vm1484, %v8476, %v8480
        %v8482 = vshrl.u32 %v8394, 16
        %v8484 = vor.u32 %v8482, %v8480
        %v8486 = vshll.u32 %v8395, 16
        %v8488 = vrot.slane %v8486, 1
        %v8489 = vsel %vm1484, %v8484, %v8488
        %v8490 = vshrl.u32 %v8395, 16
        %v8492 = vor.u32 %v8490, %v8488
        %v8494 = vshll.u32 %v8396, 16
        %v8496 = vrot.slane %v8494, 1
        %v8497 = vsel %vm1484, %v8492, %v8496
        %v8498 = vshrl.u32 %v8396, 16
        %v8500 = vor.u32 %v8498, %v8496
        %v8502 = vshll.u32 %v8397, 16
        %v8504 = vrot.slane %v8502, 1
        %v8505 = vsel %vm1484, %v8500, %v8504
        %v8506 = vshrl.u32 %v8397, 16
        %v8508 = vor.u32 %v8506, %v8504
        %v8510 = vshll.u32 %v8398, 16
        %v8512 = vrot.slane %v8510, 1
        %v8513 = vsel %vm1484, %v8508, %v8512
        %v8514 = vshrl.u32 %v8398, 16
        %v8516 = vor.u32 %v8514, %v8512
        %v8518 = vshll.u32 %v8399, 16
        %v8520 = vrot.slane %v8518, 1
        %v8521 = vsel %vm1484, %v8516, %v8520
        %v8522 = vshrl.u32 %v8399, 16
        %v8524 = vor.u32 %v8522, %v8520
        %v8526 = vshll.u32 %v8400, 16
        %v8528 = vrot.slane %v8526, 1
        %v8529 = vsel %vm1484, %v8524, %v8528
        %v8530 = vshrl.u32 %v8400, 16
        %v8532 = vor.u32 %v8530, %v8528
        %v8534 = vshll.u32 %v8401, 16
        %v8536 = vrot.slane %v8534, 1
        %v8537 = vsel %vm1484, %v8532, %v8536
        %v8538 = vshrl.u32 %v8401, 16
        %v8540 = vor.u32 %v8538, %v8536
        %v8542 = vshll.u32 %v8402, 16
        %v8544 = vrot.slane %v8542, 1
        %v8545 = vsel %vm1484, %v8540, %v8544
        %v8546 = vshrl.u32 %v8402, 16
        %v8548 = vor.u32 %v8546, %v8544
        %v8550 = vshll.u32 %v8403, 16
        %v8552 = vrot.slane %v8550, 1
        %v8553 = vsel %vm1484, %v8548, %v8552
        %v8554 = vshrl.u32 %v8403, 16
        %v8556 = vor.u32 %v8554, %v8552
        %v8558 = vshll.u32 %v8404, 16
        %v8560 = vrot.slane %v8558, 1
        %v8561 = vsel %vm1484, %v8556, %v8560
        %v8562 = vshrl.u32 %v8404, 16
        %v8564 = vor.u32 %v8562, %v8560
        %v8566 = vshll.u32 %v8405, 16
        %v8568 = vrot.slane %v8566, 1
        %v8569 = vsel %vm1484, %v8564, %v8568
        %v8570 = vshrl.u32 %v8405, 16
        %v8572 = vor.u32 %v8570, %v8568
        %v8574 = vshll.u32 %v8406, 16
        %v8576 = vrot.slane %v8574, 1
        %v8577 = vsel %vm1484, %v8572, %v8576
        %v8578 = vshrl.u32 %v8406, 16
        %v8580 = vor.u32 %v8578, %v8576
        %v8582 = vshll.u32 %v8407, 16
        %v8584 = vrot.slane %v8582, 1
        %v8585 = vsel %vm1484, %v8580, %v8584
        %v8586 = vshrl.u32 %v8407, 16
        %v8588 = vor.u32 %v8586, %v8584
        %v8590 = vshll.u32 %v8408, 16
        %v8592 = vrot.slane %v8590, 1
        %v8593 = vsel %vm1484, %v8588, %v8592
        %v8594 = vshrl.u32 %v8408, 16
        %v8596 = vor.u32 %v8594, %v8592
        %v8598 = vshll.u32 %v8409, 16
        %v8600 = vrot.slane %v8598, 1
        %v8601 = vsel %vm1484, %v8596, %v8600
        %v8602 = vshrl.u32 %v8409, 16
        %v8604 = vor.u32 %v8602, %v8600
        %v8606 = vshll.u32 %v8410, 16
        %v8608 = vrot.slane %v8606, 1
        %v8609 = vsel %vm1484, %v8604, %v8608
        %v8610 = vshrl.u32 %v8410, 16
        %v8612 = vor.u32 %v8610, %v8608
        %v8614 = vshll.u32 %v8411, 16
        %v8616 = vrot.slane %v8614, 1
        %v8617 = vsel %vm1484, %v8612, %v8616
        %v8618 = vshrl.u32 %v8411, 16
        %v8620 = vor.u32 %v8618, %v8616
        %v8622 = vshll.u32 %v8412, 16
        %v8624 = vrot.slane %v8622, 1
        %v8625 = vsel %vm1484, %v8620, %v8624
        %v8666 = vunpack.c.l.b16 %v8414
        %v8667 = vunpack.c.l.b16 %v8415
        %v8668 = vunpack.c.l.b16 %v8416
        %v8669 = vunpack.c.l.b16 %v8417
        %v8670 = vunpack.c.l.b16 %v8418
        %v8671 = vunpack.c.l.b16 %v8419
        %v8672 = vunpack.c.l.b16 %v8420
        %v8673 = vunpack.c.l.b16 %v8421
        %v8674 = vunpack.c.l.b16 %v8422
        %v8675 = vunpack.c.l.b16 %v8423
        %v8676 = vunpack.c.l.b16 %v8424
        %v8677 = vunpack.c.l.b16 %v8425
        %v8678 = vunpack.c.l.b16 %v8426
        %v8679 = vunpack.c.l.b16 %v8427
        %v8680 = vunpack.c.l.b16 %v8428
        %v8681 = vunpack.c.l.b16 %v8429
        %v8682 = vpack.c.b16 %v8667, %v8666
        %v8683 = vpack.c.b16 %v8669, %v8668
        %v8684 = vpack.c.b16 %v8671, %v8670
        %v8685 = vpack.c.b16 %v8673, %v8672
        %v8686 = vpack.c.b16 %v8675, %v8674
        %v8687 = vpack.c.b16 %v8677, %v8676
        %v8688 = vpack.c.b16 %v8679, %v8678
        %v8689 = vpack.c.b16 %v8681, %v8680
        %8698 = vmatprep.subr.bf16.mxu0 0
        %8699 = vmatpush1.bf16.msra.mxu0 %v8682
        %8700 = vmatprep.subr.bf16.mxu0 0
        %8701 = vmatpush1.bf16.msra.mxu0 %v8683
        %8702 = vmatprep.subr.bf16.mxu0 0
        %8703 = vmatpush1.bf16.msra.mxu0 %v8684
        %8704 = vmatprep.subr.bf16.mxu0 0
        %8705 = vmatpush1.bf16.msra.mxu0 %v8685
        %8706 = vmatprep.subr.bf16.mxu0 0
        %8707 = vmatpush1.bf16.msra.mxu0 %v8686
        %8708 = vmatprep.subr.bf16.mxu0 0
        %8709 = vmatpush1.bf16.msra.mxu0 %v8687
        %8710 = vmatprep.subr.bf16.mxu0 0
        %8711 = vmatpush1.bf16.msra.mxu0 %v8688
        %8712 = vmatprep.subr.bf16.mxu0 0
        %8713 = vmatpush1.bf16.msra.mxu0 %v8689
        %8714 = vmatprep.subr.bf16.mxu0 0
        %8715 = vmatpush1.bf16.msra.mxu0 0
        %8716 = vmatprep.subr.bf16.mxu0 0
        %8717 = vmatpush1.bf16.msra.mxu0 0
        %8718 = vmatprep.subr.bf16.mxu0 0
        %8719 = vmatpush1.bf16.msra.mxu0 0
        %8720 = vmatprep.subr.bf16.mxu0 0
        %8721 = vmatpush1.bf16.msra.mxu0 0
        %8722 = vmatprep.subr.bf16.mxu0 0
        %8723 = vmatpush1.bf16.msra.mxu0 0
        %8724 = vmatprep.subr.bf16.mxu0 0
        %8725 = vmatpush1.bf16.msra.mxu0 0
        %8726 = vmatprep.subr.bf16.mxu0 0
        %8727 = vmatpush1.bf16.msra.mxu0 0
        %8728 = vmatprep.subr.bf16.mxu0 0
        %8729 = vmatpush1.bf16.msra.mxu0 0
        %8730 = vmatprep.mubr.bf16.mxu0 0
        %8731 = vmatmul.mubr.bf16.gmra.mrb[0].mxu0 %v8441
        %v8732 = vpop.f32.mrb[0].mxu0
        %v8733 = vadd.f32 0.0, %v8732
        %v8734 = vpop.f32.mrb[0].mxu0
        %v8735 = vpop.f32.mrb[0].mxu0
        %v8736 = vadd.f32 0.0, %v8735
        %v8737 = vpop.f32.mrb[0].mxu0
        %8738 = vmatprep.mubr.bf16.mxu0 0
        %8739 = vmatmul.mubr.bf16.gmra.mrb[0].mxu0 %v8449
        %v8740 = vpop.f32.mrb[0].mxu0
        %v8741 = vadd.f32 0.0, %v8740
        %v8742 = vpop.f32.mrb[0].mxu0
        %v8743 = vpop.f32.mrb[0].mxu0
        %v8744 = vadd.f32 0.0, %v8743
        %v8745 = vpop.f32.mrb[0].mxu0
        %8746 = vmatprep.mubr.bf16.mxu0 0
        %8747 = vmatmul.mubr.bf16.gmra.mrb[0].mxu0 %v8457
        %v8748 = vpop.f32.mrb[0].mxu0
        %v8749 = vadd.f32 0.0, %v8748
        %v8750 = vpop.f32.mrb[0].mxu0
        %v8751 = vpop.f32.mrb[0].mxu0
        %v8752 = vadd.f32 0.0, %v8751
        %v8753 = vpop.f32.mrb[0].mxu0
        %8754 = vmatprep.mubr.bf16.mxu0 0
        %8755 = vmatmul.mubr.bf16.gmra.mrb[0].mxu0 %v8465
        %v8756 = vpop.f32.mrb[0].mxu0
        %v8757 = vadd.f32 0.0, %v8756
        %v8758 = vpop.f32.mrb[0].mxu0
        %v8759 = vpop.f32.mrb[0].mxu0
        %v8760 = vadd.f32 0.0, %v8759
        %v8761 = vpop.f32.mrb[0].mxu0
        %8762 = vmatprep.mubr.bf16.mxu0 0
        %8763 = vmatmul.mubr.bf16.gmra.mrb[0].mxu0 %v8473
        %v8764 = vpop.f32.mrb[0].mxu0
        %v8765 = vadd.f32 0.0, %v8764
        %v8766 = vpop.f32.mrb[0].mxu0
        %v8767 = vpop.f32.mrb[0].mxu0
        %v8768 = vadd.f32 0.0, %v8767
        %v8769 = vpop.f32.mrb[0].mxu0
        %8770 = vmatprep.mubr.bf16.mxu0 0
        %8771 = vmatmul.mubr.bf16.gmra.mrb[0].mxu0 %v8481
        %v8772 = vpop.f32.mrb[0].mxu0
        %v8773 = vadd.f32 0.0, %v8772
        %v8774 = vpop.f32.mrb[0].mxu0
        %v8775 = vpop.f32.mrb[0].mxu0
        %v8776 = vadd.f32 0.0, %v8775
        %v8777 = vpop.f32.mrb[0].mxu0
        %8778 = vmatprep.mubr.bf16.mxu0 0
        %8779 = vmatmul.mubr.bf16.gmra.mrb[0].mxu0 %v8489
        %v8780 = vpop.f32.mrb[0].mxu0
        %v8781 = vadd.f32 0.0, %v8780
        %v8782 = vpop.f32.mrb[0].mxu0
        %v8783 = vpop.f32.mrb[0].mxu0
        %v8784 = vadd.f32 0.0, %v8783
        %v8785 = vpop.f32.mrb[0].mxu0
        %8786 = vmatprep.mubr.bf16.mxu0 0
        %8787 = vmatmul.mubr.bf16.gmra.mrb[0].mxu0 %v8497
        %v8788 = vpop.f32.mrb[0].mxu0
        %v8789 = vadd.f32 0.0, %v8788
        %v8790 = vpop.f32.mrb[0].mxu0
        %v8791 = vpop.f32.mrb[0].mxu0
        %v8792 = vadd.f32 0.0, %v8791
        %v8793 = vpop.f32.mrb[0].mxu0
        %8794 = vmatprep.mubr.bf16.mxu0 0
        %8795 = vmatmul.mubr.bf16.gmra.mrb[0].mxu0 %v8505
        %v8796 = vpop.f32.mrb[0].mxu0
        %v8797 = vadd.f32 0.0, %v8796
        %v8798 = vpop.f32.mrb[0].mxu0
        %v8799 = vpop.f32.mrb[0].mxu0
        %v8800 = vadd.f32 0.0, %v8799
        %v8801 = vpop.f32.mrb[0].mxu0
        %8802 = vmatprep.mubr.bf16.mxu0 0
        %8803 = vmatmul.mubr.bf16.gmra.mrb[0].mxu0 %v8513
        %v8804 = vpop.f32.mrb[0].mxu0
        %v8805 = vadd.f32 0.0, %v8804
        %v8806 = vpop.f32.mrb[0].mxu0
        %v8807 = vpop.f32.mrb[0].mxu0
        %v8808 = vadd.f32 0.0, %v8807
        %v8809 = vpop.f32.mrb[0].mxu0
        %8810 = vmatprep.mubr.bf16.mxu0 0
        %8811 = vmatmul.mubr.bf16.gmra.mrb[0].mxu0 %v8521
        %v8812 = vpop.f32.mrb[0].mxu0
        %v8813 = vadd.f32 0.0, %v8812
        %v8814 = vpop.f32.mrb[0].mxu0
        %v8815 = vpop.f32.mrb[0].mxu0
        %v8816 = vadd.f32 0.0, %v8815
        %v8817 = vpop.f32.mrb[0].mxu0
        %8818 = vmatprep.mubr.bf16.mxu0 0
        %8819 = vmatmul.mubr.bf16.gmra.mrb[0].mxu0 %v8529
        %v8820 = vpop.f32.mrb[0].mxu0
        %v8821 = vadd.f32 0.0, %v8820
        %v8822 = vpop.f32.mrb[0].mxu0
        %v8823 = vpop.f32.mrb[0].mxu0
        %v8824 = vadd.f32 0.0, %v8823
        %v8825 = vpop.f32.mrb[0].mxu0
        %8826 = vmatprep.mubr.bf16.mxu0 0
        %8827 = vmatmul.mubr.bf16.gmra.mrb[0].mxu0 %v8537
        %v8828 = vpop.f32.mrb[0].mxu0
        %v8829 = vadd.f32 0.0, %v8828
        %v8830 = vpop.f32.mrb[0].mxu0
        %v8831 = vpop.f32.mrb[0].mxu0
        %v8832 = vadd.f32 0.0, %v8831
        %v8833 = vpop.f32.mrb[0].mxu0
        %8834 = vmatprep.mubr.bf16.mxu0 0
        %8835 = vmatmul.mubr.bf16.gmra.mrb[0].mxu0 %v8545
        %v8836 = vpop.f32.mrb[0].mxu0
        %v8837 = vadd.f32 0.0, %v8836
        %v8838 = vpop.f32.mrb[0].mxu0
        %v8839 = vpop.f32.mrb[0].mxu0
        %v8840 = vadd.f32 0.0, %v8839
        %v8841 = vpop.f32.mrb[0].mxu0
        %8842 = vmatprep.mubr.bf16.mxu0 0
        %8843 = vmatmul.mubr.bf16.gmra.mrb[0].mxu0 %v8553
        %v8844 = vpop.f32.mrb[0].mxu0
        %v8845 = vadd.f32 0.0, %v8844
        %v8846 = vpop.f32.mrb[0].mxu0
        %v8847 = vpop.f32.mrb[0].mxu0
        %v8848 = vadd.f32 0.0, %v8847
        %v8849 = vpop.f32.mrb[0].mxu0
        %8850 = vmatprep.mubr.bf16.mxu0 0
        %8851 = vmatmul.mubr.bf16.gmra.mrb[0].mxu0 %v8561
        %v8852 = vpop.f32.mrb[0].mxu0
        %v8853 = vadd.f32 0.0, %v8852
        %v8854 = vpop.f32.mrb[0].mxu0
        %v8855 = vpop.f32.mrb[0].mxu0
        %v8856 = vadd.f32 0.0, %v8855
        %v8857 = vpop.f32.mrb[0].mxu0
        %8858 = vmatprep.mubr.bf16.mxu0 0
        %8859 = vmatmul.mubr.bf16.gmra.mrb[0].mxu0 %v8569
        %v8860 = vpop.f32.mrb[0].mxu0
        %v8861 = vadd.f32 0.0, %v8860
        %v8862 = vpop.f32.mrb[0].mxu0
        %v8863 = vpop.f32.mrb[0].mxu0
        %v8864 = vadd.f32 0.0, %v8863
        %v8865 = vpop.f32.mrb[0].mxu0
        %8866 = vmatprep.mubr.bf16.mxu0 0
        %8867 = vmatmul.mubr.bf16.gmra.mrb[0].mxu0 %v8577
        %v8868 = vpop.f32.mrb[0].mxu0
        %v8869 = vadd.f32 0.0, %v8868
        %v8870 = vpop.f32.mrb[0].mxu0
        %v8871 = vpop.f32.mrb[0].mxu0
        %v8872 = vadd.f32 0.0, %v8871
        %v8873 = vpop.f32.mrb[0].mxu0
        %8874 = vmatprep.mubr.bf16.mxu0 0
        %8875 = vmatmul.mubr.bf16.gmra.mrb[0].mxu0 %v8585
        %v8876 = vpop.f32.mrb[0].mxu0
        %v8877 = vadd.f32 0.0, %v8876
        %v8878 = vpop.f32.mrb[0].mxu0
        %v8879 = vpop.f32.mrb[0].mxu0
        %v8880 = vadd.f32 0.0, %v8879
        %v8881 = vpop.f32.mrb[0].mxu0
        %8882 = vmatprep.mubr.bf16.mxu0 0
        %8883 = vmatmul.mubr.bf16.gmra.mrb[0].mxu0 %v8593
        %v8884 = vpop.f32.mrb[0].mxu0
        %v8885 = vadd.f32 0.0, %v8884
        %v8886 = vpop.f32.mrb[0].mxu0
        %v8887 = vpop.f32.mrb[0].mxu0
        %v8888 = vadd.f32 0.0, %v8887
        %v8889 = vpop.f32.mrb[0].mxu0
        %8890 = vmatprep.mubr.bf16.mxu0 0
        %8891 = vmatmul.mubr.bf16.gmra.mrb[0].mxu0 %v8601
        %v8892 = vpop.f32.mrb[0].mxu0
        %v8893 = vadd.f32 0.0, %v8892
        %v8894 = vpop.f32.mrb[0].mxu0
        %v8895 = vpop.f32.mrb[0].mxu0
        %v8896 = vadd.f32 0.0, %v8895
        %v8897 = vpop.f32.mrb[0].mxu0
        %8898 = vmatprep.mubr.bf16.mxu0 0
        %8899 = vmatmul.mubr.bf16.gmra.mrb[0].mxu0 %v8609
        %v8900 = vpop.f32.mrb[0].mxu0
        %v8901 = vadd.f32 0.0, %v8900
        %v8902 = vpop.f32.mrb[0].mxu0
        %v8903 = vpop.f32.mrb[0].mxu0
        %v8904 = vadd.f32 0.0, %v8903
        %v8905 = vpop.f32.mrb[0].mxu0
        %8906 = vmatprep.mubr.bf16.mxu0 0
        %8907 = vmatmul.mubr.bf16.gmra.mrb[0].mxu0 %v8617
        %v8908 = vpop.f32.mrb[0].mxu0
        %v8909 = vadd.f32 0.0, %v8908
        %v8910 = vpop.f32.mrb[0].mxu0
        %v8911 = vpop.f32.mrb[0].mxu0
        %v8912 = vadd.f32 0.0, %v8911
        %v8913 = vpop.f32.mrb[0].mxu0
        %8914 = vmatprep.mubr.bf16.mxu0 0
        %8915 = vmatmul.mubr.bf16.gmra.mrb[0].mxu0 %v8625
        %v8916 = vpop.f32.mrb[0].mxu0
        %v8917 = vadd.f32 0.0, %v8916
        %v8918 = vpop.f32.mrb[0].mxu0
        %v8919 = vpop.f32.mrb[0].mxu0
        %v8920 = vadd.f32 0.0, %v8919
        %v8921 = vpop.f32.mrb[0].mxu0
        %8922 = vdwg.mxu0
        %v8923 = vadd.f32 %v8340, %v8733
        %v8924 = vadd.f32 %v8341, %v8736
        %v8925 = vadd.f32 %v8342, %v8741
        %v8926 = vadd.f32 %v8343, %v8744
        %v8927 = vadd.f32 %v8344, %v8749
        %v8928 = vadd.f32 %v8345, %v8752
        %v8929 = vadd.f32 %v8346, %v8757
        %v8930 = vadd.f32 %v8347, %v8760
        %v8931 = vadd.f32 %v8348, %v8765
        %v8932 = vadd.f32 %v8349, %v8768
        %v8933 = vadd.f32 %v8350, %v8773
        %v8934 = vadd.f32 %v8351, %v8776
        %v8935 = vadd.f32 %v8352, %v8781
        %v8936 = vadd.f32 %v8353, %v8784
        %v8937 = vadd.f32 %v8354, %v8789
        %v8938 = vadd.f32 %v8355, %v8792
        %v8939 = vadd.f32 %v8356, %v8797
        %v8940 = vadd.f32 %v8357, %v8800
        %v8941 = vadd.f32 %v8358, %v8805
        %v8942 = vadd.f32 %v8359, %v8808
        %v8943 = vadd.f32 %v8360, %v8813
        %v8944 = vadd.f32 %v8361, %v8816
        %v8945 = vadd.f32 %v8362, %v8821
        %v8946 = vadd.f32 %v8363, %v8824
        %v8947 = vadd.f32 %v8364, %v8829
        %v8948 = vadd.f32 %v8365, %v8832
        %v8949 = vadd.f32 %v8366, %v8837
        %v8950 = vadd.f32 %v8367, %v8840
        %v8951 = vadd.f32 %v8368, %v8845
        %v8952 = vadd.f32 %v8369, %v8848
        %v8953 = vadd.f32 %v8370, %v8853
        %v8954 = vadd.f32 %v8371, %v8856
        %v8955 = vadd.f32 %v8372, %v8861
        %v8956 = vadd.f32 %v8373, %v8864
        %v8957 = vadd.f32 %v8374, %v8869
        %v8958 = vadd.f32 %v8375, %v8872
        %v8959 = vadd.f32 %v8376, %v8877
        %v8960 = vadd.f32 %v8377, %v8880
        %v8961 = vadd.f32 %v8378, %v8885
        %v8962 = vadd.f32 %v8379, %v8888
        %v8963 = vadd.f32 %v8380, %v8893
        %v8964 = vadd.f32 %v8381, %v8896
        %v8965 = vadd.f32 %v8382, %v8901
        %v8966 = vadd.f32 %v8383, %v8904
        %v8967 = vadd.f32 %v8384, %v8909
        %v8968 = vadd.f32 %v8385, %v8912
        %v8969 = vadd.f32 %v8386, %v8917
        %v8970 = vadd.f32 %v8387, %v8920
        %v8971 = vld [vmem:[#allocation2 + $0x20] sm:$0xf8]
        %v8972 = vld [vmem:[#allocation2 + $0x28] sm:$0xff]
        %v8973 = vld [vmem:[#allocation2 + $0x30] sm:$0xff]
        %v8974 = vld [vmem:[#allocation2 + $0x38] sm:$0xff]
        %v8975 = vld [vmem:[#allocation2 + $0x40] sm:$0xff]
        %v8976 = vld [vmem:[#allocation2 + $0x48] sm:$0xff]
        %v8977 = vld [vmem:[#allocation2 + $0x50] sm:$0xff]
        %v8978 = vld [vmem:[#allocation2 + $0x58] sm:$0xff]
        %v8979 = vld [vmem:[#allocation2 + $0x60] sm:$0xff]
        %v8980 = vld [vmem:[#allocation2 + $0x68] sm:$0xff]
        %v8981 = vld [vmem:[#allocation2 + $0x70] sm:$0xff]
        %v8982 = vld [vmem:[#allocation2 + $0x78] sm:$0xff]
        %v8983 = vld [vmem:[#allocation2 + $0x80] sm:$0xff]
        %v8984 = vld [vmem:[#allocation2 + $0x88] sm:$0xff]
        %v8985 = vld [vmem:[#allocation2 + $0x90] sm:$0xff]
        %v8986 = vld [vmem:[#allocation2 + $0x98] sm:$0xff]
        %v8987 = vld [vmem:[#allocation2 + $0xa0] sm:$0xff]
        %v8988 = vld [vmem:[#allocation2 + $0xa8] sm:$0xff]
        %v8989 = vld [vmem:[#allocation2 + $0xb0] sm:$0xff]
        %v8990 = vld [vmem:[#allocation2 + $0xb8] sm:$0xff]
        %v8991 = vld [vmem:[#allocation2 + $0xc0] sm:$0xff]
        %v8992 = vld [vmem:[#allocation2 + $0xc8] sm:$0xff]
        %v8993 = vld [vmem:[#allocation2 + $0xd0] sm:$0xff]
        %v8994 = vld [vmem:[#allocation2 + $0xd8] sm:$0xff]
        %v8995 = vld [vmem:[#allocation2 + $0xe0] sm:$0xf]
        %s8996 = scalar_lea.vmem [#allocation8], 384
        %v8997 = vld [vmem:[%s8996] sm:$0xf]
        %v8998 = vld [vmem:[%s8996 + $0x4] sm:$0xf]
        %v8999 = vld [vmem:[%s8996 + $0x8] sm:$0xf]
        %v9000 = vld [vmem:[%s8996 + $0xc] sm:$0xf]
        %v9001 = vld [vmem:[%s8996 + $0x10] sm:$0xf]
        %v9002 = vld [vmem:[%s8996 + $0x14] sm:$0xf]
        %v9003 = vld [vmem:[%s8996 + $0x18] sm:$0xf]
        %v9004 = vld [vmem:[%s8996 + $0x1c] sm:$0xf]
        %v9005 = vld [vmem:[%s8996 + $0x20] sm:$0xf]
        %v9006 = vld [vmem:[%s8996 + $0x24] sm:$0xf]
        %v9007 = vld [vmem:[%s8996 + $0x28] sm:$0xf]
        %v9008 = vld [vmem:[%s8996 + $0x2c] sm:$0xf]
        %v9009 = vld [vmem:[%s8996 + $0x30] sm:$0xf]
        %v9010 = vld [vmem:[%s8996 + $0x34] sm:$0xf]
        %v9011 = vld [vmem:[%s8996 + $0x38] sm:$0xf]
        %v9012 = vld [vmem:[%s8996 + $0x3c] sm:$0xf]
        %v9014 = vshrl.u32 %v8971, 16
        %v9016 = vrot.slane %v9014, 3
        %v9017 = vshll.u32 %v8971, 16
        %v9019 = vrot.slane %v9017, 4
        %v9020 = vor.u32 %v9016, %v9019
        %v9022 = vshrl.u32 %v8972, 16
        %v9024 = vrot.slane %v9022, 3
        %v9025 = vshll.u32 %v8972, 16
        %v9027 = vrot.slane %v9025, 4
        %v9028 = vor.u32 %v9024, %v9027
        %v9029 = vsel %vm773, %v9020, %v9028
        %v9031 = vshrl.u32 %v8973, 16
        %v9033 = vrot.slane %v9031, 3
        %v9034 = vshll.u32 %v8973, 16
        %v9036 = vrot.slane %v9034, 4
        %v9037 = vor.u32 %v9033, %v9036
        %v9038 = vsel %vm773, %v9028, %v9037
        %v9040 = vshrl.u32 %v8974, 16
        %v9042 = vrot.slane %v9040, 3
        %v9043 = vshll.u32 %v8974, 16
        %v9045 = vrot.slane %v9043, 4
        %v9046 = vor.u32 %v9042, %v9045
        %v9047 = vsel %vm773, %v9037, %v9046
        %v9049 = vshrl.u32 %v8975, 16
        %v9051 = vrot.slane %v9049, 3
        %v9052 = vshll.u32 %v8975, 16
        %v9054 = vrot.slane %v9052, 4
        %v9055 = vor.u32 %v9051, %v9054
        %v9056 = vsel %vm773, %v9046, %v9055
        %v9058 = vshrl.u32 %v8976, 16
        %v9060 = vrot.slane %v9058, 3
        %v9061 = vshll.u32 %v8976, 16
        %v9063 = vrot.slane %v9061, 4
        %v9064 = vor.u32 %v9060, %v9063
        %v9065 = vsel %vm773, %v9055, %v9064
        %v9067 = vshrl.u32 %v8977, 16
        %v9069 = vrot.slane %v9067, 3
        %v9070 = vshll.u32 %v8977, 16
        %v9072 = vrot.slane %v9070, 4
        %v9073 = vor.u32 %v9069, %v9072
        %v9074 = vsel %vm773, %v9064, %v9073
        %v9076 = vshrl.u32 %v8978, 16
        %v9078 = vrot.slane %v9076, 3
        %v9079 = vshll.u32 %v8978, 16
        %v9081 = vrot.slane %v9079, 4
        %v9082 = vor.u32 %v9078, %v9081
        %v9083 = vsel %vm773, %v9073, %v9082
        %v9085 = vshrl.u32 %v8979, 16
        %v9087 = vrot.slane %v9085, 3
        %v9088 = vshll.u32 %v8979, 16
        %v9090 = vrot.slane %v9088, 4
        %v9091 = vor.u32 %v9087, %v9090
        %v9092 = vsel %vm773, %v9082, %v9091
        %v9094 = vshrl.u32 %v8980, 16
        %v9096 = vrot.slane %v9094, 3
        %v9097 = vshll.u32 %v8980, 16
        %v9099 = vrot.slane %v9097, 4
        %v9100 = vor.u32 %v9096, %v9099
        %v9101 = vsel %vm773, %v9091, %v9100
        %v9103 = vshrl.u32 %v8981, 16
        %v9105 = vrot.slane %v9103, 3
        %v9106 = vshll.u32 %v8981, 16
        %v9108 = vrot.slane %v9106, 4
        %v9109 = vor.u32 %v9105, %v9108
        %v9110 = vsel %vm773, %v9100, %v9109
        %v9112 = vshrl.u32 %v8982, 16
        %v9114 = vrot.slane %v9112, 3
        %v9115 = vshll.u32 %v8982, 16
        %v9117 = vrot.slane %v9115, 4
        %v9118 = vor.u32 %v9114, %v9117
        %v9119 = vsel %vm773, %v9109, %v9118
        %v9121 = vshrl.u32 %v8983, 16
        %v9123 = vrot.slane %v9121, 3
        %v9124 = vshll.u32 %v8983, 16
        %v9126 = vrot.slane %v9124, 4
        %v9127 = vor.u32 %v9123, %v9126
        %v9128 = vsel %vm773, %v9118, %v9127
        %v9130 = vshrl.u32 %v8984, 16
        %v9132 = vrot.slane %v9130, 3
        %v9133 = vshll.u32 %v8984, 16
        %v9135 = vrot.slane %v9133, 4
        %v9136 = vor.u32 %v9132, %v9135
        %v9137 = vsel %vm773, %v9127, %v9136
        %v9139 = vshrl.u32 %v8985, 16
        %v9141 = vrot.slane %v9139, 3
        %v9142 = vshll.u32 %v8985, 16
        %v9144 = vrot.slane %v9142, 4
        %v9145 = vor.u32 %v9141, %v9144
        %v9146 = vsel %vm773, %v9136, %v9145
        %v9148 = vshrl.u32 %v8986, 16
        %v9150 = vrot.slane %v9148, 3
        %v9151 = vshll.u32 %v8986, 16
        %v9153 = vrot.slane %v9151, 4
        %v9154 = vor.u32 %v9150, %v9153
        %v9155 = vsel %vm773, %v9145, %v9154
        %v9157 = vshrl.u32 %v8987, 16
        %v9159 = vrot.slane %v9157, 3
        %v9160 = vshll.u32 %v8987, 16
        %v9162 = vrot.slane %v9160, 4
        %v9163 = vor.u32 %v9159, %v9162
        %v9164 = vsel %vm773, %v9154, %v9163
        %v9166 = vshrl.u32 %v8988, 16
        %v9168 = vrot.slane %v9166, 3
        %v9169 = vshll.u32 %v8988, 16
        %v9171 = vrot.slane %v9169, 4
        %v9172 = vor.u32 %v9168, %v9171
        %v9173 = vsel %vm773, %v9163, %v9172
        %v9175 = vshrl.u32 %v8989, 16
        %v9177 = vrot.slane %v9175, 3
        %v9178 = vshll.u32 %v8989, 16
        %v9180 = vrot.slane %v9178, 4
        %v9181 = vor.u32 %v9177, %v9180
        %v9182 = vsel %vm773, %v9172, %v9181
        %v9184 = vshrl.u32 %v8990, 16
        %v9186 = vrot.slane %v9184, 3
        %v9187 = vshll.u32 %v8990, 16
        %v9189 = vrot.slane %v9187, 4
        %v9190 = vor.u32 %v9186, %v9189
        %v9191 = vsel %vm773, %v9181, %v9190
        %v9193 = vshrl.u32 %v8991, 16
        %v9195 = vrot.slane %v9193, 3
        %v9196 = vshll.u32 %v8991, 16
        %v9198 = vrot.slane %v9196, 4
        %v9199 = vor.u32 %v9195, %v9198
        %v9200 = vsel %vm773, %v9190, %v9199
        %v9202 = vshrl.u32 %v8992, 16
        %v9204 = vrot.slane %v9202, 3
        %v9205 = vshll.u32 %v8992, 16
        %v9207 = vrot.slane %v9205, 4
        %v9208 = vor.u32 %v9204, %v9207
        %v9209 = vsel %vm773, %v9199, %v9208
        %v9211 = vshrl.u32 %v8993, 16
        %v9213 = vrot.slane %v9211, 3
        %v9214 = vshll.u32 %v8993, 16
        %v9216 = vrot.slane %v9214, 4
        %v9217 = vor.u32 %v9213, %v9216
        %v9218 = vsel %vm773, %v9208, %v9217
        %v9220 = vshrl.u32 %v8994, 16
        %v9222 = vrot.slane %v9220, 3
        %v9223 = vshll.u32 %v8994, 16
        %v9225 = vrot.slane %v9223, 4
        %v9226 = vor.u32 %v9222, %v9225
        %v9227 = vsel %vm773, %v9217, %v9226
        %v9229 = vshrl.u32 %v8995, 16
        %v9231 = vrot.slane %v9229, 3
        %v9232 = vshll.u32 %v8995, 16
        %v9234 = vrot.slane %v9232, 4
        %v9235 = vor.u32 %v9231, %v9234
        %v9236 = vsel %vm773, %v9226, %v9235
        %v9277 = vunpack.c.l.b16 %v8997
        %v9278 = vunpack.c.l.b16 %v8998
        %v9279 = vunpack.c.l.b16 %v8999
        %v9280 = vunpack.c.l.b16 %v9000
        %v9281 = vunpack.c.l.b16 %v9001
        %v9282 = vunpack.c.l.b16 %v9002
        %v9283 = vunpack.c.l.b16 %v9003
        %v9284 = vunpack.c.l.b16 %v9004
        %v9285 = vunpack.c.l.b16 %v9005
        %v9286 = vunpack.c.l.b16 %v9006
        %v9287 = vunpack.c.l.b16 %v9007
        %v9288 = vunpack.c.l.b16 %v9008
        %v9289 = vunpack.c.l.b16 %v9009
        %v9290 = vunpack.c.l.b16 %v9010
        %v9291 = vunpack.c.l.b16 %v9011
        %v9292 = vunpack.c.l.b16 %v9012
        %v9293 = vpack.c.b16 %v9278, %v9277
        %v9294 = vpack.c.b16 %v9280, %v9279
        %v9295 = vpack.c.b16 %v9282, %v9281
        %v9296 = vpack.c.b16 %v9284, %v9283
        %v9297 = vpack.c.b16 %v9286, %v9285
        %v9298 = vpack.c.b16 %v9288, %v9287
        %v9299 = vpack.c.b16 %v9290, %v9289
        %v9300 = vpack.c.b16 %v9292, %v9291
        %9309 = vmatprep.subr.bf16.mxu0 0
        %9310 = vmatpush1.bf16.msra.mxu0 %v9293
        %9311 = vmatprep.subr.bf16.mxu0 0
        %9312 = vmatpush1.bf16.msra.mxu0 %v9294
        %9313 = vmatprep.subr.bf16.mxu0 0
        %9314 = vmatpush1.bf16.msra.mxu0 %v9295
        %9315 = vmatprep.subr.bf16.mxu0 0
        %9316 = vmatpush1.bf16.msra.mxu0 %v9296
        %9317 = vmatprep.subr.bf16.mxu0 0
        %9318 = vmatpush1.bf16.msra.mxu0 %v9297
        %9319 = vmatprep.subr.bf16.mxu0 0
        %9320 = vmatpush1.bf16.msra.mxu0 %v9298
        %9321 = vmatprep.subr.bf16.mxu0 0
        %9322 = vmatpush1.bf16.msra.mxu0 %v9299
        %9323 = vmatprep.subr.bf16.mxu0 0
        %9324 = vmatpush1.bf16.msra.mxu0 %v9300
        %9325 = vmatprep.subr.bf16.mxu0 0
        %9326 = vmatpush1.bf16.msra.mxu0 0
        %9327 = vmatprep.subr.bf16.mxu0 0
        %9328 = vmatpush1.bf16.msra.mxu0 0
        %9329 = vmatprep.subr.bf16.mxu0 0
        %9330 = vmatpush1.bf16.msra.mxu0 0
        %9331 = vmatprep.subr.bf16.mxu0 0
        %9332 = vmatpush1.bf16.msra.mxu0 0
        %9333 = vmatprep.subr.bf16.mxu0 0
        %9334 = vmatpush1.bf16.msra.mxu0 0
        %9335 = vmatprep.subr.bf16.mxu0 0
        %9336 = vmatpush1.bf16.msra.mxu0 0
        %9337 = vmatprep.subr.bf16.mxu0 0
        %9338 = vmatpush1.bf16.msra.mxu0 0
        %9339 = vmatprep.subr.bf16.mxu0 0
        %9340 = vmatpush1.bf16.msra.mxu0 0
        %9341 = vmatprep.mubr.bf16.mxu0 0
        %9342 = vmatmul.mubr.bf16.gmra.mrb[0].mxu0 %v9029
        %v9343 = vpop.f32.mrb[0].mxu0
        %v9344 = vadd.f32 0.0, %v9343
        %v9345 = vpop.f32.mrb[0].mxu0
        %v9346 = vpop.f32.mrb[0].mxu0
        %v9347 = vadd.f32 0.0, %v9346
        %v9348 = vpop.f32.mrb[0].mxu0
        %9349 = vmatprep.mubr.bf16.mxu0 0
        %9350 = vmatmul.mubr.bf16.gmra.mrb[0].mxu0 %v9038
        %v9351 = vpop.f32.mrb[0].mxu0
        %v9352 = vadd.f32 0.0, %v9351
        %v9353 = vpop.f32.mrb[0].mxu0
        %v9354 = vpop.f32.mrb[0].mxu0
        %v9355 = vadd.f32 0.0, %v9354
        %v9356 = vpop.f32.mrb[0].mxu0
        %9357 = vmatprep.mubr.bf16.mxu0 0
        %9358 = vmatmul.mubr.bf16.gmra.mrb[0].mxu0 %v9047
        %v9359 = vpop.f32.mrb[0].mxu0
        %v9360 = vadd.f32 0.0, %v9359
        %v9361 = vpop.f32.mrb[0].mxu0
        %v9362 = vpop.f32.mrb[0].mxu0
        %v9363 = vadd.f32 0.0, %v9362
        %v9364 = vpop.f32.mrb[0].mxu0
        %9365 = vmatprep.mubr.bf16.mxu0 0
        %9366 = vmatmul.mubr.bf16.gmra.mrb[0].mxu0 %v9056
        %v9367 = vpop.f32.mrb[0].mxu0
        %v9368 = vadd.f32 0.0, %v9367
        %v9369 = vpop.f32.mrb[0].mxu0
        %v9370 = vpop.f32.mrb[0].mxu0
        %v9371 = vadd.f32 0.0, %v9370
        %v9372 = vpop.f32.mrb[0].mxu0
        %9373 = vmatprep.mubr.bf16.mxu0 0
        %9374 = vmatmul.mubr.bf16.gmra.mrb[0].mxu0 %v9065
        %v9375 = vpop.f32.mrb[0].mxu0
        %v9376 = vadd.f32 0.0, %v9375
        %v9377 = vpop.f32.mrb[0].mxu0
        %v9378 = vpop.f32.mrb[0].mxu0
        %v9379 = vadd.f32 0.0, %v9378
        %v9380 = vpop.f32.mrb[0].mxu0
        %9381 = vmatprep.mubr.bf16.mxu0 0
        %9382 = vmatmul.mubr.bf16.gmra.mrb[0].mxu0 %v9074
        %v9383 = vpop.f32.mrb[0].mxu0
        %v9384 = vadd.f32 0.0, %v9383
        %v9385 = vpop.f32.mrb[0].mxu0
        %v9386 = vpop.f32.mrb[0].mxu0
        %v9387 = vadd.f32 0.0, %v9386
        %v9388 = vpop.f32.mrb[0].mxu0
        %9389 = vmatprep.mubr.bf16.mxu0 0
        %9390 = vmatmul.mubr.bf16.gmra.mrb[0].mxu0 %v9083
        %v9391 = vpop.f32.mrb[0].mxu0
        %v9392 = vadd.f32 0.0, %v9391
        %v9393 = vpop.f32.mrb[0].mxu0
        %v9394 = vpop.f32.mrb[0].mxu0
        %v9395 = vadd.f32 0.0, %v9394
        %v9396 = vpop.f32.mrb[0].mxu0
        %9397 = vmatprep.mubr.bf16.mxu0 0
        %9398 = vmatmul.mubr.bf16.gmra.mrb[0].mxu0 %v9092
        %v9399 = vpop.f32.mrb[0].mxu0
        %v9400 = vadd.f32 0.0, %v9399
        %v9401 = vpop.f32.mrb[0].mxu0
        %v9402 = vpop.f32.mrb[0].mxu0
        %v9403 = vadd.f32 0.0, %v9402
        %v9404 = vpop.f32.mrb[0].mxu0
        %9405 = vmatprep.mubr.bf16.mxu0 0
        %9406 = vmatmul.mubr.bf16.gmra.mrb[0].mxu0 %v9101
        %v9407 = vpop.f32.mrb[0].mxu0
        %v9408 = vadd.f32 0.0, %v9407
        %v9409 = vpop.f32.mrb[0].mxu0
        %v9410 = vpop.f32.mrb[0].mxu0
        %v9411 = vadd.f32 0.0, %v9410
        %v9412 = vpop.f32.mrb[0].mxu0
        %9413 = vmatprep.mubr.bf16.mxu0 0
        %9414 = vmatmul.mubr.bf16.gmra.mrb[0].mxu0 %v9110
        %v9415 = vpop.f32.mrb[0].mxu0
        %v9416 = vadd.f32 0.0, %v9415
        %v9417 = vpop.f32.mrb[0].mxu0
        %v9418 = vpop.f32.mrb[0].mxu0
        %v9419 = vadd.f32 0.0, %v9418
        %v9420 = vpop.f32.mrb[0].mxu0
        %9421 = vmatprep.mubr.bf16.mxu0 0
        %9422 = vmatmul.mubr.bf16.gmra.mrb[0].mxu0 %v9119
        %v9423 = vpop.f32.mrb[0].mxu0
        %v9424 = vadd.f32 0.0, %v9423
        %v9425 = vpop.f32.mrb[0].mxu0
        %v9426 = vpop.f32.mrb[0].mxu0
        %v9427 = vadd.f32 0.0, %v9426
        %v9428 = vpop.f32.mrb[0].mxu0
        %9429 = vmatprep.mubr.bf16.mxu0 0
        %9430 = vmatmul.mubr.bf16.gmra.mrb[0].mxu0 %v9128
        %v9431 = vpop.f32.mrb[0].mxu0
        %v9432 = vadd.f32 0.0, %v9431
        %v9433 = vpop.f32.mrb[0].mxu0
        %v9434 = vpop.f32.mrb[0].mxu0
        %v9435 = vadd.f32 0.0, %v9434
        %v9436 = vpop.f32.mrb[0].mxu0
        %9437 = vmatprep.mubr.bf16.mxu0 0
        %9438 = vmatmul.mubr.bf16.gmra.mrb[0].mxu0 %v9137
        %v9439 = vpop.f32.mrb[0].mxu0
        %v9440 = vadd.f32 0.0, %v9439
        %v9441 = vpop.f32.mrb[0].mxu0
        %v9442 = vpop.f32.mrb[0].mxu0
        %v9443 = vadd.f32 0.0, %v9442
        %v9444 = vpop.f32.mrb[0].mxu0
        %9445 = vmatprep.mubr.bf16.mxu0 0
        %9446 = vmatmul.mubr.bf16.gmra.mrb[0].mxu0 %v9146
        %v9447 = vpop.f32.mrb[0].mxu0
        %v9448 = vadd.f32 0.0, %v9447
        %v9449 = vpop.f32.mrb[0].mxu0
        %v9450 = vpop.f32.mrb[0].mxu0
        %v9451 = vadd.f32 0.0, %v9450
        %v9452 = vpop.f32.mrb[0].mxu0
        %9453 = vmatprep.mubr.bf16.mxu0 0
        %9454 = vmatmul.mubr.bf16.gmra.mrb[0].mxu0 %v9155
        %v9455 = vpop.f32.mrb[0].mxu0
        %v9456 = vadd.f32 0.0, %v9455
        %v9457 = vpop.f32.mrb[0].mxu0
        %v9458 = vpop.f32.mrb[0].mxu0
        %v9459 = vadd.f32 0.0, %v9458
        %v9460 = vpop.f32.mrb[0].mxu0
        %9461 = vmatprep.mubr.bf16.mxu0 0
        %9462 = vmatmul.mubr.bf16.gmra.mrb[0].mxu0 %v9164
        %v9463 = vpop.f32.mrb[0].mxu0
        %v9464 = vadd.f32 0.0, %v9463
        %v9465 = vpop.f32.mrb[0].mxu0
        %v9466 = vpop.f32.mrb[0].mxu0
        %v9467 = vadd.f32 0.0, %v9466
        %v9468 = vpop.f32.mrb[0].mxu0
        %9469 = vmatprep.mubr.bf16.mxu0 0
        %9470 = vmatmul.mubr.bf16.gmra.mrb[0].mxu0 %v9173
        %v9471 = vpop.f32.mrb[0].mxu0
        %v9472 = vadd.f32 0.0, %v9471
        %v9473 = vpop.f32.mrb[0].mxu0
        %v9474 = vpop.f32.mrb[0].mxu0
        %v9475 = vadd.f32 0.0, %v9474
        %v9476 = vpop.f32.mrb[0].mxu0
        %9477 = vmatprep.mubr.bf16.mxu0 0
        %9478 = vmatmul.mubr.bf16.gmra.mrb[0].mxu0 %v9182
        %v9479 = vpop.f32.mrb[0].mxu0
        %v9480 = vadd.f32 0.0, %v9479
        %v9481 = vpop.f32.mrb[0].mxu0
        %v9482 = vpop.f32.mrb[0].mxu0
        %v9483 = vadd.f32 0.0, %v9482
        %v9484 = vpop.f32.mrb[0].mxu0
        %9485 = vmatprep.mubr.bf16.mxu0 0
        %9486 = vmatmul.mubr.bf16.gmra.mrb[0].mxu0 %v9191
        %v9487 = vpop.f32.mrb[0].mxu0
        %v9488 = vadd.f32 0.0, %v9487
        %v9489 = vpop.f32.mrb[0].mxu0
        %v9490 = vpop.f32.mrb[0].mxu0
        %v9491 = vadd.f32 0.0, %v9490
        %v9492 = vpop.f32.mrb[0].mxu0
        %9493 = vmatprep.mubr.bf16.mxu0 0
        %9494 = vmatmul.mubr.bf16.gmra.mrb[0].mxu0 %v9200
        %v9495 = vpop.f32.mrb[0].mxu0
        %v9496 = vadd.f32 0.0, %v9495
        %v9497 = vpop.f32.mrb[0].mxu0
        %v9498 = vpop.f32.mrb[0].mxu0
        %v9499 = vadd.f32 0.0, %v9498
        %v9500 = vpop.f32.mrb[0].mxu0
        %9501 = vmatprep.mubr.bf16.mxu0 0
        %9502 = vmatmul.mubr.bf16.gmra.mrb[0].mxu0 %v9209
        %v9503 = vpop.f32.mrb[0].mxu0
        %v9504 = vadd.f32 0.0, %v9503
        %v9505 = vpop.f32.mrb[0].mxu0
        %v9506 = vpop.f32.mrb[0].mxu0
        %v9507 = vadd.f32 0.0, %v9506
        %v9508 = vpop.f32.mrb[0].mxu0
        %9509 = vmatprep.mubr.bf16.mxu0 0
        %9510 = vmatmul.mubr.bf16.gmra.mrb[0].mxu0 %v9218
        %v9511 = vpop.f32.mrb[0].mxu0
        %v9512 = vadd.f32 0.0, %v9511
        %v9513 = vpop.f32.mrb[0].mxu0
        %v9514 = vpop.f32.mrb[0].mxu0
        %v9515 = vadd.f32 0.0, %v9514
        %v9516 = vpop.f32.mrb[0].mxu0
        %9517 = vmatprep.mubr.bf16.mxu0 0
        %9518 = vmatmul.mubr.bf16.gmra.mrb[0].mxu0 %v9227
        %v9519 = vpop.f32.mrb[0].mxu0
        %v9520 = vadd.f32 0.0, %v9519
        %v9521 = vpop.f32.mrb[0].mxu0
        %v9522 = vpop.f32.mrb[0].mxu0
        %v9523 = vadd.f32 0.0, %v9522
        %v9524 = vpop.f32.mrb[0].mxu0
        %9525 = vmatprep.mubr.bf16.mxu0 0
        %9526 = vmatmul.mubr.bf16.gmra.mrb[0].mxu0 %v9236
        %v9527 = vpop.f32.mrb[0].mxu0
        %v9528 = vadd.f32 0.0, %v9527
        %v9529 = vpop.f32.mrb[0].mxu0
        %v9530 = vpop.f32.mrb[0].mxu0
        %v9531 = vadd.f32 0.0, %v9530
        %v9532 = vpop.f32.mrb[0].mxu0
        %9533 = vdwg.mxu0
        %v9534 = vadd.f32 %v8923, %v9344
        %v9535 = vadd.f32 %v8924, %v9347
        %v9536 = vadd.f32 %v8925, %v9352
        %v9537 = vadd.f32 %v8926, %v9355
        %v9538 = vadd.f32 %v8927, %v9360
        %v9539 = vadd.f32 %v8928, %v9363
        %v9540 = vadd.f32 %v8929, %v9368
        %v9541 = vadd.f32 %v8930, %v9371
        %v9542 = vadd.f32 %v8931, %v9376
        %v9543 = vadd.f32 %v8932, %v9379
        %v9544 = vadd.f32 %v8933, %v9384
        %v9545 = vadd.f32 %v8934, %v9387
        %v9546 = vadd.f32 %v8935, %v9392
        %v9547 = vadd.f32 %v8936, %v9395
        %v9548 = vadd.f32 %v8937, %v9400
        %v9549 = vadd.f32 %v8938, %v9403
        %v9550 = vadd.f32 %v8939, %v9408
        %v9551 = vadd.f32 %v8940, %v9411
        %v9552 = vadd.f32 %v8941, %v9416
        %v9553 = vadd.f32 %v8942, %v9419
        %v9554 = vadd.f32 %v8943, %v9424
        %v9555 = vadd.f32 %v8944, %v9427
        %v9556 = vadd.f32 %v8945, %v9432
        %v9557 = vadd.f32 %v8946, %v9435
        %v9558 = vadd.f32 %v8947, %v9440
        %v9559 = vadd.f32 %v8948, %v9443
        %v9560 = vadd.f32 %v8949, %v9448
        %v9561 = vadd.f32 %v8950, %v9451
        %v9562 = vadd.f32 %v8951, %v9456
        %v9563 = vadd.f32 %v8952, %v9459
        %v9564 = vadd.f32 %v8953, %v9464
        %v9565 = vadd.f32 %v8954, %v9467
        %v9566 = vadd.f32 %v8955, %v9472
        %v9567 = vadd.f32 %v8956, %v9475
        %v9568 = vadd.f32 %v8957, %v9480
        %v9569 = vadd.f32 %v8958, %v9483
        %v9570 = vadd.f32 %v8959, %v9488
        %v9571 = vadd.f32 %v8960, %v9491
        %v9572 = vadd.f32 %v8961, %v9496
        %v9573 = vadd.f32 %v8962, %v9499
        %v9574 = vadd.f32 %v8963, %v9504
        %v9575 = vadd.f32 %v8964, %v9507
        %v9576 = vadd.f32 %v8965, %v9512
        %v9577 = vadd.f32 %v8966, %v9515
        %v9578 = vadd.f32 %v8967, %v9520
        %v9579 = vadd.f32 %v8968, %v9523
        %v9580 = vadd.f32 %v8969, %v9528
        %v9581 = vadd.f32 %v8970, %v9531
        %v9582 = vld [vmem:[#allocation2 + $0x20] sm:$0xf0]
        %s9583 = scalar_lea.vmem [#allocation8], 448
        %v9584 = vld [vmem:[%s9583] sm:$0xf]
        %v9585 = vld [vmem:[%s9583 + $0x4] sm:$0xf]
        %v9586 = vld [vmem:[%s9583 + $0x8] sm:$0xf]
        %v9587 = vld [vmem:[%s9583 + $0xc] sm:$0xf]
        %v9588 = vld [vmem:[%s9583 + $0x10] sm:$0xf]
        %v9589 = vld [vmem:[%s9583 + $0x14] sm:$0xf]
        %v9590 = vld [vmem:[%s9583 + $0x18] sm:$0xf]
        %v9591 = vld [vmem:[%s9583 + $0x1c] sm:$0xf]
        %v9592 = vld [vmem:[%s9583 + $0x20] sm:$0xf]
        %v9593 = vld [vmem:[%s9583 + $0x24] sm:$0xf]
        %v9594 = vld [vmem:[%s9583 + $0x28] sm:$0xf]
        %v9595 = vld [vmem:[%s9583 + $0x2c] sm:$0xf]
        %v9596 = vld [vmem:[%s9583 + $0x30] sm:$0xf]
        %v9597 = vld [vmem:[%s9583 + $0x34] sm:$0xf]
        %v9598 = vld [vmem:[%s9583 + $0x38] sm:$0xf]
        %v9599 = vld [vmem:[%s9583 + $0x3c] sm:$0xf]
        %v9625 = vrot.slane %v9582, 4
        %v9626 = vrot.slane %v8972, 4
        %v9627 = vsel %vm6125, %v9625, %v9626
        %v9628 = vrot.slane %v8973, 4
        %v9629 = vsel %vm6125, %v9626, %v9628
        %v9630 = vrot.slane %v8974, 4
        %v9631 = vsel %vm6125, %v9628, %v9630
        %v9632 = vrot.slane %v8975, 4
        %v9633 = vsel %vm6125, %v9630, %v9632
        %v9634 = vrot.slane %v8976, 4
        %v9635 = vsel %vm6125, %v9632, %v9634
        %v9636 = vrot.slane %v8977, 4
        %v9637 = vsel %vm6125, %v9634, %v9636
        %v9638 = vrot.slane %v8978, 4
        %v9639 = vsel %vm6125, %v9636, %v9638
        %v9640 = vrot.slane %v8979, 4
        %v9641 = vsel %vm6125, %v9638, %v9640
        %v9642 = vrot.slane %v8980, 4
        %v9643 = vsel %vm6125, %v9640, %v9642
        %v9644 = vrot.slane %v8981, 4
        %v9645 = vsel %vm6125, %v9642, %v9644
        %v9646 = vrot.slane %v8982, 4
        %v9647 = vsel %vm6125, %v9644, %v9646
        %v9648 = vrot.slane %v8983, 4
        %v9649 = vsel %vm6125, %v9646, %v9648
        %v9650 = vrot.slane %v8984, 4
        %v9651 = vsel %vm6125, %v9648, %v9650
        %v9652 = vrot.slane %v8985, 4
        %v9653 = vsel %vm6125, %v9650, %v9652
        %v9654 = vrot.slane %v8986, 4
        %v9655 = vsel %vm6125, %v9652, %v9654
        %v9656 = vrot.slane %v8987, 4
        %v9657 = vsel %vm6125, %v9654, %v9656
        %v9658 = vrot.slane %v8988, 4
        %v9659 = vsel %vm6125, %v9656, %v9658
        %v9660 = vrot.slane %v8989, 4
        %v9661 = vsel %vm6125, %v9658, %v9660
        %v9662 = vrot.slane %v8990, 4
        %v9663 = vsel %vm6125, %v9660, %v9662
        %v9664 = vrot.slane %v8991, 4
        %v9665 = vsel %vm6125, %v9662, %v9664
        %v9666 = vrot.slane %v8992, 4
        %v9667 = vsel %vm6125, %v9664, %v9666
        %v9668 = vrot.slane %v8993, 4
        %v9669 = vsel %vm6125, %v9666, %v9668
        %v9670 = vrot.slane %v8994, 4
        %v9671 = vsel %vm6125, %v9668, %v9670
        %v9672 = vrot.slane %v8995, 4
        %v9673 = vsel %vm6125, %v9670, %v9672
        %v9714 = vunpack.c.l.b16 %v9584
        %v9715 = vunpack.c.l.b16 %v9585
        %v9716 = vunpack.c.l.b16 %v9586
        %v9717 = vunpack.c.l.b16 %v9587
        %v9718 = vunpack.c.l.b16 %v9588
        %v9719 = vunpack.c.l.b16 %v9589
        %v9720 = vunpack.c.l.b16 %v9590
        %v9721 = vunpack.c.l.b16 %v9591
        %v9722 = vunpack.c.l.b16 %v9592
        %v9723 = vunpack.c.l.b16 %v9593
        %v9724 = vunpack.c.l.b16 %v9594
        %v9725 = vunpack.c.l.b16 %v9595
        %v9726 = vunpack.c.l.b16 %v9596
        %v9727 = vunpack.c.l.b16 %v9597
        %v9728 = vunpack.c.l.b16 %v9598
        %v9729 = vunpack.c.l.b16 %v9599
        %v9730 = vpack.c.b16 %v9715, %v9714
        %v9731 = vpack.c.b16 %v9717, %v9716
        %v9732 = vpack.c.b16 %v9719, %v9718
        %v9733 = vpack.c.b16 %v9721, %v9720
        %v9734 = vpack.c.b16 %v9723, %v9722
        %v9735 = vpack.c.b16 %v9725, %v9724
        %v9736 = vpack.c.b16 %v9727, %v9726
        %v9737 = vpack.c.b16 %v9729, %v9728
        %9746 = vmatprep.subr.bf16.mxu0 0
        %9747 = vmatpush1.bf16.msra.mxu0 %v9730
        %9748 = vmatprep.subr.bf16.mxu0 0
        %9749 = vmatpush1.bf16.msra.mxu0 %v9731
        %9750 = vmatprep.subr.bf16.mxu0 0
        %9751 = vmatpush1.bf16.msra.mxu0 %v9732
        %9752 = vmatprep.subr.bf16.mxu0 0
        %9753 = vmatpush1.bf16.msra.mxu0 %v9733
        %9754 = vmatprep.subr.bf16.mxu0 0
        %9755 = vmatpush1.bf16.msra.mxu0 %v9734
        %9756 = vmatprep.subr.bf16.mxu0 0
        %9757 = vmatpush1.bf16.msra.mxu0 %v9735
        %9758 = vmatprep.subr.bf16.mxu0 0
        %9759 = vmatpush1.bf16.msra.mxu0 %v9736
        %9760 = vmatprep.subr.bf16.mxu0 0
        %9761 = vmatpush1.bf16.msra.mxu0 %v9737
        %9762 = vmatprep.subr.bf16.mxu0 0
        %9763 = vmatpush1.bf16.msra.mxu0 0
        %9764 = vmatprep.subr.bf16.mxu0 0
        %9765 = vmatpush1.bf16.msra.mxu0 0
        %9766 = vmatprep.subr.bf16.mxu0 0
        %9767 = vmatpush1.bf16.msra.mxu0 0
        %9768 = vmatprep.subr.bf16.mxu0 0
        %9769 = vmatpush1.bf16.msra.mxu0 0
        %9770 = vmatprep.subr.bf16.mxu0 0
        %9771 = vmatpush1.bf16.msra.mxu0 0
        %9772 = vmatprep.subr.bf16.mxu0 0
        %9773 = vmatpush1.bf16.msra.mxu0 0
        %9774 = vmatprep.subr.bf16.mxu0 0
        %9775 = vmatpush1.bf16.msra.mxu0 0
        %9776 = vmatprep.subr.bf16.mxu0 0
        %9777 = vmatpush1.bf16.msra.mxu0 0
        %9778 = vmatprep.mubr.bf16.mxu0 0
        %9779 = vmatmul.mubr.bf16.gmra.mrb[0].mxu0 %v9627
        %v9780 = vpop.f32.mrb[0].mxu0
        %v9781 = vadd.f32 0.0, %v9780
        %v9782 = vpop.f32.mrb[0].mxu0
        %v9783 = vpop.f32.mrb[0].mxu0
        %v9784 = vadd.f32 0.0, %v9783
        %v9785 = vpop.f32.mrb[0].mxu0
        %9786 = vmatprep.mubr.bf16.mxu0 0
        %9787 = vmatmul.mubr.bf16.gmra.mrb[0].mxu0 %v9629
        %v9788 = vpop.f32.mrb[0].mxu0
        %v9789 = vadd.f32 0.0, %v9788
        %v9790 = vpop.f32.mrb[0].mxu0
        %v9791 = vpop.f32.mrb[0].mxu0
        %v9792 = vadd.f32 0.0, %v9791
        %v9793 = vpop.f32.mrb[0].mxu0
        %9794 = vmatprep.mubr.bf16.mxu0 0
        %9795 = vmatmul.mubr.bf16.gmra.mrb[0].mxu0 %v9631
        %v9796 = vpop.f32.mrb[0].mxu0
        %v9797 = vadd.f32 0.0, %v9796
        %v9798 = vpop.f32.mrb[0].mxu0
        %v9799 = vpop.f32.mrb[0].mxu0
        %v9800 = vadd.f32 0.0, %v9799
        %v9801 = vpop.f32.mrb[0].mxu0
        %9802 = vmatprep.mubr.bf16.mxu0 0
        %9803 = vmatmul.mubr.bf16.gmra.mrb[0].mxu0 %v9633
        %v9804 = vpop.f32.mrb[0].mxu0
        %v9805 = vadd.f32 0.0, %v9804
        %v9806 = vpop.f32.mrb[0].mxu0
        %v9807 = vpop.f32.mrb[0].mxu0
        %v9808 = vadd.f32 0.0, %v9807
        %v9809 = vpop.f32.mrb[0].mxu0
        %9810 = vmatprep.mubr.bf16.mxu0 0
        %9811 = vmatmul.mubr.bf16.gmra.mrb[0].mxu0 %v9635
        %v9812 = vpop.f32.mrb[0].mxu0
        %v9813 = vadd.f32 0.0, %v9812
        %v9814 = vpop.f32.mrb[0].mxu0
        %v9815 = vpop.f32.mrb[0].mxu0
        %v9816 = vadd.f32 0.0, %v9815
        %v9817 = vpop.f32.mrb[0].mxu0
        %9818 = vmatprep.mubr.bf16.mxu0 0
        %9819 = vmatmul.mubr.bf16.gmra.mrb[0].mxu0 %v9637
        %v9820 = vpop.f32.mrb[0].mxu0
        %v9821 = vadd.f32 0.0, %v9820
        %v9822 = vpop.f32.mrb[0].mxu0
        %v9823 = vpop.f32.mrb[0].mxu0
        %v9824 = vadd.f32 0.0, %v9823
        %v9825 = vpop.f32.mrb[0].mxu0
        %9826 = vmatprep.mubr.bf16.mxu0 0
        %9827 = vmatmul.mubr.bf16.gmra.mrb[0].mxu0 %v9639
        %v9828 = vpop.f32.mrb[0].mxu0
        %v9829 = vadd.f32 0.0, %v9828
        %v9830 = vpop.f32.mrb[0].mxu0
        %v9831 = vpop.f32.mrb[0].mxu0
        %v9832 = vadd.f32 0.0, %v9831
        %v9833 = vpop.f32.mrb[0].mxu0
        %9834 = vmatprep.mubr.bf16.mxu0 0
        %9835 = vmatmul.mubr.bf16.gmra.mrb[0].mxu0 %v9641
        %v9836 = vpop.f32.mrb[0].mxu0
        %v9837 = vadd.f32 0.0, %v9836
        %v9838 = vpop.f32.mrb[0].mxu0
        %v9839 = vpop.f32.mrb[0].mxu0
        %v9840 = vadd.f32 0.0, %v9839
        %v9841 = vpop.f32.mrb[0].mxu0
        %9842 = vmatprep.mubr.bf16.mxu0 0
        %9843 = vmatmul.mubr.bf16.gmra.mrb[0].mxu0 %v9643
        %v9844 = vpop.f32.mrb[0].mxu0
        %v9845 = vadd.f32 0.0, %v9844
        %v9846 = vpop.f32.mrb[0].mxu0
        %v9847 = vpop.f32.mrb[0].mxu0
        %v9848 = vadd.f32 0.0, %v9847
        %v9849 = vpop.f32.mrb[0].mxu0
        %9850 = vmatprep.mubr.bf16.mxu0 0
        %9851 = vmatmul.mubr.bf16.gmra.mrb[0].mxu0 %v9645
        %v9852 = vpop.f32.mrb[0].mxu0
        %v9853 = vadd.f32 0.0, %v9852
        %v9854 = vpop.f32.mrb[0].mxu0
        %v9855 = vpop.f32.mrb[0].mxu0
        %v9856 = vadd.f32 0.0, %v9855
        %v9857 = vpop.f32.mrb[0].mxu0
        %9858 = vmatprep.mubr.bf16.mxu0 0
        %9859 = vmatmul.mubr.bf16.gmra.mrb[0].mxu0 %v9647
        %v9860 = vpop.f32.mrb[0].mxu0
        %v9861 = vadd.f32 0.0, %v9860
        %v9862 = vpop.f32.mrb[0].mxu0
        %v9863 = vpop.f32.mrb[0].mxu0
        %v9864 = vadd.f32 0.0, %v9863
        %v9865 = vpop.f32.mrb[0].mxu0
        %9866 = vmatprep.mubr.bf16.mxu0 0
        %9867 = vmatmul.mubr.bf16.gmra.mrb[0].mxu0 %v9649
        %v9868 = vpop.f32.mrb[0].mxu0
        %v9869 = vadd.f32 0.0, %v9868
        %v9870 = vpop.f32.mrb[0].mxu0
        %v9871 = vpop.f32.mrb[0].mxu0
        %v9872 = vadd.f32 0.0, %v9871
        %v9873 = vpop.f32.mrb[0].mxu0
        %9874 = vmatprep.mubr.bf16.mxu0 0
        %9875 = vmatmul.mubr.bf16.gmra.mrb[0].mxu0 %v9651
        %v9876 = vpop.f32.mrb[0].mxu0
        %v9877 = vadd.f32 0.0, %v9876
        %v9878 = vpop.f32.mrb[0].mxu0
        %v9879 = vpop.f32.mrb[0].mxu0
        %v9880 = vadd.f32 0.0, %v9879
        %v9881 = vpop.f32.mrb[0].mxu0
        %9882 = vmatprep.mubr.bf16.mxu0 0
        %9883 = vmatmul.mubr.bf16.gmra.mrb[0].mxu0 %v9653
        %v9884 = vpop.f32.mrb[0].mxu0
        %v9885 = vadd.f32 0.0, %v9884
        %v9886 = vpop.f32.mrb[0].mxu0
        %v9887 = vpop.f32.mrb[0].mxu0
        %v9888 = vadd.f32 0.0, %v9887
        %v9889 = vpop.f32.mrb[0].mxu0
        %9890 = vmatprep.mubr.bf16.mxu0 0
        %9891 = vmatmul.mubr.bf16.gmra.mrb[0].mxu0 %v9655
        %v9892 = vpop.f32.mrb[0].mxu0
        %v9893 = vadd.f32 0.0, %v9892
        %v9894 = vpop.f32.mrb[0].mxu0
        %v9895 = vpop.f32.mrb[0].mxu0
        %v9896 = vadd.f32 0.0, %v9895
        %v9897 = vpop.f32.mrb[0].mxu0
        %9898 = vmatprep.mubr.bf16.mxu0 0
        %9899 = vmatmul.mubr.bf16.gmra.mrb[0].mxu0 %v9657
        %v9900 = vpop.f32.mrb[0].mxu0
        %v9901 = vadd.f32 0.0, %v9900
        %v9902 = vpop.f32.mrb[0].mxu0
        %v9903 = vpop.f32.mrb[0].mxu0
        %v9904 = vadd.f32 0.0, %v9903
        %v9905 = vpop.f32.mrb[0].mxu0
        %9906 = vmatprep.mubr.bf16.mxu0 0
        %9907 = vmatmul.mubr.bf16.gmra.mrb[0].mxu0 %v9659
        %v9908 = vpop.f32.mrb[0].mxu0
        %v9909 = vadd.f32 0.0, %v9908
        %v9910 = vpop.f32.mrb[0].mxu0
        %v9911 = vpop.f32.mrb[0].mxu0
        %v9912 = vadd.f32 0.0, %v9911
        %v9913 = vpop.f32.mrb[0].mxu0
        %9914 = vmatprep.mubr.bf16.mxu0 0
        %9915 = vmatmul.mubr.bf16.gmra.mrb[0].mxu0 %v9661
        %v9916 = vpop.f32.mrb[0].mxu0
        %v9917 = vadd.f32 0.0, %v9916
        %v9918 = vpop.f32.mrb[0].mxu0
        %v9919 = vpop.f32.mrb[0].mxu0
        %v9920 = vadd.f32 0.0, %v9919
        %v9921 = vpop.f32.mrb[0].mxu0
        %9922 = vmatprep.mubr.bf16.mxu0 0
        %9923 = vmatmul.mubr.bf16.gmra.mrb[0].mxu0 %v9663
        %v9924 = vpop.f32.mrb[0].mxu0
        %v9925 = vadd.f32 0.0, %v9924
        %v9926 = vpop.f32.mrb[0].mxu0
        %v9927 = vpop.f32.mrb[0].mxu0
        %v9928 = vadd.f32 0.0, %v9927
        %v9929 = vpop.f32.mrb[0].mxu0
        %9930 = vmatprep.mubr.bf16.mxu0 0
        %9931 = vmatmul.mubr.bf16.gmra.mrb[0].mxu0 %v9665
        %v9932 = vpop.f32.mrb[0].mxu0
        %v9933 = vadd.f32 0.0, %v9932
        %v9934 = vpop.f32.mrb[0].mxu0
        %v9935 = vpop.f32.mrb[0].mxu0
        %v9936 = vadd.f32 0.0, %v9935
        %v9937 = vpop.f32.mrb[0].mxu0
        %9938 = vmatprep.mubr.bf16.mxu0 0
        %9939 = vmatmul.mubr.bf16.gmra.mrb[0].mxu0 %v9667
        %v9940 = vpop.f32.mrb[0].mxu0
        %v9941 = vadd.f32 0.0, %v9940
        %v9942 = vpop.f32.mrb[0].mxu0
        %v9943 = vpop.f32.mrb[0].mxu0
        %v9944 = vadd.f32 0.0, %v9943
        %v9945 = vpop.f32.mrb[0].mxu0
        %9946 = vmatprep.mubr.bf16.mxu0 0
        %9947 = vmatmul.mubr.bf16.gmra.mrb[0].mxu0 %v9669
        %v9948 = vpop.f32.mrb[0].mxu0
        %v9949 = vadd.f32 0.0, %v9948
        %v9950 = vpop.f32.mrb[0].mxu0
        %v9951 = vpop.f32.mrb[0].mxu0
        %v9952 = vadd.f32 0.0, %v9951
        %v9953 = vpop.f32.mrb[0].mxu0
        %9954 = vmatprep.mubr.bf16.mxu0 0
        %9955 = vmatmul.mubr.bf16.gmra.mrb[0].mxu0 %v9671
        %v9956 = vpop.f32.mrb[0].mxu0
        %v9957 = vadd.f32 0.0, %v9956
        %v9958 = vpop.f32.mrb[0].mxu0
        %v9959 = vpop.f32.mrb[0].mxu0
        %v9960 = vadd.f32 0.0, %v9959
        %v9961 = vpop.f32.mrb[0].mxu0
        %9962 = vmatprep.mubr.bf16.mxu0 0
        %9963 = vmatmul.mubr.bf16.gmra.mrb[0].mxu0 %v9673
        %v9964 = vpop.f32.mrb[0].mxu0
        %v9965 = vadd.f32 0.0, %v9964
        %v9966 = vpop.f32.mrb[0].mxu0
        %v9967 = vpop.f32.mrb[0].mxu0
        %v9968 = vadd.f32 0.0, %v9967
        %v9969 = vpop.f32.mrb[0].mxu0
        %9970 = vdwg.mxu0
        %v9971 = vadd.f32 %v9534, %v9781
        %v9972 = vadd.f32 %v9535, %v9784
        %v9973 = vadd.f32 %v9536, %v9789
        %v9974 = vadd.f32 %v9537, %v9792
        %v9975 = vadd.f32 %v9538, %v9797
        %v9976 = vadd.f32 %v9539, %v9800
        %v9977 = vadd.f32 %v9540, %v9805
        %v9978 = vadd.f32 %v9541, %v9808
        %v9979 = vadd.f32 %v9542, %v9813
        %v9980 = vadd.f32 %v9543, %v9816
        %v9981 = vadd.f32 %v9544, %v9821
        %v9982 = vadd.f32 %v9545, %v9824
        %v9983 = vadd.f32 %v9546, %v9829
        %v9984 = vadd.f32 %v9547, %v9832
        %v9985 = vadd.f32 %v9548, %v9837
        %v9986 = vadd.f32 %v9549, %v9840
        %v9987 = vadd.f32 %v9550, %v9845
        %v9988 = vadd.f32 %v9551, %v9848
        %v9989 = vadd.f32 %v9552, %v9853
        %v9990 = vadd.f32 %v9553, %v9856
        %v9991 = vadd.f32 %v9554, %v9861
        %v9992 = vadd.f32 %v9555, %v9864
        %v9993 = vadd.f32 %v9556, %v9869
        %v9994 = vadd.f32 %v9557, %v9872
        %v9995 = vadd.f32 %v9558, %v9877
        %v9996 = vadd.f32 %v9559, %v9880
        %v9997 = vadd.f32 %v9560, %v9885
        %v9998 = vadd.f32 %v9561, %v9888
        %v9999 = vadd.f32 %v9562, %v9893
        %v10000 = vadd.f32 %v9563, %v9896
        %v10001 = vadd.f32 %v9564, %v9901
        %v10002 = vadd.f32 %v9565, %v9904
        %v10003 = vadd.f32 %v9566, %v9909
        %v10004 = vadd.f32 %v9567, %v9912
        %v10005 = vadd.f32 %v9568, %v9917
        %v10006 = vadd.f32 %v9569, %v9920
        %v10007 = vadd.f32 %v9570, %v9925
        %v10008 = vadd.f32 %v9571, %v9928
        %v10009 = vadd.f32 %v9572, %v9933
        %v10010 = vadd.f32 %v9573, %v9936
        %v10011 = vadd.f32 %v9574, %v9941
        %v10012 = vadd.f32 %v9575, %v9944
        %v10013 = vadd.f32 %v9576, %v9949
        %v10014 = vadd.f32 %v9577, %v9952
        %v10015 = vadd.f32 %v9578, %v9957
        %v10016 = vadd.f32 %v9579, %v9960
        %v10017 = vadd.f32 %v9580, %v9965
        %v10018 = vadd.f32 %v9581, %v9968
        %v10019 = vld [vmem:[#allocation2 + $0xe0] sm:$0x1f]
        %s10020 = scalar_lea.vmem [#allocation8], 512
        %v10021 = vld [vmem:[%s10020] sm:$0xf]
        %v10022 = vld [vmem:[%s10020 + $0x4] sm:$0xf]
        %v10023 = vld [vmem:[%s10020 + $0x8] sm:$0xf]
        %v10024 = vld [vmem:[%s10020 + $0xc] sm:$0xf]
        %v10025 = vld [vmem:[%s10020 + $0x10] sm:$0xf]
        %v10026 = vld [vmem:[%s10020 + $0x14] sm:$0xf]
        %v10027 = vld [vmem:[%s10020 + $0x18] sm:$0xf]
        %v10028 = vld [vmem:[%s10020 + $0x1c] sm:$0xf]
        %v10029 = vld [vmem:[%s10020 + $0x20] sm:$0xf]
        %v10030 = vld [vmem:[%s10020 + $0x24] sm:$0xf]
        %v10031 = vld [vmem:[%s10020 + $0x28] sm:$0xf]
        %v10032 = vld [vmem:[%s10020 + $0x2c] sm:$0xf]
        %v10033 = vld [vmem:[%s10020 + $0x30] sm:$0xf]
        %v10034 = vld [vmem:[%s10020 + $0x34] sm:$0xf]
        %v10035 = vld [vmem:[%s10020 + $0x38] sm:$0xf]
        %v10036 = vld [vmem:[%s10020 + $0x3c] sm:$0xf]
        %v10038 = vshrl.u32 %v9582, 16
        %v10040 = vrot.slane %v10038, 4
        %v10041 = vshll.u32 %v9582, 16
        %v10043 = vrot.slane %v10041, 5
        %v10044 = vor.u32 %v10040, %v10043
        %v10045 = vrot.slane %v9022, 4
        %v10046 = vrot.slane %v9025, 5
        %v10047 = vor.u32 %v10045, %v10046
        %v10048 = vsel %vm7011, %v10044, %v10047
        %v10049 = vrot.slane %v9031, 4
        %v10050 = vrot.slane %v9034, 5
        %v10051 = vor.u32 %v10049, %v10050
        %v10052 = vsel %vm7011, %v10047, %v10051
        %v10053 = vrot.slane %v9040, 4
        %v10054 = vrot.slane %v9043, 5
        %v10055 = vor.u32 %v10053, %v10054
        %v10056 = vsel %vm7011, %v10051, %v10055
        %v10057 = vrot.slane %v9049, 4
        %v10058 = vrot.slane %v9052, 5
        %v10059 = vor.u32 %v10057, %v10058
        %v10060 = vsel %vm7011, %v10055, %v10059
        %v10061 = vrot.slane %v9058, 4
        %v10062 = vrot.slane %v9061, 5
        %v10063 = vor.u32 %v10061, %v10062
        %v10064 = vsel %vm7011, %v10059, %v10063
        %v10065 = vrot.slane %v9067, 4
        %v10066 = vrot.slane %v9070, 5
        %v10067 = vor.u32 %v10065, %v10066
        %v10068 = vsel %vm7011, %v10063, %v10067
        %v10069 = vrot.slane %v9076, 4
        %v10070 = vrot.slane %v9079, 5
        %v10071 = vor.u32 %v10069, %v10070
        %v10072 = vsel %vm7011, %v10067, %v10071
        %v10073 = vrot.slane %v9085, 4
        %v10074 = vrot.slane %v9088, 5
        %v10075 = vor.u32 %v10073, %v10074
        %v10076 = vsel %vm7011, %v10071, %v10075
        %v10077 = vrot.slane %v9094, 4
        %v10078 = vrot.slane %v9097, 5
        %v10079 = vor.u32 %v10077, %v10078
        %v10080 = vsel %vm7011, %v10075, %v10079
        %v10081 = vrot.slane %v9103, 4
        %v10082 = vrot.slane %v9106, 5
        %v10083 = vor.u32 %v10081, %v10082
        %v10084 = vsel %vm7011, %v10079, %v10083
        %v10085 = vrot.slane %v9112, 4
        %v10086 = vrot.slane %v9115, 5
        %v10087 = vor.u32 %v10085, %v10086
        %v10088 = vsel %vm7011, %v10083, %v10087
        %v10089 = vrot.slane %v9121, 4
        %v10090 = vrot.slane %v9124, 5
        %v10091 = vor.u32 %v10089, %v10090
        %v10092 = vsel %vm7011, %v10087, %v10091
        %v10093 = vrot.slane %v9130, 4
        %v10094 = vrot.slane %v9133, 5
        %v10095 = vor.u32 %v10093, %v10094
        %v10096 = vsel %vm7011, %v10091, %v10095
        %v10097 = vrot.slane %v9139, 4
        %v10098 = vrot.slane %v9142, 5
        %v10099 = vor.u32 %v10097, %v10098
        %v10100 = vsel %vm7011, %v10095, %v10099
        %v10101 = vrot.slane %v9148, 4
        %v10102 = vrot.slane %v9151, 5
        %v10103 = vor.u32 %v10101, %v10102
        %v10104 = vsel %vm7011, %v10099, %v10103
        %v10105 = vrot.slane %v9157, 4
        %v10106 = vrot.slane %v9160, 5
        %v10107 = vor.u32 %v10105, %v10106
        %v10108 = vsel %vm7011, %v10103, %v10107
        %v10109 = vrot.slane %v9166, 4
        %v10110 = vrot.slane %v9169, 5
        %v10111 = vor.u32 %v10109, %v10110
        %v10112 = vsel %vm7011, %v10107, %v10111
        %v10113 = vrot.slane %v9175, 4
        %v10114 = vrot.slane %v9178, 5
        %v10115 = vor.u32 %v10113, %v10114
        %v10116 = vsel %vm7011, %v10111, %v10115
        %v10117 = vrot.slane %v9184, 4
        %v10118 = vrot.slane %v9187, 5
        %v10119 = vor.u32 %v10117, %v10118
        %v10120 = vsel %vm7011, %v10115, %v10119
        %v10121 = vrot.slane %v9193, 4
        %v10122 = vrot.slane %v9196, 5
        %v10123 = vor.u32 %v10121, %v10122
        %v10124 = vsel %vm7011, %v10119, %v10123
        %v10125 = vrot.slane %v9202, 4
        %v10126 = vrot.slane %v9205, 5
        %v10127 = vor.u32 %v10125, %v10126
        %v10128 = vsel %vm7011, %v10123, %v10127
        %v10129 = vrot.slane %v9211, 4
        %v10130 = vrot.slane %v9214, 5
        %v10131 = vor.u32 %v10129, %v10130
        %v10132 = vsel %vm7011, %v10127, %v10131
        %v10133 = vrot.slane %v9220, 4
        %v10134 = vrot.slane %v9223, 5
        %v10135 = vor.u32 %v10133, %v10134
        %v10136 = vsel %vm7011, %v10131, %v10135
        %v10138 = vshrl.u32 %v10019, 16
        %v10140 = vrot.slane %v10138, 4
        %v10141 = vshll.u32 %v10019, 16
        %v10143 = vrot.slane %v10141, 5
        %v10144 = vor.u32 %v10140, %v10143
        %v10145 = vsel %vm7011, %v10135, %v10144
        %v10186 = vunpack.c.l.b16 %v10021
        %v10187 = vunpack.c.l.b16 %v10022
        %v10188 = vunpack.c.l.b16 %v10023
        %v10189 = vunpack.c.l.b16 %v10024
        %v10190 = vunpack.c.l.b16 %v10025
        %v10191 = vunpack.c.l.b16 %v10026
        %v10192 = vunpack.c.l.b16 %v10027
        %v10193 = vunpack.c.l.b16 %v10028
        %v10194 = vunpack.c.l.b16 %v10029
        %v10195 = vunpack.c.l.b16 %v10030
        %v10196 = vunpack.c.l.b16 %v10031
        %v10197 = vunpack.c.l.b16 %v10032
        %v10198 = vunpack.c.l.b16 %v10033
        %v10199 = vunpack.c.l.b16 %v10034
        %v10200 = vunpack.c.l.b16 %v10035
        %v10201 = vunpack.c.l.b16 %v10036
        %v10202 = vpack.c.b16 %v10187, %v10186
        %v10203 = vpack.c.b16 %v10189, %v10188
        %v10204 = vpack.c.b16 %v10191, %v10190
        %v10205 = vpack.c.b16 %v10193, %v10192
        %v10206 = vpack.c.b16 %v10195, %v10194
        %v10207 = vpack.c.b16 %v10197, %v10196
        %v10208 = vpack.c.b16 %v10199, %v10198
        %v10209 = vpack.c.b16 %v10201, %v10200
        %10218 = vmatprep.subr.bf16.mxu0 0
        %10219 = vmatpush1.bf16.msra.mxu0 %v10202
        %10220 = vmatprep.subr.bf16.mxu0 0
        %10221 = vmatpush1.bf16.msra.mxu0 %v10203
        %10222 = vmatprep.subr.bf16.mxu0 0
        %10223 = vmatpush1.bf16.msra.mxu0 %v10204
        %10224 = vmatprep.subr.bf16.mxu0 0
        %10225 = vmatpush1.bf16.msra.mxu0 %v10205
        %10226 = vmatprep.subr.bf16.mxu0 0
        %10227 = vmatpush1.bf16.msra.mxu0 %v10206
        %10228 = vmatprep.subr.bf16.mxu0 0
        %10229 = vmatpush1.bf16.msra.mxu0 %v10207
        %10230 = vmatprep.subr.bf16.mxu0 0
        %10231 = vmatpush1.bf16.msra.mxu0 %v10208
        %10232 = vmatprep.subr.bf16.mxu0 0
        %10233 = vmatpush1.bf16.msra.mxu0 %v10209
        %10234 = vmatprep.subr.bf16.mxu0 0
        %10235 = vmatpush1.bf16.msra.mxu0 0
        %10236 = vmatprep.subr.bf16.mxu0 0
        %10237 = vmatpush1.bf16.msra.mxu0 0
        %10238 = vmatprep.subr.bf16.mxu0 0
        %10239 = vmatpush1.bf16.msra.mxu0 0
        %10240 = vmatprep.subr.bf16.mxu0 0
        %10241 = vmatpush1.bf16.msra.mxu0 0
        %10242 = vmatprep.subr.bf16.mxu0 0
        %10243 = vmatpush1.bf16.msra.mxu0 0
        %10244 = vmatprep.subr.bf16.mxu0 0
        %10245 = vmatpush1.bf16.msra.mxu0 0
        %10246 = vmatprep.subr.bf16.mxu0 0
        %10247 = vmatpush1.bf16.msra.mxu0 0
        %10248 = vmatprep.subr.bf16.mxu0 0
        %10249 = vmatpush1.bf16.msra.mxu0 0
        %10250 = vmatprep.mubr.bf16.mxu0 0
        %10251 = vmatmul.mubr.bf16.gmra.mrb[0].mxu0 %v10048
        %v10252 = vpop.f32.mrb[0].mxu0
        %v10253 = vadd.f32 0.0, %v10252
        %v10254 = vpop.f32.mrb[0].mxu0
        %v10255 = vpop.f32.mrb[0].mxu0
        %v10256 = vadd.f32 0.0, %v10255
        %v10257 = vpop.f32.mrb[0].mxu0
        %10258 = vmatprep.mubr.bf16.mxu0 0
        %10259 = vmatmul.mubr.bf16.gmra.mrb[0].mxu0 %v10052
        %v10260 = vpop.f32.mrb[0].mxu0
        %v10261 = vadd.f32 0.0, %v10260
        %v10262 = vpop.f32.mrb[0].mxu0
        %v10263 = vpop.f32.mrb[0].mxu0
        %v10264 = vadd.f32 0.0, %v10263
        %v10265 = vpop.f32.mrb[0].mxu0
        %10266 = vmatprep.mubr.bf16.mxu0 0
        %10267 = vmatmul.mubr.bf16.gmra.mrb[0].mxu0 %v10056
        %v10268 = vpop.f32.mrb[0].mxu0
        %v10269 = vadd.f32 0.0, %v10268
        %v10270 = vpop.f32.mrb[0].mxu0
        %v10271 = vpop.f32.mrb[0].mxu0
        %v10272 = vadd.f32 0.0, %v10271
        %v10273 = vpop.f32.mrb[0].mxu0
        %10274 = vmatprep.mubr.bf16.mxu0 0
        %10275 = vmatmul.mubr.bf16.gmra.mrb[0].mxu0 %v10060
        %v10276 = vpop.f32.mrb[0].mxu0
        %v10277 = vadd.f32 0.0, %v10276
        %v10278 = vpop.f32.mrb[0].mxu0
        %v10279 = vpop.f32.mrb[0].mxu0
        %v10280 = vadd.f32 0.0, %v10279
        %v10281 = vpop.f32.mrb[0].mxu0
        %10282 = vmatprep.mubr.bf16.mxu0 0
        %10283 = vmatmul.mubr.bf16.gmra.mrb[0].mxu0 %v10064
        %v10284 = vpop.f32.mrb[0].mxu0
        %v10285 = vadd.f32 0.0, %v10284
        %v10286 = vpop.f32.mrb[0].mxu0
        %v10287 = vpop.f32.mrb[0].mxu0
        %v10288 = vadd.f32 0.0, %v10287
        %v10289 = vpop.f32.mrb[0].mxu0
        %10290 = vmatprep.mubr.bf16.mxu0 0
        %10291 = vmatmul.mubr.bf16.gmra.mrb[0].mxu0 %v10068
        %v10292 = vpop.f32.mrb[0].mxu0
        %v10293 = vadd.f32 0.0, %v10292
        %v10294 = vpop.f32.mrb[0].mxu0
        %v10295 = vpop.f32.mrb[0].mxu0
        %v10296 = vadd.f32 0.0, %v10295
        %v10297 = vpop.f32.mrb[0].mxu0
        %10298 = vmatprep.mubr.bf16.mxu0 0
        %10299 = vmatmul.mubr.bf16.gmra.mrb[0].mxu0 %v10072
        %v10300 = vpop.f32.mrb[0].mxu0
        %v10301 = vadd.f32 0.0, %v10300
        %v10302 = vpop.f32.mrb[0].mxu0
        %v10303 = vpop.f32.mrb[0].mxu0
        %v10304 = vadd.f32 0.0, %v10303
        %v10305 = vpop.f32.mrb[0].mxu0
        %10306 = vmatprep.mubr.bf16.mxu0 0
        %10307 = vmatmul.mubr.bf16.gmra.mrb[0].mxu0 %v10076
        %v10308 = vpop.f32.mrb[0].mxu0
        %v10309 = vadd.f32 0.0, %v10308
        %v10310 = vpop.f32.mrb[0].mxu0
        %v10311 = vpop.f32.mrb[0].mxu0
        %v10312 = vadd.f32 0.0, %v10311
        %v10313 = vpop.f32.mrb[0].mxu0
        %10314 = vmatprep.mubr.bf16.mxu0 0
        %10315 = vmatmul.mubr.bf16.gmra.mrb[0].mxu0 %v10080
        %v10316 = vpop.f32.mrb[0].mxu0
        %v10317 = vadd.f32 0.0, %v10316
        %v10318 = vpop.f32.mrb[0].mxu0
        %v10319 = vpop.f32.mrb[0].mxu0
        %v10320 = vadd.f32 0.0, %v10319
        %v10321 = vpop.f32.mrb[0].mxu0
        %10322 = vmatprep.mubr.bf16.mxu0 0
        %10323 = vmatmul.mubr.bf16.gmra.mrb[0].mxu0 %v10084
        %v10324 = vpop.f32.mrb[0].mxu0
        %v10325 = vadd.f32 0.0, %v10324
        %v10326 = vpop.f32.mrb[0].mxu0
        %v10327 = vpop.f32.mrb[0].mxu0
        %v10328 = vadd.f32 0.0, %v10327
        %v10329 = vpop.f32.mrb[0].mxu0
        %10330 = vmatprep.mubr.bf16.mxu0 0
        %10331 = vmatmul.mubr.bf16.gmra.mrb[0].mxu0 %v10088
        %v10332 = vpop.f32.mrb[0].mxu0
        %v10333 = vadd.f32 0.0, %v10332
        %v10334 = vpop.f32.mrb[0].mxu0
        %v10335 = vpop.f32.mrb[0].mxu0
        %v10336 = vadd.f32 0.0, %v10335
        %v10337 = vpop.f32.mrb[0].mxu0
        %10338 = vmatprep.mubr.bf16.mxu0 0
        %10339 = vmatmul.mubr.bf16.gmra.mrb[0].mxu0 %v10092
        %v10340 = vpop.f32.mrb[0].mxu0
        %v10341 = vadd.f32 0.0, %v10340
        %v10342 = vpop.f32.mrb[0].mxu0
        %v10343 = vpop.f32.mrb[0].mxu0
        %v10344 = vadd.f32 0.0, %v10343
        %v10345 = vpop.f32.mrb[0].mxu0
        %10346 = vmatprep.mubr.bf16.mxu0 0
        %10347 = vmatmul.mubr.bf16.gmra.mrb[0].mxu0 %v10096
        %v10348 = vpop.f32.mrb[0].mxu0
        %v10349 = vadd.f32 0.0, %v10348
        %v10350 = vpop.f32.mrb[0].mxu0
        %v10351 = vpop.f32.mrb[0].mxu0
        %v10352 = vadd.f32 0.0, %v10351
        %v10353 = vpop.f32.mrb[0].mxu0
        %10354 = vmatprep.mubr.bf16.mxu0 0
        %10355 = vmatmul.mubr.bf16.gmra.mrb[0].mxu0 %v10100
        %v10356 = vpop.f32.mrb[0].mxu0
        %v10357 = vadd.f32 0.0, %v10356
        %v10358 = vpop.f32.mrb[0].mxu0
        %v10359 = vpop.f32.mrb[0].mxu0
        %v10360 = vadd.f32 0.0, %v10359
        %v10361 = vpop.f32.mrb[0].mxu0
        %10362 = vmatprep.mubr.bf16.mxu0 0
        %10363 = vmatmul.mubr.bf16.gmra.mrb[0].mxu0 %v10104
        %v10364 = vpop.f32.mrb[0].mxu0
        %v10365 = vadd.f32 0.0, %v10364
        %v10366 = vpop.f32.mrb[0].mxu0
        %v10367 = vpop.f32.mrb[0].mxu0
        %v10368 = vadd.f32 0.0, %v10367
        %v10369 = vpop.f32.mrb[0].mxu0
        %10370 = vmatprep.mubr.bf16.mxu0 0
        %10371 = vmatmul.mubr.bf16.gmra.mrb[0].mxu0 %v10108
        %v10372 = vpop.f32.mrb[0].mxu0
        %v10373 = vadd.f32 0.0, %v10372
        %v10374 = vpop.f32.mrb[0].mxu0
        %v10375 = vpop.f32.mrb[0].mxu0
        %v10376 = vadd.f32 0.0, %v10375
        %v10377 = vpop.f32.mrb[0].mxu0
        %10378 = vmatprep.mubr.bf16.mxu0 0
        %10379 = vmatmul.mubr.bf16.gmra.mrb[0].mxu0 %v10112
        %v10380 = vpop.f32.mrb[0].mxu0
        %v10381 = vadd.f32 0.0, %v10380
        %v10382 = vpop.f32.mrb[0].mxu0
        %v10383 = vpop.f32.mrb[0].mxu0
        %v10384 = vadd.f32 0.0, %v10383
        %v10385 = vpop.f32.mrb[0].mxu0
        %10386 = vmatprep.mubr.bf16.mxu0 0
        %10387 = vmatmul.mubr.bf16.gmra.mrb[0].mxu0 %v10116
        %v10388 = vpop.f32.mrb[0].mxu0
        %v10389 = vadd.f32 0.0, %v10388
        %v10390 = vpop.f32.mrb[0].mxu0
        %v10391 = vpop.f32.mrb[0].mxu0
        %v10392 = vadd.f32 0.0, %v10391
        %v10393 = vpop.f32.mrb[0].mxu0
        %10394 = vmatprep.mubr.bf16.mxu0 0
        %10395 = vmatmul.mubr.bf16.gmra.mrb[0].mxu0 %v10120
        %v10396 = vpop.f32.mrb[0].mxu0
        %v10397 = vadd.f32 0.0, %v10396
        %v10398 = vpop.f32.mrb[0].mxu0
        %v10399 = vpop.f32.mrb[0].mxu0
        %v10400 = vadd.f32 0.0, %v10399
        %v10401 = vpop.f32.mrb[0].mxu0
        %10402 = vmatprep.mubr.bf16.mxu0 0
        %10403 = vmatmul.mubr.bf16.gmra.mrb[0].mxu0 %v10124
        %v10404 = vpop.f32.mrb[0].mxu0
        %v10405 = vadd.f32 0.0, %v10404
        %v10406 = vpop.f32.mrb[0].mxu0
        %v10407 = vpop.f32.mrb[0].mxu0
        %v10408 = vadd.f32 0.0, %v10407
        %v10409 = vpop.f32.mrb[0].mxu0
        %10410 = vmatprep.mubr.bf16.mxu0 0
        %10411 = vmatmul.mubr.bf16.gmra.mrb[0].mxu0 %v10128
        %v10412 = vpop.f32.mrb[0].mxu0
        %v10413 = vadd.f32 0.0, %v10412
        %v10414 = vpop.f32.mrb[0].mxu0
        %v10415 = vpop.f32.mrb[0].mxu0
        %v10416 = vadd.f32 0.0, %v10415
        %v10417 = vpop.f32.mrb[0].mxu0
        %10418 = vmatprep.mubr.bf16.mxu0 0
        %10419 = vmatmul.mubr.bf16.gmra.mrb[0].mxu0 %v10132
        %v10420 = vpop.f32.mrb[0].mxu0
        %v10421 = vadd.f32 0.0, %v10420
        %v10422 = vpop.f32.mrb[0].mxu0
        %v10423 = vpop.f32.mrb[0].mxu0
        %v10424 = vadd.f32 0.0, %v10423
        %v10425 = vpop.f32.mrb[0].mxu0
        %10426 = vmatprep.mubr.bf16.mxu0 0
        %10427 = vmatmul.mubr.bf16.gmra.mrb[0].mxu0 %v10136
        %v10428 = vpop.f32.mrb[0].mxu0
        %v10429 = vadd.f32 0.0, %v10428
        %v10430 = vpop.f32.mrb[0].mxu0
        %v10431 = vpop.f32.mrb[0].mxu0
        %v10432 = vadd.f32 0.0, %v10431
        %v10433 = vpop.f32.mrb[0].mxu0
        %10434 = vmatprep.mubr.bf16.mxu0 0
        %10435 = vmatmul.mubr.bf16.gmra.mrb[0].mxu0 %v10145
        %v10436 = vpop.f32.mrb[0].mxu0
        %v10437 = vadd.f32 0.0, %v10436
        %v10438 = vpop.f32.mrb[0].mxu0
        %v10439 = vpop.f32.mrb[0].mxu0
        %v10440 = vadd.f32 0.0, %v10439
        %v10441 = vpop.f32.mrb[0].mxu0
        %10442 = vdwg.mxu0
        %v10443 = vadd.f32 %v9971, %v10253
        %v10444 = vadd.f32 %v9972, %v10256
        %v10445 = vadd.f32 %v9973, %v10261
        %v10446 = vadd.f32 %v9974, %v10264
        %v10447 = vadd.f32 %v9975, %v10269
        %v10448 = vadd.f32 %v9976, %v10272
        %v10449 = vadd.f32 %v9977, %v10277
        %v10450 = vadd.f32 %v9978, %v10280
        %v10451 = vadd.f32 %v9979, %v10285
        %v10452 = vadd.f32 %v9980, %v10288
        %v10453 = vadd.f32 %v9981, %v10293
        %v10454 = vadd.f32 %v9982, %v10296
        %v10455 = vadd.f32 %v9983, %v10301
        %v10456 = vadd.f32 %v9984, %v10304
        %v10457 = vadd.f32 %v9985, %v10309
        %v10458 = vadd.f32 %v9986, %v10312
        %v10459 = vadd.f32 %v9987, %v10317
        %v10460 = vadd.f32 %v9988, %v10320
        %v10461 = vadd.f32 %v9989, %v10325
        %v10462 = vadd.f32 %v9990, %v10328
        %v10463 = vadd.f32 %v9991, %v10333
        %v10464 = vadd.f32 %v9992, %v10336
        %v10465 = vadd.f32 %v9993, %v10341
        %v10466 = vadd.f32 %v9994, %v10344
        %v10467 = vadd.f32 %v9995, %v10349
        %v10468 = vadd.f32 %v9996, %v10352
        %v10469 = vadd.f32 %v9997, %v10357
        %v10470 = vadd.f32 %v9998, %v10360
        %v10471 = vadd.f32 %v9999, %v10365
        %v10472 = vadd.f32 %v10000, %v10368
        %v10473 = vadd.f32 %v10001, %v10373
        %v10474 = vadd.f32 %v10002, %v10376
        %v10475 = vadd.f32 %v10003, %v10381
        %v10476 = vadd.f32 %v10004, %v10384
        %v10477 = vadd.f32 %v10005, %v10389
        %v10478 = vadd.f32 %v10006, %v10392
        %v10479 = vadd.f32 %v10007, %v10397
        %v10480 = vadd.f32 %v10008, %v10400
        %v10481 = vadd.f32 %v10009, %v10405
        %v10482 = vadd.f32 %v10010, %v10408
        %v10483 = vadd.f32 %v10011, %v10413
        %v10484 = vadd.f32 %v10012, %v10416
        %v10485 = vadd.f32 %v10013, %v10421
        %v10486 = vadd.f32 %v10014, %v10424
        %v10487 = vadd.f32 %v10015, %v10429
        %v10488 = vadd.f32 %v10016, %v10432
        %v10489 = vadd.f32 %v10017, %v10437
        %v10490 = vadd.f32 %v10018, %v10440
        %v10491 = vld [vmem:[%s212 + $0x18] sm:$0xf]
        %v10492 = vld [vmem:[%s212 + $0x1c] sm:$0xf]
        %v10493 = vld [vmem:[%s212 + $0x20] sm:$0xf]
        %v10494 = vld [vmem:[%s212 + $0x24] sm:$0xf]
        %v10495 = vld [vmem:[%s212 + $0x28] sm:$0xf]
        %v10496 = vld [vmem:[%s212 + $0x2c] sm:$0xf]
        %v10497 = vld [vmem:[%s212 + $0x30] sm:$0xf]
        %v10498 = vld [vmem:[%s212 + $0x34] sm:$0xf]
        %v10499 = vld [vmem:[%s212 + $0x38] sm:$0xf]
        %v10500 = vld [vmem:[%s212 + $0x3c] sm:$0xf]
        %v10501 = vld [vmem:[%s212 + $0x40] sm:$0xf]
        %v10502 = vld [vmem:[%s212 + $0x44] sm:$0xf]
        %v10503 = vld [vmem:[%s212 + $0x48] sm:$0xf]
        %v10504 = vld [vmem:[%s212 + $0x4c] sm:$0xf]
        %v10505 = vld [vmem:[%s212 + $0x50] sm:$0xf]
        %v10506 = vld [vmem:[%s212 + $0x54] sm:$0xf]
        %v10507 = vld [vmem:[%s212 + $0x58] sm:$0xf]
        %v10508 = vld [vmem:[%s212 + $0x5c] sm:$0xf]
        %v10509 = vld [vmem:[%s212 + $0x60] sm:$0xf]
        %v10510 = vld [vmem:[%s212 + $0x64] sm:$0xf]
        %v10511 = vld [vmem:[%s212 + $0x68] sm:$0xf]
        %v10512 = vld [vmem:[%s212 + $0x6c] sm:$0xf]
        %v10513 = vld [vmem:[%s212 + $0x70] sm:$0xf]
        %v10514 = vld [vmem:[%s212 + $0x74] sm:$0xf]
        %v10515 = vld [vmem:[%s212 + $0x78] sm:$0xf]
        %v10516 = vld [vmem:[%s212 + $0x7c] sm:$0xf]
        %v10517 = vld [vmem:[%s212 + $0x80] sm:$0xf]
        %v10518 = vld [vmem:[%s212 + $0x84] sm:$0xf]
        %v10519 = vld [vmem:[%s212 + $0x88] sm:$0xf]
        %v10520 = vld [vmem:[%s212 + $0x8c] sm:$0xf]
        %v10521 = vld [vmem:[%s212 + $0x90] sm:$0xf]
        %v10522 = vld [vmem:[%s212 + $0x94] sm:$0xf]
        %v10523 = vld [vmem:[%s212 + $0x98] sm:$0xf]
        %v10524 = vld [vmem:[%s212 + $0x9c] sm:$0xf]
        %v10525 = vld [vmem:[%s212 + $0xa0] sm:$0xf]
        %v10526 = vld [vmem:[%s212 + $0xa4] sm:$0xf]
        %v10527 = vld [vmem:[%s212 + $0xa8] sm:$0xf]
        %v10528 = vld [vmem:[%s212 + $0xac] sm:$0xf]
        %v10529 = vld [vmem:[%s212 + $0xb0] sm:$0xf]
        %v10530 = vld [vmem:[%s212 + $0xb4] sm:$0xf]
        %v10531 = vld [vmem:[%s212 + $0xb8] sm:$0xf]
        %v10532 = vld [vmem:[%s212 + $0xbc] sm:$0xf]
        %v10533 = vld [vmem:[%s212 + $0xc0] sm:$0xf]
        %v10534 = vld [vmem:[%s212 + $0xc4] sm:$0xf]
        %v10535 = vld [vmem:[%s212 + $0xc8] sm:$0xf]
        %v10536 = vld [vmem:[%s212 + $0xcc] sm:$0xf]
        %v10537 = vld [vmem:[%s212 + $0xd0] sm:$0xf]
        %v10538 = vld [vmem:[%s212 + $0xd4] sm:$0xf]
        %v10539 = vunpack.c.l.bf16 %v10491
        %v10540 = vunpack.c.l.bf16 %v10492
        %v10541 = vunpack.c.l.bf16 %v10493
        %v10542 = vunpack.c.l.bf16 %v10494
        %v10543 = vunpack.c.l.bf16 %v10495
        %v10544 = vunpack.c.l.bf16 %v10496
        %v10545 = vunpack.c.l.bf16 %v10497
        %v10546 = vunpack.c.l.bf16 %v10498
        %v10547 = vunpack.c.l.bf16 %v10499
        %v10548 = vunpack.c.l.bf16 %v10500
        %v10549 = vunpack.c.l.bf16 %v10501
        %v10550 = vunpack.c.l.bf16 %v10502
        %v10551 = vunpack.c.l.bf16 %v10503
        %v10552 = vunpack.c.l.bf16 %v10504
        %v10553 = vunpack.c.l.bf16 %v10505
        %v10554 = vunpack.c.l.bf16 %v10506
        %v10555 = vunpack.c.l.bf16 %v10507
        %v10556 = vunpack.c.l.bf16 %v10508
        %v10557 = vunpack.c.l.bf16 %v10509
        %v10558 = vunpack.c.l.bf16 %v10510
        %v10559 = vunpack.c.l.bf16 %v10511
        %v10560 = vunpack.c.l.bf16 %v10512
        %v10561 = vunpack.c.l.bf16 %v10513
        %v10562 = vunpack.c.l.bf16 %v10514
        %v10563 = vunpack.c.l.bf16 %v10515
        %v10564 = vunpack.c.l.bf16 %v10516
        %v10565 = vunpack.c.l.bf16 %v10517
        %v10566 = vunpack.c.l.bf16 %v10518
        %v10567 = vunpack.c.l.bf16 %v10519
        %v10568 = vunpack.c.l.bf16 %v10520
        %v10569 = vunpack.c.l.bf16 %v10521
        %v10570 = vunpack.c.l.bf16 %v10522
        %v10571 = vunpack.c.l.bf16 %v10523
        %v10572 = vunpack.c.l.bf16 %v10524
        %v10573 = vunpack.c.l.bf16 %v10525
        %v10574 = vunpack.c.l.bf16 %v10526
        %v10575 = vunpack.c.l.bf16 %v10527
        %v10576 = vunpack.c.l.bf16 %v10528
        %v10577 = vunpack.c.l.bf16 %v10529
        %v10578 = vunpack.c.l.bf16 %v10530
        %v10579 = vunpack.c.l.bf16 %v10531
        %v10580 = vunpack.c.l.bf16 %v10532
        %v10581 = vunpack.c.l.bf16 %v10533
        %v10582 = vunpack.c.l.bf16 %v10534
        %v10583 = vunpack.c.l.bf16 %v10535
        %v10584 = vunpack.c.l.bf16 %v10536
        %v10585 = vunpack.c.l.bf16 %v10537
        %v10586 = vunpack.c.l.bf16 %v10538
        %v10587 = vlaneseq
        %v10588 = vshrl.u32 %v10587, 7
        %v10589 = vsub.s32 2, %v10588
        %v10590 = vrot.slane %v246, %v10589
        %v10591 = vmul.f32 %v10443, %v10590
        %v10592 = vmul.f32 %v10444, %v10590
        %v10593 = vmul.f32 %v10445, %v10590
        %v10594 = vmul.f32 %v10446, %v10590
        %v10595 = vmul.f32 %v10447, %v10590
        %v10596 = vmul.f32 %v10448, %v10590
        %v10597 = vmul.f32 %v10449, %v10590
        %v10598 = vmul.f32 %v10450, %v10590
        %v10599 = vmul.f32 %v10451, %v10590
        %v10600 = vmul.f32 %v10452, %v10590
        %v10601 = vmul.f32 %v10453, %v10590
        %v10602 = vmul.f32 %v10454, %v10590
        %v10603 = vmul.f32 %v10455, %v10590
        %v10604 = vmul.f32 %v10456, %v10590
        %v10605 = vmul.f32 %v10457, %v10590
        %v10606 = vmul.f32 %v10458, %v10590
        %v10607 = vmul.f32 %v10459, %v10590
        %v10608 = vmul.f32 %v10460, %v10590
        %v10609 = vmul.f32 %v10461, %v10590
        %v10610 = vmul.f32 %v10462, %v10590
        %v10611 = vmul.f32 %v10463, %v10590
        %v10612 = vmul.f32 %v10464, %v10590
        %v10613 = vmul.f32 %v10465, %v10590
        %v10614 = vmul.f32 %v10466, %v10590
        %v10615 = vmul.f32 %v10467, %v10590
        %v10616 = vmul.f32 %v10468, %v10590
        %v10617 = vmul.f32 %v10469, %v10590
        %v10618 = vmul.f32 %v10470, %v10590
        %v10619 = vmul.f32 %v10471, %v10590
        %v10620 = vmul.f32 %v10472, %v10590
        %v10621 = vmul.f32 %v10473, %v10590
        %v10622 = vmul.f32 %v10474, %v10590
        %v10623 = vmul.f32 %v10475, %v10590
        %v10624 = vmul.f32 %v10476, %v10590
        %v10625 = vmul.f32 %v10477, %v10590
        %v10626 = vmul.f32 %v10478, %v10590
        %v10627 = vmul.f32 %v10479, %v10590
        %v10628 = vmul.f32 %v10480, %v10590
        %v10629 = vmul.f32 %v10481, %v10590
        %v10630 = vmul.f32 %v10482, %v10590
        %v10631 = vmul.f32 %v10483, %v10590
        %v10632 = vmul.f32 %v10484, %v10590
        %v10633 = vmul.f32 %v10485, %v10590
        %v10634 = vmul.f32 %v10486, %v10590
        %v10635 = vmul.f32 %v10487, %v10590
        %v10636 = vmul.f32 %v10488, %v10590
        %v10637 = vmul.f32 %v10489, %v10590
        %v10638 = vmul.f32 %v10490, %v10590
        %v10639 = vlaneseq
        %v10640 = vshrl.u32 %v10639, 7
        %v10641 = vsub.s32 3, %v10640
        %v10642 = vrot.slane %v246, %v10641
        %v10643 = vadd.f32 %v10591, %v10642
        %v10644 = vadd.f32 %v10592, %v10642
        %v10645 = vadd.f32 %v10593, %v10642
        %v10646 = vadd.f32 %v10594, %v10642
        %v10647 = vadd.f32 %v10595, %v10642
        %v10648 = vadd.f32 %v10596, %v10642
        %v10649 = vadd.f32 %v10597, %v10642
        %v10650 = vadd.f32 %v10598, %v10642
        %v10651 = vadd.f32 %v10599, %v10642
        %v10652 = vadd.f32 %v10600, %v10642
        %v10653 = vadd.f32 %v10601, %v10642
        %v10654 = vadd.f32 %v10602, %v10642
        %v10655 = vadd.f32 %v10603, %v10642
        %v10656 = vadd.f32 %v10604, %v10642
        %v10657 = vadd.f32 %v10605, %v10642
        %v10658 = vadd.f32 %v10606, %v10642
        %v10659 = vadd.f32 %v10607, %v10642
        %v10660 = vadd.f32 %v10608, %v10642
        %v10661 = vadd.f32 %v10609, %v10642
        %v10662 = vadd.f32 %v10610, %v10642
        %v10663 = vadd.f32 %v10611, %v10642
        %v10664 = vadd.f32 %v10612, %v10642
        %v10665 = vadd.f32 %v10613, %v10642
        %v10666 = vadd.f32 %v10614, %v10642
        %v10667 = vadd.f32 %v10615, %v10642
        %v10668 = vadd.f32 %v10616, %v10642
        %v10669 = vadd.f32 %v10617, %v10642
        %v10670 = vadd.f32 %v10618, %v10642
        %v10671 = vadd.f32 %v10619, %v10642
        %v10672 = vadd.f32 %v10620, %v10642
        %v10673 = vadd.f32 %v10621, %v10642
        %v10674 = vadd.f32 %v10622, %v10642
        %v10675 = vadd.f32 %v10623, %v10642
        %v10676 = vadd.f32 %v10624, %v10642
        %v10677 = vadd.f32 %v10625, %v10642
        %v10678 = vadd.f32 %v10626, %v10642
        %v10679 = vadd.f32 %v10627, %v10642
        %v10680 = vadd.f32 %v10628, %v10642
        %v10681 = vadd.f32 %v10629, %v10642
        %v10682 = vadd.f32 %v10630, %v10642
        %v10683 = vadd.f32 %v10631, %v10642
        %v10684 = vadd.f32 %v10632, %v10642
        %v10685 = vadd.f32 %v10633, %v10642
        %v10686 = vadd.f32 %v10634, %v10642
        %v10687 = vadd.f32 %v10635, %v10642
        %v10688 = vadd.f32 %v10636, %v10642
        %v10689 = vadd.f32 %v10637, %v10642
        %v10690 = vadd.f32 %v10638, %v10642
        %v10691 = vadd.f32 %v10643, %v10539
        %v10692 = vadd.f32 %v10644, %v10540
        %v10693 = vadd.f32 %v10645, %v10541
        %v10694 = vadd.f32 %v10646, %v10542
        %v10695 = vadd.f32 %v10647, %v10543
        %v10696 = vadd.f32 %v10648, %v10544
        %v10697 = vadd.f32 %v10649, %v10545
        %v10698 = vadd.f32 %v10650, %v10546
        %v10699 = vadd.f32 %v10651, %v10547
        %v10700 = vadd.f32 %v10652, %v10548
        %v10701 = vadd.f32 %v10653, %v10549
        %v10702 = vadd.f32 %v10654, %v10550
        %v10703 = vadd.f32 %v10655, %v10551
        %v10704 = vadd.f32 %v10656, %v10552
        %v10705 = vadd.f32 %v10657, %v10553
        %v10706 = vadd.f32 %v10658, %v10554
        %v10707 = vadd.f32 %v10659, %v10555
        %v10708 = vadd.f32 %v10660, %v10556
        %v10709 = vadd.f32 %v10661, %v10557
        %v10710 = vadd.f32 %v10662, %v10558
        %v10711 = vadd.f32 %v10663, %v10559
        %v10712 = vadd.f32 %v10664, %v10560
        %v10713 = vadd.f32 %v10665, %v10561
        %v10714 = vadd.f32 %v10666, %v10562
        %v10715 = vadd.f32 %v10667, %v10563
        %v10716 = vadd.f32 %v10668, %v10564
        %v10717 = vadd.f32 %v10669, %v10565
        %v10718 = vadd.f32 %v10670, %v10566
        %v10719 = vadd.f32 %v10671, %v10567
        %v10720 = vadd.f32 %v10672, %v10568
        %v10721 = vadd.f32 %v10673, %v10569
        %v10722 = vadd.f32 %v10674, %v10570
        %v10723 = vadd.f32 %v10675, %v10571
        %v10724 = vadd.f32 %v10676, %v10572
        %v10725 = vadd.f32 %v10677, %v10573
        %v10726 = vadd.f32 %v10678, %v10574
        %v10727 = vadd.f32 %v10679, %v10575
        %v10728 = vadd.f32 %v10680, %v10576
        %v10729 = vadd.f32 %v10681, %v10577
        %v10730 = vadd.f32 %v10682, %v10578
        %v10731 = vadd.f32 %v10683, %v10579
        %v10732 = vadd.f32 %v10684, %v10580
        %v10733 = vadd.f32 %v10685, %v10581
        %v10734 = vadd.f32 %v10686, %v10582
        %v10735 = vadd.f32 %v10687, %v10583
        %v10736 = vadd.f32 %v10688, %v10584
        %v10737 = vadd.f32 %v10689, %v10585
        %v10738 = vadd.f32 %v10690, %v10586
        %v10739 = vmax.f32 %v10691, 0.0
        %v10740 = vmax.f32 %v10692, 0.0
        %v10741 = vmax.f32 %v10693, 0.0
        %v10742 = vmax.f32 %v10694, 0.0
        %v10743 = vmax.f32 %v10695, 0.0
        %v10744 = vmax.f32 %v10696, 0.0
        %v10745 = vmax.f32 %v10697, 0.0
        %v10746 = vmax.f32 %v10698, 0.0
        %v10747 = vmax.f32 %v10699, 0.0
        %v10748 = vmax.f32 %v10700, 0.0
        %v10749 = vmax.f32 %v10701, 0.0
        %v10750 = vmax.f32 %v10702, 0.0
        %v10751 = vmax.f32 %v10703, 0.0
        %v10752 = vmax.f32 %v10704, 0.0
        %v10753 = vmax.f32 %v10705, 0.0
        %v10754 = vmax.f32 %v10706, 0.0
        %v10755 = vmax.f32 %v10707, 0.0
        %v10756 = vmax.f32 %v10708, 0.0
        %v10757 = vmax.f32 %v10709, 0.0
        %v10758 = vmax.f32 %v10710, 0.0
        %v10759 = vmax.f32 %v10711, 0.0
        %v10760 = vmax.f32 %v10712, 0.0
        %v10761 = vmax.f32 %v10713, 0.0
        %v10762 = vmax.f32 %v10714, 0.0
        %v10763 = vmax.f32 %v10715, 0.0
        %v10764 = vmax.f32 %v10716, 0.0
        %v10765 = vmax.f32 %v10717, 0.0
        %v10766 = vmax.f32 %v10718, 0.0
        %v10767 = vmax.f32 %v10719, 0.0
        %v10768 = vmax.f32 %v10720, 0.0
        %v10769 = vmax.f32 %v10721, 0.0
        %v10770 = vmax.f32 %v10722, 0.0
        %v10771 = vmax.f32 %v10723, 0.0
        %v10772 = vmax.f32 %v10724, 0.0
        %v10773 = vmax.f32 %v10725, 0.0
        %v10774 = vmax.f32 %v10726, 0.0
        %v10775 = vmax.f32 %v10727, 0.0
        %v10776 = vmax.f32 %v10728, 0.0
        %v10777 = vmax.f32 %v10729, 0.0
        %v10778 = vmax.f32 %v10730, 0.0
        %v10779 = vmax.f32 %v10731, 0.0
        %v10780 = vmax.f32 %v10732, 0.0
        %v10781 = vmax.f32 %v10733, 0.0
        %v10782 = vmax.f32 %v10734, 0.0
        %v10783 = vmax.f32 %v10735, 0.0
        %v10784 = vmax.f32 %v10736, 0.0
        %v10785 = vmax.f32 %v10737, 0.0
        %v10786 = vmax.f32 %v10738, 0.0
        %10787 = vst [vmem:[%s244] sm:$0xff] %v10739
        %10788 = vst [vmem:[%s244 + $0x8] sm:$0xff] %v10740
        %10789 = vst [vmem:[%s244 + $0x10] sm:$0xff] %v10741
        %10790 = vst [vmem:[%s244 + $0x18] sm:$0xff] %v10742
        %10791 = vst [vmem:[%s244 + $0x20] sm:$0xff] %v10743
        %10792 = vst [vmem:[%s244 + $0x28] sm:$0xff] %v10744
        %10793 = vst [vmem:[%s244 + $0x30] sm:$0xff] %v10745
        %10794 = vst [vmem:[%s244 + $0x38] sm:$0xff] %v10746
        %10795 = vst [vmem:[%s244 + $0x40] sm:$0xff] %v10747
        %10796 = vst [vmem:[%s244 + $0x48] sm:$0xff] %v10748
        %10797 = vst [vmem:[%s244 + $0x50] sm:$0xff] %v10749
        %10798 = vst [vmem:[%s244 + $0x58] sm:$0xff] %v10750
        %10799 = vst [vmem:[%s244 + $0x60] sm:$0xff] %v10751
        %10800 = vst [vmem:[%s244 + $0x68] sm:$0xff] %v10752
        %10801 = vst [vmem:[%s244 + $0x70] sm:$0xff] %v10753
        %10802 = vst [vmem:[%s244 + $0x78] sm:$0xff] %v10754
        %10803 = vst [vmem:[%s244 + $0x80] sm:$0xff] %v10755
        %10804 = vst [vmem:[%s244 + $0x88] sm:$0xff] %v10756
        %10805 = vst [vmem:[%s244 + $0x90] sm:$0xff] %v10757
        %10806 = vst [vmem:[%s244 + $0x98] sm:$0xff] %v10758
        %10807 = vst [vmem:[%s244 + $0xa0] sm:$0xff] %v10759
        %10808 = vst [vmem:[%s244 + $0xa8] sm:$0xff] %v10760
        %10809 = vst [vmem:[%s244 + $0xb0] sm:$0xff] %v10761
        %10810 = vst [vmem:[%s244 + $0xb8] sm:$0xff] %v10762
        %10811 = vst [vmem:[%s244 + $0xc0] sm:$0xff] %v10763
        %10812 = vst [vmem:[%s244 + $0xc8] sm:$0xff] %v10764
        %10813 = vst [vmem:[%s244 + $0xd0] sm:$0xff] %v10765
        %10814 = vst [vmem:[%s244 + $0xd8] sm:$0xff] %v10766
        %10815 = vst [vmem:[%s244 + $0xe0] sm:$0xff] %v10767
        %10816 = vst [vmem:[%s244 + $0xe8] sm:$0xff] %v10768
        %10817 = vst [vmem:[%s244 + $0xf0] sm:$0xff] %v10769
        %10818 = vst [vmem:[%s244 + $0xf8] sm:$0xff] %v10770
        %10819 = vst [vmem:[%s244 + $0x100] sm:$0xff] %v10771
        %10820 = vst [vmem:[%s244 + $0x108] sm:$0xff] %v10772
        %10821 = vst [vmem:[%s244 + $0x110] sm:$0xff] %v10773
        %10822 = vst [vmem:[%s244 + $0x118] sm:$0xff] %v10774
        %10823 = vst [vmem:[%s244 + $0x120] sm:$0xff] %v10775
        %10824 = vst [vmem:[%s244 + $0x128] sm:$0xff] %v10776
        %10825 = vst [vmem:[%s244 + $0x130] sm:$0xff] %v10777
        %10826 = vst [vmem:[%s244 + $0x138] sm:$0xff] %v10778
        %10827 = vst [vmem:[%s244 + $0x140] sm:$0xff] %v10779
        %10828 = vst [vmem:[%s244 + $0x148] sm:$0xff] %v10780
        %10829 = vst [vmem:[%s244 + $0x150] sm:$0xff] %v10781
        %10830 = vst [vmem:[%s244 + $0x158] sm:$0xff] %v10782
        %10831 = vst [vmem:[%s244 + $0x160] sm:$0xff] %v10783
        %10832 = vst [vmem:[%s244 + $0x168] sm:$0xff] %v10784
        %10833 = vst [vmem:[%s244 + $0x170] sm:$0xff] %v10785
        %10834 = vst [vmem:[%s244 + $0x178] sm:$0xff] %v10786
        %s10835 = sand.u32 %s119, 1
        %s10836 = scalar_lea.sflag [#allocation5], %s10835
        %s10837 = sand.u32 %s119, 1
        %s10838 = smul.addr %s10837, 384
        %s10839 = scalar_lea.vmem [#allocation9], %s10838
        // Predicated region
        $region49: #{tpu_custom_call.1} parent=35 // pred_check
          %p10840 = pneg %p129
        $region50: #{tpu_custom_call.1} parent=35 // pred_check_branch
          %10842 = sbr.rel (%p10840) target = $region52
        $region51: #{tpu_custom_call.1} parent=35 // pred_region
          %s10844 = ssub.s32 6144, 6144
          %10845 = vsyncadd %s10836, %s10844
          %s10846 = smul.addr %s22, 48
          %s10847 = smul.addr %s10846, 128
          %s10848 = scalar_lea.hbm %s4, %s10847
          %s10849 = sshll.u32 %s10839, 4
          %s10850 = int_to_ptr.vmem [resolvable:$true] %s10849
          %10855 = dma.vmem_to_hbm [thread:$0]  %s10850, 6144, %s10848, %s10836, 128, 128, 8
        $region52: #{tpu_custom_call.1} parent=35 // pred_fallthru
          _
      $region36: #{tpu_custom_call.1} parent=5 // pred_fallthru
        _
      %p10856 = scmp.le.s32.totalorder 2, %s17
      // Predicated region
      $region53: #{tpu_custom_call.1} parent=5 // pred_check
        %p10857 = pneg %p10856
      $region54: #{tpu_custom_call.1} parent=5 // pred_check_branch
        %10859 = sbr.rel (%p10857) target = $region56
      $region55: #{tpu_custom_call.1} parent=5 // pred_region
        %s10860 = ssub.s32 %s17, 2
        // Predicated region
        $region57: #{tpu_custom_call.1} parent=55 // pred_check
          %p10861 = pneg %p135
        $region58: #{tpu_custom_call.1} parent=55 // pred_check_branch
          %10863 = sbr.rel (%p10861) target = $region60
        $region59: #{tpu_custom_call.1} parent=55 // pred_region
          %s10864 = sand.u32 %s120, 1
          %s10865 = scalar_lea.sflag [#allocation5], %s10864
          %s10866 = sand.u32 %s120, 1
          %s10867 = smul.addr %s10866, 384
          %s10868 = scalar_lea.vmem [#allocation9], %s10867
          %10869 = dma.done %s10865, 6144
        $region60: #{tpu_custom_call.1} parent=55 // pred_fallthru
          _
      $region56: #{tpu_custom_call.1} parent=5 // pred_fallthru
        _
    $region6: #{tpu_custom_call.1} parent=1 // loop_footer
      %s21 = sadd.s32 1, %s17
    $region7: #{tpu_custom_call.1} parent=1 // loop_footer_branch
      %16 = sbr.rel target = $region3
    $region8: #{tpu_custom_call.1} parent=1 // loop_exit
      _
    %10870 = vsyncpa [#allocation4], 1
    %s10871 = scalar_lea.sflag [#allocation4], 1
    %10872 = vsyncpa %s10871, 1
    %10873 = vsyncpa [#allocation7], 1
    %10874 = vsyncpa [#allocation5], 1
    %s10875 = scalar_lea.sflag [#allocation5], 1
    %10876 = vsyncpa %s10875, 1

</llo_original>
